<compile_context>
chip_gen: v5e
topology: v5e:2x2
jax: 0.10.0
libtpu: 0.0.40
codegen_flags: <defaults>
</compile_context>

<pallas_src>
import functools

import jax
import jax.numpy as jnp
from jax import lax
from jax.experimental import pallas as pl
from jax.experimental.pallas import tpu as pltpu


def _block_kernel(x_ref, dww_ref, dwb_ref, g_ref, beta_ref,
                  w1_ref, b1_ref, w2_ref, b2_ref, o_ref, xp_ref, *, eps):
    """One grid step = one full (H, W, C) image of the batch."""
    _, H, W, C = x_ref.shape
    KH = KW = 7
    PAD = 3

    # ---- load the input tile once (f32); reused for halo fill + residual --
    xin = x_ref[0].astype(jnp.float32)                 # (H, W, C)

    # ---- zero-padded halo in VMEM scratch (no HBM pad round trip) ---------
    # Full re-init every step keeps this correct when the batch axis is
    # sharded across cores (scratch is per-core, not shared).
    xp_ref[...] = jnp.zeros_like(xp_ref)
    xp_ref[PAD:PAD + H, PAD:PAD + W, :] = xin

    # ---- 7x7 depthwise conv: 49 shifted multiply-adds on the VPU ----------
    dww = dww_ref[...].astype(jnp.float32)             # (49, C)
    acc = jnp.zeros((H, W, C), jnp.float32)
    for kh in range(KH):
        for kw in range(KW):
            k = kh * KW + kw
            wk = dww[k:k + 1, :]                       # (1, C) -> broadcasts over H, W
            acc = acc + xp_ref[kh:kh + H, kw:kw + W, :] * wk
    acc = acc + dwb_ref[...].astype(jnp.float32)       # (1, C) bias

    # ---- LayerNorm over C (f32, two-pass stats, matches F.layer_norm) -----
    y = acc.reshape(H * W, C)
    mean = jnp.mean(y, axis=-1, keepdims=True)
    yc = y - mean
    var = jnp.mean(yc * yc, axis=-1, keepdims=True)    # biased variance
    yn = yc * lax.rsqrt(var + eps)
    yn = yn * g_ref[...].astype(jnp.float32) + beta_ref[...].astype(jnp.float32)

    # ---- pwconv1 -> ReLU -> pwconv2 on the MXU -----------------------------
    h = jnp.dot(yn, w1_ref[...].astype(jnp.float32),
                preferred_element_type=jnp.float32) + b1_ref[...].astype(jnp.float32)
    h = jnp.maximum(h, 0.0)
    z = jnp.dot(h, w2_ref[...].astype(jnp.float32),
                preferred_element_type=jnp.float32) + b2_ref[...].astype(jnp.float32)

    # ---- residual add: input tile is already in registers ------------------
    o_ref[0] = (xin.reshape(H * W, C) + z).reshape(H, W, C).astype(o_ref.dtype)


def _vmem_limit_bytes(H, W, C):
    """Rough per-core VMEM budget with headroom, clamped for v5e/v6e/v7x."""
    def rup(n, m):
        return ((n + m - 1) // m) * m
    img = H * rup(W, 8) * rup(C, 128) * 4                 # one (1,H,W,C) f32 block
    pad_img = (H + 6) * rup(W + 6, 8) * rup(C, 128) * 4   # halo scratch
    hidden = rup(H * W, 8) * rup(4 * C, 128) * 4          # MLP intermediate / spill
    est = 2 * (2 * img) + pad_img + 4 * hidden + (1 << 20)
    return min(max(est, 8 * 1024 * 1024), 48 * 1024 * 1024)


def convnext_block(x, params, *, eps=1e-6):
    """Forward pass of the ConvNeXtV2 Block.

    x:      (B, C, H, W) float array (NCHW, like the PyTorch module).
    params: dict with PyTorch-shaped parameters:
      dwconv_w (C,1,7,7)  dwconv_b (C,)
      norm_w   (C,)       norm_b   (C,)
      pw1_w    (4C, C)    pw1_b    (4C,)
      pw2_w    (C, 4C)    pw2_b    (C,)
    """
    B, C, H, W = x.shape
    C4 = 4 * C

    # Channel-last layout for the kernel; these two transposes mirror the
    # module's own permutes (the fused path in between never touches HBM).
    x_nhwc = jnp.transpose(x, (0, 2, 3, 1))                       # (B, H, W, C)

    dww = jnp.transpose(params["dwconv_w"][:, 0], (1, 2, 0)).reshape(49, C)
    dwb = params["dwconv_b"].reshape(1, C)
    g = params["norm_w"].reshape(1, C)
    beta = params["norm_b"].reshape(1, C)
    w1 = jnp.transpose(params["pw1_w"])                           # (C, 4C)
    b1 = params["pw1_b"].reshape(1, C4)
    w2 = jnp.transpose(params["pw2_w"])                           # (4C, C)
    b2 = params["pw2_b"].reshape(1, C)

    out_nhwc = pl.pallas_call(
        functools.partial(_block_kernel, eps=eps),
        out_shape=jax.ShapeDtypeStruct((B, H, W, C), x.dtype),
        grid_spec=pltpu.PrefetchScalarGridSpec(
            num_scalar_prefetch=0,
            grid=(B,),
            in_specs=[
                pl.BlockSpec((1, H, W, C), lambda b: (b, 0, 0, 0)),  # image
                pl.BlockSpec((49, C), lambda b: (0, 0)),             # dw weight
                pl.BlockSpec((1, C), lambda b: (0, 0)),              # dw bias
                pl.BlockSpec((1, C), lambda b: (0, 0)),              # ln gamma
                pl.BlockSpec((1, C), lambda b: (0, 0)),              # ln beta
                pl.BlockSpec((C, C4), lambda b: (0, 0)),             # pwconv1 W
                pl.BlockSpec((1, C4), lambda b: (0, 0)),             # pwconv1 b
                pl.BlockSpec((C4, C), lambda b: (0, 0)),             # pwconv2 W
                pl.BlockSpec((1, C), lambda b: (0, 0)),              # pwconv2 b
            ],
            out_specs=pl.BlockSpec((1, H, W, C), lambda b: (b, 0, 0, 0)),
            scratch_shapes=[pltpu.VMEM((H + 6, W + 6, C), jnp.float32)],
        ),
        compiler_params=pltpu.CompilerParams(
            dimension_semantics=("parallel",),            # shards batch over 2 TCs
            vmem_limit_bytes=_vmem_limit_bytes(H, W, C),
        ),
    )(x_nhwc, dww, dwb, g, beta, w1, b1, w2, b2)

    return jnp.transpose(out_nhwc, (0, 3, 1, 2))                  # back to NCHW


def _reference_block(x, params, eps=1e-6):
    """Pure-JAX reference mirroring the PyTorch forward exactly."""
    C = x.shape[1]
    y = lax.conv_general_dilated(
        x, params["dwconv_w"], window_strides=(1, 1),
        padding=((3, 3), (3, 3)),
        dimension_numbers=("NCHW", "OIHW", "NCHW"),
        feature_group_count=C,
        precision=lax.Precision.HIGHEST)
    y = y + params["dwconv_b"][None, :, None, None]
    y = jnp.transpose(y, (0, 2, 3, 1))
    mean = jnp.mean(y, axis=-1, keepdims=True)
    var = jnp.mean((y - mean) ** 2, axis=-1, keepdims=True)
    y = (y - mean) / jnp.sqrt(var + eps) * params["norm_w"] + params["norm_b"]
    y = jnp.einsum("bhwc,dc->bhwd", y, params["pw1_w"],
                   precision=lax.Precision.HIGHEST) + params["pw1_b"]
    y = jnp.maximum(y, 0.0)
    y = jnp.einsum("bhwd,cd->bhwc", y, params["pw2_w"],
                   precision=lax.Precision.HIGHEST) + params["pw2_b"]
    y = jnp.transpose(y, (0, 3, 1, 2))
    return x + y


if __name__ == "__main__":
    key = jax.random.PRNGKey(0)
    ks = jax.random.split(key, 9)

    B, C, H, W = 2, 4, 16, 16
    x = jax.random.normal(ks[0], (B, C, H, W), dtype=jnp.float32)

    params = {
        "dwconv_w": 0.2 * jax.random.normal(ks[1], (C, 1, 7, 7), jnp.float32),
        "dwconv_b": 0.1 * jax.random.normal(ks[2], (C,), jnp.float32),
        "norm_w": jnp.ones((C,), jnp.float32)
                  + 0.1 * jax.random.normal(ks[3], (C,), jnp.float32),
        "norm_b": 0.1 * jax.random.normal(ks[4], (C,), jnp.float32),
        "pw1_w": 0.05 * jax.random.normal(ks[5], (4 * C, C), jnp.float32),
        "pw1_b": 0.1 * jax.random.normal(ks[6], (4 * C,), jnp.float32),
        "pw2_w": 0.05 * jax.random.normal(ks[7], (C, 4 * C), jnp.float32),
        "pw2_b": 0.1 * jax.random.normal(ks[8], (C,), jnp.float32),
    }

    out = convnext_block(x, params, eps=1e-6)
    out = jax.block_until_ready(out)

    ref = _reference_block(x, params, eps=1e-6)
    assert out.shape == x.shape
    assert jnp.allclose(out, ref, atol=1e-2, rtol=1e-3), \
        float(jnp.max(jnp.abs(out - ref)))

    print("KERNEL_OK")
</pallas_src>

<mosaic_0001>
module attributes {stable_mosaic.version = 11 : i64} {
  func.func @_block_kernel(%arg0: i32, %arg1: memref<1x16x16x4xf32, #tpu.memory_space<vmem>>, %arg2: memref<49x4xf32, #tpu.memory_space<vmem>>, %arg3: memref<1x4xf32, #tpu.memory_space<vmem>>, %arg4: memref<1x4xf32, #tpu.memory_space<vmem>>, %arg5: memref<1x4xf32, #tpu.memory_space<vmem>>, %arg6: memref<4x16xf32, #tpu.memory_space<vmem>>, %arg7: memref<1x16xf32, #tpu.memory_space<vmem>>, %arg8: memref<16x4xf32, #tpu.memory_space<vmem>>, %arg9: memref<1x4xf32, #tpu.memory_space<vmem>>, %arg10: memref<1x16x16x4xf32, #tpu.memory_space<vmem>>, %arg11: memref<22x22x4xf32, #tpu.memory_space<vmem>>) attributes {dimension_semantics = [#tpu.dimension_semantics<parallel>], iteration_bounds = array<i64: 2>, scalar_prefetch = 0 : i64, scratch_operands = 1 : i64, tpu.core_type = #tpu.core_type<tc>, window_params = [{transform_indices = @transform_0, window_bounds = array<i64: 1, 16, 16, 4>}, {pipeline_mode = #tpu.pipeline_mode<synchronous>, transform_indices = @transform_1, window_bounds = array<i64: 49, 4>}, {pipeline_mode = #tpu.pipeline_mode<synchronous>, transform_indices = @transform_2, window_bounds = array<i64: 1, 4>}, {pipeline_mode = #tpu.pipeline_mode<synchronous>, transform_indices = @transform_3, window_bounds = array<i64: 1, 4>}, {pipeline_mode = #tpu.pipeline_mode<synchronous>, transform_indices = @transform_4, window_bounds = array<i64: 1, 4>}, {pipeline_mode = #tpu.pipeline_mode<synchronous>, transform_indices = @transform_5, window_bounds = array<i64: 4, 16>}, {pipeline_mode = #tpu.pipeline_mode<synchronous>, transform_indices = @transform_6, window_bounds = array<i64: 1, 16>}, {pipeline_mode = #tpu.pipeline_mode<synchronous>, transform_indices = @transform_7, window_bounds = array<i64: 16, 4>}, {pipeline_mode = #tpu.pipeline_mode<synchronous>, transform_indices = @transform_8, window_bounds = array<i64: 1, 4>}, {transform_indices = @transform_9, window_bounds = array<i64: 1, 16, 16, 4>}]} {
    %c0 = arith.constant 0 : index
    %c0_0 = arith.constant 0 : index
    %c0_1 = arith.constant 0 : index
    %c0_2 = arith.constant 0 : index
    %0 = vector.load %arg1[%c0, %c0_0, %c0_1, %c0_2] : memref<1x16x16x4xf32, #tpu.memory_space<vmem>>, vector<1x16x16x4xf32>
    %1 = vector.shape_cast %0 : vector<1x16x16x4xf32> to vector<16x16x4xf32>
    %cst = arith.constant 0.000000e+00 : f32
    %2 = vector.broadcast %cst : f32 to vector<22x22x4xf32>
    %c0_3 = arith.constant 0 : index
    %c0_4 = arith.constant 0 : index
    %c0_5 = arith.constant 0 : index
    %3 = vector.load %arg11[%c0_3, %c0_4, %c0_5] : memref<22x22x4xf32, #tpu.memory_space<vmem>>, vector<22x22x4xf32>
    tpu.vector_store %arg11[%c0_3, %c0_4, %c0_5], %2 {strides = array<i32>} : memref<22x22x4xf32, #tpu.memory_space<vmem>>, vector<22x22x4xf32>,
    %c3 = arith.constant 3 : index
    %c3_6 = arith.constant 3 : index
    %c0_7 = arith.constant 0 : index
    %4 = vector.load %arg11[%c3, %c3_6, %c0_7] : memref<22x22x4xf32, #tpu.memory_space<vmem>>, vector<16x16x4xf32>
    tpu.vector_store %arg11[%c3, %c3_6, %c0_7], %1 {strides = array<i32>} : memref<22x22x4xf32, #tpu.memory_space<vmem>>, vector<16x16x4xf32>,
    %c0_8 = arith.constant 0 : index
    %c0_9 = arith.constant 0 : index
    %5 = vector.load %arg2[%c0_8, %c0_9] : memref<49x4xf32, #tpu.memory_space<vmem>>, vector<49x4xf32>
    %cst_10 = arith.constant 0.000000e+00 : f32
    %6 = vector.broadcast %cst_10 : f32 to vector<16x16x4xf32>
    %7 = vector.extract_strided_slice %5 {offsets = [0, 0], sizes = [1, 4], strides = [1, 1]} : vector<49x4xf32> to vector<1x4xf32>
    %c0_11 = arith.constant 0 : index
    %c0_12 = arith.constant 0 : index
    %c0_13 = arith.constant 0 : index
    %8 = vector.load %arg11[%c0_11, %c0_12, %c0_13] : memref<22x22x4xf32, #tpu.memory_space<vmem>>, vector<16x16x4xf32>
    %9 = vector.shape_cast %7 : vector<1x4xf32> to vector<1x1x4xf32>
    %10 = vector.broadcast %9 : vector<1x1x4xf32> to vector<16x16x4xf32>
    %11 = arith.mulf %8, %10 : vector<16x16x4xf32>
    %12 = arith.addf %6, %11 : vector<16x16x4xf32>
    %13 = vector.extract_strided_slice %5 {offsets = [1, 0], sizes = [1, 4], strides = [1, 1]} : vector<49x4xf32> to vector<1x4xf32>
    %c0_14 = arith.constant 0 : index
    %c1 = arith.constant 1 : index
    %c0_15 = arith.constant 0 : index
    %14 = vector.load %arg11[%c0_14, %c1, %c0_15] : memref<22x22x4xf32, #tpu.memory_space<vmem>>, vector<16x16x4xf32>
    %15 = vector.shape_cast %13 : vector<1x4xf32> to vector<1x1x4xf32>
    %16 = vector.broadcast %15 : vector<1x1x4xf32> to vector<16x16x4xf32>
    %17 = arith.mulf %14, %16 : vector<16x16x4xf32>
    %18 = arith.addf %12, %17 : vector<16x16x4xf32>
    %19 = vector.extract_strided_slice %5 {offsets = [2, 0], sizes = [1, 4], strides = [1, 1]} : vector<49x4xf32> to vector<1x4xf32>
    %c0_16 = arith.constant 0 : index
    %c2 = arith.constant 2 : index
    %c0_17 = arith.constant 0 : index
    %20 = vector.load %arg11[%c0_16, %c2, %c0_17] : memref<22x22x4xf32, #tpu.memory_space<vmem>>, vector<16x16x4xf32>
    %21 = vector.shape_cast %19 : vector<1x4xf32> to vector<1x1x4xf32>
    %22 = vector.broadcast %21 : vector<1x1x4xf32> to vector<16x16x4xf32>
    %23 = arith.mulf %20, %22 : vector<16x16x4xf32>
    %24 = arith.addf %18, %23 : vector<16x16x4xf32>
    %25 = vector.extract_strided_slice %5 {offsets = [3, 0], sizes = [1, 4], strides = [1, 1]} : vector<49x4xf32> to vector<1x4xf32>
    %c0_18 = arith.constant 0 : index
    %c3_19 = arith.constant 3 : index
    %c0_20 = arith.constant 0 : index
    %26 = vector.load %arg11[%c0_18, %c3_19, %c0_20] : memref<22x22x4xf32, #tpu.memory_space<vmem>>, vector<16x16x4xf32>
    %27 = vector.shape_cast %25 : vector<1x4xf32> to vector<1x1x4xf32>
    %28 = vector.broadcast %27 : vector<1x1x4xf32> to vector<16x16x4xf32>
    %29 = arith.mulf %26, %28 : vector<16x16x4xf32>
    %30 = arith.addf %24, %29 : vector<16x16x4xf32>
    %31 = vector.extract_strided_slice %5 {offsets = [4, 0], sizes = [1, 4], strides = [1, 1]} : vector<49x4xf32> to vector<1x4xf32>
    %c0_21 = arith.constant 0 : index
    %c4 = arith.constant 4 : index
    %c0_22 = arith.constant 0 : index
    %32 = vector.load %arg11[%c0_21, %c4, %c0_22] : memref<22x22x4xf32, #tpu.memory_space<vmem>>, vector<16x16x4xf32>
    %33 = vector.shape_cast %31 : vector<1x4xf32> to vector<1x1x4xf32>
    %34 = vector.broadcast %33 : vector<1x1x4xf32> to vector<16x16x4xf32>
    %35 = arith.mulf %32, %34 : vector<16x16x4xf32>
    %36 = arith.addf %30, %35 : vector<16x16x4xf32>
    %37 = vector.extract_strided_slice %5 {offsets = [5, 0], sizes = [1, 4], strides = [1, 1]} : vector<49x4xf32> to vector<1x4xf32>
    %c0_23 = arith.constant 0 : index
    %c5 = arith.constant 5 : index
    %c0_24 = arith.constant 0 : index
    %38 = vector.load %arg11[%c0_23, %c5, %c0_24] : memref<22x22x4xf32, #tpu.memory_space<vmem>>, vector<16x16x4xf32>
    %39 = vector.shape_cast %37 : vector<1x4xf32> to vector<1x1x4xf32>
    %40 = vector.broadcast %39 : vector<1x1x4xf32> to vector<16x16x4xf32>
    %41 = arith.mulf %38, %40 : vector<16x16x4xf32>
    %42 = arith.addf %36, %41 : vector<16x16x4xf32>
    %43 = vector.extract_strided_slice %5 {offsets = [6, 0], sizes = [1, 4], strides = [1, 1]} : vector<49x4xf32> to vector<1x4xf32>
    %c0_25 = arith.constant 0 : index
    %c6 = arith.constant 6 : index
    %c0_26 = arith.constant 0 : index
    %44 = vector.load %arg11[%c0_25, %c6, %c0_26] : memref<22x22x4xf32, #tpu.memory_space<vmem>>, vector<16x16x4xf32>
    %45 = vector.shape_cast %43 : vector<1x4xf32> to vector<1x1x4xf32>
    %46 = vector.broadcast %45 : vector<1x1x4xf32> to vector<16x16x4xf32>
    %47 = arith.mulf %44, %46 : vector<16x16x4xf32>
    %48 = arith.addf %42, %47 : vector<16x16x4xf32>
    %49 = vector.extract_strided_slice %5 {offsets = [7, 0], sizes = [1, 4], strides = [1, 1]} : vector<49x4xf32> to vector<1x4xf32>
    %c1_27 = arith.constant 1 : index
    %c0_28 = arith.constant 0 : index
    %c0_29 = arith.constant 0 : index
    %50 = vector.load %arg11[%c1_27, %c0_28, %c0_29] : memref<22x22x4xf32, #tpu.memory_space<vmem>>, vector<16x16x4xf32>
    %51 = vector.shape_cast %49 : vector<1x4xf32> to vector<1x1x4xf32>
    %52 = vector.broadcast %51 : vector<1x1x4xf32> to vector<16x16x4xf32>
    %53 = arith.mulf %50, %52 : vector<16x16x4xf32>
    %54 = arith.addf %48, %53 : vector<16x16x4xf32>
    %55 = vector.extract_strided_slice %5 {offsets = [8, 0], sizes = [1, 4], strides = [1, 1]} : vector<49x4xf32> to vector<1x4xf32>
    %c1_30 = arith.constant 1 : index
    %c1_31 = arith.constant 1 : index
    %c0_32 = arith.constant 0 : index
    %56 = vector.load %arg11[%c1_30, %c1_31, %c0_32] : memref<22x22x4xf32, #tpu.memory_space<vmem>>, vector<16x16x4xf32>
    %57 = vector.shape_cast %55 : vector<1x4xf32> to vector<1x1x4xf32>
    %58 = vector.broadcast %57 : vector<1x1x4xf32> to vector<16x16x4xf32>
    %59 = arith.mulf %56, %58 : vector<16x16x4xf32>
    %60 = arith.addf %54, %59 : vector<16x16x4xf32>
    %61 = vector.extract_strided_slice %5 {offsets = [9, 0], sizes = [1, 4], strides = [1, 1]} : vector<49x4xf32> to vector<1x4xf32>
    %c1_33 = arith.constant 1 : index
    %c2_34 = arith.constant 2 : index
    %c0_35 = arith.constant 0 : index
    %62 = vector.load %arg11[%c1_33, %c2_34, %c0_35] : memref<22x22x4xf32, #tpu.memory_space<vmem>>, vector<16x16x4xf32>
    %63 = vector.shape_cast %61 : vector<1x4xf32> to vector<1x1x4xf32>
    %64 = vector.broadcast %63 : vector<1x1x4xf32> to vector<16x16x4xf32>
    %65 = arith.mulf %62, %64 : vector<16x16x4xf32>
    %66 = arith.addf %60, %65 : vector<16x16x4xf32>
    %67 = vector.extract_strided_slice %5 {offsets = [10, 0], sizes = [1, 4], strides = [1, 1]} : vector<49x4xf32> to vector<1x4xf32>
    %c1_36 = arith.constant 1 : index
    %c3_37 = arith.constant 3 : index
    %c0_38 = arith.constant 0 : index
    %68 = vector.load %arg11[%c1_36, %c3_37, %c0_38] : memref<22x22x4xf32, #tpu.memory_space<vmem>>, vector<16x16x4xf32>
    %69 = vector.shape_cast %67 : vector<1x4xf32> to vector<1x1x4xf32>
    %70 = vector.broadcast %69 : vector<1x1x4xf32> to vector<16x16x4xf32>
    %71 = arith.mulf %68, %70 : vector<16x16x4xf32>
    %72 = arith.addf %66, %71 : vector<16x16x4xf32>
    %73 = vector.extract_strided_slice %5 {offsets = [11, 0], sizes = [1, 4], strides = [1, 1]} : vector<49x4xf32> to vector<1x4xf32>
    %c1_39 = arith.constant 1 : index
    %c4_40 = arith.constant 4 : index
    %c0_41 = arith.constant 0 : index
    %74 = vector.load %arg11[%c1_39, %c4_40, %c0_41] : memref<22x22x4xf32, #tpu.memory_space<vmem>>, vector<16x16x4xf32>
    %75 = vector.shape_cast %73 : vector<1x4xf32> to vector<1x1x4xf32>
    %76 = vector.broadcast %75 : vector<1x1x4xf32> to vector<16x16x4xf32>
    %77 = arith.mulf %74, %76 : vector<16x16x4xf32>
    %78 = arith.addf %72, %77 : vector<16x16x4xf32>
    %79 = vector.extract_strided_slice %5 {offsets = [12, 0], sizes = [1, 4], strides = [1, 1]} : vector<49x4xf32> to vector<1x4xf32>
    %c1_42 = arith.constant 1 : index
    %c5_43 = arith.constant 5 : index
    %c0_44 = arith.constant 0 : index
    %80 = vector.load %arg11[%c1_42, %c5_43, %c0_44] : memref<22x22x4xf32, #tpu.memory_space<vmem>>, vector<16x16x4xf32>
    %81 = vector.shape_cast %79 : vector<1x4xf32> to vector<1x1x4xf32>
    %82 = vector.broadcast %81 : vector<1x1x4xf32> to vector<16x16x4xf32>
    %83 = arith.mulf %80, %82 : vector<16x16x4xf32>
    %84 = arith.addf %78, %83 : vector<16x16x4xf32>
    %85 = vector.extract_strided_slice %5 {offsets = [13, 0], sizes = [1, 4], strides = [1, 1]} : vector<49x4xf32> to vector<1x4xf32>
    %c1_45 = arith.constant 1 : index
    %c6_46 = arith.constant 6 : index
    %c0_47 = arith.constant 0 : index
    %86 = vector.load %arg11[%c1_45, %c6_46, %c0_47] : memref<22x22x4xf32, #tpu.memory_space<vmem>>, vector<16x16x4xf32>
    %87 = vector.shape_cast %85 : vector<1x4xf32> to vector<1x1x4xf32>
    %88 = vector.broadcast %87 : vector<1x1x4xf32> to vector<16x16x4xf32>
    %89 = arith.mulf %86, %88 : vector<16x16x4xf32>
    %90 = arith.addf %84, %89 : vector<16x16x4xf32>
    %91 = vector.extract_strided_slice %5 {offsets = [14, 0], sizes = [1, 4], strides = [1, 1]} : vector<49x4xf32> to vector<1x4xf32>
    %c2_48 = arith.constant 2 : index
    %c0_49 = arith.constant 0 : index
    %c0_50 = arith.constant 0 : index
    %92 = vector.load %arg11[%c2_48, %c0_49, %c0_50] : memref<22x22x4xf32, #tpu.memory_space<vmem>>, vector<16x16x4xf32>
    %93 = vector.shape_cast %91 : vector<1x4xf32> to vector<1x1x4xf32>
    %94 = vector.broadcast %93 : vector<1x1x4xf32> to vector<16x16x4xf32>
    %95 = arith.mulf %92, %94 : vector<16x16x4xf32>
    %96 = arith.addf %90, %95 : vector<16x16x4xf32>
    %97 = vector.extract_strided_slice %5 {offsets = [15, 0], sizes = [1, 4], strides = [1, 1]} : vector<49x4xf32> to vector<1x4xf32>
    %c2_51 = arith.constant 2 : index
    %c1_52 = arith.constant 1 : index
    %c0_53 = arith.constant 0 : index
    %98 = vector.load %arg11[%c2_51, %c1_52, %c0_53] : memref<22x22x4xf32, #tpu.memory_space<vmem>>, vector<16x16x4xf32>
    %99 = vector.shape_cast %97 : vector<1x4xf32> to vector<1x1x4xf32>
    %100 = vector.broadcast %99 : vector<1x1x4xf32> to vector<16x16x4xf32>
    %101 = arith.mulf %98, %100 : vector<16x16x4xf32>
    %102 = arith.addf %96, %101 : vector<16x16x4xf32>
    %103 = vector.extract_strided_slice %5 {offsets = [16, 0], sizes = [1, 4], strides = [1, 1]} : vector<49x4xf32> to vector<1x4xf32>
    %c2_54 = arith.constant 2 : index
    %c2_55 = arith.constant 2 : index
    %c0_56 = arith.constant 0 : index
    %104 = vector.load %arg11[%c2_54, %c2_55, %c0_56] : memref<22x22x4xf32, #tpu.memory_space<vmem>>, vector<16x16x4xf32>
    %105 = vector.shape_cast %103 : vector<1x4xf32> to vector<1x1x4xf32>
    %106 = vector.broadcast %105 : vector<1x1x4xf32> to vector<16x16x4xf32>
    %107 = arith.mulf %104, %106 : vector<16x16x4xf32>
    %108 = arith.addf %102, %107 : vector<16x16x4xf32>
    %109 = vector.extract_strided_slice %5 {offsets = [17, 0], sizes = [1, 4], strides = [1, 1]} : vector<49x4xf32> to vector<1x4xf32>
    %c2_57 = arith.constant 2 : index
    %c3_58 = arith.constant 3 : index
    %c0_59 = arith.constant 0 : index
    %110 = vector.load %arg11[%c2_57, %c3_58, %c0_59] : memref<22x22x4xf32, #tpu.memory_space<vmem>>, vector<16x16x4xf32>
    %111 = vector.shape_cast %109 : vector<1x4xf32> to vector<1x1x4xf32>
    %112 = vector.broadcast %111 : vector<1x1x4xf32> to vector<16x16x4xf32>
    %113 = arith.mulf %110, %112 : vector<16x16x4xf32>
    %114 = arith.addf %108, %113 : vector<16x16x4xf32>
    %115 = vector.extract_strided_slice %5 {offsets = [18, 0], sizes = [1, 4], strides = [1, 1]} : vector<49x4xf32> to vector<1x4xf32>
    %c2_60 = arith.constant 2 : index
    %c4_61 = arith.constant 4 : index
    %c0_62 = arith.constant 0 : index
    %116 = vector.load %arg11[%c2_60, %c4_61, %c0_62] : memref<22x22x4xf32, #tpu.memory_space<vmem>>, vector<16x16x4xf32>
    %117 = vector.shape_cast %115 : vector<1x4xf32> to vector<1x1x4xf32>
    %118 = vector.broadcast %117 : vector<1x1x4xf32> to vector<16x16x4xf32>
    %119 = arith.mulf %116, %118 : vector<16x16x4xf32>
    %120 = arith.addf %114, %119 : vector<16x16x4xf32>
    %121 = vector.extract_strided_slice %5 {offsets = [19, 0], sizes = [1, 4], strides = [1, 1]} : vector<49x4xf32> to vector<1x4xf32>
    %c2_63 = arith.constant 2 : index
    %c5_64 = arith.constant 5 : index
    %c0_65 = arith.constant 0 : index
    %122 = vector.load %arg11[%c2_63, %c5_64, %c0_65] : memref<22x22x4xf32, #tpu.memory_space<vmem>>, vector<16x16x4xf32>
    %123 = vector.shape_cast %121 : vector<1x4xf32> to vector<1x1x4xf32>
    %124 = vector.broadcast %123 : vector<1x1x4xf32> to vector<16x16x4xf32>
    %125 = arith.mulf %122, %124 : vector<16x16x4xf32>
    %126 = arith.addf %120, %125 : vector<16x16x4xf32>
    %127 = vector.extract_strided_slice %5 {offsets = [20, 0], sizes = [1, 4], strides = [1, 1]} : vector<49x4xf32> to vector<1x4xf32>
    %c2_66 = arith.constant 2 : index
    %c6_67 = arith.constant 6 : index
    %c0_68 = arith.constant 0 : index
    %128 = vector.load %arg11[%c2_66, %c6_67, %c0_68] : memref<22x22x4xf32, #tpu.memory_space<vmem>>, vector<16x16x4xf32>
    %129 = vector.shape_cast %127 : vector<1x4xf32> to vector<1x1x4xf32>
    %130 = vector.broadcast %129 : vector<1x1x4xf32> to vector<16x16x4xf32>
    %131 = arith.mulf %128, %130 : vector<16x16x4xf32>
    %132 = arith.addf %126, %131 : vector<16x16x4xf32>
    %133 = vector.extract_strided_slice %5 {offsets = [21, 0], sizes = [1, 4], strides = [1, 1]} : vector<49x4xf32> to vector<1x4xf32>
    %c3_69 = arith.constant 3 : index
    %c0_70 = arith.constant 0 : index
    %c0_71 = arith.constant 0 : index
    %134 = vector.load %arg11[%c3_69, %c0_70, %c0_71] : memref<22x22x4xf32, #tpu.memory_space<vmem>>, vector<16x16x4xf32>
    %135 = vector.shape_cast %133 : vector<1x4xf32> to vector<1x1x4xf32>
    %136 = vector.broadcast %135 : vector<1x1x4xf32> to vector<16x16x4xf32>
    %137 = arith.mulf %134, %136 : vector<16x16x4xf32>
    %138 = arith.addf %132, %137 : vector<16x16x4xf32>
    %139 = vector.extract_strided_slice %5 {offsets = [22, 0], sizes = [1, 4], strides = [1, 1]} : vector<49x4xf32> to vector<1x4xf32>
    %c3_72 = arith.constant 3 : index
    %c1_73 = arith.constant 1 : index
    %c0_74 = arith.constant 0 : index
    %140 = vector.load %arg11[%c3_72, %c1_73, %c0_74] : memref<22x22x4xf32, #tpu.memory_space<vmem>>, vector<16x16x4xf32>
    %141 = vector.shape_cast %139 : vector<1x4xf32> to vector<1x1x4xf32>
    %142 = vector.broadcast %141 : vector<1x1x4xf32> to vector<16x16x4xf32>
    %143 = arith.mulf %140, %142 : vector<16x16x4xf32>
    %144 = arith.addf %138, %143 : vector<16x16x4xf32>
    %145 = vector.extract_strided_slice %5 {offsets = [23, 0], sizes = [1, 4], strides = [1, 1]} : vector<49x4xf32> to vector<1x4xf32>
    %c3_75 = arith.constant 3 : index
    %c2_76 = arith.constant 2 : index
    %c0_77 = arith.constant 0 : index
    %146 = vector.load %arg11[%c3_75, %c2_76, %c0_77] : memref<22x22x4xf32, #tpu.memory_space<vmem>>, vector<16x16x4xf32>
    %147 = vector.shape_cast %145 : vector<1x4xf32> to vector<1x1x4xf32>
    %148 = vector.broadcast %147 : vector<1x1x4xf32> to vector<16x16x4xf32>
    %149 = arith.mulf %146, %148 : vector<16x16x4xf32>
    %150 = arith.addf %144, %149 : vector<16x16x4xf32>
    %151 = vector.extract_strided_slice %5 {offsets = [24, 0], sizes = [1, 4], strides = [1, 1]} : vector<49x4xf32> to vector<1x4xf32>
    %c3_78 = arith.constant 3 : index
    %c3_79 = arith.constant 3 : index
    %c0_80 = arith.constant 0 : index
    %152 = vector.load %arg11[%c3_78, %c3_79, %c0_80] : memref<22x22x4xf32, #tpu.memory_space<vmem>>, vector<16x16x4xf32>
    %153 = vector.shape_cast %151 : vector<1x4xf32> to vector<1x1x4xf32>
    %154 = vector.broadcast %153 : vector<1x1x4xf32> to vector<16x16x4xf32>
    %155 = arith.mulf %152, %154 : vector<16x16x4xf32>
    %156 = arith.addf %150, %155 : vector<16x16x4xf32>
    %157 = vector.extract_strided_slice %5 {offsets = [25, 0], sizes = [1, 4], strides = [1, 1]} : vector<49x4xf32> to vector<1x4xf32>
    %c3_81 = arith.constant 3 : index
    %c4_82 = arith.constant 4 : index
    %c0_83 = arith.constant 0 : index
    %158 = vector.load %arg11[%c3_81, %c4_82, %c0_83] : memref<22x22x4xf32, #tpu.memory_space<vmem>>, vector<16x16x4xf32>
    %159 = vector.shape_cast %157 : vector<1x4xf32> to vector<1x1x4xf32>
    %160 = vector.broadcast %159 : vector<1x1x4xf32> to vector<16x16x4xf32>
    %161 = arith.mulf %158, %160 : vector<16x16x4xf32>
    %162 = arith.addf %156, %161 : vector<16x16x4xf32>
    %163 = vector.extract_strided_slice %5 {offsets = [26, 0], sizes = [1, 4], strides = [1, 1]} : vector<49x4xf32> to vector<1x4xf32>
    %c3_84 = arith.constant 3 : index
    %c5_85 = arith.constant 5 : index
    %c0_86 = arith.constant 0 : index
    %164 = vector.load %arg11[%c3_84, %c5_85, %c0_86] : memref<22x22x4xf32, #tpu.memory_space<vmem>>, vector<16x16x4xf32>
    %165 = vector.shape_cast %163 : vector<1x4xf32> to vector<1x1x4xf32>
    %166 = vector.broadcast %165 : vector<1x1x4xf32> to vector<16x16x4xf32>
    %167 = arith.mulf %164, %166 : vector<16x16x4xf32>
    %168 = arith.addf %162, %167 : vector<16x16x4xf32>
    %169 = vector.extract_strided_slice %5 {offsets = [27, 0], sizes = [1, 4], strides = [1, 1]} : vector<49x4xf32> to vector<1x4xf32>
    %c3_87 = arith.constant 3 : index
    %c6_88 = arith.constant 6 : index
    %c0_89 = arith.constant 0 : index
    %170 = vector.load %arg11[%c3_87, %c6_88, %c0_89] : memref<22x22x4xf32, #tpu.memory_space<vmem>>, vector<16x16x4xf32>
    %171 = vector.shape_cast %169 : vector<1x4xf32> to vector<1x1x4xf32>
    %172 = vector.broadcast %171 : vector<1x1x4xf32> to vector<16x16x4xf32>
    %173 = arith.mulf %170, %172 : vector<16x16x4xf32>
    %174 = arith.addf %168, %173 : vector<16x16x4xf32>
    %175 = vector.extract_strided_slice %5 {offsets = [28, 0], sizes = [1, 4], strides = [1, 1]} : vector<49x4xf32> to vector<1x4xf32>
    %c4_90 = arith.constant 4 : index
    %c0_91 = arith.constant 0 : index
    %c0_92 = arith.constant 0 : index
    %176 = vector.load %arg11[%c4_90, %c0_91, %c0_92] : memref<22x22x4xf32, #tpu.memory_space<vmem>>, vector<16x16x4xf32>
    %177 = vector.shape_cast %175 : vector<1x4xf32> to vector<1x1x4xf32>
    %178 = vector.broadcast %177 : vector<1x1x4xf32> to vector<16x16x4xf32>
    %179 = arith.mulf %176, %178 : vector<16x16x4xf32>
    %180 = arith.addf %174, %179 : vector<16x16x4xf32>
    %181 = vector.extract_strided_slice %5 {offsets = [29, 0], sizes = [1, 4], strides = [1, 1]} : vector<49x4xf32> to vector<1x4xf32>
    %c4_93 = arith.constant 4 : index
    %c1_94 = arith.constant 1 : index
    %c0_95 = arith.constant 0 : index
    %182 = vector.load %arg11[%c4_93, %c1_94, %c0_95] : memref<22x22x4xf32, #tpu.memory_space<vmem>>, vector<16x16x4xf32>
    %183 = vector.shape_cast %181 : vector<1x4xf32> to vector<1x1x4xf32>
    %184 = vector.broadcast %183 : vector<1x1x4xf32> to vector<16x16x4xf32>
    %185 = arith.mulf %182, %184 : vector<16x16x4xf32>
    %186 = arith.addf %180, %185 : vector<16x16x4xf32>
    %187 = vector.extract_strided_slice %5 {offsets = [30, 0], sizes = [1, 4], strides = [1, 1]} : vector<49x4xf32> to vector<1x4xf32>
    %c4_96 = arith.constant 4 : index
    %c2_97 = arith.constant 2 : index
    %c0_98 = arith.constant 0 : index
    %188 = vector.load %arg11[%c4_96, %c2_97, %c0_98] : memref<22x22x4xf32, #tpu.memory_space<vmem>>, vector<16x16x4xf32>
    %189 = vector.shape_cast %187 : vector<1x4xf32> to vector<1x1x4xf32>
    %190 = vector.broadcast %189 : vector<1x1x4xf32> to vector<16x16x4xf32>
    %191 = arith.mulf %188, %190 : vector<16x16x4xf32>
    %192 = arith.addf %186, %191 : vector<16x16x4xf32>
    %193 = vector.extract_strided_slice %5 {offsets = [31, 0], sizes = [1, 4], strides = [1, 1]} : vector<49x4xf32> to vector<1x4xf32>
    %c4_99 = arith.constant 4 : index
    %c3_100 = arith.constant 3 : index
    %c0_101 = arith.constant 0 : index
    %194 = vector.load %arg11[%c4_99, %c3_100, %c0_101] : memref<22x22x4xf32, #tpu.memory_space<vmem>>, vector<16x16x4xf32>
    %195 = vector.shape_cast %193 : vector<1x4xf32> to vector<1x1x4xf32>
    %196 = vector.broadcast %195 : vector<1x1x4xf32> to vector<16x16x4xf32>
    %197 = arith.mulf %194, %196 : vector<16x16x4xf32>
    %198 = arith.addf %192, %197 : vector<16x16x4xf32>
    %199 = vector.extract_strided_slice %5 {offsets = [32, 0], sizes = [1, 4], strides = [1, 1]} : vector<49x4xf32> to vector<1x4xf32>
    %c4_102 = arith.constant 4 : index
    %c4_103 = arith.constant 4 : index
    %c0_104 = arith.constant 0 : index
    %200 = vector.load %arg11[%c4_102, %c4_103, %c0_104] : memref<22x22x4xf32, #tpu.memory_space<vmem>>, vector<16x16x4xf32>
    %201 = vector.shape_cast %199 : vector<1x4xf32> to vector<1x1x4xf32>
    %202 = vector.broadcast %201 : vector<1x1x4xf32> to vector<16x16x4xf32>
    %203 = arith.mulf %200, %202 : vector<16x16x4xf32>
    %204 = arith.addf %198, %203 : vector<16x16x4xf32>
    %205 = vector.extract_strided_slice %5 {offsets = [33, 0], sizes = [1, 4], strides = [1, 1]} : vector<49x4xf32> to vector<1x4xf32>
    %c4_105 = arith.constant 4 : index
    %c5_106 = arith.constant 5 : index
    %c0_107 = arith.constant 0 : index
    %206 = vector.load %arg11[%c4_105, %c5_106, %c0_107] : memref<22x22x4xf32, #tpu.memory_space<vmem>>, vector<16x16x4xf32>
    %207 = vector.shape_cast %205 : vector<1x4xf32> to vector<1x1x4xf32>
    %208 = vector.broadcast %207 : vector<1x1x4xf32> to vector<16x16x4xf32>
    %209 = arith.mulf %206, %208 : vector<16x16x4xf32>
    %210 = arith.addf %204, %209 : vector<16x16x4xf32>
    %211 = vector.extract_strided_slice %5 {offsets = [34, 0], sizes = [1, 4], strides = [1, 1]} : vector<49x4xf32> to vector<1x4xf32>
    %c4_108 = arith.constant 4 : index
    %c6_109 = arith.constant 6 : index
    %c0_110 = arith.constant 0 : index
    %212 = vector.load %arg11[%c4_108, %c6_109, %c0_110] : memref<22x22x4xf32, #tpu.memory_space<vmem>>, vector<16x16x4xf32>
    %213 = vector.shape_cast %211 : vector<1x4xf32> to vector<1x1x4xf32>
    %214 = vector.broadcast %213 : vector<1x1x4xf32> to vector<16x16x4xf32>
    %215 = arith.mulf %212, %214 : vector<16x16x4xf32>
    %216 = arith.addf %210, %215 : vector<16x16x4xf32>
    %217 = vector.extract_strided_slice %5 {offsets = [35, 0], sizes = [1, 4], strides = [1, 1]} : vector<49x4xf32> to vector<1x4xf32>
    %c5_111 = arith.constant 5 : index
    %c0_112 = arith.constant 0 : index
    %c0_113 = arith.constant 0 : index
    %218 = vector.load %arg11[%c5_111, %c0_112, %c0_113] : memref<22x22x4xf32, #tpu.memory_space<vmem>>, vector<16x16x4xf32>
    %219 = vector.shape_cast %217 : vector<1x4xf32> to vector<1x1x4xf32>
    %220 = vector.broadcast %219 : vector<1x1x4xf32> to vector<16x16x4xf32>
    %221 = arith.mulf %218, %220 : vector<16x16x4xf32>
    %222 = arith.addf %216, %221 : vector<16x16x4xf32>
    %223 = vector.extract_strided_slice %5 {offsets = [36, 0], sizes = [1, 4], strides = [1, 1]} : vector<49x4xf32> to vector<1x4xf32>
    %c5_114 = arith.constant 5 : index
    %c1_115 = arith.constant 1 : index
    %c0_116 = arith.constant 0 : index
    %224 = vector.load %arg11[%c5_114, %c1_115, %c0_116] : memref<22x22x4xf32, #tpu.memory_space<vmem>>, vector<16x16x4xf32>
    %225 = vector.shape_cast %223 : vector<1x4xf32> to vector<1x1x4xf32>
    %226 = vector.broadcast %225 : vector<1x1x4xf32> to vector<16x16x4xf32>
    %227 = arith.mulf %224, %226 : vector<16x16x4xf32>
    %228 = arith.addf %222, %227 : vector<16x16x4xf32>
    %229 = vector.extract_strided_slice %5 {offsets = [37, 0], sizes = [1, 4], strides = [1, 1]} : vector<49x4xf32> to vector<1x4xf32>
    %c5_117 = arith.constant 5 : index
    %c2_118 = arith.constant 2 : index
    %c0_119 = arith.constant 0 : index
    %230 = vector.load %arg11[%c5_117, %c2_118, %c0_119] : memref<22x22x4xf32, #tpu.memory_space<vmem>>, vector<16x16x4xf32>
    %231 = vector.shape_cast %229 : vector<1x4xf32> to vector<1x1x4xf32>
    %232 = vector.broadcast %231 : vector<1x1x4xf32> to vector<16x16x4xf32>
    %233 = arith.mulf %230, %232 : vector<16x16x4xf32>
    %234 = arith.addf %228, %233 : vector<16x16x4xf32>
    %235 = vector.extract_strided_slice %5 {offsets = [38, 0], sizes = [1, 4], strides = [1, 1]} : vector<49x4xf32> to vector<1x4xf32>
    %c5_120 = arith.constant 5 : index
    %c3_121 = arith.constant 3 : index
    %c0_122 = arith.constant 0 : index
    %236 = vector.load %arg11[%c5_120, %c3_121, %c0_122] : memref<22x22x4xf32, #tpu.memory_space<vmem>>, vector<16x16x4xf32>
    %237 = vector.shape_cast %235 : vector<1x4xf32> to vector<1x1x4xf32>
    %238 = vector.broadcast %237 : vector<1x1x4xf32> to vector<16x16x4xf32>
    %239 = arith.mulf %236, %238 : vector<16x16x4xf32>
    %240 = arith.addf %234, %239 : vector<16x16x4xf32>
    %241 = vector.extract_strided_slice %5 {offsets = [39, 0], sizes = [1, 4], strides = [1, 1]} : vector<49x4xf32> to vector<1x4xf32>
    %c5_123 = arith.constant 5 : index
    %c4_124 = arith.constant 4 : index
    %c0_125 = arith.constant 0 : index
    %242 = vector.load %arg11[%c5_123, %c4_124, %c0_125] : memref<22x22x4xf32, #tpu.memory_space<vmem>>, vector<16x16x4xf32>
    %243 = vector.shape_cast %241 : vector<1x4xf32> to vector<1x1x4xf32>
    %244 = vector.broadcast %243 : vector<1x1x4xf32> to vector<16x16x4xf32>
    %245 = arith.mulf %242, %244 : vector<16x16x4xf32>
    %246 = arith.addf %240, %245 : vector<16x16x4xf32>
    %247 = vector.extract_strided_slice %5 {offsets = [40, 0], sizes = [1, 4], strides = [1, 1]} : vector<49x4xf32> to vector<1x4xf32>
    %c5_126 = arith.constant 5 : index
    %c5_127 = arith.constant 5 : index
    %c0_128 = arith.constant 0 : index
    %248 = vector.load %arg11[%c5_126, %c5_127, %c0_128] : memref<22x22x4xf32, #tpu.memory_space<vmem>>, vector<16x16x4xf32>
    %249 = vector.shape_cast %247 : vector<1x4xf32> to vector<1x1x4xf32>
    %250 = vector.broadcast %249 : vector<1x1x4xf32> to vector<16x16x4xf32>
    %251 = arith.mulf %248, %250 : vector<16x16x4xf32>
    %252 = arith.addf %246, %251 : vector<16x16x4xf32>
    %253 = vector.extract_strided_slice %5 {offsets = [41, 0], sizes = [1, 4], strides = [1, 1]} : vector<49x4xf32> to vector<1x4xf32>
    %c5_129 = arith.constant 5 : index
    %c6_130 = arith.constant 6 : index
    %c0_131 = arith.constant 0 : index
    %254 = vector.load %arg11[%c5_129, %c6_130, %c0_131] : memref<22x22x4xf32, #tpu.memory_space<vmem>>, vector<16x16x4xf32>
    %255 = vector.shape_cast %253 : vector<1x4xf32> to vector<1x1x4xf32>
    %256 = vector.broadcast %255 : vector<1x1x4xf32> to vector<16x16x4xf32>
    %257 = arith.mulf %254, %256 : vector<16x16x4xf32>
    %258 = arith.addf %252, %257 : vector<16x16x4xf32>
    %259 = vector.extract_strided_slice %5 {offsets = [42, 0], sizes = [1, 4], strides = [1, 1]} : vector<49x4xf32> to vector<1x4xf32>
    %c6_132 = arith.constant 6 : index
    %c0_133 = arith.constant 0 : index
    %c0_134 = arith.constant 0 : index
    %260 = vector.load %arg11[%c6_132, %c0_133, %c0_134] : memref<22x22x4xf32, #tpu.memory_space<vmem>>, vector<16x16x4xf32>
    %261 = vector.shape_cast %259 : vector<1x4xf32> to vector<1x1x4xf32>
    %262 = vector.broadcast %261 : vector<1x1x4xf32> to vector<16x16x4xf32>
    %263 = arith.mulf %260, %262 : vector<16x16x4xf32>
    %264 = arith.addf %258, %263 : vector<16x16x4xf32>
    %265 = vector.extract_strided_slice %5 {offsets = [43, 0], sizes = [1, 4], strides = [1, 1]} : vector<49x4xf32> to vector<1x4xf32>
    %c6_135 = arith.constant 6 : index
    %c1_136 = arith.constant 1 : index
    %c0_137 = arith.constant 0 : index
    %266 = vector.load %arg11[%c6_135, %c1_136, %c0_137] : memref<22x22x4xf32, #tpu.memory_space<vmem>>, vector<16x16x4xf32>
    %267 = vector.shape_cast %265 : vector<1x4xf32> to vector<1x1x4xf32>
    %268 = vector.broadcast %267 : vector<1x1x4xf32> to vector<16x16x4xf32>
    %269 = arith.mulf %266, %268 : vector<16x16x4xf32>
    %270 = arith.addf %264, %269 : vector<16x16x4xf32>
    %271 = vector.extract_strided_slice %5 {offsets = [44, 0], sizes = [1, 4], strides = [1, 1]} : vector<49x4xf32> to vector<1x4xf32>
    %c6_138 = arith.constant 6 : index
    %c2_139 = arith.constant 2 : index
    %c0_140 = arith.constant 0 : index
    %272 = vector.load %arg11[%c6_138, %c2_139, %c0_140] : memref<22x22x4xf32, #tpu.memory_space<vmem>>, vector<16x16x4xf32>
    %273 = vector.shape_cast %271 : vector<1x4xf32> to vector<1x1x4xf32>
    %274 = vector.broadcast %273 : vector<1x1x4xf32> to vector<16x16x4xf32>
    %275 = arith.mulf %272, %274 : vector<16x16x4xf32>
    %276 = arith.addf %270, %275 : vector<16x16x4xf32>
    %277 = vector.extract_strided_slice %5 {offsets = [45, 0], sizes = [1, 4], strides = [1, 1]} : vector<49x4xf32> to vector<1x4xf32>
    %c6_141 = arith.constant 6 : index
    %c3_142 = arith.constant 3 : index
    %c0_143 = arith.constant 0 : index
    %278 = vector.load %arg11[%c6_141, %c3_142, %c0_143] : memref<22x22x4xf32, #tpu.memory_space<vmem>>, vector<16x16x4xf32>
    %279 = vector.shape_cast %277 : vector<1x4xf32> to vector<1x1x4xf32>
    %280 = vector.broadcast %279 : vector<1x1x4xf32> to vector<16x16x4xf32>
    %281 = arith.mulf %278, %280 : vector<16x16x4xf32>
    %282 = arith.addf %276, %281 : vector<16x16x4xf32>
    %283 = vector.extract_strided_slice %5 {offsets = [46, 0], sizes = [1, 4], strides = [1, 1]} : vector<49x4xf32> to vector<1x4xf32>
    %c6_144 = arith.constant 6 : index
    %c4_145 = arith.constant 4 : index
    %c0_146 = arith.constant 0 : index
    %284 = vector.load %arg11[%c6_144, %c4_145, %c0_146] : memref<22x22x4xf32, #tpu.memory_space<vmem>>, vector<16x16x4xf32>
    %285 = vector.shape_cast %283 : vector<1x4xf32> to vector<1x1x4xf32>
    %286 = vector.broadcast %285 : vector<1x1x4xf32> to vector<16x16x4xf32>
    %287 = arith.mulf %284, %286 : vector<16x16x4xf32>
    %288 = arith.addf %282, %287 : vector<16x16x4xf32>
    %289 = vector.extract_strided_slice %5 {offsets = [47, 0], sizes = [1, 4], strides = [1, 1]} : vector<49x4xf32> to vector<1x4xf32>
    %c6_147 = arith.constant 6 : index
    %c5_148 = arith.constant 5 : index
    %c0_149 = arith.constant 0 : index
    %290 = vector.load %arg11[%c6_147, %c5_148, %c0_149] : memref<22x22x4xf32, #tpu.memory_space<vmem>>, vector<16x16x4xf32>
    %291 = vector.shape_cast %289 : vector<1x4xf32> to vector<1x1x4xf32>
    %292 = vector.broadcast %291 : vector<1x1x4xf32> to vector<16x16x4xf32>
    %293 = arith.mulf %290, %292 : vector<16x16x4xf32>
    %294 = arith.addf %288, %293 : vector<16x16x4xf32>
    %295 = vector.extract_strided_slice %5 {offsets = [48, 0], sizes = [1, 4], strides = [1, 1]} : vector<49x4xf32> to vector<1x4xf32>
    %c6_150 = arith.constant 6 : index
    %c6_151 = arith.constant 6 : index
    %c0_152 = arith.constant 0 : index
    %296 = vector.load %arg11[%c6_150, %c6_151, %c0_152] : memref<22x22x4xf32, #tpu.memory_space<vmem>>, vector<16x16x4xf32>
    %297 = vector.shape_cast %295 : vector<1x4xf32> to vector<1x1x4xf32>
    %298 = vector.broadcast %297 : vector<1x1x4xf32> to vector<16x16x4xf32>
    %299 = arith.mulf %296, %298 : vector<16x16x4xf32>
    %300 = arith.addf %294, %299 : vector<16x16x4xf32>
    %c0_153 = arith.constant 0 : index
    %c0_154 = arith.constant 0 : index
    %301 = vector.load %arg3[%c0_153, %c0_154] : memref<1x4xf32, #tpu.memory_space<vmem>>, vector<1x4xf32>
    %302 = vector.shape_cast %301 : vector<1x4xf32> to vector<1x1x4xf32>
    %303 = vector.broadcast %302 : vector<1x1x4xf32> to vector<16x16x4xf32>
    %304 = arith.addf %300, %303 : vector<16x16x4xf32>
    %305 = vector.shape_cast %304 : vector<16x16x4xf32> to vector<256x4xf32>
    %cst_155 = arith.constant dense<0.000000e+00> : vector<256xf32>
    %306 = vector.multi_reduction <add>, %305, %cst_155 [1] : vector<256x4xf32> to vector<256xf32>
    %307 = vector.shape_cast %306 : vector<256xf32> to vector<256x1xf32>
    %cst_156 = arith.constant 4.000000e+00 : f32
    %308 = vector.broadcast %cst_156 : f32 to vector<256x1xf32>
    %309 = arith.divf %307, %308 : vector<256x1xf32>
    %310 = vector.broadcast %309 : vector<256x1xf32> to vector<256x4xf32>
    %311 = arith.subf %305, %310 : vector<256x4xf32>
    %312 = arith.mulf %311, %311 : vector<256x4xf32>
    %cst_157 = arith.constant dense<0.000000e+00> : vector<256xf32>
    %313 = vector.multi_reduction <add>, %312, %cst_157 [1] : vector<256x4xf32> to vector<256xf32>
    %314 = vector.shape_cast %313 : vector<256xf32> to vector<256x1xf32>
    %cst_158 = arith.constant 4.000000e+00 : f32
    %315 = vector.broadcast %cst_158 : f32 to vector<256x1xf32>
    %316 = arith.divf %314, %315 : vector<256x1xf32>
    %cst_159 = arith.constant 9.99999997E-7 : f32
    %317 = vector.broadcast %cst_159 : f32 to vector<256x1xf32>
    %318 = arith.addf %316, %317 : vector<256x1xf32>
    %319 = math.rsqrt %318 : vector<256x1xf32>
    %320 = vector.broadcast %319 : vector<256x1xf32> to vector<256x4xf32>
    %321 = arith.mulf %311, %320 : vector<256x4xf32>
    %c0_160 = arith.constant 0 : index
    %c0_161 = arith.constant 0 : index
    %322 = vector.load %arg4[%c0_160, %c0_161] : memref<1x4xf32, #tpu.memory_space<vmem>>, vector<1x4xf32>
    %323 = vector.broadcast %322 : vector<1x4xf32> to vector<256x4xf32>
    %324 = arith.mulf %321, %323 : vector<256x4xf32>
    %c0_162 = arith.constant 0 : index
    %c0_163 = arith.constant 0 : index
    %325 = vector.load %arg5[%c0_162, %c0_163] : memref<1x4xf32, #tpu.memory_space<vmem>>, vector<1x4xf32>
    %326 = vector.broadcast %325 : vector<1x4xf32> to vector<256x4xf32>
    %327 = arith.addf %324, %326 : vector<256x4xf32>
    %c0_164 = arith.constant 0 : index
    %c0_165 = arith.constant 0 : index
    %328 = vector.load %arg6[%c0_164, %c0_165] : memref<4x16xf32, #tpu.memory_space<vmem>>, vector<4x16xf32>
    %cst_166 = arith.constant dense<0.000000e+00> : vector<256x16xf32>
    %329 = tpu.matmul %327, %328, %cst_166 {dimension_numbers = #tpu.dot_dimension_numbers<[1], [0], [0], [1], [0, 0, 1, 1], [], []>} : vector<256x4xf32>, vector<4x16xf32>, vector<256x16xf32> -> vector<256x16xf32>
    %c0_167 = arith.constant 0 : index
    %c0_168 = arith.constant 0 : index
    %330 = vector.load %arg7[%c0_167, %c0_168] : memref<1x16xf32, #tpu.memory_space<vmem>>, vector<1x16xf32>
    %331 = vector.broadcast %330 : vector<1x16xf32> to vector<256x16xf32>
    %332 = arith.addf %329, %331 : vector<256x16xf32>
    %cst_169 = arith.constant 0.000000e+00 : f32
    %333 = vector.broadcast %cst_169 : f32 to vector<256x16xf32>
    %334 = arith.maximumf %332, %333 : vector<256x16xf32>
    %c0_170 = arith.constant 0 : index
    %c0_171 = arith.constant 0 : index
    %335 = vector.load %arg8[%c0_170, %c0_171] : memref<16x4xf32, #tpu.memory_space<vmem>>, vector<16x4xf32>
    %cst_172 = arith.constant dense<0.000000e+00> : vector<256x4xf32>
    %336 = tpu.matmul %334, %335, %cst_172 {dimension_numbers = #tpu.dot_dimension_numbers<[1], [0], [0], [1], [0, 0, 1, 1], [], []>} : vector<256x16xf32>, vector<16x4xf32>, vector<256x4xf32> -> vector<256x4xf32>
    %c0_173 = arith.constant 0 : index
    %c0_174 = arith.constant 0 : index
    %337 = vector.load %arg9[%c0_173, %c0_174] : memref<1x4xf32, #tpu.memory_space<vmem>>, vector<1x4xf32>
    %338 = vector.broadcast %337 : vector<1x4xf32> to vector<256x4xf32>
    %339 = arith.addf %336, %338 : vector<256x4xf32>
    %340 = vector.shape_cast %1 : vector<16x16x4xf32> to vector<256x4xf32>
    %341 = arith.addf %340, %339 : vector<256x4xf32>
    %342 = vector.shape_cast %341 : vector<256x4xf32> to vector<16x16x4xf32>
    %c0_175 = arith.constant 0 : index
    %c0_176 = arith.constant 0 : index
    %c0_177 = arith.constant 0 : index
    %c0_178 = arith.constant 0 : index
    %343 = vector.load %arg10[%c0_175, %c0_176, %c0_177, %c0_178] : memref<1x16x16x4xf32, #tpu.memory_space<vmem>>, vector<1x16x16x4xf32>
    %344 = vector.shape_cast %343 : vector<1x16x16x4xf32> to vector<16x16x4xf32>
    %345 = vector.shape_cast %342 : vector<16x16x4xf32> to vector<1x16x16x4xf32>
    tpu.vector_store %arg10[%c0_175, %c0_176, %c0_177, %c0_178], %345 {strides = array<i32>} : memref<1x16x16x4xf32, #tpu.memory_space<vmem>>, vector<1x16x16x4xf32>,
    return
  }
  func.func @transform_0(%arg0: i32) -> (i32, i32, i32, i32) {
    %c0_i32 = arith.constant 0 : i32
    %c0_i32_0 = arith.constant 0 : i32
    %c0_i32_1 = arith.constant 0 : i32
    %c0_i32_2 = arith.constant 0 : i32
    return %arg0, %c0_i32, %c0_i32_0, %c0_i32_1 : i32, i32, i32, i32
  }
  func.func @transform_1(%arg0: i32) -> (i32, i32) {
    %c0_i32 = arith.constant 0 : i32
    %c0_i32_0 = arith.constant 0 : i32
    %c0_i32_1 = arith.constant 0 : i32
    return %c0_i32, %c0_i32_0 : i32, i32
  }
  func.func @transform_2(%arg0: i32) -> (i32, i32) {
    %c0_i32 = arith.constant 0 : i32
    %c0_i32_0 = arith.constant 0 : i32
    %c0_i32_1 = arith.constant 0 : i32
    return %c0_i32, %c0_i32_0 : i32, i32
  }
  func.func @transform_3(%arg0: i32) -> (i32, i32) {
    %c0_i32 = arith.constant 0 : i32
    %c0_i32_0 = arith.constant 0 : i32
    %c0_i32_1 = arith.constant 0 : i32
    return %c0_i32, %c0_i32_0 : i32, i32
  }
  func.func @transform_4(%arg0: i32) -> (i32, i32) {
    %c0_i32 = arith.constant 0 : i32
    %c0_i32_0 = arith.constant 0 : i32
    %c0_i32_1 = arith.constant 0 : i32
    return %c0_i32, %c0_i32_0 : i32, i32
  }
  func.func @transform_5(%arg0: i32) -> (i32, i32) {
    %c0_i32 = arith.constant 0 : i32
    %c0_i32_0 = arith.constant 0 : i32
    %c0_i32_1 = arith.constant 0 : i32
    return %c0_i32, %c0_i32_0 : i32, i32
  }
  func.func @transform_6(%arg0: i32) -> (i32, i32) {
    %c0_i32 = arith.constant 0 : i32
    %c0_i32_0 = arith.constant 0 : i32
    %c0_i32_1 = arith.constant 0 : i32
    return %c0_i32, %c0_i32_0 : i32, i32
  }
  func.func @transform_7(%arg0: i32) -> (i32, i32) {
    %c0_i32 = arith.constant 0 : i32
    %c0_i32_0 = arith.constant 0 : i32
    %c0_i32_1 = arith.constant 0 : i32
    return %c0_i32, %c0_i32_0 : i32, i32
  }
  func.func @transform_8(%arg0: i32) -> (i32, i32) {
    %c0_i32 = arith.constant 0 : i32
    %c0_i32_0 = arith.constant 0 : i32
    %c0_i32_1 = arith.constant 0 : i32
    return %c0_i32, %c0_i32_0 : i32, i32
  }
  func.func @transform_9(%arg0: i32) -> (i32, i32, i32, i32) {
    %c0_i32 = arith.constant 0 : i32
    %c0_i32_0 = arith.constant 0 : i32
    %c0_i32_1 = arith.constant 0 : i32
    %c0_i32_2 = arith.constant 0 : i32
    return %arg0, %c0_i32, %c0_i32_0, %c0_i32_1 : i32, i32, i32, i32
  }
}

</mosaic_0001>

<llo_original>
// kernel: tpu_custom_call.1
$region0: #{tpu_custom_call.1}
  #allocation0 [shape = 'u32[]', space=smem, size = 0x4, offset = 0x4, fixed_abs, tag = 'smem constant byte address 0x4 - core index']
  #allocation1 [shape = 'u32[72,128]{1,0:T(1,128)}', space=vmem, size = 0x9000, scoped, tag = 'internal scratch']
  #allocation2 [shape = 'f32[22,22,4]{2,1,0:T(8,128)}', space=vmem, size = 0x42000, scoped, tag = 'scratch operand']
  %s0 = inlined_call_operand.vmem [shape: f32[2,16,16,4], index: 0, kind: input, shape index: {}]
  %s1 = inlined_call_operand.vmem [shape: f32[49,4], index: 1, kind: input, shape index: {}]
  %s2 = inlined_call_operand.vmem [shape: f32[1,4], index: 2, kind: input, shape index: {}]
  %s3 = inlined_call_operand.vmem [shape: f32[1,4], index: 3, kind: input, shape index: {}]
  %s4 = inlined_call_operand.vmem [shape: f32[1,4], index: 4, kind: input, shape index: {}]
  %s5 = inlined_call_operand.vmem [shape: f32[4,16], index: 5, kind: input, shape index: {}]
  %s6 = inlined_call_operand.vmem [shape: f32[1,16], index: 6, kind: input, shape index: {}]
  %s7 = inlined_call_operand.vmem [shape: f32[16,4], index: 7, kind: input, shape index: {}]
  %s8 = inlined_call_operand.vmem [shape: f32[1,4], index: 8, kind: input, shape index: {}]
  %s9 = inlined_call_operand.vmem [shape: f32[2,16,16,4], index: 9, kind: output, shape index: {}]
  %s10 = sld [smem:[#allocation0]]
  $region69: #{tpu_custom_call.1} parent=0
    _
  %s12 = ssub.s32 1, %s10
  %s13 = scalar_select 0, %s12, %s10
  loop: start=0, step=1, limit=4
  $region2: #{tpu_custom_call.1} parent=0 // loop_pre_header
    _
  $region3: #{tpu_custom_call.1} parent=0 // loop_header
    %s15 = sphi 0, %s19
    %p16 = scmp.ge.s32.totalorder %s15, 4
    %s25 = sphi 0, %s27
    %s28 = sphi 0, %s25
    %s29 = sphi 0, %s28
    %s45 = sphi 0, %s29
    %s49 = sphi 0, %s49
    %s51 = sphi 0, %s49
    %s52 = sphi 0, %s51
    %s66 = sphi 0, %s52
    %s70 = sphi 0, %s70
    %s72 = sphi 0, %s70
    %s73 = sphi 0, %s72
    %s87 = sphi 0, %s73
    %s91 = sphi 0, %s91
    %s93 = sphi 0, %s91
    %s94 = sphi 0, %s93
    %s108 = sphi 0, %s94
    %s112 = sphi 0, %s112
    %s114 = sphi 0, %s112
    %s115 = sphi 0, %s114
    %s129 = sphi 0, %s115
    %s133 = sphi 0, %s133
    %s135 = sphi 0, %s133
    %s136 = sphi 0, %s135
    %s150 = sphi 0, %s136
    %s154 = sphi 0, %s154
    %s156 = sphi 0, %s154
    %s157 = sphi 0, %s156
    %s171 = sphi 0, %s157
    %s175 = sphi 0, %s175
    %s177 = sphi 0, %s175
    %s178 = sphi 0, %s177
    %s192 = sphi 0, %s178
    %s196 = sphi 0, %s196
    %s198 = sphi 0, %s196
    %s199 = sphi 0, %s198
    %s213 = sphi 0, %s199
    %s219 = sphi 0, %s221
    %s222 = sphi 0, %s219
    %s223 = sphi 0, %s222
    %s239 = sphi 0, %s223
  $region4: #{tpu_custom_call.1} parent=0 // loop_header_branch
    %18 = sbr.rel (%p16) target = $region8
  $region5: #{tpu_custom_call.1} parent=0 // loop_body
    %s20 = ssub.s32 %s15, 1
    %s21 = ssub.s32 %s15, 2
    %s22 = sadd.s32 %s15, 1
    %s23 = ssub.s32 %s15, %s22
    %p24 = scmp.eq.s32.totalorder %s23, 0
    %s26 = sadd.s32 %s25, 1
    %s27 = scalar_select %p24, %s25, %s26
    %p30 = pneg %p24
    %p31 = scmp.eq.s32.totalorder %s15, 1
    %p32 = por %p30, %p31
    %p33 = scmp.ne.s32.totalorder %s25, %s28
    %p34 = scmp.eq.s32.totalorder %s15, 0
    %p35 = por %p33, %p34
    %p36 = scmp.ne.s32.totalorder %s25, %s28
    %p37 = scmp.eq.s32.totalorder %s20, 1
    %p38 = por %p36, %p37
    %p39 = scmp.ne.s32.totalorder %s28, %s29
    %p40 = scmp.eq.s32.totalorder %s20, 0
    %p41 = por %p39, %p40
    %p42 = scmp.ne.s32.totalorder %s28, %s29
    %p43 = scmp.eq.s32.totalorder %s21, 1
    %p44 = por %p42, %p43
    %p46 = scmp.ne.s32.totalorder %s29, %s45
    %p47 = scmp.eq.s32.totalorder %s21, 0
    %p48 = por %p46, %p47
    %s50 = sadd.s32 %s49, 1
    %p53 = scmp.eq.s32.totalorder %s15, 1
    %p54 = scmp.ne.s32.totalorder %s49, %s51
    %p55 = scmp.eq.s32.totalorder %s15, 0
    %p56 = por %p54, %p55
    %p57 = scmp.ne.s32.totalorder %s49, %s51
    %p58 = scmp.eq.s32.totalorder %s20, 1
    %p59 = por %p57, %p58
    %p60 = scmp.ne.s32.totalorder %s51, %s52
    %p61 = scmp.eq.s32.totalorder %s20, 0
    %p62 = por %p60, %p61
    %p63 = scmp.ne.s32.totalorder %s51, %s52
    %p64 = scmp.eq.s32.totalorder %s21, 1
    %p65 = por %p63, %p64
    %p67 = scmp.ne.s32.totalorder %s52, %s66
    %p68 = scmp.eq.s32.totalorder %s21, 0
    %p69 = por %p67, %p68
    %s71 = sadd.s32 %s70, 1
    %p74 = scmp.eq.s32.totalorder %s15, 1
    %p75 = scmp.ne.s32.totalorder %s70, %s72
    %p76 = scmp.eq.s32.totalorder %s15, 0
    %p77 = por %p75, %p76
    %p78 = scmp.ne.s32.totalorder %s70, %s72
    %p79 = scmp.eq.s32.totalorder %s20, 1
    %p80 = por %p78, %p79
    %p81 = scmp.ne.s32.totalorder %s72, %s73
    %p82 = scmp.eq.s32.totalorder %s20, 0
    %p83 = por %p81, %p82
    %p84 = scmp.ne.s32.totalorder %s72, %s73
    %p85 = scmp.eq.s32.totalorder %s21, 1
    %p86 = por %p84, %p85
    %p88 = scmp.ne.s32.totalorder %s73, %s87
    %p89 = scmp.eq.s32.totalorder %s21, 0
    %p90 = por %p88, %p89
    %s92 = sadd.s32 %s91, 1
    %p95 = scmp.eq.s32.totalorder %s15, 1
    %p96 = scmp.ne.s32.totalorder %s91, %s93
    %p97 = scmp.eq.s32.totalorder %s15, 0
    %p98 = por %p96, %p97
    %p99 = scmp.ne.s32.totalorder %s91, %s93
    %p100 = scmp.eq.s32.totalorder %s20, 1
    %p101 = por %p99, %p100
    %p102 = scmp.ne.s32.totalorder %s93, %s94
    %p103 = scmp.eq.s32.totalorder %s20, 0
    %p104 = por %p102, %p103
    %p105 = scmp.ne.s32.totalorder %s93, %s94
    %p106 = scmp.eq.s32.totalorder %s21, 1
    %p107 = por %p105, %p106
    %p109 = scmp.ne.s32.totalorder %s94, %s108
    %p110 = scmp.eq.s32.totalorder %s21, 0
    %p111 = por %p109, %p110
    %s113 = sadd.s32 %s112, 1
    %p116 = scmp.eq.s32.totalorder %s15, 1
    %p117 = scmp.ne.s32.totalorder %s112, %s114
    %p118 = scmp.eq.s32.totalorder %s15, 0
    %p119 = por %p117, %p118
    %p120 = scmp.ne.s32.totalorder %s112, %s114
    %p121 = scmp.eq.s32.totalorder %s20, 1
    %p122 = por %p120, %p121
    %p123 = scmp.ne.s32.totalorder %s114, %s115
    %p124 = scmp.eq.s32.totalorder %s20, 0
    %p125 = por %p123, %p124
    %p126 = scmp.ne.s32.totalorder %s114, %s115
    %p127 = scmp.eq.s32.totalorder %s21, 1
    %p128 = por %p126, %p127
    %p130 = scmp.ne.s32.totalorder %s115, %s129
    %p131 = scmp.eq.s32.totalorder %s21, 0
    %p132 = por %p130, %p131
    %s134 = sadd.s32 %s133, 1
    %p137 = scmp.eq.s32.totalorder %s15, 1
    %p138 = scmp.ne.s32.totalorder %s133, %s135
    %p139 = scmp.eq.s32.totalorder %s15, 0
    %p140 = por %p138, %p139
    %p141 = scmp.ne.s32.totalorder %s133, %s135
    %p142 = scmp.eq.s32.totalorder %s20, 1
    %p143 = por %p141, %p142
    %p144 = scmp.ne.s32.totalorder %s135, %s136
    %p145 = scmp.eq.s32.totalorder %s20, 0
    %p146 = por %p144, %p145
    %p147 = scmp.ne.s32.totalorder %s135, %s136
    %p148 = scmp.eq.s32.totalorder %s21, 1
    %p149 = por %p147, %p148
    %p151 = scmp.ne.s32.totalorder %s136, %s150
    %p152 = scmp.eq.s32.totalorder %s21, 0
    %p153 = por %p151, %p152
    %s155 = sadd.s32 %s154, 1
    %p158 = scmp.eq.s32.totalorder %s15, 1
    %p159 = scmp.ne.s32.totalorder %s154, %s156
    %p160 = scmp.eq.s32.totalorder %s15, 0
    %p161 = por %p159, %p160
    %p162 = scmp.ne.s32.totalorder %s154, %s156
    %p163 = scmp.eq.s32.totalorder %s20, 1
    %p164 = por %p162, %p163
    %p165 = scmp.ne.s32.totalorder %s156, %s157
    %p166 = scmp.eq.s32.totalorder %s20, 0
    %p167 = por %p165, %p166
    %p168 = scmp.ne.s32.totalorder %s156, %s157
    %p169 = scmp.eq.s32.totalorder %s21, 1
    %p170 = por %p168, %p169
    %p172 = scmp.ne.s32.totalorder %s157, %s171
    %p173 = scmp.eq.s32.totalorder %s21, 0
    %p174 = por %p172, %p173
    %s176 = sadd.s32 %s175, 1
    %p179 = scmp.eq.s32.totalorder %s15, 1
    %p180 = scmp.ne.s32.totalorder %s175, %s177
    %p181 = scmp.eq.s32.totalorder %s15, 0
    %p182 = por %p180, %p181
    %p183 = scmp.ne.s32.totalorder %s175, %s177
    %p184 = scmp.eq.s32.totalorder %s20, 1
    %p185 = por %p183, %p184
    %p186 = scmp.ne.s32.totalorder %s177, %s178
    %p187 = scmp.eq.s32.totalorder %s20, 0
    %p188 = por %p186, %p187
    %p189 = scmp.ne.s32.totalorder %s177, %s178
    %p190 = scmp.eq.s32.totalorder %s21, 1
    %p191 = por %p189, %p190
    %p193 = scmp.ne.s32.totalorder %s178, %s192
    %p194 = scmp.eq.s32.totalorder %s21, 0
    %p195 = por %p193, %p194
    %s197 = sadd.s32 %s196, 1
    %p200 = scmp.eq.s32.totalorder %s15, 1
    %p201 = scmp.ne.s32.totalorder %s196, %s198
    %p202 = scmp.eq.s32.totalorder %s15, 0
    %p203 = por %p201, %p202
    %p204 = scmp.ne.s32.totalorder %s196, %s198
    %p205 = scmp.eq.s32.totalorder %s20, 1
    %p206 = por %p204, %p205
    %p207 = scmp.ne.s32.totalorder %s198, %s199
    %p208 = scmp.eq.s32.totalorder %s20, 0
    %p209 = por %p207, %p208
    %p210 = scmp.ne.s32.totalorder %s198, %s199
    %p211 = scmp.eq.s32.totalorder %s21, 1
    %p212 = por %p210, %p211
    %p214 = scmp.ne.s32.totalorder %s199, %s213
    %p215 = scmp.eq.s32.totalorder %s21, 0
    %p216 = por %p214, %p215
    %s217 = ssub.s32 %s15, %s22
    %p218 = scmp.eq.s32.totalorder %s217, 0
    %s220 = sadd.s32 %s219, 1
    %s221 = scalar_select %p218, %s219, %s220
    %p224 = pneg %p218
    %p225 = scmp.eq.s32.totalorder %s15, 1
    %p226 = por %p224, %p225
    %p227 = scmp.ne.s32.totalorder %s219, %s222
    %p228 = scmp.eq.s32.totalorder %s15, 0
    %p229 = por %p227, %p228
    %p230 = scmp.ne.s32.totalorder %s219, %s222
    %p231 = scmp.eq.s32.totalorder %s20, 1
    %p232 = por %p230, %p231
    %p233 = scmp.ne.s32.totalorder %s222, %s223
    %p234 = scmp.eq.s32.totalorder %s20, 0
    %p235 = por %p233, %p234
    %p236 = scmp.ne.s32.totalorder %s222, %s223
    %p237 = scmp.eq.s32.totalorder %s21, 1
    %p238 = por %p236, %p237
    %p240 = scmp.ne.s32.totalorder %s223, %s239
    %p241 = scmp.eq.s32.totalorder %s21, 0
    %p242 = por %p240, %p241
    %p243 = scmp.le.s32.totalorder 1, %s15
    %p244 = scmp.lt.s32.totalorder %s15, 3
    %p245 = pnand %p243, %p244
    %p246 = pneg %p245
    // Predicated region
    $region9: #{tpu_custom_call.1} parent=5 // pred_check
      _
    $region10: #{tpu_custom_call.1} parent=5 // pred_check_branch
      %248 = sbr.rel (%p245) target = $region12
    $region11: #{tpu_custom_call.1} parent=5 // pred_region
      %s249 = ssub.s32 %s15, 1
      // Predicated region
      $region13: #{tpu_custom_call.1} parent=11 // pred_check
        %p250 = pneg %p62
      $region14: #{tpu_custom_call.1} parent=11 // pred_check_branch
        %252 = sbr.rel (%p250) target = $region16
      $region15: #{tpu_custom_call.1} parent=11 // pred_region
        _
      $region16: #{tpu_custom_call.1} parent=11 // pred_fallthru
        _
      // Predicated region
      $region17: #{tpu_custom_call.1} parent=11 // pred_check
        %p253 = pneg %p83
      $region18: #{tpu_custom_call.1} parent=11 // pred_check_branch
        %255 = sbr.rel (%p253) target = $region20
      $region19: #{tpu_custom_call.1} parent=11 // pred_region
        _
      $region20: #{tpu_custom_call.1} parent=11 // pred_fallthru
        _
      // Predicated region
      $region21: #{tpu_custom_call.1} parent=11 // pred_check
        %p256 = pneg %p104
      $region22: #{tpu_custom_call.1} parent=11 // pred_check_branch
        %258 = sbr.rel (%p256) target = $region24
      $region23: #{tpu_custom_call.1} parent=11 // pred_region
        _
      $region24: #{tpu_custom_call.1} parent=11 // pred_fallthru
        _
      // Predicated region
      $region25: #{tpu_custom_call.1} parent=11 // pred_check
        %p259 = pneg %p125
      $region26: #{tpu_custom_call.1} parent=11 // pred_check_branch
        %261 = sbr.rel (%p259) target = $region28
      $region27: #{tpu_custom_call.1} parent=11 // pred_region
        _
      $region28: #{tpu_custom_call.1} parent=11 // pred_fallthru
        _
      // Predicated region
      $region29: #{tpu_custom_call.1} parent=11 // pred_check
        %p262 = pneg %p146
      $region30: #{tpu_custom_call.1} parent=11 // pred_check_branch
        %264 = sbr.rel (%p262) target = $region32
      $region31: #{tpu_custom_call.1} parent=11 // pred_region
        _
      $region32: #{tpu_custom_call.1} parent=11 // pred_fallthru
        _
      // Predicated region
      $region33: #{tpu_custom_call.1} parent=11 // pred_check
        %p265 = pneg %p167
      $region34: #{tpu_custom_call.1} parent=11 // pred_check_branch
        %267 = sbr.rel (%p265) target = $region36
      $region35: #{tpu_custom_call.1} parent=11 // pred_region
        _
      $region36: #{tpu_custom_call.1} parent=11 // pred_fallthru
        _
      // Predicated region
      $region37: #{tpu_custom_call.1} parent=11 // pred_check
        %p268 = pneg %p188
      $region38: #{tpu_custom_call.1} parent=11 // pred_check_branch
        %270 = sbr.rel (%p268) target = $region40
      $region39: #{tpu_custom_call.1} parent=11 // pred_region
        _
      $region40: #{tpu_custom_call.1} parent=11 // pred_fallthru
        _
      // Predicated region
      $region41: #{tpu_custom_call.1} parent=11 // pred_check
        %p271 = pneg %p209
      $region42: #{tpu_custom_call.1} parent=11 // pred_check_branch
        %273 = sbr.rel (%p271) target = $region44
      $region43: #{tpu_custom_call.1} parent=11 // pred_region
        _
      $region44: #{tpu_custom_call.1} parent=11 // pred_fallthru
        _
    $region12: #{tpu_custom_call.1} parent=5 // pred_fallthru
      _
    %p274 = scmp.lt.s32.totalorder %s15, 2
    // Predicated region
    $region45: #{tpu_custom_call.1} parent=5 // pred_check
      %p275 = pneg %p274
    $region46: #{tpu_custom_call.1} parent=5 // pred_check_branch
      %277 = sbr.rel (%p275) target = $region48
    $region47: #{tpu_custom_call.1} parent=5 // pred_region
      // Predicated region
      $region49: #{tpu_custom_call.1} parent=47 // pred_check
        %p278 = pneg %p35
      $region50: #{tpu_custom_call.1} parent=47 // pred_check_branch
        %280 = sbr.rel (%p278) target = $region52
      $region51: #{tpu_custom_call.1} parent=47 // pred_region
        %p281 = scmp.lt.s32.totalorder %s15, 1
        %s282 = scalar_select %p281, %s15, 1
        %s283 = smul.addr %s282, 32
        %s284 = smul.addr %s283, 8
        %s285 = scalar_lea.vmem %s0, %s284
      $region52: #{tpu_custom_call.1} parent=47 // pred_fallthru
        _
    $region48: #{tpu_custom_call.1} parent=5 // pred_fallthru
      _
    %p286 = scmp.le.s32.totalorder 1, %s15
    %p287 = scmp.lt.s32.totalorder %s15, 3
    %p288 = pnand %p286, %p287
    %p289 = pneg %p288
    // Predicated region
    $region53: #{tpu_custom_call.1} parent=5 // pred_check
      _
    $region54: #{tpu_custom_call.1} parent=5 // pred_check_branch
      %291 = sbr.rel (%p288) target = $region56
    $region55: #{tpu_custom_call.1} parent=5 // pred_region
      %s292 = ssub.s32 %s15, 1
      %p293 = scmp.lt.s32.totalorder %s20, 1
      %s294 = scalar_select %p293, %s20, 1
      %s295 = smul.addr %s294, 32
      %s296 = smul.addr %s295, 8
      %s297 = scalar_lea.vmem %s0, %s296
      %p298 = pneg %p41
      %p299 = pneg %p38
      %p300 = pneg %p62
      %p301 = pneg %p59
      %p302 = pneg %p83
      %p303 = pneg %p80
      %p304 = pneg %p104
      %p305 = pneg %p101
      %p306 = pneg %p125
      %p307 = pneg %p122
      %p308 = pneg %p146
      %p309 = pneg %p143
      %p310 = pneg %p167
      %p311 = pneg %p164
      %p312 = pneg %p188
      %p313 = pneg %p185
      %p314 = pneg %p209
      %p315 = pneg %p206
      %p316 = pneg %p235
      %p317 = pneg %p232
      %p318 = scmp.lt.s32.totalorder %s20, 1
      %s319 = scalar_select %p318, %s20, 1
      %s320 = smul.addr %s319, 32
      %s321 = smul.addr %s320, 8
      %s322 = scalar_lea.vmem %s9, %s321
      %p323 = scmp.lt.s32.totalorder %s20, 1
      %s324 = scalar_select %p323, %s20, 1
      %s325 = smul.addr %s324, 32
      %s326 = smul.addr %s325, 8
      %s327 = scalar_lea.vmem %s0, %s326
      %p328 = scmp.lt.s32.totalorder %s20, 1
      %s329 = scalar_select %p328, %s20, 1
      %s330 = smul.addr %s329, 32
      %s331 = smul.addr %s330, 8
      %s332 = scalar_lea.vmem %s9, %s331
      %v333 = vld [vmem:[%s327] sm:$0xff]
      %v334 = vld [vmem:[%s327 + $0x8] sm:$0xff]
      %v335 = vld [vmem:[%s327 + $0x10] sm:$0xff]
      %v336 = vld [vmem:[%s327 + $0x18] sm:$0xff]
      %v337 = vld [vmem:[%s327 + $0x20] sm:$0xff]
      %v338 = vld [vmem:[%s327 + $0x28] sm:$0xff]
      %v339 = vld [vmem:[%s327 + $0x30] sm:$0xff]
      %v340 = vld [vmem:[%s327 + $0x38] sm:$0xff]
      %v341 = vld [vmem:[%s327 + $0x40] sm:$0xff]
      %v342 = vld [vmem:[%s327 + $0x48] sm:$0xff]
      %v343 = vld [vmem:[%s327 + $0x50] sm:$0xff]
      %v344 = vld [vmem:[%s327 + $0x58] sm:$0xff]
      %v345 = vld [vmem:[%s327 + $0x60] sm:$0xff]
      %v346 = vld [vmem:[%s327 + $0x68] sm:$0xff]
      %v347 = vld [vmem:[%s327 + $0x70] sm:$0xff]
      %v348 = vld [vmem:[%s327 + $0x78] sm:$0xff]
      %v349 = vld [vmem:[%s327 + $0x80] sm:$0xff]
      %v350 = vld [vmem:[%s327 + $0x88] sm:$0xff]
      %v351 = vld [vmem:[%s327 + $0x90] sm:$0xff]
      %v352 = vld [vmem:[%s327 + $0x98] sm:$0xff]
      %v353 = vld [vmem:[%s327 + $0xa0] sm:$0xff]
      %v354 = vld [vmem:[%s327 + $0xa8] sm:$0xff]
      %v355 = vld [vmem:[%s327 + $0xb0] sm:$0xff]
      %v356 = vld [vmem:[%s327 + $0xb8] sm:$0xff]
      %v357 = vld [vmem:[%s327 + $0xc0] sm:$0xff]
      %v358 = vld [vmem:[%s327 + $0xc8] sm:$0xff]
      %v359 = vld [vmem:[%s327 + $0xd0] sm:$0xff]
      %v360 = vld [vmem:[%s327 + $0xd8] sm:$0xff]
      %v361 = vld [vmem:[%s327 + $0xe0] sm:$0xff]
      %v362 = vld [vmem:[%s327 + $0xe8] sm:$0xff]
      %v363 = vld [vmem:[%s327 + $0xf0] sm:$0xff]
      %v364 = vld [vmem:[%s327 + $0xf8] sm:$0xff]
      %vm365 = vcmask 31744
      %366 = vst.msk [vmem:[#allocation2] sm:$0xff] %vm365, 0.0
      %367 = vst.msk [vmem:[#allocation2 + $0x8] sm:$0xff] %vm365, 0.0
      %vm368 = vcmask 29696
      %369 = vst.msk [vmem:[#allocation2 + $0x10] sm:$0x3f] %vm368, 0.0
      %370 = vst.msk [vmem:[#allocation2 + $0x18] sm:$0xff] %vm365, 0.0
      %371 = vst.msk [vmem:[#allocation2 + $0x20] sm:$0xff] %vm365, 0.0
      %372 = vst.msk [vmem:[#allocation2 + $0x28] sm:$0x3f] %vm368, 0.0
      %373 = vst.msk [vmem:[#allocation2 + $0x30] sm:$0xff] %vm365, 0.0
      %374 = vst.msk [vmem:[#allocation2 + $0x38] sm:$0xff] %vm365, 0.0
      %375 = vst.msk [vmem:[#allocation2 + $0x40] sm:$0x3f] %vm368, 0.0
      %376 = vst.msk [vmem:[#allocation2 + $0x48] sm:$0xff] %vm365, 0.0
      %377 = vst.msk [vmem:[#allocation2 + $0x50] sm:$0xff] %vm365, 0.0
      %378 = vst.msk [vmem:[#allocation2 + $0x58] sm:$0x3f] %vm368, 0.0
      %379 = vst.msk [vmem:[#allocation2 + $0x60] sm:$0xff] %vm365, 0.0
      %380 = vst.msk [vmem:[#allocation2 + $0x68] sm:$0xff] %vm365, 0.0
      %381 = vst.msk [vmem:[#allocation2 + $0x70] sm:$0x3f] %vm368, 0.0
      %382 = vst.msk [vmem:[#allocation2 + $0x78] sm:$0xff] %vm365, 0.0
      %383 = vst.msk [vmem:[#allocation2 + $0x80] sm:$0xff] %vm365, 0.0
      %384 = vst.msk [vmem:[#allocation2 + $0x88] sm:$0x3f] %vm368, 0.0
      %385 = vst.msk [vmem:[#allocation2 + $0x90] sm:$0xff] %vm365, 0.0
      %386 = vst.msk [vmem:[#allocation2 + $0x98] sm:$0xff] %vm365, 0.0
      %387 = vst.msk [vmem:[#allocation2 + $0xa0] sm:$0x3f] %vm368, 0.0
      %388 = vst.msk [vmem:[#allocation2 + $0xa8] sm:$0xff] %vm365, 0.0
      %389 = vst.msk [vmem:[#allocation2 + $0xb0] sm:$0xff] %vm365, 0.0
      %390 = vst.msk [vmem:[#allocation2 + $0xb8] sm:$0x3f] %vm368, 0.0
      %391 = vst.msk [vmem:[#allocation2 + $0xc0] sm:$0xff] %vm365, 0.0
      %392 = vst.msk [vmem:[#allocation2 + $0xc8] sm:$0xff] %vm365, 0.0
      %393 = vst.msk [vmem:[#allocation2 + $0xd0] sm:$0x3f] %vm368, 0.0
      %394 = vst.msk [vmem:[#allocation2 + $0xd8] sm:$0xff] %vm365, 0.0
      %395 = vst.msk [vmem:[#allocation2 + $0xe0] sm:$0xff] %vm365, 0.0
      %396 = vst.msk [vmem:[#allocation2 + $0xe8] sm:$0x3f] %vm368, 0.0
      %397 = vst.msk [vmem:[#allocation2 + $0xf0] sm:$0xff] %vm365, 0.0
      %398 = vst.msk [vmem:[#allocation2 + $0xf8] sm:$0xff] %vm365, 0.0
      %399 = vst.msk [vmem:[#allocation2 + $0x100] sm:$0x3f] %vm368, 0.0
      %400 = vst.msk [vmem:[#allocation2 + $0x108] sm:$0xff] %vm365, 0.0
      %401 = vst.msk [vmem:[#allocation2 + $0x110] sm:$0xff] %vm365, 0.0
      %402 = vst.msk [vmem:[#allocation2 + $0x118] sm:$0x3f] %vm368, 0.0
      %403 = vst.msk [vmem:[#allocation2 + $0x120] sm:$0xff] %vm365, 0.0
      %404 = vst.msk [vmem:[#allocation2 + $0x128] sm:$0xff] %vm365, 0.0
      %405 = vst.msk [vmem:[#allocation2 + $0x130] sm:$0x3f] %vm368, 0.0
      %406 = vst.msk [vmem:[#allocation2 + $0x138] sm:$0xff] %vm365, 0.0
      %407 = vst.msk [vmem:[#allocation2 + $0x140] sm:$0xff] %vm365, 0.0
      %408 = vst.msk [vmem:[#allocation2 + $0x148] sm:$0x3f] %vm368, 0.0
      %409 = vst.msk [vmem:[#allocation2 + $0x150] sm:$0xff] %vm365, 0.0
      %410 = vst.msk [vmem:[#allocation2 + $0x158] sm:$0xff] %vm365, 0.0
      %411 = vst.msk [vmem:[#allocation2 + $0x160] sm:$0x3f] %vm368, 0.0
      %412 = vst.msk [vmem:[#allocation2 + $0x168] sm:$0xff] %vm365, 0.0
      %413 = vst.msk [vmem:[#allocation2 + $0x170] sm:$0xff] %vm365, 0.0
      %414 = vst.msk [vmem:[#allocation2 + $0x178] sm:$0x3f] %vm368, 0.0
      %415 = vst.msk [vmem:[#allocation2 + $0x180] sm:$0xff] %vm365, 0.0
      %416 = vst.msk [vmem:[#allocation2 + $0x188] sm:$0xff] %vm365, 0.0
      %417 = vst.msk [vmem:[#allocation2 + $0x190] sm:$0x3f] %vm368, 0.0
      %418 = vst.msk [vmem:[#allocation2 + $0x198] sm:$0xff] %vm365, 0.0
      %419 = vst.msk [vmem:[#allocation2 + $0x1a0] sm:$0xff] %vm365, 0.0
      %420 = vst.msk [vmem:[#allocation2 + $0x1a8] sm:$0x3f] %vm368, 0.0
      %421 = vst.msk [vmem:[#allocation2 + $0x1b0] sm:$0xff] %vm365, 0.0
      %422 = vst.msk [vmem:[#allocation2 + $0x1b8] sm:$0xff] %vm365, 0.0
      %423 = vst.msk [vmem:[#allocation2 + $0x1c0] sm:$0x3f] %vm368, 0.0
      %424 = vst.msk [vmem:[#allocation2 + $0x1c8] sm:$0xff] %vm365, 0.0
      %425 = vst.msk [vmem:[#allocation2 + $0x1d0] sm:$0xff] %vm365, 0.0
      %426 = vst.msk [vmem:[#allocation2 + $0x1d8] sm:$0x3f] %vm368, 0.0
      %427 = vst.msk [vmem:[#allocation2 + $0x1e0] sm:$0xff] %vm365, 0.0
      %428 = vst.msk [vmem:[#allocation2 + $0x1e8] sm:$0xff] %vm365, 0.0
      %429 = vst.msk [vmem:[#allocation2 + $0x1f0] sm:$0x3f] %vm368, 0.0
      %430 = vst.msk [vmem:[#allocation2 + $0x1f8] sm:$0xff] %vm365, 0.0
      %431 = vst.msk [vmem:[#allocation2 + $0x200] sm:$0xff] %vm365, 0.0
      %432 = vst.msk [vmem:[#allocation2 + $0x208] sm:$0x3f] %vm368, 0.0
      %s433 = scalar_lea.vmem [#allocation2], 72
      %434 = vst.msk [vmem:[%s433 + $0x3] sm:$0xff] %vm365, %v333
      %435 = vst.msk [vmem:[%s433 + $0xb] sm:$0xff] %vm365, %v334
      %436 = vst.msk [vmem:[%s433 + $0x1b] sm:$0xff] %vm365, %v335
      %437 = vst.msk [vmem:[%s433 + $0x23] sm:$0xff] %vm365, %v336
      %438 = vst.msk [vmem:[%s433 + $0x33] sm:$0xff] %vm365, %v337
      %439 = vst.msk [vmem:[%s433 + $0x3b] sm:$0xff] %vm365, %v338
      %440 = vst.msk [vmem:[%s433 + $0x4b] sm:$0xff] %vm365, %v339
      %441 = vst.msk [vmem:[%s433 + $0x53] sm:$0xff] %vm365, %v340
      %442 = vst.msk [vmem:[%s433 + $0x63] sm:$0xff] %vm365, %v341
      %443 = vst.msk [vmem:[%s433 + $0x6b] sm:$0xff] %vm365, %v342
      %444 = vst.msk [vmem:[%s433 + $0x7b] sm:$0xff] %vm365, %v343
      %445 = vst.msk [vmem:[%s433 + $0x83] sm:$0xff] %vm365, %v344
      %446 = vst.msk [vmem:[%s433 + $0x93] sm:$0xff] %vm365, %v345
      %447 = vst.msk [vmem:[%s433 + $0x9b] sm:$0xff] %vm365, %v346
      %448 = vst.msk [vmem:[%s433 + $0xab] sm:$0xff] %vm365, %v347
      %449 = vst.msk [vmem:[%s433 + $0xb3] sm:$0xff] %vm365, %v348
      %450 = vst.msk [vmem:[%s433 + $0xc3] sm:$0xff] %vm365, %v349
      %451 = vst.msk [vmem:[%s433 + $0xcb] sm:$0xff] %vm365, %v350
      %452 = vst.msk [vmem:[%s433 + $0xdb] sm:$0xff] %vm365, %v351
      %453 = vst.msk [vmem:[%s433 + $0xe3] sm:$0xff] %vm365, %v352
      %454 = vst.msk [vmem:[%s433 + $0xf3] sm:$0xff] %vm365, %v353
      %455 = vst.msk [vmem:[%s433 + $0xfb] sm:$0xff] %vm365, %v354
      %456 = vst.msk [vmem:[%s433 + $0x10b] sm:$0xff] %vm365, %v355
      %457 = vst.msk [vmem:[%s433 + $0x113] sm:$0xff] %vm365, %v356
      %458 = vst.msk [vmem:[%s433 + $0x123] sm:$0xff] %vm365, %v357
      %459 = vst.msk [vmem:[%s433 + $0x12b] sm:$0xff] %vm365, %v358
      %460 = vst.msk [vmem:[%s433 + $0x13b] sm:$0xff] %vm365, %v359
      %461 = vst.msk [vmem:[%s433 + $0x143] sm:$0xff] %vm365, %v360
      %462 = vst.msk [vmem:[%s433 + $0x153] sm:$0xff] %vm365, %v361
      %463 = vst.msk [vmem:[%s433 + $0x15b] sm:$0xff] %vm365, %v362
      %464 = vst.msk [vmem:[%s433 + $0x16b] sm:$0xff] %vm365, %v363
      %465 = vst.msk [vmem:[%s433 + $0x173] sm:$0xff] %vm365, %v364
      %v466 = vld [vmem:[%s1] sm:$0xff]
      %v467 = vld [vmem:[%s1 + $0x8] sm:$0xff]
      %v468 = vld [vmem:[%s1 + $0x10] sm:$0xff]
      %v469 = vld [vmem:[%s1 + $0x18] sm:$0xff]
      %v470 = vld [vmem:[%s1 + $0x20] sm:$0xff]
      %v471 = vld [vmem:[%s1 + $0x28] sm:$0xff]
      %v472 = vld [vmem:[%s1 + $0x30] sm:$0x1]
      %v473 = vld [vmem:[#allocation2] sm:$0xff]
      %v474 = vld [vmem:[#allocation2 + $0x8] sm:$0xff]
      %v475 = vld [vmem:[#allocation2 + $0x18] sm:$0xff]
      %v476 = vld [vmem:[#allocation2 + $0x20] sm:$0xff]
      %v477 = vld [vmem:[#allocation2 + $0x30] sm:$0xff]
      %v478 = vld [vmem:[#allocation2 + $0x38] sm:$0xff]
      %v479 = vld [vmem:[#allocation2 + $0x48] sm:$0xff]
      %v480 = vld [vmem:[#allocation2 + $0x50] sm:$0xff]
      %v481 = vld [vmem:[#allocation2 + $0x60] sm:$0xff]
      %v482 = vld [vmem:[#allocation2 + $0x68] sm:$0xff]
      %v483 = vld [vmem:[#allocation2 + $0x78] sm:$0xff]
      %v484 = vld [vmem:[#allocation2 + $0x80] sm:$0xff]
      %v485 = vld [vmem:[#allocation2 + $0x90] sm:$0xff]
      %v486 = vld [vmem:[#allocation2 + $0x98] sm:$0xff]
      %v487 = vld [vmem:[#allocation2 + $0xa8] sm:$0xff]
      %v488 = vld [vmem:[#allocation2 + $0xb0] sm:$0xff]
      %v489 = vld [vmem:[#allocation2 + $0xc0] sm:$0xff]
      %v490 = vld [vmem:[#allocation2 + $0xc8] sm:$0xff]
      %v491 = vld [vmem:[#allocation2 + $0xd8] sm:$0xff]
      %v492 = vld [vmem:[#allocation2 + $0xe0] sm:$0xff]
      %v493 = vld [vmem:[#allocation2 + $0xf0] sm:$0xff]
      %v494 = vld [vmem:[#allocation2 + $0xf8] sm:$0xff]
      %v495 = vld [vmem:[#allocation2 + $0x108] sm:$0xff]
      %v496 = vld [vmem:[#allocation2 + $0x110] sm:$0xff]
      %v497 = vld [vmem:[#allocation2 + $0x120] sm:$0xff]
      %v498 = vld [vmem:[#allocation2 + $0x128] sm:$0xff]
      %v499 = vld [vmem:[#allocation2 + $0x138] sm:$0xff]
      %v500 = vld [vmem:[#allocation2 + $0x140] sm:$0xff]
      %v501 = vld [vmem:[#allocation2 + $0x150] sm:$0xff]
      %v502 = vld [vmem:[#allocation2 + $0x158] sm:$0xff]
      %v503 = vld [vmem:[#allocation2 + $0x168] sm:$0xff]
      %v504 = vld [vmem:[#allocation2 + $0x170] sm:$0xff]
      %v505 = vperm.slane %v466, 0
      %v506 = vmul.f32 %v473, %v505
      %v507 = vmul.f32 %v474, %v505
      %v508 = vmul.f32 %v475, %v505
      %v509 = vmul.f32 %v476, %v505
      %v510 = vmul.f32 %v477, %v505
      %v511 = vmul.f32 %v478, %v505
      %v512 = vmul.f32 %v479, %v505
      %v513 = vmul.f32 %v480, %v505
      %v514 = vmul.f32 %v481, %v505
      %v515 = vmul.f32 %v482, %v505
      %v516 = vmul.f32 %v483, %v505
      %v517 = vmul.f32 %v484, %v505
      %v518 = vmul.f32 %v485, %v505
      %v519 = vmul.f32 %v486, %v505
      %v520 = vmul.f32 %v487, %v505
      %v521 = vmul.f32 %v488, %v505
      %v522 = vmul.f32 %v489, %v505
      %v523 = vmul.f32 %v490, %v505
      %v524 = vmul.f32 %v491, %v505
      %v525 = vmul.f32 %v492, %v505
      %v526 = vmul.f32 %v493, %v505
      %v527 = vmul.f32 %v494, %v505
      %v528 = vmul.f32 %v495, %v505
      %v529 = vmul.f32 %v496, %v505
      %v530 = vmul.f32 %v497, %v505
      %v531 = vmul.f32 %v498, %v505
      %v532 = vmul.f32 %v499, %v505
      %v533 = vmul.f32 %v500, %v505
      %v534 = vmul.f32 %v501, %v505
      %v535 = vmul.f32 %v502, %v505
      %v536 = vmul.f32 %v503, %v505
      %v537 = vmul.f32 %v504, %v505
      %v538 = vadd.f32 %v506, 0.0
      %v539 = vadd.f32 %v507, 0.0
      %v540 = vadd.f32 %v508, 0.0
      %v541 = vadd.f32 %v509, 0.0
      %v542 = vadd.f32 %v510, 0.0
      %v543 = vadd.f32 %v511, 0.0
      %v544 = vadd.f32 %v512, 0.0
      %v545 = vadd.f32 %v513, 0.0
      %v546 = vadd.f32 %v514, 0.0
      %v547 = vadd.f32 %v515, 0.0
      %v548 = vadd.f32 %v516, 0.0
      %v549 = vadd.f32 %v517, 0.0
      %v550 = vadd.f32 %v518, 0.0
      %v551 = vadd.f32 %v519, 0.0
      %v552 = vadd.f32 %v520, 0.0
      %v553 = vadd.f32 %v521, 0.0
      %v554 = vadd.f32 %v522, 0.0
      %v555 = vadd.f32 %v523, 0.0
      %v556 = vadd.f32 %v524, 0.0
      %v557 = vadd.f32 %v525, 0.0
      %v558 = vadd.f32 %v526, 0.0
      %v559 = vadd.f32 %v527, 0.0
      %v560 = vadd.f32 %v528, 0.0
      %v561 = vadd.f32 %v529, 0.0
      %v562 = vadd.f32 %v530, 0.0
      %v563 = vadd.f32 %v531, 0.0
      %v564 = vadd.f32 %v532, 0.0
      %v565 = vadd.f32 %v533, 0.0
      %v566 = vadd.f32 %v534, 0.0
      %v567 = vadd.f32 %v535, 0.0
      %v568 = vadd.f32 %v536, 0.0
      %v569 = vadd.f32 %v537, 0.0
      %v570 = vld [vmem:[#allocation2 + $0x1] sm:$0xff]
      %v571 = vld [vmem:[#allocation2 + $0x9] sm:$0xff]
      %v572 = vld [vmem:[#allocation2 + $0x19] sm:$0xff]
      %v573 = vld [vmem:[#allocation2 + $0x21] sm:$0xff]
      %v574 = vld [vmem:[#allocation2 + $0x31] sm:$0xff]
      %v575 = vld [vmem:[#allocation2 + $0x39] sm:$0xff]
      %v576 = vld [vmem:[#allocation2 + $0x49] sm:$0xff]
      %v577 = vld [vmem:[#allocation2 + $0x51] sm:$0xff]
      %v578 = vld [vmem:[#allocation2 + $0x61] sm:$0xff]
      %v579 = vld [vmem:[#allocation2 + $0x69] sm:$0xff]
      %v580 = vld [vmem:[#allocation2 + $0x79] sm:$0xff]
      %v581 = vld [vmem:[#allocation2 + $0x81] sm:$0xff]
      %v582 = vld [vmem:[#allocation2 + $0x91] sm:$0xff]
      %v583 = vld [vmem:[#allocation2 + $0x99] sm:$0xff]
      %v584 = vld [vmem:[#allocation2 + $0xa9] sm:$0xff]
      %v585 = vld [vmem:[#allocation2 + $0xb1] sm:$0xff]
      %v586 = vld [vmem:[#allocation2 + $0xc1] sm:$0xff]
      %v587 = vld [vmem:[#allocation2 + $0xc9] sm:$0xff]
      %v588 = vld [vmem:[#allocation2 + $0xd9] sm:$0xff]
      %v589 = vld [vmem:[#allocation2 + $0xe1] sm:$0xff]
      %v590 = vld [vmem:[#allocation2 + $0xf1] sm:$0xff]
      %v591 = vld [vmem:[#allocation2 + $0xf9] sm:$0xff]
      %v592 = vld [vmem:[#allocation2 + $0x109] sm:$0xff]
      %v593 = vld [vmem:[#allocation2 + $0x111] sm:$0xff]
      %v594 = vld [vmem:[#allocation2 + $0x121] sm:$0xff]
      %v595 = vld [vmem:[#allocation2 + $0x129] sm:$0xff]
      %v596 = vld [vmem:[#allocation2 + $0x139] sm:$0xff]
      %v597 = vld [vmem:[#allocation2 + $0x141] sm:$0xff]
      %v598 = vld [vmem:[#allocation2 + $0x151] sm:$0xff]
      %v599 = vld [vmem:[#allocation2 + $0x159] sm:$0xff]
      %v600 = vld [vmem:[#allocation2 + $0x169] sm:$0xff]
      %v601 = vld [vmem:[#allocation2 + $0x171] sm:$0xff]
      %v602 = vperm.slane %v466, 1
      %v603 = vmul.f32 %v570, %v602
      %v604 = vmul.f32 %v571, %v602
      %v605 = vmul.f32 %v572, %v602
      %v606 = vmul.f32 %v573, %v602
      %v607 = vmul.f32 %v574, %v602
      %v608 = vmul.f32 %v575, %v602
      %v609 = vmul.f32 %v576, %v602
      %v610 = vmul.f32 %v577, %v602
      %v611 = vmul.f32 %v578, %v602
      %v612 = vmul.f32 %v579, %v602
      %v613 = vmul.f32 %v580, %v602
      %v614 = vmul.f32 %v581, %v602
      %v615 = vmul.f32 %v582, %v602
      %v616 = vmul.f32 %v583, %v602
      %v617 = vmul.f32 %v584, %v602
      %v618 = vmul.f32 %v585, %v602
      %v619 = vmul.f32 %v586, %v602
      %v620 = vmul.f32 %v587, %v602
      %v621 = vmul.f32 %v588, %v602
      %v622 = vmul.f32 %v589, %v602
      %v623 = vmul.f32 %v590, %v602
      %v624 = vmul.f32 %v591, %v602
      %v625 = vmul.f32 %v592, %v602
      %v626 = vmul.f32 %v593, %v602
      %v627 = vmul.f32 %v594, %v602
      %v628 = vmul.f32 %v595, %v602
      %v629 = vmul.f32 %v596, %v602
      %v630 = vmul.f32 %v597, %v602
      %v631 = vmul.f32 %v598, %v602
      %v632 = vmul.f32 %v599, %v602
      %v633 = vmul.f32 %v600, %v602
      %v634 = vmul.f32 %v601, %v602
      %v635 = vadd.f32 %v538, %v603
      %v636 = vadd.f32 %v539, %v604
      %v637 = vadd.f32 %v540, %v605
      %v638 = vadd.f32 %v541, %v606
      %v639 = vadd.f32 %v542, %v607
      %v640 = vadd.f32 %v543, %v608
      %v641 = vadd.f32 %v544, %v609
      %v642 = vadd.f32 %v545, %v610
      %v643 = vadd.f32 %v546, %v611
      %v644 = vadd.f32 %v547, %v612
      %v645 = vadd.f32 %v548, %v613
      %v646 = vadd.f32 %v549, %v614
      %v647 = vadd.f32 %v550, %v615
      %v648 = vadd.f32 %v551, %v616
      %v649 = vadd.f32 %v552, %v617
      %v650 = vadd.f32 %v553, %v618
      %v651 = vadd.f32 %v554, %v619
      %v652 = vadd.f32 %v555, %v620
      %v653 = vadd.f32 %v556, %v621
      %v654 = vadd.f32 %v557, %v622
      %v655 = vadd.f32 %v558, %v623
      %v656 = vadd.f32 %v559, %v624
      %v657 = vadd.f32 %v560, %v625
      %v658 = vadd.f32 %v561, %v626
      %v659 = vadd.f32 %v562, %v627
      %v660 = vadd.f32 %v563, %v628
      %v661 = vadd.f32 %v564, %v629
      %v662 = vadd.f32 %v565, %v630
      %v663 = vadd.f32 %v566, %v631
      %v664 = vadd.f32 %v567, %v632
      %v665 = vadd.f32 %v568, %v633
      %v666 = vadd.f32 %v569, %v634
      %v667 = vld [vmem:[#allocation2 + $0x2] sm:$0xff]
      %v668 = vld [vmem:[#allocation2 + $0xa] sm:$0xff]
      %v669 = vld [vmem:[#allocation2 + $0x1a] sm:$0xff]
      %v670 = vld [vmem:[#allocation2 + $0x22] sm:$0xff]
      %v671 = vld [vmem:[#allocation2 + $0x32] sm:$0xff]
      %v672 = vld [vmem:[#allocation2 + $0x3a] sm:$0xff]
      %v673 = vld [vmem:[#allocation2 + $0x4a] sm:$0xff]
      %v674 = vld [vmem:[#allocation2 + $0x52] sm:$0xff]
      %v675 = vld [vmem:[#allocation2 + $0x62] sm:$0xff]
      %v676 = vld [vmem:[#allocation2 + $0x6a] sm:$0xff]
      %v677 = vld [vmem:[#allocation2 + $0x7a] sm:$0xff]
      %v678 = vld [vmem:[#allocation2 + $0x82] sm:$0xff]
      %v679 = vld [vmem:[#allocation2 + $0x92] sm:$0xff]
      %v680 = vld [vmem:[#allocation2 + $0x9a] sm:$0xff]
      %v681 = vld [vmem:[#allocation2 + $0xaa] sm:$0xff]
      %v682 = vld [vmem:[#allocation2 + $0xb2] sm:$0xff]
      %v683 = vld [vmem:[#allocation2 + $0xc2] sm:$0xff]
      %v684 = vld [vmem:[#allocation2 + $0xca] sm:$0xff]
      %v685 = vld [vmem:[#allocation2 + $0xda] sm:$0xff]
      %v686 = vld [vmem:[#allocation2 + $0xe2] sm:$0xff]
      %v687 = vld [vmem:[#allocation2 + $0xf2] sm:$0xff]
      %v688 = vld [vmem:[#allocation2 + $0xfa] sm:$0xff]
      %v689 = vld [vmem:[#allocation2 + $0x10a] sm:$0xff]
      %v690 = vld [vmem:[#allocation2 + $0x112] sm:$0xff]
      %v691 = vld [vmem:[#allocation2 + $0x122] sm:$0xff]
      %v692 = vld [vmem:[#allocation2 + $0x12a] sm:$0xff]
      %v693 = vld [vmem:[#allocation2 + $0x13a] sm:$0xff]
      %v694 = vld [vmem:[#allocation2 + $0x142] sm:$0xff]
      %v695 = vld [vmem:[#allocation2 + $0x152] sm:$0xff]
      %v696 = vld [vmem:[#allocation2 + $0x15a] sm:$0xff]
      %v697 = vld [vmem:[#allocation2 + $0x16a] sm:$0xff]
      %v698 = vld [vmem:[#allocation2 + $0x172] sm:$0xff]
      %v699 = vperm.slane %v466, 2
      %v700 = vmul.f32 %v667, %v699
      %v701 = vmul.f32 %v668, %v699
      %v702 = vmul.f32 %v669, %v699
      %v703 = vmul.f32 %v670, %v699
      %v704 = vmul.f32 %v671, %v699
      %v705 = vmul.f32 %v672, %v699
      %v706 = vmul.f32 %v673, %v699
      %v707 = vmul.f32 %v674, %v699
      %v708 = vmul.f32 %v675, %v699
      %v709 = vmul.f32 %v676, %v699
      %v710 = vmul.f32 %v677, %v699
      %v711 = vmul.f32 %v678, %v699
      %v712 = vmul.f32 %v679, %v699
      %v713 = vmul.f32 %v680, %v699
      %v714 = vmul.f32 %v681, %v699
      %v715 = vmul.f32 %v682, %v699
      %v716 = vmul.f32 %v683, %v699
      %v717 = vmul.f32 %v684, %v699
      %v718 = vmul.f32 %v685, %v699
      %v719 = vmul.f32 %v686, %v699
      %v720 = vmul.f32 %v687, %v699
      %v721 = vmul.f32 %v688, %v699
      %v722 = vmul.f32 %v689, %v699
      %v723 = vmul.f32 %v690, %v699
      %v724 = vmul.f32 %v691, %v699
      %v725 = vmul.f32 %v692, %v699
      %v726 = vmul.f32 %v693, %v699
      %v727 = vmul.f32 %v694, %v699
      %v728 = vmul.f32 %v695, %v699
      %v729 = vmul.f32 %v696, %v699
      %v730 = vmul.f32 %v697, %v699
      %v731 = vmul.f32 %v698, %v699
      %v732 = vadd.f32 %v635, %v700
      %v733 = vadd.f32 %v636, %v701
      %v734 = vadd.f32 %v637, %v702
      %v735 = vadd.f32 %v638, %v703
      %v736 = vadd.f32 %v639, %v704
      %v737 = vadd.f32 %v640, %v705
      %v738 = vadd.f32 %v641, %v706
      %v739 = vadd.f32 %v642, %v707
      %v740 = vadd.f32 %v643, %v708
      %v741 = vadd.f32 %v644, %v709
      %v742 = vadd.f32 %v645, %v710
      %v743 = vadd.f32 %v646, %v711
      %v744 = vadd.f32 %v647, %v712
      %v745 = vadd.f32 %v648, %v713
      %v746 = vadd.f32 %v649, %v714
      %v747 = vadd.f32 %v650, %v715
      %v748 = vadd.f32 %v651, %v716
      %v749 = vadd.f32 %v652, %v717
      %v750 = vadd.f32 %v653, %v718
      %v751 = vadd.f32 %v654, %v719
      %v752 = vadd.f32 %v655, %v720
      %v753 = vadd.f32 %v656, %v721
      %v754 = vadd.f32 %v657, %v722
      %v755 = vadd.f32 %v658, %v723
      %v756 = vadd.f32 %v659, %v724
      %v757 = vadd.f32 %v660, %v725
      %v758 = vadd.f32 %v661, %v726
      %v759 = vadd.f32 %v662, %v727
      %v760 = vadd.f32 %v663, %v728
      %v761 = vadd.f32 %v664, %v729
      %v762 = vadd.f32 %v665, %v730
      %v763 = vadd.f32 %v666, %v731
      %v764 = vld [vmem:[#allocation2 + $0x3] sm:$0xff]
      %v765 = vld [vmem:[#allocation2 + $0xb] sm:$0xff]
      %v766 = vld [vmem:[#allocation2 + $0x1b] sm:$0xff]
      %v767 = vld [vmem:[#allocation2 + $0x23] sm:$0xff]
      %v768 = vld [vmem:[#allocation2 + $0x33] sm:$0xff]
      %v769 = vld [vmem:[#allocation2 + $0x3b] sm:$0xff]
      %v770 = vld [vmem:[#allocation2 + $0x4b] sm:$0xff]
      %v771 = vld [vmem:[#allocation2 + $0x53] sm:$0xff]
      %v772 = vld [vmem:[#allocation2 + $0x63] sm:$0xff]
      %v773 = vld [vmem:[#allocation2 + $0x6b] sm:$0xff]
      %v774 = vld [vmem:[#allocation2 + $0x7b] sm:$0xff]
      %v775 = vld [vmem:[#allocation2 + $0x83] sm:$0xff]
      %v776 = vld [vmem:[#allocation2 + $0x93] sm:$0xff]
      %v777 = vld [vmem:[#allocation2 + $0x9b] sm:$0xff]
      %v778 = vld [vmem:[#allocation2 + $0xab] sm:$0xff]
      %v779 = vld [vmem:[#allocation2 + $0xb3] sm:$0xff]
      %v780 = vld [vmem:[#allocation2 + $0xc3] sm:$0xff]
      %v781 = vld [vmem:[#allocation2 + $0xcb] sm:$0xff]
      %v782 = vld [vmem:[#allocation2 + $0xdb] sm:$0xff]
      %v783 = vld [vmem:[#allocation2 + $0xe3] sm:$0xff]
      %v784 = vld [vmem:[#allocation2 + $0xf3] sm:$0xff]
      %v785 = vld [vmem:[#allocation2 + $0xfb] sm:$0xff]
      %v786 = vld [vmem:[#allocation2 + $0x10b] sm:$0xff]
      %v787 = vld [vmem:[#allocation2 + $0x113] sm:$0xff]
      %v788 = vld [vmem:[#allocation2 + $0x123] sm:$0xff]
      %v789 = vld [vmem:[#allocation2 + $0x12b] sm:$0xff]
      %v790 = vld [vmem:[#allocation2 + $0x13b] sm:$0xff]
      %v791 = vld [vmem:[#allocation2 + $0x143] sm:$0xff]
      %v792 = vld [vmem:[#allocation2 + $0x153] sm:$0xff]
      %v793 = vld [vmem:[#allocation2 + $0x15b] sm:$0xff]
      %v794 = vld [vmem:[#allocation2 + $0x16b] sm:$0xff]
      %v795 = vld [vmem:[#allocation2 + $0x173] sm:$0xff]
      %v796 = vperm.slane %v466, 3
      %v797 = vmul.f32 %v764, %v796
      %v798 = vmul.f32 %v765, %v796
      %v799 = vmul.f32 %v766, %v796
      %v800 = vmul.f32 %v767, %v796
      %v801 = vmul.f32 %v768, %v796
      %v802 = vmul.f32 %v769, %v796
      %v803 = vmul.f32 %v770, %v796
      %v804 = vmul.f32 %v771, %v796
      %v805 = vmul.f32 %v772, %v796
      %v806 = vmul.f32 %v773, %v796
      %v807 = vmul.f32 %v774, %v796
      %v808 = vmul.f32 %v775, %v796
      %v809 = vmul.f32 %v776, %v796
      %v810 = vmul.f32 %v777, %v796
      %v811 = vmul.f32 %v778, %v796
      %v812 = vmul.f32 %v779, %v796
      %v813 = vmul.f32 %v780, %v796
      %v814 = vmul.f32 %v781, %v796
      %v815 = vmul.f32 %v782, %v796
      %v816 = vmul.f32 %v783, %v796
      %v817 = vmul.f32 %v784, %v796
      %v818 = vmul.f32 %v785, %v796
      %v819 = vmul.f32 %v786, %v796
      %v820 = vmul.f32 %v787, %v796
      %v821 = vmul.f32 %v788, %v796
      %v822 = vmul.f32 %v789, %v796
      %v823 = vmul.f32 %v790, %v796
      %v824 = vmul.f32 %v791, %v796
      %v825 = vmul.f32 %v792, %v796
      %v826 = vmul.f32 %v793, %v796
      %v827 = vmul.f32 %v794, %v796
      %v828 = vmul.f32 %v795, %v796
      %v829 = vadd.f32 %v732, %v797
      %v830 = vadd.f32 %v733, %v798
      %v831 = vadd.f32 %v734, %v799
      %v832 = vadd.f32 %v735, %v800
      %v833 = vadd.f32 %v736, %v801
      %v834 = vadd.f32 %v737, %v802
      %v835 = vadd.f32 %v738, %v803
      %v836 = vadd.f32 %v739, %v804
      %v837 = vadd.f32 %v740, %v805
      %v838 = vadd.f32 %v741, %v806
      %v839 = vadd.f32 %v742, %v807
      %v840 = vadd.f32 %v743, %v808
      %v841 = vadd.f32 %v744, %v809
      %v842 = vadd.f32 %v745, %v810
      %v843 = vadd.f32 %v746, %v811
      %v844 = vadd.f32 %v747, %v812
      %v845 = vadd.f32 %v748, %v813
      %v846 = vadd.f32 %v749, %v814
      %v847 = vadd.f32 %v750, %v815
      %v848 = vadd.f32 %v751, %v816
      %v849 = vadd.f32 %v752, %v817
      %v850 = vadd.f32 %v753, %v818
      %v851 = vadd.f32 %v754, %v819
      %v852 = vadd.f32 %v755, %v820
      %v853 = vadd.f32 %v756, %v821
      %v854 = vadd.f32 %v757, %v822
      %v855 = vadd.f32 %v758, %v823
      %v856 = vadd.f32 %v759, %v824
      %v857 = vadd.f32 %v760, %v825
      %v858 = vadd.f32 %v761, %v826
      %v859 = vadd.f32 %v762, %v827
      %v860 = vadd.f32 %v763, %v828
      %v861 = vld [vmem:[#allocation2 + $0x4] sm:$0xff]
      %v862 = vld [vmem:[#allocation2 + $0xc] sm:$0xff]
      %v863 = vld [vmem:[#allocation2 + $0x1c] sm:$0xff]
      %v864 = vld [vmem:[#allocation2 + $0x24] sm:$0xff]
      %v865 = vld [vmem:[#allocation2 + $0x34] sm:$0xff]
      %v866 = vld [vmem:[#allocation2 + $0x3c] sm:$0xff]
      %v867 = vld [vmem:[#allocation2 + $0x4c] sm:$0xff]
      %v868 = vld [vmem:[#allocation2 + $0x54] sm:$0xff]
      %v869 = vld [vmem:[#allocation2 + $0x64] sm:$0xff]
      %v870 = vld [vmem:[#allocation2 + $0x6c] sm:$0xff]
      %v871 = vld [vmem:[#allocation2 + $0x7c] sm:$0xff]
      %v872 = vld [vmem:[#allocation2 + $0x84] sm:$0xff]
      %v873 = vld [vmem:[#allocation2 + $0x94] sm:$0xff]
      %v874 = vld [vmem:[#allocation2 + $0x9c] sm:$0xff]
      %v875 = vld [vmem:[#allocation2 + $0xac] sm:$0xff]
      %v876 = vld [vmem:[#allocation2 + $0xb4] sm:$0xff]
      %v877 = vld [vmem:[#allocation2 + $0xc4] sm:$0xff]
      %v878 = vld [vmem:[#allocation2 + $0xcc] sm:$0xff]
      %v879 = vld [vmem:[#allocation2 + $0xdc] sm:$0xff]
      %v880 = vld [vmem:[#allocation2 + $0xe4] sm:$0xff]
      %v881 = vld [vmem:[#allocation2 + $0xf4] sm:$0xff]
      %v882 = vld [vmem:[#allocation2 + $0xfc] sm:$0xff]
      %v883 = vld [vmem:[#allocation2 + $0x10c] sm:$0xff]
      %v884 = vld [vmem:[#allocation2 + $0x114] sm:$0xff]
      %v885 = vld [vmem:[#allocation2 + $0x124] sm:$0xff]
      %v886 = vld [vmem:[#allocation2 + $0x12c] sm:$0xff]
      %v887 = vld [vmem:[#allocation2 + $0x13c] sm:$0xff]
      %v888 = vld [vmem:[#allocation2 + $0x144] sm:$0xff]
      %v889 = vld [vmem:[#allocation2 + $0x154] sm:$0xff]
      %v890 = vld [vmem:[#allocation2 + $0x15c] sm:$0xff]
      %v891 = vld [vmem:[#allocation2 + $0x16c] sm:$0xff]
      %v892 = vld [vmem:[#allocation2 + $0x174] sm:$0xff]
      %v893 = vperm.slane %v466, 4
      %v894 = vmul.f32 %v861, %v893
      %v895 = vmul.f32 %v862, %v893
      %v896 = vmul.f32 %v863, %v893
      %v897 = vmul.f32 %v864, %v893
      %v898 = vmul.f32 %v865, %v893
      %v899 = vmul.f32 %v866, %v893
      %v900 = vmul.f32 %v867, %v893
      %v901 = vmul.f32 %v868, %v893
      %v902 = vmul.f32 %v869, %v893
      %v903 = vmul.f32 %v870, %v893
      %v904 = vmul.f32 %v871, %v893
      %v905 = vmul.f32 %v872, %v893
      %v906 = vmul.f32 %v873, %v893
      %v907 = vmul.f32 %v874, %v893
      %v908 = vmul.f32 %v875, %v893
      %v909 = vmul.f32 %v876, %v893
      %v910 = vmul.f32 %v877, %v893
      %v911 = vmul.f32 %v878, %v893
      %v912 = vmul.f32 %v879, %v893
      %v913 = vmul.f32 %v880, %v893
      %v914 = vmul.f32 %v881, %v893
      %v915 = vmul.f32 %v882, %v893
      %v916 = vmul.f32 %v883, %v893
      %v917 = vmul.f32 %v884, %v893
      %v918 = vmul.f32 %v885, %v893
      %v919 = vmul.f32 %v886, %v893
      %v920 = vmul.f32 %v887, %v893
      %v921 = vmul.f32 %v888, %v893
      %v922 = vmul.f32 %v889, %v893
      %v923 = vmul.f32 %v890, %v893
      %v924 = vmul.f32 %v891, %v893
      %v925 = vmul.f32 %v892, %v893
      %v926 = vadd.f32 %v829, %v894
      %v927 = vadd.f32 %v830, %v895
      %v928 = vadd.f32 %v831, %v896
      %v929 = vadd.f32 %v832, %v897
      %v930 = vadd.f32 %v833, %v898
      %v931 = vadd.f32 %v834, %v899
      %v932 = vadd.f32 %v835, %v900
      %v933 = vadd.f32 %v836, %v901
      %v934 = vadd.f32 %v837, %v902
      %v935 = vadd.f32 %v838, %v903
      %v936 = vadd.f32 %v839, %v904
      %v937 = vadd.f32 %v840, %v905
      %v938 = vadd.f32 %v841, %v906
      %v939 = vadd.f32 %v842, %v907
      %v940 = vadd.f32 %v843, %v908
      %v941 = vadd.f32 %v844, %v909
      %v942 = vadd.f32 %v845, %v910
      %v943 = vadd.f32 %v846, %v911
      %v944 = vadd.f32 %v847, %v912
      %v945 = vadd.f32 %v848, %v913
      %v946 = vadd.f32 %v849, %v914
      %v947 = vadd.f32 %v850, %v915
      %v948 = vadd.f32 %v851, %v916
      %v949 = vadd.f32 %v852, %v917
      %v950 = vadd.f32 %v853, %v918
      %v951 = vadd.f32 %v854, %v919
      %v952 = vadd.f32 %v855, %v920
      %v953 = vadd.f32 %v856, %v921
      %v954 = vadd.f32 %v857, %v922
      %v955 = vadd.f32 %v858, %v923
      %v956 = vadd.f32 %v859, %v924
      %v957 = vadd.f32 %v860, %v925
      %v958 = vld [vmem:[#allocation2 + $0x5] sm:$0xff]
      %v959 = vld [vmem:[#allocation2 + $0xd] sm:$0xff]
      %v960 = vld [vmem:[#allocation2 + $0x1d] sm:$0xff]
      %v961 = vld [vmem:[#allocation2 + $0x25] sm:$0xff]
      %v962 = vld [vmem:[#allocation2 + $0x35] sm:$0xff]
      %v963 = vld [vmem:[#allocation2 + $0x3d] sm:$0xff]
      %v964 = vld [vmem:[#allocation2 + $0x4d] sm:$0xff]
      %v965 = vld [vmem:[#allocation2 + $0x55] sm:$0xff]
      %v966 = vld [vmem:[#allocation2 + $0x65] sm:$0xff]
      %v967 = vld [vmem:[#allocation2 + $0x6d] sm:$0xff]
      %v968 = vld [vmem:[#allocation2 + $0x7d] sm:$0xff]
      %v969 = vld [vmem:[#allocation2 + $0x85] sm:$0xff]
      %v970 = vld [vmem:[#allocation2 + $0x95] sm:$0xff]
      %v971 = vld [vmem:[#allocation2 + $0x9d] sm:$0xff]
      %v972 = vld [vmem:[#allocation2 + $0xad] sm:$0xff]
      %v973 = vld [vmem:[#allocation2 + $0xb5] sm:$0xff]
      %v974 = vld [vmem:[#allocation2 + $0xc5] sm:$0xff]
      %v975 = vld [vmem:[#allocation2 + $0xcd] sm:$0xff]
      %v976 = vld [vmem:[#allocation2 + $0xdd] sm:$0xff]
      %v977 = vld [vmem:[#allocation2 + $0xe5] sm:$0xff]
      %v978 = vld [vmem:[#allocation2 + $0xf5] sm:$0xff]
      %v979 = vld [vmem:[#allocation2 + $0xfd] sm:$0xff]
      %v980 = vld [vmem:[#allocation2 + $0x10d] sm:$0xff]
      %v981 = vld [vmem:[#allocation2 + $0x115] sm:$0xff]
      %v982 = vld [vmem:[#allocation2 + $0x125] sm:$0xff]
      %v983 = vld [vmem:[#allocation2 + $0x12d] sm:$0xff]
      %v984 = vld [vmem:[#allocation2 + $0x13d] sm:$0xff]
      %v985 = vld [vmem:[#allocation2 + $0x145] sm:$0xff]
      %v986 = vld [vmem:[#allocation2 + $0x155] sm:$0xff]
      %v987 = vld [vmem:[#allocation2 + $0x15d] sm:$0xff]
      %v988 = vld [vmem:[#allocation2 + $0x16d] sm:$0xff]
      %v989 = vld [vmem:[#allocation2 + $0x175] sm:$0xff]
      %v990 = vperm.slane %v466, 5
      %v991 = vmul.f32 %v958, %v990
      %v992 = vmul.f32 %v959, %v990
      %v993 = vmul.f32 %v960, %v990
      %v994 = vmul.f32 %v961, %v990
      %v995 = vmul.f32 %v962, %v990
      %v996 = vmul.f32 %v963, %v990
      %v997 = vmul.f32 %v964, %v990
      %v998 = vmul.f32 %v965, %v990
      %v999 = vmul.f32 %v966, %v990
      %v1000 = vmul.f32 %v967, %v990
      %v1001 = vmul.f32 %v968, %v990
      %v1002 = vmul.f32 %v969, %v990
      %v1003 = vmul.f32 %v970, %v990
      %v1004 = vmul.f32 %v971, %v990
      %v1005 = vmul.f32 %v972, %v990
      %v1006 = vmul.f32 %v973, %v990
      %v1007 = vmul.f32 %v974, %v990
      %v1008 = vmul.f32 %v975, %v990
      %v1009 = vmul.f32 %v976, %v990
      %v1010 = vmul.f32 %v977, %v990
      %v1011 = vmul.f32 %v978, %v990
      %v1012 = vmul.f32 %v979, %v990
      %v1013 = vmul.f32 %v980, %v990
      %v1014 = vmul.f32 %v981, %v990
      %v1015 = vmul.f32 %v982, %v990
      %v1016 = vmul.f32 %v983, %v990
      %v1017 = vmul.f32 %v984, %v990
      %v1018 = vmul.f32 %v985, %v990
      %v1019 = vmul.f32 %v986, %v990
      %v1020 = vmul.f32 %v987, %v990
      %v1021 = vmul.f32 %v988, %v990
      %v1022 = vmul.f32 %v989, %v990
      %v1023 = vadd.f32 %v926, %v991
      %v1024 = vadd.f32 %v927, %v992
      %v1025 = vadd.f32 %v928, %v993
      %v1026 = vadd.f32 %v929, %v994
      %v1027 = vadd.f32 %v930, %v995
      %v1028 = vadd.f32 %v931, %v996
      %v1029 = vadd.f32 %v932, %v997
      %v1030 = vadd.f32 %v933, %v998
      %v1031 = vadd.f32 %v934, %v999
      %v1032 = vadd.f32 %v935, %v1000
      %v1033 = vadd.f32 %v936, %v1001
      %v1034 = vadd.f32 %v937, %v1002
      %v1035 = vadd.f32 %v938, %v1003
      %v1036 = vadd.f32 %v939, %v1004
      %v1037 = vadd.f32 %v940, %v1005
      %v1038 = vadd.f32 %v941, %v1006
      %v1039 = vadd.f32 %v942, %v1007
      %v1040 = vadd.f32 %v943, %v1008
      %v1041 = vadd.f32 %v944, %v1009
      %v1042 = vadd.f32 %v945, %v1010
      %v1043 = vadd.f32 %v946, %v1011
      %v1044 = vadd.f32 %v947, %v1012
      %v1045 = vadd.f32 %v948, %v1013
      %v1046 = vadd.f32 %v949, %v1014
      %v1047 = vadd.f32 %v950, %v1015
      %v1048 = vadd.f32 %v951, %v1016
      %v1049 = vadd.f32 %v952, %v1017
      %v1050 = vadd.f32 %v953, %v1018
      %v1051 = vadd.f32 %v954, %v1019
      %v1052 = vadd.f32 %v955, %v1020
      %v1053 = vadd.f32 %v956, %v1021
      %v1054 = vadd.f32 %v957, %v1022
      %v1055 = vld [vmem:[#allocation2 + $0x6] sm:$0xff]
      %v1056 = vld [vmem:[#allocation2 + $0xe] sm:$0xff]
      %v1057 = vld [vmem:[#allocation2 + $0x1e] sm:$0xff]
      %v1058 = vld [vmem:[#allocation2 + $0x26] sm:$0xff]
      %v1059 = vld [vmem:[#allocation2 + $0x36] sm:$0xff]
      %v1060 = vld [vmem:[#allocation2 + $0x3e] sm:$0xff]
      %v1061 = vld [vmem:[#allocation2 + $0x4e] sm:$0xff]
      %v1062 = vld [vmem:[#allocation2 + $0x56] sm:$0xff]
      %v1063 = vld [vmem:[#allocation2 + $0x66] sm:$0xff]
      %v1064 = vld [vmem:[#allocation2 + $0x6e] sm:$0xff]
      %v1065 = vld [vmem:[#allocation2 + $0x7e] sm:$0xff]
      %v1066 = vld [vmem:[#allocation2 + $0x86] sm:$0xff]
      %v1067 = vld [vmem:[#allocation2 + $0x96] sm:$0xff]
      %v1068 = vld [vmem:[#allocation2 + $0x9e] sm:$0xff]
      %v1069 = vld [vmem:[#allocation2 + $0xae] sm:$0xff]
      %v1070 = vld [vmem:[#allocation2 + $0xb6] sm:$0xff]
      %v1071 = vld [vmem:[#allocation2 + $0xc6] sm:$0xff]
      %v1072 = vld [vmem:[#allocation2 + $0xce] sm:$0xff]
      %v1073 = vld [vmem:[#allocation2 + $0xde] sm:$0xff]
      %v1074 = vld [vmem:[#allocation2 + $0xe6] sm:$0xff]
      %v1075 = vld [vmem:[#allocation2 + $0xf6] sm:$0xff]
      %v1076 = vld [vmem:[#allocation2 + $0xfe] sm:$0xff]
      %v1077 = vld [vmem:[#allocation2 + $0x10e] sm:$0xff]
      %v1078 = vld [vmem:[#allocation2 + $0x116] sm:$0xff]
      %v1079 = vld [vmem:[#allocation2 + $0x126] sm:$0xff]
      %v1080 = vld [vmem:[#allocation2 + $0x12e] sm:$0xff]
      %v1081 = vld [vmem:[#allocation2 + $0x13e] sm:$0xff]
      %v1082 = vld [vmem:[#allocation2 + $0x146] sm:$0xff]
      %v1083 = vld [vmem:[#allocation2 + $0x156] sm:$0xff]
      %v1084 = vld [vmem:[#allocation2 + $0x15e] sm:$0xff]
      %v1085 = vld [vmem:[#allocation2 + $0x16e] sm:$0xff]
      %v1086 = vld [vmem:[#allocation2 + $0x176] sm:$0xff]
      %v1087 = vperm.slane %v466, 6
      %v1088 = vmul.f32 %v1055, %v1087
      %v1089 = vmul.f32 %v1056, %v1087
      %v1090 = vmul.f32 %v1057, %v1087
      %v1091 = vmul.f32 %v1058, %v1087
      %v1092 = vmul.f32 %v1059, %v1087
      %v1093 = vmul.f32 %v1060, %v1087
      %v1094 = vmul.f32 %v1061, %v1087
      %v1095 = vmul.f32 %v1062, %v1087
      %v1096 = vmul.f32 %v1063, %v1087
      %v1097 = vmul.f32 %v1064, %v1087
      %v1098 = vmul.f32 %v1065, %v1087
      %v1099 = vmul.f32 %v1066, %v1087
      %v1100 = vmul.f32 %v1067, %v1087
      %v1101 = vmul.f32 %v1068, %v1087
      %v1102 = vmul.f32 %v1069, %v1087
      %v1103 = vmul.f32 %v1070, %v1087
      %v1104 = vmul.f32 %v1071, %v1087
      %v1105 = vmul.f32 %v1072, %v1087
      %v1106 = vmul.f32 %v1073, %v1087
      %v1107 = vmul.f32 %v1074, %v1087
      %v1108 = vmul.f32 %v1075, %v1087
      %v1109 = vmul.f32 %v1076, %v1087
      %v1110 = vmul.f32 %v1077, %v1087
      %v1111 = vmul.f32 %v1078, %v1087
      %v1112 = vmul.f32 %v1079, %v1087
      %v1113 = vmul.f32 %v1080, %v1087
      %v1114 = vmul.f32 %v1081, %v1087
      %v1115 = vmul.f32 %v1082, %v1087
      %v1116 = vmul.f32 %v1083, %v1087
      %v1117 = vmul.f32 %v1084, %v1087
      %v1118 = vmul.f32 %v1085, %v1087
      %v1119 = vmul.f32 %v1086, %v1087
      %v1120 = vadd.f32 %v1023, %v1088
      %v1121 = vadd.f32 %v1024, %v1089
      %v1122 = vadd.f32 %v1025, %v1090
      %v1123 = vadd.f32 %v1026, %v1091
      %v1124 = vadd.f32 %v1027, %v1092
      %v1125 = vadd.f32 %v1028, %v1093
      %v1126 = vadd.f32 %v1029, %v1094
      %v1127 = vadd.f32 %v1030, %v1095
      %v1128 = vadd.f32 %v1031, %v1096
      %v1129 = vadd.f32 %v1032, %v1097
      %v1130 = vadd.f32 %v1033, %v1098
      %v1131 = vadd.f32 %v1034, %v1099
      %v1132 = vadd.f32 %v1035, %v1100
      %v1133 = vadd.f32 %v1036, %v1101
      %v1134 = vadd.f32 %v1037, %v1102
      %v1135 = vadd.f32 %v1038, %v1103
      %v1136 = vadd.f32 %v1039, %v1104
      %v1137 = vadd.f32 %v1040, %v1105
      %v1138 = vadd.f32 %v1041, %v1106
      %v1139 = vadd.f32 %v1042, %v1107
      %v1140 = vadd.f32 %v1043, %v1108
      %v1141 = vadd.f32 %v1044, %v1109
      %v1142 = vadd.f32 %v1045, %v1110
      %v1143 = vadd.f32 %v1046, %v1111
      %v1144 = vadd.f32 %v1047, %v1112
      %v1145 = vadd.f32 %v1048, %v1113
      %v1146 = vadd.f32 %v1049, %v1114
      %v1147 = vadd.f32 %v1050, %v1115
      %v1148 = vadd.f32 %v1051, %v1116
      %v1149 = vadd.f32 %v1052, %v1117
      %v1150 = vadd.f32 %v1053, %v1118
      %v1151 = vadd.f32 %v1054, %v1119
      %s1152 = scalar_lea.vmem [#allocation2], 24
      %v1153 = vld [vmem:[%s1152] sm:$0xff]
      %v1154 = vld [vmem:[%s1152 + $0x8] sm:$0xff]
      %v1155 = vld [vmem:[%s1152 + $0x18] sm:$0xff]
      %v1156 = vld [vmem:[%s1152 + $0x20] sm:$0xff]
      %v1157 = vld [vmem:[%s1152 + $0x30] sm:$0xff]
      %v1158 = vld [vmem:[%s1152 + $0x38] sm:$0xff]
      %v1159 = vld [vmem:[%s1152 + $0x48] sm:$0xff]
      %v1160 = vld [vmem:[%s1152 + $0x50] sm:$0xff]
      %v1161 = vld [vmem:[%s1152 + $0x60] sm:$0xff]
      %v1162 = vld [vmem:[%s1152 + $0x68] sm:$0xff]
      %v1163 = vld [vmem:[%s1152 + $0x78] sm:$0xff]
      %v1164 = vld [vmem:[%s1152 + $0x80] sm:$0xff]
      %v1165 = vld [vmem:[%s1152 + $0x90] sm:$0xff]
      %v1166 = vld [vmem:[%s1152 + $0x98] sm:$0xff]
      %v1167 = vld [vmem:[%s1152 + $0xa8] sm:$0xff]
      %v1168 = vld [vmem:[%s1152 + $0xb0] sm:$0xff]
      %v1169 = vld [vmem:[%s1152 + $0xc0] sm:$0xff]
      %v1170 = vld [vmem:[%s1152 + $0xc8] sm:$0xff]
      %v1171 = vld [vmem:[%s1152 + $0xd8] sm:$0xff]
      %v1172 = vld [vmem:[%s1152 + $0xe0] sm:$0xff]
      %v1173 = vld [vmem:[%s1152 + $0xf0] sm:$0xff]
      %v1174 = vld [vmem:[%s1152 + $0xf8] sm:$0xff]
      %v1175 = vld [vmem:[%s1152 + $0x108] sm:$0xff]
      %v1176 = vld [vmem:[%s1152 + $0x110] sm:$0xff]
      %v1177 = vld [vmem:[%s1152 + $0x120] sm:$0xff]
      %v1178 = vld [vmem:[%s1152 + $0x128] sm:$0xff]
      %v1179 = vld [vmem:[%s1152 + $0x138] sm:$0xff]
      %v1180 = vld [vmem:[%s1152 + $0x140] sm:$0xff]
      %v1181 = vld [vmem:[%s1152 + $0x150] sm:$0xff]
      %v1182 = vld [vmem:[%s1152 + $0x158] sm:$0xff]
      %v1183 = vld [vmem:[%s1152 + $0x168] sm:$0xff]
      %v1184 = vld [vmem:[%s1152 + $0x170] sm:$0xff]
      %v1185 = vperm.slane %v466, 7
      %v1186 = vmul.f32 %v1153, %v1185
      %v1187 = vmul.f32 %v1154, %v1185
      %v1188 = vmul.f32 %v1155, %v1185
      %v1189 = vmul.f32 %v1156, %v1185
      %v1190 = vmul.f32 %v1157, %v1185
      %v1191 = vmul.f32 %v1158, %v1185
      %v1192 = vmul.f32 %v1159, %v1185
      %v1193 = vmul.f32 %v1160, %v1185
      %v1194 = vmul.f32 %v1161, %v1185
      %v1195 = vmul.f32 %v1162, %v1185
      %v1196 = vmul.f32 %v1163, %v1185
      %v1197 = vmul.f32 %v1164, %v1185
      %v1198 = vmul.f32 %v1165, %v1185
      %v1199 = vmul.f32 %v1166, %v1185
      %v1200 = vmul.f32 %v1167, %v1185
      %v1201 = vmul.f32 %v1168, %v1185
      %v1202 = vmul.f32 %v1169, %v1185
      %v1203 = vmul.f32 %v1170, %v1185
      %v1204 = vmul.f32 %v1171, %v1185
      %v1205 = vmul.f32 %v1172, %v1185
      %v1206 = vmul.f32 %v1173, %v1185
      %v1207 = vmul.f32 %v1174, %v1185
      %v1208 = vmul.f32 %v1175, %v1185
      %v1209 = vmul.f32 %v1176, %v1185
      %v1210 = vmul.f32 %v1177, %v1185
      %v1211 = vmul.f32 %v1178, %v1185
      %v1212 = vmul.f32 %v1179, %v1185
      %v1213 = vmul.f32 %v1180, %v1185
      %v1214 = vmul.f32 %v1181, %v1185
      %v1215 = vmul.f32 %v1182, %v1185
      %v1216 = vmul.f32 %v1183, %v1185
      %v1217 = vmul.f32 %v1184, %v1185
      %v1218 = vadd.f32 %v1120, %v1186
      %v1219 = vadd.f32 %v1121, %v1187
      %v1220 = vadd.f32 %v1122, %v1188
      %v1221 = vadd.f32 %v1123, %v1189
      %v1222 = vadd.f32 %v1124, %v1190
      %v1223 = vadd.f32 %v1125, %v1191
      %v1224 = vadd.f32 %v1126, %v1192
      %v1225 = vadd.f32 %v1127, %v1193
      %v1226 = vadd.f32 %v1128, %v1194
      %v1227 = vadd.f32 %v1129, %v1195
      %v1228 = vadd.f32 %v1130, %v1196
      %v1229 = vadd.f32 %v1131, %v1197
      %v1230 = vadd.f32 %v1132, %v1198
      %v1231 = vadd.f32 %v1133, %v1199
      %v1232 = vadd.f32 %v1134, %v1200
      %v1233 = vadd.f32 %v1135, %v1201
      %v1234 = vadd.f32 %v1136, %v1202
      %v1235 = vadd.f32 %v1137, %v1203
      %v1236 = vadd.f32 %v1138, %v1204
      %v1237 = vadd.f32 %v1139, %v1205
      %v1238 = vadd.f32 %v1140, %v1206
      %v1239 = vadd.f32 %v1141, %v1207
      %v1240 = vadd.f32 %v1142, %v1208
      %v1241 = vadd.f32 %v1143, %v1209
      %v1242 = vadd.f32 %v1144, %v1210
      %v1243 = vadd.f32 %v1145, %v1211
      %v1244 = vadd.f32 %v1146, %v1212
      %v1245 = vadd.f32 %v1147, %v1213
      %v1246 = vadd.f32 %v1148, %v1214
      %v1247 = vadd.f32 %v1149, %v1215
      %v1248 = vadd.f32 %v1150, %v1216
      %v1249 = vadd.f32 %v1151, %v1217
      %v1250 = vld [vmem:[%s1152 + $0x1] sm:$0xff]
      %v1251 = vld [vmem:[%s1152 + $0x9] sm:$0xff]
      %v1252 = vld [vmem:[%s1152 + $0x19] sm:$0xff]
      %v1253 = vld [vmem:[%s1152 + $0x21] sm:$0xff]
      %v1254 = vld [vmem:[%s1152 + $0x31] sm:$0xff]
      %v1255 = vld [vmem:[%s1152 + $0x39] sm:$0xff]
      %v1256 = vld [vmem:[%s1152 + $0x49] sm:$0xff]
      %v1257 = vld [vmem:[%s1152 + $0x51] sm:$0xff]
      %v1258 = vld [vmem:[%s1152 + $0x61] sm:$0xff]
      %v1259 = vld [vmem:[%s1152 + $0x69] sm:$0xff]
      %v1260 = vld [vmem:[%s1152 + $0x79] sm:$0xff]
      %v1261 = vld [vmem:[%s1152 + $0x81] sm:$0xff]
      %v1262 = vld [vmem:[%s1152 + $0x91] sm:$0xff]
      %v1263 = vld [vmem:[%s1152 + $0x99] sm:$0xff]
      %v1264 = vld [vmem:[%s1152 + $0xa9] sm:$0xff]
      %v1265 = vld [vmem:[%s1152 + $0xb1] sm:$0xff]
      %v1266 = vld [vmem:[%s1152 + $0xc1] sm:$0xff]
      %v1267 = vld [vmem:[%s1152 + $0xc9] sm:$0xff]
      %v1268 = vld [vmem:[%s1152 + $0xd9] sm:$0xff]
      %v1269 = vld [vmem:[%s1152 + $0xe1] sm:$0xff]
      %v1270 = vld [vmem:[%s1152 + $0xf1] sm:$0xff]
      %v1271 = vld [vmem:[%s1152 + $0xf9] sm:$0xff]
      %v1272 = vld [vmem:[%s1152 + $0x109] sm:$0xff]
      %v1273 = vld [vmem:[%s1152 + $0x111] sm:$0xff]
      %v1274 = vld [vmem:[%s1152 + $0x121] sm:$0xff]
      %v1275 = vld [vmem:[%s1152 + $0x129] sm:$0xff]
      %v1276 = vld [vmem:[%s1152 + $0x139] sm:$0xff]
      %v1277 = vld [vmem:[%s1152 + $0x141] sm:$0xff]
      %v1278 = vld [vmem:[%s1152 + $0x151] sm:$0xff]
      %v1279 = vld [vmem:[%s1152 + $0x159] sm:$0xff]
      %v1280 = vld [vmem:[%s1152 + $0x169] sm:$0xff]
      %v1281 = vld [vmem:[%s1152 + $0x171] sm:$0xff]
      %v1282 = vperm.slane %v467, 0
      %v1283 = vmul.f32 %v1250, %v1282
      %v1284 = vmul.f32 %v1251, %v1282
      %v1285 = vmul.f32 %v1252, %v1282
      %v1286 = vmul.f32 %v1253, %v1282
      %v1287 = vmul.f32 %v1254, %v1282
      %v1288 = vmul.f32 %v1255, %v1282
      %v1289 = vmul.f32 %v1256, %v1282
      %v1290 = vmul.f32 %v1257, %v1282
      %v1291 = vmul.f32 %v1258, %v1282
      %v1292 = vmul.f32 %v1259, %v1282
      %v1293 = vmul.f32 %v1260, %v1282
      %v1294 = vmul.f32 %v1261, %v1282
      %v1295 = vmul.f32 %v1262, %v1282
      %v1296 = vmul.f32 %v1263, %v1282
      %v1297 = vmul.f32 %v1264, %v1282
      %v1298 = vmul.f32 %v1265, %v1282
      %v1299 = vmul.f32 %v1266, %v1282
      %v1300 = vmul.f32 %v1267, %v1282
      %v1301 = vmul.f32 %v1268, %v1282
      %v1302 = vmul.f32 %v1269, %v1282
      %v1303 = vmul.f32 %v1270, %v1282
      %v1304 = vmul.f32 %v1271, %v1282
      %v1305 = vmul.f32 %v1272, %v1282
      %v1306 = vmul.f32 %v1273, %v1282
      %v1307 = vmul.f32 %v1274, %v1282
      %v1308 = vmul.f32 %v1275, %v1282
      %v1309 = vmul.f32 %v1276, %v1282
      %v1310 = vmul.f32 %v1277, %v1282
      %v1311 = vmul.f32 %v1278, %v1282
      %v1312 = vmul.f32 %v1279, %v1282
      %v1313 = vmul.f32 %v1280, %v1282
      %v1314 = vmul.f32 %v1281, %v1282
      %v1315 = vadd.f32 %v1218, %v1283
      %v1316 = vadd.f32 %v1219, %v1284
      %v1317 = vadd.f32 %v1220, %v1285
      %v1318 = vadd.f32 %v1221, %v1286
      %v1319 = vadd.f32 %v1222, %v1287
      %v1320 = vadd.f32 %v1223, %v1288
      %v1321 = vadd.f32 %v1224, %v1289
      %v1322 = vadd.f32 %v1225, %v1290
      %v1323 = vadd.f32 %v1226, %v1291
      %v1324 = vadd.f32 %v1227, %v1292
      %v1325 = vadd.f32 %v1228, %v1293
      %v1326 = vadd.f32 %v1229, %v1294
      %v1327 = vadd.f32 %v1230, %v1295
      %v1328 = vadd.f32 %v1231, %v1296
      %v1329 = vadd.f32 %v1232, %v1297
      %v1330 = vadd.f32 %v1233, %v1298
      %v1331 = vadd.f32 %v1234, %v1299
      %v1332 = vadd.f32 %v1235, %v1300
      %v1333 = vadd.f32 %v1236, %v1301
      %v1334 = vadd.f32 %v1237, %v1302
      %v1335 = vadd.f32 %v1238, %v1303
      %v1336 = vadd.f32 %v1239, %v1304
      %v1337 = vadd.f32 %v1240, %v1305
      %v1338 = vadd.f32 %v1241, %v1306
      %v1339 = vadd.f32 %v1242, %v1307
      %v1340 = vadd.f32 %v1243, %v1308
      %v1341 = vadd.f32 %v1244, %v1309
      %v1342 = vadd.f32 %v1245, %v1310
      %v1343 = vadd.f32 %v1246, %v1311
      %v1344 = vadd.f32 %v1247, %v1312
      %v1345 = vadd.f32 %v1248, %v1313
      %v1346 = vadd.f32 %v1249, %v1314
      %v1347 = vld [vmem:[%s1152 + $0x2] sm:$0xff]
      %v1348 = vld [vmem:[%s1152 + $0xa] sm:$0xff]
      %v1349 = vld [vmem:[%s1152 + $0x1a] sm:$0xff]
      %v1350 = vld [vmem:[%s1152 + $0x22] sm:$0xff]
      %v1351 = vld [vmem:[%s1152 + $0x32] sm:$0xff]
      %v1352 = vld [vmem:[%s1152 + $0x3a] sm:$0xff]
      %v1353 = vld [vmem:[%s1152 + $0x4a] sm:$0xff]
      %v1354 = vld [vmem:[%s1152 + $0x52] sm:$0xff]
      %v1355 = vld [vmem:[%s1152 + $0x62] sm:$0xff]
      %v1356 = vld [vmem:[%s1152 + $0x6a] sm:$0xff]
      %v1357 = vld [vmem:[%s1152 + $0x7a] sm:$0xff]
      %v1358 = vld [vmem:[%s1152 + $0x82] sm:$0xff]
      %v1359 = vld [vmem:[%s1152 + $0x92] sm:$0xff]
      %v1360 = vld [vmem:[%s1152 + $0x9a] sm:$0xff]
      %v1361 = vld [vmem:[%s1152 + $0xaa] sm:$0xff]
      %v1362 = vld [vmem:[%s1152 + $0xb2] sm:$0xff]
      %v1363 = vld [vmem:[%s1152 + $0xc2] sm:$0xff]
      %v1364 = vld [vmem:[%s1152 + $0xca] sm:$0xff]
      %v1365 = vld [vmem:[%s1152 + $0xda] sm:$0xff]
      %v1366 = vld [vmem:[%s1152 + $0xe2] sm:$0xff]
      %v1367 = vld [vmem:[%s1152 + $0xf2] sm:$0xff]
      %v1368 = vld [vmem:[%s1152 + $0xfa] sm:$0xff]
      %v1369 = vld [vmem:[%s1152 + $0x10a] sm:$0xff]
      %v1370 = vld [vmem:[%s1152 + $0x112] sm:$0xff]
      %v1371 = vld [vmem:[%s1152 + $0x122] sm:$0xff]
      %v1372 = vld [vmem:[%s1152 + $0x12a] sm:$0xff]
      %v1373 = vld [vmem:[%s1152 + $0x13a] sm:$0xff]
      %v1374 = vld [vmem:[%s1152 + $0x142] sm:$0xff]
      %v1375 = vld [vmem:[%s1152 + $0x152] sm:$0xff]
      %v1376 = vld [vmem:[%s1152 + $0x15a] sm:$0xff]
      %v1377 = vld [vmem:[%s1152 + $0x16a] sm:$0xff]
      %v1378 = vld [vmem:[%s1152 + $0x172] sm:$0xff]
      %v1379 = vperm.slane %v467, 1
      %v1380 = vmul.f32 %v1347, %v1379
      %v1381 = vmul.f32 %v1348, %v1379
      %v1382 = vmul.f32 %v1349, %v1379
      %v1383 = vmul.f32 %v1350, %v1379
      %v1384 = vmul.f32 %v1351, %v1379
      %v1385 = vmul.f32 %v1352, %v1379
      %v1386 = vmul.f32 %v1353, %v1379
      %v1387 = vmul.f32 %v1354, %v1379
      %v1388 = vmul.f32 %v1355, %v1379
      %v1389 = vmul.f32 %v1356, %v1379
      %v1390 = vmul.f32 %v1357, %v1379
      %v1391 = vmul.f32 %v1358, %v1379
      %v1392 = vmul.f32 %v1359, %v1379
      %v1393 = vmul.f32 %v1360, %v1379
      %v1394 = vmul.f32 %v1361, %v1379
      %v1395 = vmul.f32 %v1362, %v1379
      %v1396 = vmul.f32 %v1363, %v1379
      %v1397 = vmul.f32 %v1364, %v1379
      %v1398 = vmul.f32 %v1365, %v1379
      %v1399 = vmul.f32 %v1366, %v1379
      %v1400 = vmul.f32 %v1367, %v1379
      %v1401 = vmul.f32 %v1368, %v1379
      %v1402 = vmul.f32 %v1369, %v1379
      %v1403 = vmul.f32 %v1370, %v1379
      %v1404 = vmul.f32 %v1371, %v1379
      %v1405 = vmul.f32 %v1372, %v1379
      %v1406 = vmul.f32 %v1373, %v1379
      %v1407 = vmul.f32 %v1374, %v1379
      %v1408 = vmul.f32 %v1375, %v1379
      %v1409 = vmul.f32 %v1376, %v1379
      %v1410 = vmul.f32 %v1377, %v1379
      %v1411 = vmul.f32 %v1378, %v1379
      %v1412 = vadd.f32 %v1315, %v1380
      %v1413 = vadd.f32 %v1316, %v1381
      %v1414 = vadd.f32 %v1317, %v1382
      %v1415 = vadd.f32 %v1318, %v1383
      %v1416 = vadd.f32 %v1319, %v1384
      %v1417 = vadd.f32 %v1320, %v1385
      %v1418 = vadd.f32 %v1321, %v1386
      %v1419 = vadd.f32 %v1322, %v1387
      %v1420 = vadd.f32 %v1323, %v1388
      %v1421 = vadd.f32 %v1324, %v1389
      %v1422 = vadd.f32 %v1325, %v1390
      %v1423 = vadd.f32 %v1326, %v1391
      %v1424 = vadd.f32 %v1327, %v1392
      %v1425 = vadd.f32 %v1328, %v1393
      %v1426 = vadd.f32 %v1329, %v1394
      %v1427 = vadd.f32 %v1330, %v1395
      %v1428 = vadd.f32 %v1331, %v1396
      %v1429 = vadd.f32 %v1332, %v1397
      %v1430 = vadd.f32 %v1333, %v1398
      %v1431 = vadd.f32 %v1334, %v1399
      %v1432 = vadd.f32 %v1335, %v1400
      %v1433 = vadd.f32 %v1336, %v1401
      %v1434 = vadd.f32 %v1337, %v1402
      %v1435 = vadd.f32 %v1338, %v1403
      %v1436 = vadd.f32 %v1339, %v1404
      %v1437 = vadd.f32 %v1340, %v1405
      %v1438 = vadd.f32 %v1341, %v1406
      %v1439 = vadd.f32 %v1342, %v1407
      %v1440 = vadd.f32 %v1343, %v1408
      %v1441 = vadd.f32 %v1344, %v1409
      %v1442 = vadd.f32 %v1345, %v1410
      %v1443 = vadd.f32 %v1346, %v1411
      %v1444 = vld [vmem:[%s1152 + $0x3] sm:$0xff]
      %v1445 = vld [vmem:[%s1152 + $0xb] sm:$0xff]
      %v1446 = vld [vmem:[%s1152 + $0x1b] sm:$0xff]
      %v1447 = vld [vmem:[%s1152 + $0x23] sm:$0xff]
      %v1448 = vld [vmem:[%s1152 + $0x33] sm:$0xff]
      %v1449 = vld [vmem:[%s1152 + $0x3b] sm:$0xff]
      %v1450 = vld [vmem:[%s1152 + $0x4b] sm:$0xff]
      %v1451 = vld [vmem:[%s1152 + $0x53] sm:$0xff]
      %v1452 = vld [vmem:[%s1152 + $0x63] sm:$0xff]
      %v1453 = vld [vmem:[%s1152 + $0x6b] sm:$0xff]
      %v1454 = vld [vmem:[%s1152 + $0x7b] sm:$0xff]
      %v1455 = vld [vmem:[%s1152 + $0x83] sm:$0xff]
      %v1456 = vld [vmem:[%s1152 + $0x93] sm:$0xff]
      %v1457 = vld [vmem:[%s1152 + $0x9b] sm:$0xff]
      %v1458 = vld [vmem:[%s1152 + $0xab] sm:$0xff]
      %v1459 = vld [vmem:[%s1152 + $0xb3] sm:$0xff]
      %v1460 = vld [vmem:[%s1152 + $0xc3] sm:$0xff]
      %v1461 = vld [vmem:[%s1152 + $0xcb] sm:$0xff]
      %v1462 = vld [vmem:[%s1152 + $0xdb] sm:$0xff]
      %v1463 = vld [vmem:[%s1152 + $0xe3] sm:$0xff]
      %v1464 = vld [vmem:[%s1152 + $0xf3] sm:$0xff]
      %v1465 = vld [vmem:[%s1152 + $0xfb] sm:$0xff]
      %v1466 = vld [vmem:[%s1152 + $0x10b] sm:$0xff]
      %v1467 = vld [vmem:[%s1152 + $0x113] sm:$0xff]
      %v1468 = vld [vmem:[%s1152 + $0x123] sm:$0xff]
      %v1469 = vld [vmem:[%s1152 + $0x12b] sm:$0xff]
      %v1470 = vld [vmem:[%s1152 + $0x13b] sm:$0xff]
      %v1471 = vld [vmem:[%s1152 + $0x143] sm:$0xff]
      %v1472 = vld [vmem:[%s1152 + $0x153] sm:$0xff]
      %v1473 = vld [vmem:[%s1152 + $0x15b] sm:$0xff]
      %v1474 = vld [vmem:[%s1152 + $0x16b] sm:$0xff]
      %v1475 = vld [vmem:[%s1152 + $0x173] sm:$0xff]
      %v1476 = vperm.slane %v467, 2
      %v1477 = vmul.f32 %v1444, %v1476
      %v1478 = vmul.f32 %v1445, %v1476
      %v1479 = vmul.f32 %v1446, %v1476
      %v1480 = vmul.f32 %v1447, %v1476
      %v1481 = vmul.f32 %v1448, %v1476
      %v1482 = vmul.f32 %v1449, %v1476
      %v1483 = vmul.f32 %v1450, %v1476
      %v1484 = vmul.f32 %v1451, %v1476
      %v1485 = vmul.f32 %v1452, %v1476
      %v1486 = vmul.f32 %v1453, %v1476
      %v1487 = vmul.f32 %v1454, %v1476
      %v1488 = vmul.f32 %v1455, %v1476
      %v1489 = vmul.f32 %v1456, %v1476
      %v1490 = vmul.f32 %v1457, %v1476
      %v1491 = vmul.f32 %v1458, %v1476
      %v1492 = vmul.f32 %v1459, %v1476
      %v1493 = vmul.f32 %v1460, %v1476
      %v1494 = vmul.f32 %v1461, %v1476
      %v1495 = vmul.f32 %v1462, %v1476
      %v1496 = vmul.f32 %v1463, %v1476
      %v1497 = vmul.f32 %v1464, %v1476
      %v1498 = vmul.f32 %v1465, %v1476
      %v1499 = vmul.f32 %v1466, %v1476
      %v1500 = vmul.f32 %v1467, %v1476
      %v1501 = vmul.f32 %v1468, %v1476
      %v1502 = vmul.f32 %v1469, %v1476
      %v1503 = vmul.f32 %v1470, %v1476
      %v1504 = vmul.f32 %v1471, %v1476
      %v1505 = vmul.f32 %v1472, %v1476
      %v1506 = vmul.f32 %v1473, %v1476
      %v1507 = vmul.f32 %v1474, %v1476
      %v1508 = vmul.f32 %v1475, %v1476
      %v1509 = vadd.f32 %v1412, %v1477
      %v1510 = vadd.f32 %v1413, %v1478
      %v1511 = vadd.f32 %v1414, %v1479
      %v1512 = vadd.f32 %v1415, %v1480
      %v1513 = vadd.f32 %v1416, %v1481
      %v1514 = vadd.f32 %v1417, %v1482
      %v1515 = vadd.f32 %v1418, %v1483
      %v1516 = vadd.f32 %v1419, %v1484
      %v1517 = vadd.f32 %v1420, %v1485
      %v1518 = vadd.f32 %v1421, %v1486
      %v1519 = vadd.f32 %v1422, %v1487
      %v1520 = vadd.f32 %v1423, %v1488
      %v1521 = vadd.f32 %v1424, %v1489
      %v1522 = vadd.f32 %v1425, %v1490
      %v1523 = vadd.f32 %v1426, %v1491
      %v1524 = vadd.f32 %v1427, %v1492
      %v1525 = vadd.f32 %v1428, %v1493
      %v1526 = vadd.f32 %v1429, %v1494
      %v1527 = vadd.f32 %v1430, %v1495
      %v1528 = vadd.f32 %v1431, %v1496
      %v1529 = vadd.f32 %v1432, %v1497
      %v1530 = vadd.f32 %v1433, %v1498
      %v1531 = vadd.f32 %v1434, %v1499
      %v1532 = vadd.f32 %v1435, %v1500
      %v1533 = vadd.f32 %v1436, %v1501
      %v1534 = vadd.f32 %v1437, %v1502
      %v1535 = vadd.f32 %v1438, %v1503
      %v1536 = vadd.f32 %v1439, %v1504
      %v1537 = vadd.f32 %v1440, %v1505
      %v1538 = vadd.f32 %v1441, %v1506
      %v1539 = vadd.f32 %v1442, %v1507
      %v1540 = vadd.f32 %v1443, %v1508
      %v1541 = vld [vmem:[%s1152 + $0x4] sm:$0xff]
      %v1542 = vld [vmem:[%s1152 + $0xc] sm:$0xff]
      %v1543 = vld [vmem:[%s1152 + $0x1c] sm:$0xff]
      %v1544 = vld [vmem:[%s1152 + $0x24] sm:$0xff]
      %v1545 = vld [vmem:[%s1152 + $0x34] sm:$0xff]
      %v1546 = vld [vmem:[%s1152 + $0x3c] sm:$0xff]
      %v1547 = vld [vmem:[%s1152 + $0x4c] sm:$0xff]
      %v1548 = vld [vmem:[%s1152 + $0x54] sm:$0xff]
      %v1549 = vld [vmem:[%s1152 + $0x64] sm:$0xff]
      %v1550 = vld [vmem:[%s1152 + $0x6c] sm:$0xff]
      %v1551 = vld [vmem:[%s1152 + $0x7c] sm:$0xff]
      %v1552 = vld [vmem:[%s1152 + $0x84] sm:$0xff]
      %v1553 = vld [vmem:[%s1152 + $0x94] sm:$0xff]
      %v1554 = vld [vmem:[%s1152 + $0x9c] sm:$0xff]
      %v1555 = vld [vmem:[%s1152 + $0xac] sm:$0xff]
      %v1556 = vld [vmem:[%s1152 + $0xb4] sm:$0xff]
      %v1557 = vld [vmem:[%s1152 + $0xc4] sm:$0xff]
      %v1558 = vld [vmem:[%s1152 + $0xcc] sm:$0xff]
      %v1559 = vld [vmem:[%s1152 + $0xdc] sm:$0xff]
      %v1560 = vld [vmem:[%s1152 + $0xe4] sm:$0xff]
      %v1561 = vld [vmem:[%s1152 + $0xf4] sm:$0xff]
      %v1562 = vld [vmem:[%s1152 + $0xfc] sm:$0xff]
      %v1563 = vld [vmem:[%s1152 + $0x10c] sm:$0xff]
      %v1564 = vld [vmem:[%s1152 + $0x114] sm:$0xff]
      %v1565 = vld [vmem:[%s1152 + $0x124] sm:$0xff]
      %v1566 = vld [vmem:[%s1152 + $0x12c] sm:$0xff]
      %v1567 = vld [vmem:[%s1152 + $0x13c] sm:$0xff]
      %v1568 = vld [vmem:[%s1152 + $0x144] sm:$0xff]
      %v1569 = vld [vmem:[%s1152 + $0x154] sm:$0xff]
      %v1570 = vld [vmem:[%s1152 + $0x15c] sm:$0xff]
      %v1571 = vld [vmem:[%s1152 + $0x16c] sm:$0xff]
      %v1572 = vld [vmem:[%s1152 + $0x174] sm:$0xff]
      %v1573 = vperm.slane %v467, 3
      %v1574 = vmul.f32 %v1541, %v1573
      %v1575 = vmul.f32 %v1542, %v1573
      %v1576 = vmul.f32 %v1543, %v1573
      %v1577 = vmul.f32 %v1544, %v1573
      %v1578 = vmul.f32 %v1545, %v1573
      %v1579 = vmul.f32 %v1546, %v1573
      %v1580 = vmul.f32 %v1547, %v1573
      %v1581 = vmul.f32 %v1548, %v1573
      %v1582 = vmul.f32 %v1549, %v1573
      %v1583 = vmul.f32 %v1550, %v1573
      %v1584 = vmul.f32 %v1551, %v1573
      %v1585 = vmul.f32 %v1552, %v1573
      %v1586 = vmul.f32 %v1553, %v1573
      %v1587 = vmul.f32 %v1554, %v1573
      %v1588 = vmul.f32 %v1555, %v1573
      %v1589 = vmul.f32 %v1556, %v1573
      %v1590 = vmul.f32 %v1557, %v1573
      %v1591 = vmul.f32 %v1558, %v1573
      %v1592 = vmul.f32 %v1559, %v1573
      %v1593 = vmul.f32 %v1560, %v1573
      %v1594 = vmul.f32 %v1561, %v1573
      %v1595 = vmul.f32 %v1562, %v1573
      %v1596 = vmul.f32 %v1563, %v1573
      %v1597 = vmul.f32 %v1564, %v1573
      %v1598 = vmul.f32 %v1565, %v1573
      %v1599 = vmul.f32 %v1566, %v1573
      %v1600 = vmul.f32 %v1567, %v1573
      %v1601 = vmul.f32 %v1568, %v1573
      %v1602 = vmul.f32 %v1569, %v1573
      %v1603 = vmul.f32 %v1570, %v1573
      %v1604 = vmul.f32 %v1571, %v1573
      %v1605 = vmul.f32 %v1572, %v1573
      %v1606 = vadd.f32 %v1509, %v1574
      %v1607 = vadd.f32 %v1510, %v1575
      %v1608 = vadd.f32 %v1511, %v1576
      %v1609 = vadd.f32 %v1512, %v1577
      %v1610 = vadd.f32 %v1513, %v1578
      %v1611 = vadd.f32 %v1514, %v1579
      %v1612 = vadd.f32 %v1515, %v1580
      %v1613 = vadd.f32 %v1516, %v1581
      %v1614 = vadd.f32 %v1517, %v1582
      %v1615 = vadd.f32 %v1518, %v1583
      %v1616 = vadd.f32 %v1519, %v1584
      %v1617 = vadd.f32 %v1520, %v1585
      %v1618 = vadd.f32 %v1521, %v1586
      %v1619 = vadd.f32 %v1522, %v1587
      %v1620 = vadd.f32 %v1523, %v1588
      %v1621 = vadd.f32 %v1524, %v1589
      %v1622 = vadd.f32 %v1525, %v1590
      %v1623 = vadd.f32 %v1526, %v1591
      %v1624 = vadd.f32 %v1527, %v1592
      %v1625 = vadd.f32 %v1528, %v1593
      %v1626 = vadd.f32 %v1529, %v1594
      %v1627 = vadd.f32 %v1530, %v1595
      %v1628 = vadd.f32 %v1531, %v1596
      %v1629 = vadd.f32 %v1532, %v1597
      %v1630 = vadd.f32 %v1533, %v1598
      %v1631 = vadd.f32 %v1534, %v1599
      %v1632 = vadd.f32 %v1535, %v1600
      %v1633 = vadd.f32 %v1536, %v1601
      %v1634 = vadd.f32 %v1537, %v1602
      %v1635 = vadd.f32 %v1538, %v1603
      %v1636 = vadd.f32 %v1539, %v1604
      %v1637 = vadd.f32 %v1540, %v1605
      %v1638 = vld [vmem:[%s1152 + $0x5] sm:$0xff]
      %v1639 = vld [vmem:[%s1152 + $0xd] sm:$0xff]
      %v1640 = vld [vmem:[%s1152 + $0x1d] sm:$0xff]
      %v1641 = vld [vmem:[%s1152 + $0x25] sm:$0xff]
      %v1642 = vld [vmem:[%s1152 + $0x35] sm:$0xff]
      %v1643 = vld [vmem:[%s1152 + $0x3d] sm:$0xff]
      %v1644 = vld [vmem:[%s1152 + $0x4d] sm:$0xff]
      %v1645 = vld [vmem:[%s1152 + $0x55] sm:$0xff]
      %v1646 = vld [vmem:[%s1152 + $0x65] sm:$0xff]
      %v1647 = vld [vmem:[%s1152 + $0x6d] sm:$0xff]
      %v1648 = vld [vmem:[%s1152 + $0x7d] sm:$0xff]
      %v1649 = vld [vmem:[%s1152 + $0x85] sm:$0xff]
      %v1650 = vld [vmem:[%s1152 + $0x95] sm:$0xff]
      %v1651 = vld [vmem:[%s1152 + $0x9d] sm:$0xff]
      %v1652 = vld [vmem:[%s1152 + $0xad] sm:$0xff]
      %v1653 = vld [vmem:[%s1152 + $0xb5] sm:$0xff]
      %v1654 = vld [vmem:[%s1152 + $0xc5] sm:$0xff]
      %v1655 = vld [vmem:[%s1152 + $0xcd] sm:$0xff]
      %v1656 = vld [vmem:[%s1152 + $0xdd] sm:$0xff]
      %v1657 = vld [vmem:[%s1152 + $0xe5] sm:$0xff]
      %v1658 = vld [vmem:[%s1152 + $0xf5] sm:$0xff]
      %v1659 = vld [vmem:[%s1152 + $0xfd] sm:$0xff]
      %v1660 = vld [vmem:[%s1152 + $0x10d] sm:$0xff]
      %v1661 = vld [vmem:[%s1152 + $0x115] sm:$0xff]
      %v1662 = vld [vmem:[%s1152 + $0x125] sm:$0xff]
      %v1663 = vld [vmem:[%s1152 + $0x12d] sm:$0xff]
      %v1664 = vld [vmem:[%s1152 + $0x13d] sm:$0xff]
      %v1665 = vld [vmem:[%s1152 + $0x145] sm:$0xff]
      %v1666 = vld [vmem:[%s1152 + $0x155] sm:$0xff]
      %v1667 = vld [vmem:[%s1152 + $0x15d] sm:$0xff]
      %v1668 = vld [vmem:[%s1152 + $0x16d] sm:$0xff]
      %v1669 = vld [vmem:[%s1152 + $0x175] sm:$0xff]
      %v1670 = vperm.slane %v467, 4
      %v1671 = vmul.f32 %v1638, %v1670
      %v1672 = vmul.f32 %v1639, %v1670
      %v1673 = vmul.f32 %v1640, %v1670
      %v1674 = vmul.f32 %v1641, %v1670
      %v1675 = vmul.f32 %v1642, %v1670
      %v1676 = vmul.f32 %v1643, %v1670
      %v1677 = vmul.f32 %v1644, %v1670
      %v1678 = vmul.f32 %v1645, %v1670
      %v1679 = vmul.f32 %v1646, %v1670
      %v1680 = vmul.f32 %v1647, %v1670
      %v1681 = vmul.f32 %v1648, %v1670
      %v1682 = vmul.f32 %v1649, %v1670
      %v1683 = vmul.f32 %v1650, %v1670
      %v1684 = vmul.f32 %v1651, %v1670
      %v1685 = vmul.f32 %v1652, %v1670
      %v1686 = vmul.f32 %v1653, %v1670
      %v1687 = vmul.f32 %v1654, %v1670
      %v1688 = vmul.f32 %v1655, %v1670
      %v1689 = vmul.f32 %v1656, %v1670
      %v1690 = vmul.f32 %v1657, %v1670
      %v1691 = vmul.f32 %v1658, %v1670
      %v1692 = vmul.f32 %v1659, %v1670
      %v1693 = vmul.f32 %v1660, %v1670
      %v1694 = vmul.f32 %v1661, %v1670
      %v1695 = vmul.f32 %v1662, %v1670
      %v1696 = vmul.f32 %v1663, %v1670
      %v1697 = vmul.f32 %v1664, %v1670
      %v1698 = vmul.f32 %v1665, %v1670
      %v1699 = vmul.f32 %v1666, %v1670
      %v1700 = vmul.f32 %v1667, %v1670
      %v1701 = vmul.f32 %v1668, %v1670
      %v1702 = vmul.f32 %v1669, %v1670
      %v1703 = vadd.f32 %v1606, %v1671
      %v1704 = vadd.f32 %v1607, %v1672
      %v1705 = vadd.f32 %v1608, %v1673
      %v1706 = vadd.f32 %v1609, %v1674
      %v1707 = vadd.f32 %v1610, %v1675
      %v1708 = vadd.f32 %v1611, %v1676
      %v1709 = vadd.f32 %v1612, %v1677
      %v1710 = vadd.f32 %v1613, %v1678
      %v1711 = vadd.f32 %v1614, %v1679
      %v1712 = vadd.f32 %v1615, %v1680
      %v1713 = vadd.f32 %v1616, %v1681
      %v1714 = vadd.f32 %v1617, %v1682
      %v1715 = vadd.f32 %v1618, %v1683
      %v1716 = vadd.f32 %v1619, %v1684
      %v1717 = vadd.f32 %v1620, %v1685
      %v1718 = vadd.f32 %v1621, %v1686
      %v1719 = vadd.f32 %v1622, %v1687
      %v1720 = vadd.f32 %v1623, %v1688
      %v1721 = vadd.f32 %v1624, %v1689
      %v1722 = vadd.f32 %v1625, %v1690
      %v1723 = vadd.f32 %v1626, %v1691
      %v1724 = vadd.f32 %v1627, %v1692
      %v1725 = vadd.f32 %v1628, %v1693
      %v1726 = vadd.f32 %v1629, %v1694
      %v1727 = vadd.f32 %v1630, %v1695
      %v1728 = vadd.f32 %v1631, %v1696
      %v1729 = vadd.f32 %v1632, %v1697
      %v1730 = vadd.f32 %v1633, %v1698
      %v1731 = vadd.f32 %v1634, %v1699
      %v1732 = vadd.f32 %v1635, %v1700
      %v1733 = vadd.f32 %v1636, %v1701
      %v1734 = vadd.f32 %v1637, %v1702
      %v1735 = vld [vmem:[%s1152 + $0x6] sm:$0xff]
      %v1736 = vld [vmem:[%s1152 + $0xe] sm:$0xff]
      %v1737 = vld [vmem:[%s1152 + $0x1e] sm:$0xff]
      %v1738 = vld [vmem:[%s1152 + $0x26] sm:$0xff]
      %v1739 = vld [vmem:[%s1152 + $0x36] sm:$0xff]
      %v1740 = vld [vmem:[%s1152 + $0x3e] sm:$0xff]
      %v1741 = vld [vmem:[%s1152 + $0x4e] sm:$0xff]
      %v1742 = vld [vmem:[%s1152 + $0x56] sm:$0xff]
      %v1743 = vld [vmem:[%s1152 + $0x66] sm:$0xff]
      %v1744 = vld [vmem:[%s1152 + $0x6e] sm:$0xff]
      %v1745 = vld [vmem:[%s1152 + $0x7e] sm:$0xff]
      %v1746 = vld [vmem:[%s1152 + $0x86] sm:$0xff]
      %v1747 = vld [vmem:[%s1152 + $0x96] sm:$0xff]
      %v1748 = vld [vmem:[%s1152 + $0x9e] sm:$0xff]
      %v1749 = vld [vmem:[%s1152 + $0xae] sm:$0xff]
      %v1750 = vld [vmem:[%s1152 + $0xb6] sm:$0xff]
      %v1751 = vld [vmem:[%s1152 + $0xc6] sm:$0xff]
      %v1752 = vld [vmem:[%s1152 + $0xce] sm:$0xff]
      %v1753 = vld [vmem:[%s1152 + $0xde] sm:$0xff]
      %v1754 = vld [vmem:[%s1152 + $0xe6] sm:$0xff]
      %v1755 = vld [vmem:[%s1152 + $0xf6] sm:$0xff]
      %v1756 = vld [vmem:[%s1152 + $0xfe] sm:$0xff]
      %v1757 = vld [vmem:[%s1152 + $0x10e] sm:$0xff]
      %v1758 = vld [vmem:[%s1152 + $0x116] sm:$0xff]
      %v1759 = vld [vmem:[%s1152 + $0x126] sm:$0xff]
      %v1760 = vld [vmem:[%s1152 + $0x12e] sm:$0xff]
      %v1761 = vld [vmem:[%s1152 + $0x13e] sm:$0xff]
      %v1762 = vld [vmem:[%s1152 + $0x146] sm:$0xff]
      %v1763 = vld [vmem:[%s1152 + $0x156] sm:$0xff]
      %v1764 = vld [vmem:[%s1152 + $0x15e] sm:$0xff]
      %v1765 = vld [vmem:[%s1152 + $0x16e] sm:$0xff]
      %v1766 = vld [vmem:[%s1152 + $0x176] sm:$0xff]
      %v1767 = vperm.slane %v467, 5
      %v1768 = vmul.f32 %v1735, %v1767
      %v1769 = vmul.f32 %v1736, %v1767
      %v1770 = vmul.f32 %v1737, %v1767
      %v1771 = vmul.f32 %v1738, %v1767
      %v1772 = vmul.f32 %v1739, %v1767
      %v1773 = vmul.f32 %v1740, %v1767
      %v1774 = vmul.f32 %v1741, %v1767
      %v1775 = vmul.f32 %v1742, %v1767
      %v1776 = vmul.f32 %v1743, %v1767
      %v1777 = vmul.f32 %v1744, %v1767
      %v1778 = vmul.f32 %v1745, %v1767
      %v1779 = vmul.f32 %v1746, %v1767
      %v1780 = vmul.f32 %v1747, %v1767
      %v1781 = vmul.f32 %v1748, %v1767
      %v1782 = vmul.f32 %v1749, %v1767
      %v1783 = vmul.f32 %v1750, %v1767
      %v1784 = vmul.f32 %v1751, %v1767
      %v1785 = vmul.f32 %v1752, %v1767
      %v1786 = vmul.f32 %v1753, %v1767
      %v1787 = vmul.f32 %v1754, %v1767
      %v1788 = vmul.f32 %v1755, %v1767
      %v1789 = vmul.f32 %v1756, %v1767
      %v1790 = vmul.f32 %v1757, %v1767
      %v1791 = vmul.f32 %v1758, %v1767
      %v1792 = vmul.f32 %v1759, %v1767
      %v1793 = vmul.f32 %v1760, %v1767
      %v1794 = vmul.f32 %v1761, %v1767
      %v1795 = vmul.f32 %v1762, %v1767
      %v1796 = vmul.f32 %v1763, %v1767
      %v1797 = vmul.f32 %v1764, %v1767
      %v1798 = vmul.f32 %v1765, %v1767
      %v1799 = vmul.f32 %v1766, %v1767
      %v1800 = vadd.f32 %v1703, %v1768
      %v1801 = vadd.f32 %v1704, %v1769
      %v1802 = vadd.f32 %v1705, %v1770
      %v1803 = vadd.f32 %v1706, %v1771
      %v1804 = vadd.f32 %v1707, %v1772
      %v1805 = vadd.f32 %v1708, %v1773
      %v1806 = vadd.f32 %v1709, %v1774
      %v1807 = vadd.f32 %v1710, %v1775
      %v1808 = vadd.f32 %v1711, %v1776
      %v1809 = vadd.f32 %v1712, %v1777
      %v1810 = vadd.f32 %v1713, %v1778
      %v1811 = vadd.f32 %v1714, %v1779
      %v1812 = vadd.f32 %v1715, %v1780
      %v1813 = vadd.f32 %v1716, %v1781
      %v1814 = vadd.f32 %v1717, %v1782
      %v1815 = vadd.f32 %v1718, %v1783
      %v1816 = vadd.f32 %v1719, %v1784
      %v1817 = vadd.f32 %v1720, %v1785
      %v1818 = vadd.f32 %v1721, %v1786
      %v1819 = vadd.f32 %v1722, %v1787
      %v1820 = vadd.f32 %v1723, %v1788
      %v1821 = vadd.f32 %v1724, %v1789
      %v1822 = vadd.f32 %v1725, %v1790
      %v1823 = vadd.f32 %v1726, %v1791
      %v1824 = vadd.f32 %v1727, %v1792
      %v1825 = vadd.f32 %v1728, %v1793
      %v1826 = vadd.f32 %v1729, %v1794
      %v1827 = vadd.f32 %v1730, %v1795
      %v1828 = vadd.f32 %v1731, %v1796
      %v1829 = vadd.f32 %v1732, %v1797
      %v1830 = vadd.f32 %v1733, %v1798
      %v1831 = vadd.f32 %v1734, %v1799
      %s1832 = scalar_lea.vmem [#allocation2], 48
      %v1833 = vld [vmem:[%s1832] sm:$0xff]
      %v1834 = vld [vmem:[%s1832 + $0x8] sm:$0xff]
      %v1835 = vld [vmem:[%s1832 + $0x18] sm:$0xff]
      %v1836 = vld [vmem:[%s1832 + $0x20] sm:$0xff]
      %v1837 = vld [vmem:[%s1832 + $0x30] sm:$0xff]
      %v1838 = vld [vmem:[%s1832 + $0x38] sm:$0xff]
      %v1839 = vld [vmem:[%s1832 + $0x48] sm:$0xff]
      %v1840 = vld [vmem:[%s1832 + $0x50] sm:$0xff]
      %v1841 = vld [vmem:[%s1832 + $0x60] sm:$0xff]
      %v1842 = vld [vmem:[%s1832 + $0x68] sm:$0xff]
      %v1843 = vld [vmem:[%s1832 + $0x78] sm:$0xff]
      %v1844 = vld [vmem:[%s1832 + $0x80] sm:$0xff]
      %v1845 = vld [vmem:[%s1832 + $0x90] sm:$0xff]
      %v1846 = vld [vmem:[%s1832 + $0x98] sm:$0xff]
      %v1847 = vld [vmem:[%s1832 + $0xa8] sm:$0xff]
      %v1848 = vld [vmem:[%s1832 + $0xb0] sm:$0xff]
      %v1849 = vld [vmem:[%s1832 + $0xc0] sm:$0xff]
      %v1850 = vld [vmem:[%s1832 + $0xc8] sm:$0xff]
      %v1851 = vld [vmem:[%s1832 + $0xd8] sm:$0xff]
      %v1852 = vld [vmem:[%s1832 + $0xe0] sm:$0xff]
      %v1853 = vld [vmem:[%s1832 + $0xf0] sm:$0xff]
      %v1854 = vld [vmem:[%s1832 + $0xf8] sm:$0xff]
      %v1855 = vld [vmem:[%s1832 + $0x108] sm:$0xff]
      %v1856 = vld [vmem:[%s1832 + $0x110] sm:$0xff]
      %v1857 = vld [vmem:[%s1832 + $0x120] sm:$0xff]
      %v1858 = vld [vmem:[%s1832 + $0x128] sm:$0xff]
      %v1859 = vld [vmem:[%s1832 + $0x138] sm:$0xff]
      %v1860 = vld [vmem:[%s1832 + $0x140] sm:$0xff]
      %v1861 = vld [vmem:[%s1832 + $0x150] sm:$0xff]
      %v1862 = vld [vmem:[%s1832 + $0x158] sm:$0xff]
      %v1863 = vld [vmem:[%s1832 + $0x168] sm:$0xff]
      %v1864 = vld [vmem:[%s1832 + $0x170] sm:$0xff]
      %v1865 = vperm.slane %v467, 6
      %v1866 = vmul.f32 %v1833, %v1865
      %v1867 = vmul.f32 %v1834, %v1865
      %v1868 = vmul.f32 %v1835, %v1865
      %v1869 = vmul.f32 %v1836, %v1865
      %v1870 = vmul.f32 %v1837, %v1865
      %v1871 = vmul.f32 %v1838, %v1865
      %v1872 = vmul.f32 %v1839, %v1865
      %v1873 = vmul.f32 %v1840, %v1865
      %v1874 = vmul.f32 %v1841, %v1865
      %v1875 = vmul.f32 %v1842, %v1865
      %v1876 = vmul.f32 %v1843, %v1865
      %v1877 = vmul.f32 %v1844, %v1865
      %v1878 = vmul.f32 %v1845, %v1865
      %v1879 = vmul.f32 %v1846, %v1865
      %v1880 = vmul.f32 %v1847, %v1865
      %v1881 = vmul.f32 %v1848, %v1865
      %v1882 = vmul.f32 %v1849, %v1865
      %v1883 = vmul.f32 %v1850, %v1865
      %v1884 = vmul.f32 %v1851, %v1865
      %v1885 = vmul.f32 %v1852, %v1865
      %v1886 = vmul.f32 %v1853, %v1865
      %v1887 = vmul.f32 %v1854, %v1865
      %v1888 = vmul.f32 %v1855, %v1865
      %v1889 = vmul.f32 %v1856, %v1865
      %v1890 = vmul.f32 %v1857, %v1865
      %v1891 = vmul.f32 %v1858, %v1865
      %v1892 = vmul.f32 %v1859, %v1865
      %v1893 = vmul.f32 %v1860, %v1865
      %v1894 = vmul.f32 %v1861, %v1865
      %v1895 = vmul.f32 %v1862, %v1865
      %v1896 = vmul.f32 %v1863, %v1865
      %v1897 = vmul.f32 %v1864, %v1865
      %v1898 = vadd.f32 %v1800, %v1866
      %v1899 = vadd.f32 %v1801, %v1867
      %v1900 = vadd.f32 %v1802, %v1868
      %v1901 = vadd.f32 %v1803, %v1869
      %v1902 = vadd.f32 %v1804, %v1870
      %v1903 = vadd.f32 %v1805, %v1871
      %v1904 = vadd.f32 %v1806, %v1872
      %v1905 = vadd.f32 %v1807, %v1873
      %v1906 = vadd.f32 %v1808, %v1874
      %v1907 = vadd.f32 %v1809, %v1875
      %v1908 = vadd.f32 %v1810, %v1876
      %v1909 = vadd.f32 %v1811, %v1877
      %v1910 = vadd.f32 %v1812, %v1878
      %v1911 = vadd.f32 %v1813, %v1879
      %v1912 = vadd.f32 %v1814, %v1880
      %v1913 = vadd.f32 %v1815, %v1881
      %v1914 = vadd.f32 %v1816, %v1882
      %v1915 = vadd.f32 %v1817, %v1883
      %v1916 = vadd.f32 %v1818, %v1884
      %v1917 = vadd.f32 %v1819, %v1885
      %v1918 = vadd.f32 %v1820, %v1886
      %v1919 = vadd.f32 %v1821, %v1887
      %v1920 = vadd.f32 %v1822, %v1888
      %v1921 = vadd.f32 %v1823, %v1889
      %v1922 = vadd.f32 %v1824, %v1890
      %v1923 = vadd.f32 %v1825, %v1891
      %v1924 = vadd.f32 %v1826, %v1892
      %v1925 = vadd.f32 %v1827, %v1893
      %v1926 = vadd.f32 %v1828, %v1894
      %v1927 = vadd.f32 %v1829, %v1895
      %v1928 = vadd.f32 %v1830, %v1896
      %v1929 = vadd.f32 %v1831, %v1897
      %v1930 = vld [vmem:[%s1832 + $0x1] sm:$0xff]
      %v1931 = vld [vmem:[%s1832 + $0x9] sm:$0xff]
      %v1932 = vld [vmem:[%s1832 + $0x19] sm:$0xff]
      %v1933 = vld [vmem:[%s1832 + $0x21] sm:$0xff]
      %v1934 = vld [vmem:[%s1832 + $0x31] sm:$0xff]
      %v1935 = vld [vmem:[%s1832 + $0x39] sm:$0xff]
      %v1936 = vld [vmem:[%s1832 + $0x49] sm:$0xff]
      %v1937 = vld [vmem:[%s1832 + $0x51] sm:$0xff]
      %v1938 = vld [vmem:[%s1832 + $0x61] sm:$0xff]
      %v1939 = vld [vmem:[%s1832 + $0x69] sm:$0xff]
      %v1940 = vld [vmem:[%s1832 + $0x79] sm:$0xff]
      %v1941 = vld [vmem:[%s1832 + $0x81] sm:$0xff]
      %v1942 = vld [vmem:[%s1832 + $0x91] sm:$0xff]
      %v1943 = vld [vmem:[%s1832 + $0x99] sm:$0xff]
      %v1944 = vld [vmem:[%s1832 + $0xa9] sm:$0xff]
      %v1945 = vld [vmem:[%s1832 + $0xb1] sm:$0xff]
      %v1946 = vld [vmem:[%s1832 + $0xc1] sm:$0xff]
      %v1947 = vld [vmem:[%s1832 + $0xc9] sm:$0xff]
      %v1948 = vld [vmem:[%s1832 + $0xd9] sm:$0xff]
      %v1949 = vld [vmem:[%s1832 + $0xe1] sm:$0xff]
      %v1950 = vld [vmem:[%s1832 + $0xf1] sm:$0xff]
      %v1951 = vld [vmem:[%s1832 + $0xf9] sm:$0xff]
      %v1952 = vld [vmem:[%s1832 + $0x109] sm:$0xff]
      %v1953 = vld [vmem:[%s1832 + $0x111] sm:$0xff]
      %v1954 = vld [vmem:[%s1832 + $0x121] sm:$0xff]
      %v1955 = vld [vmem:[%s1832 + $0x129] sm:$0xff]
      %v1956 = vld [vmem:[%s1832 + $0x139] sm:$0xff]
      %v1957 = vld [vmem:[%s1832 + $0x141] sm:$0xff]
      %v1958 = vld [vmem:[%s1832 + $0x151] sm:$0xff]
      %v1959 = vld [vmem:[%s1832 + $0x159] sm:$0xff]
      %v1960 = vld [vmem:[%s1832 + $0x169] sm:$0xff]
      %v1961 = vld [vmem:[%s1832 + $0x171] sm:$0xff]
      %v1962 = vperm.slane %v467, 7
      %v1963 = vmul.f32 %v1930, %v1962
      %v1964 = vmul.f32 %v1931, %v1962
      %v1965 = vmul.f32 %v1932, %v1962
      %v1966 = vmul.f32 %v1933, %v1962
      %v1967 = vmul.f32 %v1934, %v1962
      %v1968 = vmul.f32 %v1935, %v1962
      %v1969 = vmul.f32 %v1936, %v1962
      %v1970 = vmul.f32 %v1937, %v1962
      %v1971 = vmul.f32 %v1938, %v1962
      %v1972 = vmul.f32 %v1939, %v1962
      %v1973 = vmul.f32 %v1940, %v1962
      %v1974 = vmul.f32 %v1941, %v1962
      %v1975 = vmul.f32 %v1942, %v1962
      %v1976 = vmul.f32 %v1943, %v1962
      %v1977 = vmul.f32 %v1944, %v1962
      %v1978 = vmul.f32 %v1945, %v1962
      %v1979 = vmul.f32 %v1946, %v1962
      %v1980 = vmul.f32 %v1947, %v1962
      %v1981 = vmul.f32 %v1948, %v1962
      %v1982 = vmul.f32 %v1949, %v1962
      %v1983 = vmul.f32 %v1950, %v1962
      %v1984 = vmul.f32 %v1951, %v1962
      %v1985 = vmul.f32 %v1952, %v1962
      %v1986 = vmul.f32 %v1953, %v1962
      %v1987 = vmul.f32 %v1954, %v1962
      %v1988 = vmul.f32 %v1955, %v1962
      %v1989 = vmul.f32 %v1956, %v1962
      %v1990 = vmul.f32 %v1957, %v1962
      %v1991 = vmul.f32 %v1958, %v1962
      %v1992 = vmul.f32 %v1959, %v1962
      %v1993 = vmul.f32 %v1960, %v1962
      %v1994 = vmul.f32 %v1961, %v1962
      %v1995 = vadd.f32 %v1898, %v1963
      %v1996 = vadd.f32 %v1899, %v1964
      %v1997 = vadd.f32 %v1900, %v1965
      %v1998 = vadd.f32 %v1901, %v1966
      %v1999 = vadd.f32 %v1902, %v1967
      %v2000 = vadd.f32 %v1903, %v1968
      %v2001 = vadd.f32 %v1904, %v1969
      %v2002 = vadd.f32 %v1905, %v1970
      %v2003 = vadd.f32 %v1906, %v1971
      %v2004 = vadd.f32 %v1907, %v1972
      %v2005 = vadd.f32 %v1908, %v1973
      %v2006 = vadd.f32 %v1909, %v1974
      %v2007 = vadd.f32 %v1910, %v1975
      %v2008 = vadd.f32 %v1911, %v1976
      %v2009 = vadd.f32 %v1912, %v1977
      %v2010 = vadd.f32 %v1913, %v1978
      %v2011 = vadd.f32 %v1914, %v1979
      %v2012 = vadd.f32 %v1915, %v1980
      %v2013 = vadd.f32 %v1916, %v1981
      %v2014 = vadd.f32 %v1917, %v1982
      %v2015 = vadd.f32 %v1918, %v1983
      %v2016 = vadd.f32 %v1919, %v1984
      %v2017 = vadd.f32 %v1920, %v1985
      %v2018 = vadd.f32 %v1921, %v1986
      %v2019 = vadd.f32 %v1922, %v1987
      %v2020 = vadd.f32 %v1923, %v1988
      %v2021 = vadd.f32 %v1924, %v1989
      %v2022 = vadd.f32 %v1925, %v1990
      %v2023 = vadd.f32 %v1926, %v1991
      %v2024 = vadd.f32 %v1927, %v1992
      %v2025 = vadd.f32 %v1928, %v1993
      %v2026 = vadd.f32 %v1929, %v1994
      %v2027 = vld [vmem:[%s1832 + $0x2] sm:$0xff]
      %v2028 = vld [vmem:[%s1832 + $0xa] sm:$0xff]
      %v2029 = vld [vmem:[%s1832 + $0x1a] sm:$0xff]
      %v2030 = vld [vmem:[%s1832 + $0x22] sm:$0xff]
      %v2031 = vld [vmem:[%s1832 + $0x32] sm:$0xff]
      %v2032 = vld [vmem:[%s1832 + $0x3a] sm:$0xff]
      %v2033 = vld [vmem:[%s1832 + $0x4a] sm:$0xff]
      %v2034 = vld [vmem:[%s1832 + $0x52] sm:$0xff]
      %v2035 = vld [vmem:[%s1832 + $0x62] sm:$0xff]
      %v2036 = vld [vmem:[%s1832 + $0x6a] sm:$0xff]
      %v2037 = vld [vmem:[%s1832 + $0x7a] sm:$0xff]
      %v2038 = vld [vmem:[%s1832 + $0x82] sm:$0xff]
      %v2039 = vld [vmem:[%s1832 + $0x92] sm:$0xff]
      %v2040 = vld [vmem:[%s1832 + $0x9a] sm:$0xff]
      %v2041 = vld [vmem:[%s1832 + $0xaa] sm:$0xff]
      %v2042 = vld [vmem:[%s1832 + $0xb2] sm:$0xff]
      %v2043 = vld [vmem:[%s1832 + $0xc2] sm:$0xff]
      %v2044 = vld [vmem:[%s1832 + $0xca] sm:$0xff]
      %v2045 = vld [vmem:[%s1832 + $0xda] sm:$0xff]
      %v2046 = vld [vmem:[%s1832 + $0xe2] sm:$0xff]
      %v2047 = vld [vmem:[%s1832 + $0xf2] sm:$0xff]
      %v2048 = vld [vmem:[%s1832 + $0xfa] sm:$0xff]
      %v2049 = vld [vmem:[%s1832 + $0x10a] sm:$0xff]
      %v2050 = vld [vmem:[%s1832 + $0x112] sm:$0xff]
      %v2051 = vld [vmem:[%s1832 + $0x122] sm:$0xff]
      %v2052 = vld [vmem:[%s1832 + $0x12a] sm:$0xff]
      %v2053 = vld [vmem:[%s1832 + $0x13a] sm:$0xff]
      %v2054 = vld [vmem:[%s1832 + $0x142] sm:$0xff]
      %v2055 = vld [vmem:[%s1832 + $0x152] sm:$0xff]
      %v2056 = vld [vmem:[%s1832 + $0x15a] sm:$0xff]
      %v2057 = vld [vmem:[%s1832 + $0x16a] sm:$0xff]
      %v2058 = vld [vmem:[%s1832 + $0x172] sm:$0xff]
      %v2059 = vperm.slane %v468, 0
      %v2060 = vmul.f32 %v2027, %v2059
      %v2061 = vmul.f32 %v2028, %v2059
      %v2062 = vmul.f32 %v2029, %v2059
      %v2063 = vmul.f32 %v2030, %v2059
      %v2064 = vmul.f32 %v2031, %v2059
      %v2065 = vmul.f32 %v2032, %v2059
      %v2066 = vmul.f32 %v2033, %v2059
      %v2067 = vmul.f32 %v2034, %v2059
      %v2068 = vmul.f32 %v2035, %v2059
      %v2069 = vmul.f32 %v2036, %v2059
      %v2070 = vmul.f32 %v2037, %v2059
      %v2071 = vmul.f32 %v2038, %v2059
      %v2072 = vmul.f32 %v2039, %v2059
      %v2073 = vmul.f32 %v2040, %v2059
      %v2074 = vmul.f32 %v2041, %v2059
      %v2075 = vmul.f32 %v2042, %v2059
      %v2076 = vmul.f32 %v2043, %v2059
      %v2077 = vmul.f32 %v2044, %v2059
      %v2078 = vmul.f32 %v2045, %v2059
      %v2079 = vmul.f32 %v2046, %v2059
      %v2080 = vmul.f32 %v2047, %v2059
      %v2081 = vmul.f32 %v2048, %v2059
      %v2082 = vmul.f32 %v2049, %v2059
      %v2083 = vmul.f32 %v2050, %v2059
      %v2084 = vmul.f32 %v2051, %v2059
      %v2085 = vmul.f32 %v2052, %v2059
      %v2086 = vmul.f32 %v2053, %v2059
      %v2087 = vmul.f32 %v2054, %v2059
      %v2088 = vmul.f32 %v2055, %v2059
      %v2089 = vmul.f32 %v2056, %v2059
      %v2090 = vmul.f32 %v2057, %v2059
      %v2091 = vmul.f32 %v2058, %v2059
      %v2092 = vadd.f32 %v1995, %v2060
      %v2093 = vadd.f32 %v1996, %v2061
      %v2094 = vadd.f32 %v1997, %v2062
      %v2095 = vadd.f32 %v1998, %v2063
      %v2096 = vadd.f32 %v1999, %v2064
      %v2097 = vadd.f32 %v2000, %v2065
      %v2098 = vadd.f32 %v2001, %v2066
      %v2099 = vadd.f32 %v2002, %v2067
      %v2100 = vadd.f32 %v2003, %v2068
      %v2101 = vadd.f32 %v2004, %v2069
      %v2102 = vadd.f32 %v2005, %v2070
      %v2103 = vadd.f32 %v2006, %v2071
      %v2104 = vadd.f32 %v2007, %v2072
      %v2105 = vadd.f32 %v2008, %v2073
      %v2106 = vadd.f32 %v2009, %v2074
      %v2107 = vadd.f32 %v2010, %v2075
      %v2108 = vadd.f32 %v2011, %v2076
      %v2109 = vadd.f32 %v2012, %v2077
      %v2110 = vadd.f32 %v2013, %v2078
      %v2111 = vadd.f32 %v2014, %v2079
      %v2112 = vadd.f32 %v2015, %v2080
      %v2113 = vadd.f32 %v2016, %v2081
      %v2114 = vadd.f32 %v2017, %v2082
      %v2115 = vadd.f32 %v2018, %v2083
      %v2116 = vadd.f32 %v2019, %v2084
      %v2117 = vadd.f32 %v2020, %v2085
      %v2118 = vadd.f32 %v2021, %v2086
      %v2119 = vadd.f32 %v2022, %v2087
      %v2120 = vadd.f32 %v2023, %v2088
      %v2121 = vadd.f32 %v2024, %v2089
      %v2122 = vadd.f32 %v2025, %v2090
      %v2123 = vadd.f32 %v2026, %v2091
      %v2124 = vld [vmem:[%s1832 + $0x3] sm:$0xff]
      %v2125 = vld [vmem:[%s1832 + $0xb] sm:$0xff]
      %v2126 = vld [vmem:[%s1832 + $0x1b] sm:$0xff]
      %v2127 = vld [vmem:[%s1832 + $0x23] sm:$0xff]
      %v2128 = vld [vmem:[%s1832 + $0x33] sm:$0xff]
      %v2129 = vld [vmem:[%s1832 + $0x3b] sm:$0xff]
      %v2130 = vld [vmem:[%s1832 + $0x4b] sm:$0xff]
      %v2131 = vld [vmem:[%s1832 + $0x53] sm:$0xff]
      %v2132 = vld [vmem:[%s1832 + $0x63] sm:$0xff]
      %v2133 = vld [vmem:[%s1832 + $0x6b] sm:$0xff]
      %v2134 = vld [vmem:[%s1832 + $0x7b] sm:$0xff]
      %v2135 = vld [vmem:[%s1832 + $0x83] sm:$0xff]
      %v2136 = vld [vmem:[%s1832 + $0x93] sm:$0xff]
      %v2137 = vld [vmem:[%s1832 + $0x9b] sm:$0xff]
      %v2138 = vld [vmem:[%s1832 + $0xab] sm:$0xff]
      %v2139 = vld [vmem:[%s1832 + $0xb3] sm:$0xff]
      %v2140 = vld [vmem:[%s1832 + $0xc3] sm:$0xff]
      %v2141 = vld [vmem:[%s1832 + $0xcb] sm:$0xff]
      %v2142 = vld [vmem:[%s1832 + $0xdb] sm:$0xff]
      %v2143 = vld [vmem:[%s1832 + $0xe3] sm:$0xff]
      %v2144 = vld [vmem:[%s1832 + $0xf3] sm:$0xff]
      %v2145 = vld [vmem:[%s1832 + $0xfb] sm:$0xff]
      %v2146 = vld [vmem:[%s1832 + $0x10b] sm:$0xff]
      %v2147 = vld [vmem:[%s1832 + $0x113] sm:$0xff]
      %v2148 = vld [vmem:[%s1832 + $0x123] sm:$0xff]
      %v2149 = vld [vmem:[%s1832 + $0x12b] sm:$0xff]
      %v2150 = vld [vmem:[%s1832 + $0x13b] sm:$0xff]
      %v2151 = vld [vmem:[%s1832 + $0x143] sm:$0xff]
      %v2152 = vld [vmem:[%s1832 + $0x153] sm:$0xff]
      %v2153 = vld [vmem:[%s1832 + $0x15b] sm:$0xff]
      %v2154 = vld [vmem:[%s1832 + $0x16b] sm:$0xff]
      %v2155 = vld [vmem:[%s1832 + $0x173] sm:$0xff]
      %v2156 = vperm.slane %v468, 1
      %v2157 = vmul.f32 %v2124, %v2156
      %v2158 = vmul.f32 %v2125, %v2156
      %v2159 = vmul.f32 %v2126, %v2156
      %v2160 = vmul.f32 %v2127, %v2156
      %v2161 = vmul.f32 %v2128, %v2156
      %v2162 = vmul.f32 %v2129, %v2156
      %v2163 = vmul.f32 %v2130, %v2156
      %v2164 = vmul.f32 %v2131, %v2156
      %v2165 = vmul.f32 %v2132, %v2156
      %v2166 = vmul.f32 %v2133, %v2156
      %v2167 = vmul.f32 %v2134, %v2156
      %v2168 = vmul.f32 %v2135, %v2156
      %v2169 = vmul.f32 %v2136, %v2156
      %v2170 = vmul.f32 %v2137, %v2156
      %v2171 = vmul.f32 %v2138, %v2156
      %v2172 = vmul.f32 %v2139, %v2156
      %v2173 = vmul.f32 %v2140, %v2156
      %v2174 = vmul.f32 %v2141, %v2156
      %v2175 = vmul.f32 %v2142, %v2156
      %v2176 = vmul.f32 %v2143, %v2156
      %v2177 = vmul.f32 %v2144, %v2156
      %v2178 = vmul.f32 %v2145, %v2156
      %v2179 = vmul.f32 %v2146, %v2156
      %v2180 = vmul.f32 %v2147, %v2156
      %v2181 = vmul.f32 %v2148, %v2156
      %v2182 = vmul.f32 %v2149, %v2156
      %v2183 = vmul.f32 %v2150, %v2156
      %v2184 = vmul.f32 %v2151, %v2156
      %v2185 = vmul.f32 %v2152, %v2156
      %v2186 = vmul.f32 %v2153, %v2156
      %v2187 = vmul.f32 %v2154, %v2156
      %v2188 = vmul.f32 %v2155, %v2156
      %v2189 = vadd.f32 %v2092, %v2157
      %v2190 = vadd.f32 %v2093, %v2158
      %v2191 = vadd.f32 %v2094, %v2159
      %v2192 = vadd.f32 %v2095, %v2160
      %v2193 = vadd.f32 %v2096, %v2161
      %v2194 = vadd.f32 %v2097, %v2162
      %v2195 = vadd.f32 %v2098, %v2163
      %v2196 = vadd.f32 %v2099, %v2164
      %v2197 = vadd.f32 %v2100, %v2165
      %v2198 = vadd.f32 %v2101, %v2166
      %v2199 = vadd.f32 %v2102, %v2167
      %v2200 = vadd.f32 %v2103, %v2168
      %v2201 = vadd.f32 %v2104, %v2169
      %v2202 = vadd.f32 %v2105, %v2170
      %v2203 = vadd.f32 %v2106, %v2171
      %v2204 = vadd.f32 %v2107, %v2172
      %v2205 = vadd.f32 %v2108, %v2173
      %v2206 = vadd.f32 %v2109, %v2174
      %v2207 = vadd.f32 %v2110, %v2175
      %v2208 = vadd.f32 %v2111, %v2176
      %v2209 = vadd.f32 %v2112, %v2177
      %v2210 = vadd.f32 %v2113, %v2178
      %v2211 = vadd.f32 %v2114, %v2179
      %v2212 = vadd.f32 %v2115, %v2180
      %v2213 = vadd.f32 %v2116, %v2181
      %v2214 = vadd.f32 %v2117, %v2182
      %v2215 = vadd.f32 %v2118, %v2183
      %v2216 = vadd.f32 %v2119, %v2184
      %v2217 = vadd.f32 %v2120, %v2185
      %v2218 = vadd.f32 %v2121, %v2186
      %v2219 = vadd.f32 %v2122, %v2187
      %v2220 = vadd.f32 %v2123, %v2188
      %v2221 = vld [vmem:[%s1832 + $0x4] sm:$0xff]
      %v2222 = vld [vmem:[%s1832 + $0xc] sm:$0xff]
      %v2223 = vld [vmem:[%s1832 + $0x1c] sm:$0xff]
      %v2224 = vld [vmem:[%s1832 + $0x24] sm:$0xff]
      %v2225 = vld [vmem:[%s1832 + $0x34] sm:$0xff]
      %v2226 = vld [vmem:[%s1832 + $0x3c] sm:$0xff]
      %v2227 = vld [vmem:[%s1832 + $0x4c] sm:$0xff]
      %v2228 = vld [vmem:[%s1832 + $0x54] sm:$0xff]
      %v2229 = vld [vmem:[%s1832 + $0x64] sm:$0xff]
      %v2230 = vld [vmem:[%s1832 + $0x6c] sm:$0xff]
      %v2231 = vld [vmem:[%s1832 + $0x7c] sm:$0xff]
      %v2232 = vld [vmem:[%s1832 + $0x84] sm:$0xff]
      %v2233 = vld [vmem:[%s1832 + $0x94] sm:$0xff]
      %v2234 = vld [vmem:[%s1832 + $0x9c] sm:$0xff]
      %v2235 = vld [vmem:[%s1832 + $0xac] sm:$0xff]
      %v2236 = vld [vmem:[%s1832 + $0xb4] sm:$0xff]
      %v2237 = vld [vmem:[%s1832 + $0xc4] sm:$0xff]
      %v2238 = vld [vmem:[%s1832 + $0xcc] sm:$0xff]
      %v2239 = vld [vmem:[%s1832 + $0xdc] sm:$0xff]
      %v2240 = vld [vmem:[%s1832 + $0xe4] sm:$0xff]
      %v2241 = vld [vmem:[%s1832 + $0xf4] sm:$0xff]
      %v2242 = vld [vmem:[%s1832 + $0xfc] sm:$0xff]
      %v2243 = vld [vmem:[%s1832 + $0x10c] sm:$0xff]
      %v2244 = vld [vmem:[%s1832 + $0x114] sm:$0xff]
      %v2245 = vld [vmem:[%s1832 + $0x124] sm:$0xff]
      %v2246 = vld [vmem:[%s1832 + $0x12c] sm:$0xff]
      %v2247 = vld [vmem:[%s1832 + $0x13c] sm:$0xff]
      %v2248 = vld [vmem:[%s1832 + $0x144] sm:$0xff]
      %v2249 = vld [vmem:[%s1832 + $0x154] sm:$0xff]
      %v2250 = vld [vmem:[%s1832 + $0x15c] sm:$0xff]
      %v2251 = vld [vmem:[%s1832 + $0x16c] sm:$0xff]
      %v2252 = vld [vmem:[%s1832 + $0x174] sm:$0xff]
      %v2253 = vperm.slane %v468, 2
      %v2254 = vmul.f32 %v2221, %v2253
      %v2255 = vmul.f32 %v2222, %v2253
      %v2256 = vmul.f32 %v2223, %v2253
      %v2257 = vmul.f32 %v2224, %v2253
      %v2258 = vmul.f32 %v2225, %v2253
      %v2259 = vmul.f32 %v2226, %v2253
      %v2260 = vmul.f32 %v2227, %v2253
      %v2261 = vmul.f32 %v2228, %v2253
      %v2262 = vmul.f32 %v2229, %v2253
      %v2263 = vmul.f32 %v2230, %v2253
      %v2264 = vmul.f32 %v2231, %v2253
      %v2265 = vmul.f32 %v2232, %v2253
      %v2266 = vmul.f32 %v2233, %v2253
      %v2267 = vmul.f32 %v2234, %v2253
      %v2268 = vmul.f32 %v2235, %v2253
      %v2269 = vmul.f32 %v2236, %v2253
      %v2270 = vmul.f32 %v2237, %v2253
      %v2271 = vmul.f32 %v2238, %v2253
      %v2272 = vmul.f32 %v2239, %v2253
      %v2273 = vmul.f32 %v2240, %v2253
      %v2274 = vmul.f32 %v2241, %v2253
      %v2275 = vmul.f32 %v2242, %v2253
      %v2276 = vmul.f32 %v2243, %v2253
      %v2277 = vmul.f32 %v2244, %v2253
      %v2278 = vmul.f32 %v2245, %v2253
      %v2279 = vmul.f32 %v2246, %v2253
      %v2280 = vmul.f32 %v2247, %v2253
      %v2281 = vmul.f32 %v2248, %v2253
      %v2282 = vmul.f32 %v2249, %v2253
      %v2283 = vmul.f32 %v2250, %v2253
      %v2284 = vmul.f32 %v2251, %v2253
      %v2285 = vmul.f32 %v2252, %v2253
      %v2286 = vadd.f32 %v2189, %v2254
      %v2287 = vadd.f32 %v2190, %v2255
      %v2288 = vadd.f32 %v2191, %v2256
      %v2289 = vadd.f32 %v2192, %v2257
      %v2290 = vadd.f32 %v2193, %v2258
      %v2291 = vadd.f32 %v2194, %v2259
      %v2292 = vadd.f32 %v2195, %v2260
      %v2293 = vadd.f32 %v2196, %v2261
      %v2294 = vadd.f32 %v2197, %v2262
      %v2295 = vadd.f32 %v2198, %v2263
      %v2296 = vadd.f32 %v2199, %v2264
      %v2297 = vadd.f32 %v2200, %v2265
      %v2298 = vadd.f32 %v2201, %v2266
      %v2299 = vadd.f32 %v2202, %v2267
      %v2300 = vadd.f32 %v2203, %v2268
      %v2301 = vadd.f32 %v2204, %v2269
      %v2302 = vadd.f32 %v2205, %v2270
      %v2303 = vadd.f32 %v2206, %v2271
      %v2304 = vadd.f32 %v2207, %v2272
      %v2305 = vadd.f32 %v2208, %v2273
      %v2306 = vadd.f32 %v2209, %v2274
      %v2307 = vadd.f32 %v2210, %v2275
      %v2308 = vadd.f32 %v2211, %v2276
      %v2309 = vadd.f32 %v2212, %v2277
      %v2310 = vadd.f32 %v2213, %v2278
      %v2311 = vadd.f32 %v2214, %v2279
      %v2312 = vadd.f32 %v2215, %v2280
      %v2313 = vadd.f32 %v2216, %v2281
      %v2314 = vadd.f32 %v2217, %v2282
      %v2315 = vadd.f32 %v2218, %v2283
      %v2316 = vadd.f32 %v2219, %v2284
      %v2317 = vadd.f32 %v2220, %v2285
      %v2318 = vld [vmem:[%s1832 + $0x5] sm:$0xff]
      %v2319 = vld [vmem:[%s1832 + $0xd] sm:$0xff]
      %v2320 = vld [vmem:[%s1832 + $0x1d] sm:$0xff]
      %v2321 = vld [vmem:[%s1832 + $0x25] sm:$0xff]
      %v2322 = vld [vmem:[%s1832 + $0x35] sm:$0xff]
      %v2323 = vld [vmem:[%s1832 + $0x3d] sm:$0xff]
      %v2324 = vld [vmem:[%s1832 + $0x4d] sm:$0xff]
      %v2325 = vld [vmem:[%s1832 + $0x55] sm:$0xff]
      %v2326 = vld [vmem:[%s1832 + $0x65] sm:$0xff]
      %v2327 = vld [vmem:[%s1832 + $0x6d] sm:$0xff]
      %v2328 = vld [vmem:[%s1832 + $0x7d] sm:$0xff]
      %v2329 = vld [vmem:[%s1832 + $0x85] sm:$0xff]
      %v2330 = vld [vmem:[%s1832 + $0x95] sm:$0xff]
      %v2331 = vld [vmem:[%s1832 + $0x9d] sm:$0xff]
      %v2332 = vld [vmem:[%s1832 + $0xad] sm:$0xff]
      %v2333 = vld [vmem:[%s1832 + $0xb5] sm:$0xff]
      %v2334 = vld [vmem:[%s1832 + $0xc5] sm:$0xff]
      %v2335 = vld [vmem:[%s1832 + $0xcd] sm:$0xff]
      %v2336 = vld [vmem:[%s1832 + $0xdd] sm:$0xff]
      %v2337 = vld [vmem:[%s1832 + $0xe5] sm:$0xff]
      %v2338 = vld [vmem:[%s1832 + $0xf5] sm:$0xff]
      %v2339 = vld [vmem:[%s1832 + $0xfd] sm:$0xff]
      %v2340 = vld [vmem:[%s1832 + $0x10d] sm:$0xff]
      %v2341 = vld [vmem:[%s1832 + $0x115] sm:$0xff]
      %v2342 = vld [vmem:[%s1832 + $0x125] sm:$0xff]
      %v2343 = vld [vmem:[%s1832 + $0x12d] sm:$0xff]
      %v2344 = vld [vmem:[%s1832 + $0x13d] sm:$0xff]
      %v2345 = vld [vmem:[%s1832 + $0x145] sm:$0xff]
      %v2346 = vld [vmem:[%s1832 + $0x155] sm:$0xff]
      %v2347 = vld [vmem:[%s1832 + $0x15d] sm:$0xff]
      %v2348 = vld [vmem:[%s1832 + $0x16d] sm:$0xff]
      %v2349 = vld [vmem:[%s1832 + $0x175] sm:$0xff]
      %v2350 = vperm.slane %v468, 3
      %v2351 = vmul.f32 %v2318, %v2350
      %v2352 = vmul.f32 %v2319, %v2350
      %v2353 = vmul.f32 %v2320, %v2350
      %v2354 = vmul.f32 %v2321, %v2350
      %v2355 = vmul.f32 %v2322, %v2350
      %v2356 = vmul.f32 %v2323, %v2350
      %v2357 = vmul.f32 %v2324, %v2350
      %v2358 = vmul.f32 %v2325, %v2350
      %v2359 = vmul.f32 %v2326, %v2350
      %v2360 = vmul.f32 %v2327, %v2350
      %v2361 = vmul.f32 %v2328, %v2350
      %v2362 = vmul.f32 %v2329, %v2350
      %v2363 = vmul.f32 %v2330, %v2350
      %v2364 = vmul.f32 %v2331, %v2350
      %v2365 = vmul.f32 %v2332, %v2350
      %v2366 = vmul.f32 %v2333, %v2350
      %v2367 = vmul.f32 %v2334, %v2350
      %v2368 = vmul.f32 %v2335, %v2350
      %v2369 = vmul.f32 %v2336, %v2350
      %v2370 = vmul.f32 %v2337, %v2350
      %v2371 = vmul.f32 %v2338, %v2350
      %v2372 = vmul.f32 %v2339, %v2350
      %v2373 = vmul.f32 %v2340, %v2350
      %v2374 = vmul.f32 %v2341, %v2350
      %v2375 = vmul.f32 %v2342, %v2350
      %v2376 = vmul.f32 %v2343, %v2350
      %v2377 = vmul.f32 %v2344, %v2350
      %v2378 = vmul.f32 %v2345, %v2350
      %v2379 = vmul.f32 %v2346, %v2350
      %v2380 = vmul.f32 %v2347, %v2350
      %v2381 = vmul.f32 %v2348, %v2350
      %v2382 = vmul.f32 %v2349, %v2350
      %v2383 = vadd.f32 %v2286, %v2351
      %v2384 = vadd.f32 %v2287, %v2352
      %v2385 = vadd.f32 %v2288, %v2353
      %v2386 = vadd.f32 %v2289, %v2354
      %v2387 = vadd.f32 %v2290, %v2355
      %v2388 = vadd.f32 %v2291, %v2356
      %v2389 = vadd.f32 %v2292, %v2357
      %v2390 = vadd.f32 %v2293, %v2358
      %v2391 = vadd.f32 %v2294, %v2359
      %v2392 = vadd.f32 %v2295, %v2360
      %v2393 = vadd.f32 %v2296, %v2361
      %v2394 = vadd.f32 %v2297, %v2362
      %v2395 = vadd.f32 %v2298, %v2363
      %v2396 = vadd.f32 %v2299, %v2364
      %v2397 = vadd.f32 %v2300, %v2365
      %v2398 = vadd.f32 %v2301, %v2366
      %v2399 = vadd.f32 %v2302, %v2367
      %v2400 = vadd.f32 %v2303, %v2368
      %v2401 = vadd.f32 %v2304, %v2369
      %v2402 = vadd.f32 %v2305, %v2370
      %v2403 = vadd.f32 %v2306, %v2371
      %v2404 = vadd.f32 %v2307, %v2372
      %v2405 = vadd.f32 %v2308, %v2373
      %v2406 = vadd.f32 %v2309, %v2374
      %v2407 = vadd.f32 %v2310, %v2375
      %v2408 = vadd.f32 %v2311, %v2376
      %v2409 = vadd.f32 %v2312, %v2377
      %v2410 = vadd.f32 %v2313, %v2378
      %v2411 = vadd.f32 %v2314, %v2379
      %v2412 = vadd.f32 %v2315, %v2380
      %v2413 = vadd.f32 %v2316, %v2381
      %v2414 = vadd.f32 %v2317, %v2382
      %v2415 = vld [vmem:[%s1832 + $0x6] sm:$0xff]
      %v2416 = vld [vmem:[%s1832 + $0xe] sm:$0xff]
      %v2417 = vld [vmem:[%s1832 + $0x1e] sm:$0xff]
      %v2418 = vld [vmem:[%s1832 + $0x26] sm:$0xff]
      %v2419 = vld [vmem:[%s1832 + $0x36] sm:$0xff]
      %v2420 = vld [vmem:[%s1832 + $0x3e] sm:$0xff]
      %v2421 = vld [vmem:[%s1832 + $0x4e] sm:$0xff]
      %v2422 = vld [vmem:[%s1832 + $0x56] sm:$0xff]
      %v2423 = vld [vmem:[%s1832 + $0x66] sm:$0xff]
      %v2424 = vld [vmem:[%s1832 + $0x6e] sm:$0xff]
      %v2425 = vld [vmem:[%s1832 + $0x7e] sm:$0xff]
      %v2426 = vld [vmem:[%s1832 + $0x86] sm:$0xff]
      %v2427 = vld [vmem:[%s1832 + $0x96] sm:$0xff]
      %v2428 = vld [vmem:[%s1832 + $0x9e] sm:$0xff]
      %v2429 = vld [vmem:[%s1832 + $0xae] sm:$0xff]
      %v2430 = vld [vmem:[%s1832 + $0xb6] sm:$0xff]
      %v2431 = vld [vmem:[%s1832 + $0xc6] sm:$0xff]
      %v2432 = vld [vmem:[%s1832 + $0xce] sm:$0xff]
      %v2433 = vld [vmem:[%s1832 + $0xde] sm:$0xff]
      %v2434 = vld [vmem:[%s1832 + $0xe6] sm:$0xff]
      %v2435 = vld [vmem:[%s1832 + $0xf6] sm:$0xff]
      %v2436 = vld [vmem:[%s1832 + $0xfe] sm:$0xff]
      %v2437 = vld [vmem:[%s1832 + $0x10e] sm:$0xff]
      %v2438 = vld [vmem:[%s1832 + $0x116] sm:$0xff]
      %v2439 = vld [vmem:[%s1832 + $0x126] sm:$0xff]
      %v2440 = vld [vmem:[%s1832 + $0x12e] sm:$0xff]
      %v2441 = vld [vmem:[%s1832 + $0x13e] sm:$0xff]
      %v2442 = vld [vmem:[%s1832 + $0x146] sm:$0xff]
      %v2443 = vld [vmem:[%s1832 + $0x156] sm:$0xff]
      %v2444 = vld [vmem:[%s1832 + $0x15e] sm:$0xff]
      %v2445 = vld [vmem:[%s1832 + $0x16e] sm:$0xff]
      %v2446 = vld [vmem:[%s1832 + $0x176] sm:$0xff]
      %v2447 = vperm.slane %v468, 4
      %v2448 = vmul.f32 %v2415, %v2447
      %v2449 = vmul.f32 %v2416, %v2447
      %v2450 = vmul.f32 %v2417, %v2447
      %v2451 = vmul.f32 %v2418, %v2447
      %v2452 = vmul.f32 %v2419, %v2447
      %v2453 = vmul.f32 %v2420, %v2447
      %v2454 = vmul.f32 %v2421, %v2447
      %v2455 = vmul.f32 %v2422, %v2447
      %v2456 = vmul.f32 %v2423, %v2447
      %v2457 = vmul.f32 %v2424, %v2447
      %v2458 = vmul.f32 %v2425, %v2447
      %v2459 = vmul.f32 %v2426, %v2447
      %v2460 = vmul.f32 %v2427, %v2447
      %v2461 = vmul.f32 %v2428, %v2447
      %v2462 = vmul.f32 %v2429, %v2447
      %v2463 = vmul.f32 %v2430, %v2447
      %v2464 = vmul.f32 %v2431, %v2447
      %v2465 = vmul.f32 %v2432, %v2447
      %v2466 = vmul.f32 %v2433, %v2447
      %v2467 = vmul.f32 %v2434, %v2447
      %v2468 = vmul.f32 %v2435, %v2447
      %v2469 = vmul.f32 %v2436, %v2447
      %v2470 = vmul.f32 %v2437, %v2447
      %v2471 = vmul.f32 %v2438, %v2447
      %v2472 = vmul.f32 %v2439, %v2447
      %v2473 = vmul.f32 %v2440, %v2447
      %v2474 = vmul.f32 %v2441, %v2447
      %v2475 = vmul.f32 %v2442, %v2447
      %v2476 = vmul.f32 %v2443, %v2447
      %v2477 = vmul.f32 %v2444, %v2447
      %v2478 = vmul.f32 %v2445, %v2447
      %v2479 = vmul.f32 %v2446, %v2447
      %v2480 = vadd.f32 %v2383, %v2448
      %v2481 = vadd.f32 %v2384, %v2449
      %v2482 = vadd.f32 %v2385, %v2450
      %v2483 = vadd.f32 %v2386, %v2451
      %v2484 = vadd.f32 %v2387, %v2452
      %v2485 = vadd.f32 %v2388, %v2453
      %v2486 = vadd.f32 %v2389, %v2454
      %v2487 = vadd.f32 %v2390, %v2455
      %v2488 = vadd.f32 %v2391, %v2456
      %v2489 = vadd.f32 %v2392, %v2457
      %v2490 = vadd.f32 %v2393, %v2458
      %v2491 = vadd.f32 %v2394, %v2459
      %v2492 = vadd.f32 %v2395, %v2460
      %v2493 = vadd.f32 %v2396, %v2461
      %v2494 = vadd.f32 %v2397, %v2462
      %v2495 = vadd.f32 %v2398, %v2463
      %v2496 = vadd.f32 %v2399, %v2464
      %v2497 = vadd.f32 %v2400, %v2465
      %v2498 = vadd.f32 %v2401, %v2466
      %v2499 = vadd.f32 %v2402, %v2467
      %v2500 = vadd.f32 %v2403, %v2468
      %v2501 = vadd.f32 %v2404, %v2469
      %v2502 = vadd.f32 %v2405, %v2470
      %v2503 = vadd.f32 %v2406, %v2471
      %v2504 = vadd.f32 %v2407, %v2472
      %v2505 = vadd.f32 %v2408, %v2473
      %v2506 = vadd.f32 %v2409, %v2474
      %v2507 = vadd.f32 %v2410, %v2475
      %v2508 = vadd.f32 %v2411, %v2476
      %v2509 = vadd.f32 %v2412, %v2477
      %v2510 = vadd.f32 %v2413, %v2478
      %v2511 = vadd.f32 %v2414, %v2479
      %v2512 = vld [vmem:[%s433] sm:$0xff]
      %v2513 = vld [vmem:[%s433 + $0x8] sm:$0xff]
      %v2514 = vld [vmem:[%s433 + $0x18] sm:$0xff]
      %v2515 = vld [vmem:[%s433 + $0x20] sm:$0xff]
      %v2516 = vld [vmem:[%s433 + $0x30] sm:$0xff]
      %v2517 = vld [vmem:[%s433 + $0x38] sm:$0xff]
      %v2518 = vld [vmem:[%s433 + $0x48] sm:$0xff]
      %v2519 = vld [vmem:[%s433 + $0x50] sm:$0xff]
      %v2520 = vld [vmem:[%s433 + $0x60] sm:$0xff]
      %v2521 = vld [vmem:[%s433 + $0x68] sm:$0xff]
      %v2522 = vld [vmem:[%s433 + $0x78] sm:$0xff]
      %v2523 = vld [vmem:[%s433 + $0x80] sm:$0xff]
      %v2524 = vld [vmem:[%s433 + $0x90] sm:$0xff]
      %v2525 = vld [vmem:[%s433 + $0x98] sm:$0xff]
      %v2526 = vld [vmem:[%s433 + $0xa8] sm:$0xff]
      %v2527 = vld [vmem:[%s433 + $0xb0] sm:$0xff]
      %v2528 = vld [vmem:[%s433 + $0xc0] sm:$0xff]
      %v2529 = vld [vmem:[%s433 + $0xc8] sm:$0xff]
      %v2530 = vld [vmem:[%s433 + $0xd8] sm:$0xff]
      %v2531 = vld [vmem:[%s433 + $0xe0] sm:$0xff]
      %v2532 = vld [vmem:[%s433 + $0xf0] sm:$0xff]
      %v2533 = vld [vmem:[%s433 + $0xf8] sm:$0xff]
      %v2534 = vld [vmem:[%s433 + $0x108] sm:$0xff]
      %v2535 = vld [vmem:[%s433 + $0x110] sm:$0xff]
      %v2536 = vld [vmem:[%s433 + $0x120] sm:$0xff]
      %v2537 = vld [vmem:[%s433 + $0x128] sm:$0xff]
      %v2538 = vld [vmem:[%s433 + $0x138] sm:$0xff]
      %v2539 = vld [vmem:[%s433 + $0x140] sm:$0xff]
      %v2540 = vld [vmem:[%s433 + $0x150] sm:$0xff]
      %v2541 = vld [vmem:[%s433 + $0x158] sm:$0xff]
      %v2542 = vld [vmem:[%s433 + $0x168] sm:$0xff]
      %v2543 = vld [vmem:[%s433 + $0x170] sm:$0xff]
      %v2544 = vperm.slane %v468, 5
      %v2545 = vmul.f32 %v2512, %v2544
      %v2546 = vmul.f32 %v2513, %v2544
      %v2547 = vmul.f32 %v2514, %v2544
      %v2548 = vmul.f32 %v2515, %v2544
      %v2549 = vmul.f32 %v2516, %v2544
      %v2550 = vmul.f32 %v2517, %v2544
      %v2551 = vmul.f32 %v2518, %v2544
      %v2552 = vmul.f32 %v2519, %v2544
      %v2553 = vmul.f32 %v2520, %v2544
      %v2554 = vmul.f32 %v2521, %v2544
      %v2555 = vmul.f32 %v2522, %v2544
      %v2556 = vmul.f32 %v2523, %v2544
      %v2557 = vmul.f32 %v2524, %v2544
      %v2558 = vmul.f32 %v2525, %v2544
      %v2559 = vmul.f32 %v2526, %v2544
      %v2560 = vmul.f32 %v2527, %v2544
      %v2561 = vmul.f32 %v2528, %v2544
      %v2562 = vmul.f32 %v2529, %v2544
      %v2563 = vmul.f32 %v2530, %v2544
      %v2564 = vmul.f32 %v2531, %v2544
      %v2565 = vmul.f32 %v2532, %v2544
      %v2566 = vmul.f32 %v2533, %v2544
      %v2567 = vmul.f32 %v2534, %v2544
      %v2568 = vmul.f32 %v2535, %v2544
      %v2569 = vmul.f32 %v2536, %v2544
      %v2570 = vmul.f32 %v2537, %v2544
      %v2571 = vmul.f32 %v2538, %v2544
      %v2572 = vmul.f32 %v2539, %v2544
      %v2573 = vmul.f32 %v2540, %v2544
      %v2574 = vmul.f32 %v2541, %v2544
      %v2575 = vmul.f32 %v2542, %v2544
      %v2576 = vmul.f32 %v2543, %v2544
      %v2577 = vadd.f32 %v2480, %v2545
      %v2578 = vadd.f32 %v2481, %v2546
      %v2579 = vadd.f32 %v2482, %v2547
      %v2580 = vadd.f32 %v2483, %v2548
      %v2581 = vadd.f32 %v2484, %v2549
      %v2582 = vadd.f32 %v2485, %v2550
      %v2583 = vadd.f32 %v2486, %v2551
      %v2584 = vadd.f32 %v2487, %v2552
      %v2585 = vadd.f32 %v2488, %v2553
      %v2586 = vadd.f32 %v2489, %v2554
      %v2587 = vadd.f32 %v2490, %v2555
      %v2588 = vadd.f32 %v2491, %v2556
      %v2589 = vadd.f32 %v2492, %v2557
      %v2590 = vadd.f32 %v2493, %v2558
      %v2591 = vadd.f32 %v2494, %v2559
      %v2592 = vadd.f32 %v2495, %v2560
      %v2593 = vadd.f32 %v2496, %v2561
      %v2594 = vadd.f32 %v2497, %v2562
      %v2595 = vadd.f32 %v2498, %v2563
      %v2596 = vadd.f32 %v2499, %v2564
      %v2597 = vadd.f32 %v2500, %v2565
      %v2598 = vadd.f32 %v2501, %v2566
      %v2599 = vadd.f32 %v2502, %v2567
      %v2600 = vadd.f32 %v2503, %v2568
      %v2601 = vadd.f32 %v2504, %v2569
      %v2602 = vadd.f32 %v2505, %v2570
      %v2603 = vadd.f32 %v2506, %v2571
      %v2604 = vadd.f32 %v2507, %v2572
      %v2605 = vadd.f32 %v2508, %v2573
      %v2606 = vadd.f32 %v2509, %v2574
      %v2607 = vadd.f32 %v2510, %v2575
      %v2608 = vadd.f32 %v2511, %v2576
      %v2609 = vld [vmem:[%s433 + $0x1] sm:$0xff]
      %v2610 = vld [vmem:[%s433 + $0x9] sm:$0xff]
      %v2611 = vld [vmem:[%s433 + $0x19] sm:$0xff]
      %v2612 = vld [vmem:[%s433 + $0x21] sm:$0xff]
      %v2613 = vld [vmem:[%s433 + $0x31] sm:$0xff]
      %v2614 = vld [vmem:[%s433 + $0x39] sm:$0xff]
      %v2615 = vld [vmem:[%s433 + $0x49] sm:$0xff]
      %v2616 = vld [vmem:[%s433 + $0x51] sm:$0xff]
      %v2617 = vld [vmem:[%s433 + $0x61] sm:$0xff]
      %v2618 = vld [vmem:[%s433 + $0x69] sm:$0xff]
      %v2619 = vld [vmem:[%s433 + $0x79] sm:$0xff]
      %v2620 = vld [vmem:[%s433 + $0x81] sm:$0xff]
      %v2621 = vld [vmem:[%s433 + $0x91] sm:$0xff]
      %v2622 = vld [vmem:[%s433 + $0x99] sm:$0xff]
      %v2623 = vld [vmem:[%s433 + $0xa9] sm:$0xff]
      %v2624 = vld [vmem:[%s433 + $0xb1] sm:$0xff]
      %v2625 = vld [vmem:[%s433 + $0xc1] sm:$0xff]
      %v2626 = vld [vmem:[%s433 + $0xc9] sm:$0xff]
      %v2627 = vld [vmem:[%s433 + $0xd9] sm:$0xff]
      %v2628 = vld [vmem:[%s433 + $0xe1] sm:$0xff]
      %v2629 = vld [vmem:[%s433 + $0xf1] sm:$0xff]
      %v2630 = vld [vmem:[%s433 + $0xf9] sm:$0xff]
      %v2631 = vld [vmem:[%s433 + $0x109] sm:$0xff]
      %v2632 = vld [vmem:[%s433 + $0x111] sm:$0xff]
      %v2633 = vld [vmem:[%s433 + $0x121] sm:$0xff]
      %v2634 = vld [vmem:[%s433 + $0x129] sm:$0xff]
      %v2635 = vld [vmem:[%s433 + $0x139] sm:$0xff]
      %v2636 = vld [vmem:[%s433 + $0x141] sm:$0xff]
      %v2637 = vld [vmem:[%s433 + $0x151] sm:$0xff]
      %v2638 = vld [vmem:[%s433 + $0x159] sm:$0xff]
      %v2639 = vld [vmem:[%s433 + $0x169] sm:$0xff]
      %v2640 = vld [vmem:[%s433 + $0x171] sm:$0xff]
      %v2641 = vperm.slane %v468, 6
      %v2642 = vmul.f32 %v2609, %v2641
      %v2643 = vmul.f32 %v2610, %v2641
      %v2644 = vmul.f32 %v2611, %v2641
      %v2645 = vmul.f32 %v2612, %v2641
      %v2646 = vmul.f32 %v2613, %v2641
      %v2647 = vmul.f32 %v2614, %v2641
      %v2648 = vmul.f32 %v2615, %v2641
      %v2649 = vmul.f32 %v2616, %v2641
      %v2650 = vmul.f32 %v2617, %v2641
      %v2651 = vmul.f32 %v2618, %v2641
      %v2652 = vmul.f32 %v2619, %v2641
      %v2653 = vmul.f32 %v2620, %v2641
      %v2654 = vmul.f32 %v2621, %v2641
      %v2655 = vmul.f32 %v2622, %v2641
      %v2656 = vmul.f32 %v2623, %v2641
      %v2657 = vmul.f32 %v2624, %v2641
      %v2658 = vmul.f32 %v2625, %v2641
      %v2659 = vmul.f32 %v2626, %v2641
      %v2660 = vmul.f32 %v2627, %v2641
      %v2661 = vmul.f32 %v2628, %v2641
      %v2662 = vmul.f32 %v2629, %v2641
      %v2663 = vmul.f32 %v2630, %v2641
      %v2664 = vmul.f32 %v2631, %v2641
      %v2665 = vmul.f32 %v2632, %v2641
      %v2666 = vmul.f32 %v2633, %v2641
      %v2667 = vmul.f32 %v2634, %v2641
      %v2668 = vmul.f32 %v2635, %v2641
      %v2669 = vmul.f32 %v2636, %v2641
      %v2670 = vmul.f32 %v2637, %v2641
      %v2671 = vmul.f32 %v2638, %v2641
      %v2672 = vmul.f32 %v2639, %v2641
      %v2673 = vmul.f32 %v2640, %v2641
      %v2674 = vadd.f32 %v2577, %v2642
      %v2675 = vadd.f32 %v2578, %v2643
      %v2676 = vadd.f32 %v2579, %v2644
      %v2677 = vadd.f32 %v2580, %v2645
      %v2678 = vadd.f32 %v2581, %v2646
      %v2679 = vadd.f32 %v2582, %v2647
      %v2680 = vadd.f32 %v2583, %v2648
      %v2681 = vadd.f32 %v2584, %v2649
      %v2682 = vadd.f32 %v2585, %v2650
      %v2683 = vadd.f32 %v2586, %v2651
      %v2684 = vadd.f32 %v2587, %v2652
      %v2685 = vadd.f32 %v2588, %v2653
      %v2686 = vadd.f32 %v2589, %v2654
      %v2687 = vadd.f32 %v2590, %v2655
      %v2688 = vadd.f32 %v2591, %v2656
      %v2689 = vadd.f32 %v2592, %v2657
      %v2690 = vadd.f32 %v2593, %v2658
      %v2691 = vadd.f32 %v2594, %v2659
      %v2692 = vadd.f32 %v2595, %v2660
      %v2693 = vadd.f32 %v2596, %v2661
      %v2694 = vadd.f32 %v2597, %v2662
      %v2695 = vadd.f32 %v2598, %v2663
      %v2696 = vadd.f32 %v2599, %v2664
      %v2697 = vadd.f32 %v2600, %v2665
      %v2698 = vadd.f32 %v2601, %v2666
      %v2699 = vadd.f32 %v2602, %v2667
      %v2700 = vadd.f32 %v2603, %v2668
      %v2701 = vadd.f32 %v2604, %v2669
      %v2702 = vadd.f32 %v2605, %v2670
      %v2703 = vadd.f32 %v2606, %v2671
      %v2704 = vadd.f32 %v2607, %v2672
      %v2705 = vadd.f32 %v2608, %v2673
      %v2706 = vld [vmem:[%s433 + $0x2] sm:$0xff]
      %v2707 = vld [vmem:[%s433 + $0xa] sm:$0xff]
      %v2708 = vld [vmem:[%s433 + $0x1a] sm:$0xff]
      %v2709 = vld [vmem:[%s433 + $0x22] sm:$0xff]
      %v2710 = vld [vmem:[%s433 + $0x32] sm:$0xff]
      %v2711 = vld [vmem:[%s433 + $0x3a] sm:$0xff]
      %v2712 = vld [vmem:[%s433 + $0x4a] sm:$0xff]
      %v2713 = vld [vmem:[%s433 + $0x52] sm:$0xff]
      %v2714 = vld [vmem:[%s433 + $0x62] sm:$0xff]
      %v2715 = vld [vmem:[%s433 + $0x6a] sm:$0xff]
      %v2716 = vld [vmem:[%s433 + $0x7a] sm:$0xff]
      %v2717 = vld [vmem:[%s433 + $0x82] sm:$0xff]
      %v2718 = vld [vmem:[%s433 + $0x92] sm:$0xff]
      %v2719 = vld [vmem:[%s433 + $0x9a] sm:$0xff]
      %v2720 = vld [vmem:[%s433 + $0xaa] sm:$0xff]
      %v2721 = vld [vmem:[%s433 + $0xb2] sm:$0xff]
      %v2722 = vld [vmem:[%s433 + $0xc2] sm:$0xff]
      %v2723 = vld [vmem:[%s433 + $0xca] sm:$0xff]
      %v2724 = vld [vmem:[%s433 + $0xda] sm:$0xff]
      %v2725 = vld [vmem:[%s433 + $0xe2] sm:$0xff]
      %v2726 = vld [vmem:[%s433 + $0xf2] sm:$0xff]
      %v2727 = vld [vmem:[%s433 + $0xfa] sm:$0xff]
      %v2728 = vld [vmem:[%s433 + $0x10a] sm:$0xff]
      %v2729 = vld [vmem:[%s433 + $0x112] sm:$0xff]
      %v2730 = vld [vmem:[%s433 + $0x122] sm:$0xff]
      %v2731 = vld [vmem:[%s433 + $0x12a] sm:$0xff]
      %v2732 = vld [vmem:[%s433 + $0x13a] sm:$0xff]
      %v2733 = vld [vmem:[%s433 + $0x142] sm:$0xff]
      %v2734 = vld [vmem:[%s433 + $0x152] sm:$0xff]
      %v2735 = vld [vmem:[%s433 + $0x15a] sm:$0xff]
      %v2736 = vld [vmem:[%s433 + $0x16a] sm:$0xff]
      %v2737 = vld [vmem:[%s433 + $0x172] sm:$0xff]
      %v2738 = vperm.slane %v468, 7
      %v2739 = vmul.f32 %v2706, %v2738
      %v2740 = vmul.f32 %v2707, %v2738
      %v2741 = vmul.f32 %v2708, %v2738
      %v2742 = vmul.f32 %v2709, %v2738
      %v2743 = vmul.f32 %v2710, %v2738
      %v2744 = vmul.f32 %v2711, %v2738
      %v2745 = vmul.f32 %v2712, %v2738
      %v2746 = vmul.f32 %v2713, %v2738
      %v2747 = vmul.f32 %v2714, %v2738
      %v2748 = vmul.f32 %v2715, %v2738
      %v2749 = vmul.f32 %v2716, %v2738
      %v2750 = vmul.f32 %v2717, %v2738
      %v2751 = vmul.f32 %v2718, %v2738
      %v2752 = vmul.f32 %v2719, %v2738
      %v2753 = vmul.f32 %v2720, %v2738
      %v2754 = vmul.f32 %v2721, %v2738
      %v2755 = vmul.f32 %v2722, %v2738
      %v2756 = vmul.f32 %v2723, %v2738
      %v2757 = vmul.f32 %v2724, %v2738
      %v2758 = vmul.f32 %v2725, %v2738
      %v2759 = vmul.f32 %v2726, %v2738
      %v2760 = vmul.f32 %v2727, %v2738
      %v2761 = vmul.f32 %v2728, %v2738
      %v2762 = vmul.f32 %v2729, %v2738
      %v2763 = vmul.f32 %v2730, %v2738
      %v2764 = vmul.f32 %v2731, %v2738
      %v2765 = vmul.f32 %v2732, %v2738
      %v2766 = vmul.f32 %v2733, %v2738
      %v2767 = vmul.f32 %v2734, %v2738
      %v2768 = vmul.f32 %v2735, %v2738
      %v2769 = vmul.f32 %v2736, %v2738
      %v2770 = vmul.f32 %v2737, %v2738
      %v2771 = vadd.f32 %v2674, %v2739
      %v2772 = vadd.f32 %v2675, %v2740
      %v2773 = vadd.f32 %v2676, %v2741
      %v2774 = vadd.f32 %v2677, %v2742
      %v2775 = vadd.f32 %v2678, %v2743
      %v2776 = vadd.f32 %v2679, %v2744
      %v2777 = vadd.f32 %v2680, %v2745
      %v2778 = vadd.f32 %v2681, %v2746
      %v2779 = vadd.f32 %v2682, %v2747
      %v2780 = vadd.f32 %v2683, %v2748
      %v2781 = vadd.f32 %v2684, %v2749
      %v2782 = vadd.f32 %v2685, %v2750
      %v2783 = vadd.f32 %v2686, %v2751
      %v2784 = vadd.f32 %v2687, %v2752
      %v2785 = vadd.f32 %v2688, %v2753
      %v2786 = vadd.f32 %v2689, %v2754
      %v2787 = vadd.f32 %v2690, %v2755
      %v2788 = vadd.f32 %v2691, %v2756
      %v2789 = vadd.f32 %v2692, %v2757
      %v2790 = vadd.f32 %v2693, %v2758
      %v2791 = vadd.f32 %v2694, %v2759
      %v2792 = vadd.f32 %v2695, %v2760
      %v2793 = vadd.f32 %v2696, %v2761
      %v2794 = vadd.f32 %v2697, %v2762
      %v2795 = vadd.f32 %v2698, %v2763
      %v2796 = vadd.f32 %v2699, %v2764
      %v2797 = vadd.f32 %v2700, %v2765
      %v2798 = vadd.f32 %v2701, %v2766
      %v2799 = vadd.f32 %v2702, %v2767
      %v2800 = vadd.f32 %v2703, %v2768
      %v2801 = vadd.f32 %v2704, %v2769
      %v2802 = vadd.f32 %v2705, %v2770
      %v2803 = vld [vmem:[%s433 + $0x3] sm:$0xff]
      %v2804 = vld [vmem:[%s433 + $0xb] sm:$0xff]
      %v2805 = vld [vmem:[%s433 + $0x1b] sm:$0xff]
      %v2806 = vld [vmem:[%s433 + $0x23] sm:$0xff]
      %v2807 = vld [vmem:[%s433 + $0x33] sm:$0xff]
      %v2808 = vld [vmem:[%s433 + $0x3b] sm:$0xff]
      %v2809 = vld [vmem:[%s433 + $0x4b] sm:$0xff]
      %v2810 = vld [vmem:[%s433 + $0x53] sm:$0xff]
      %v2811 = vld [vmem:[%s433 + $0x63] sm:$0xff]
      %v2812 = vld [vmem:[%s433 + $0x6b] sm:$0xff]
      %v2813 = vld [vmem:[%s433 + $0x7b] sm:$0xff]
      %v2814 = vld [vmem:[%s433 + $0x83] sm:$0xff]
      %v2815 = vld [vmem:[%s433 + $0x93] sm:$0xff]
      %v2816 = vld [vmem:[%s433 + $0x9b] sm:$0xff]
      %v2817 = vld [vmem:[%s433 + $0xab] sm:$0xff]
      %v2818 = vld [vmem:[%s433 + $0xb3] sm:$0xff]
      %v2819 = vld [vmem:[%s433 + $0xc3] sm:$0xff]
      %v2820 = vld [vmem:[%s433 + $0xcb] sm:$0xff]
      %v2821 = vld [vmem:[%s433 + $0xdb] sm:$0xff]
      %v2822 = vld [vmem:[%s433 + $0xe3] sm:$0xff]
      %v2823 = vld [vmem:[%s433 + $0xf3] sm:$0xff]
      %v2824 = vld [vmem:[%s433 + $0xfb] sm:$0xff]
      %v2825 = vld [vmem:[%s433 + $0x10b] sm:$0xff]
      %v2826 = vld [vmem:[%s433 + $0x113] sm:$0xff]
      %v2827 = vld [vmem:[%s433 + $0x123] sm:$0xff]
      %v2828 = vld [vmem:[%s433 + $0x12b] sm:$0xff]
      %v2829 = vld [vmem:[%s433 + $0x13b] sm:$0xff]
      %v2830 = vld [vmem:[%s433 + $0x143] sm:$0xff]
      %v2831 = vld [vmem:[%s433 + $0x153] sm:$0xff]
      %v2832 = vld [vmem:[%s433 + $0x15b] sm:$0xff]
      %v2833 = vld [vmem:[%s433 + $0x16b] sm:$0xff]
      %v2834 = vld [vmem:[%s433 + $0x173] sm:$0xff]
      %v2835 = vperm.slane %v469, 0
      %v2836 = vmul.f32 %v2803, %v2835
      %v2837 = vmul.f32 %v2804, %v2835
      %v2838 = vmul.f32 %v2805, %v2835
      %v2839 = vmul.f32 %v2806, %v2835
      %v2840 = vmul.f32 %v2807, %v2835
      %v2841 = vmul.f32 %v2808, %v2835
      %v2842 = vmul.f32 %v2809, %v2835
      %v2843 = vmul.f32 %v2810, %v2835
      %v2844 = vmul.f32 %v2811, %v2835
      %v2845 = vmul.f32 %v2812, %v2835
      %v2846 = vmul.f32 %v2813, %v2835
      %v2847 = vmul.f32 %v2814, %v2835
      %v2848 = vmul.f32 %v2815, %v2835
      %v2849 = vmul.f32 %v2816, %v2835
      %v2850 = vmul.f32 %v2817, %v2835
      %v2851 = vmul.f32 %v2818, %v2835
      %v2852 = vmul.f32 %v2819, %v2835
      %v2853 = vmul.f32 %v2820, %v2835
      %v2854 = vmul.f32 %v2821, %v2835
      %v2855 = vmul.f32 %v2822, %v2835
      %v2856 = vmul.f32 %v2823, %v2835
      %v2857 = vmul.f32 %v2824, %v2835
      %v2858 = vmul.f32 %v2825, %v2835
      %v2859 = vmul.f32 %v2826, %v2835
      %v2860 = vmul.f32 %v2827, %v2835
      %v2861 = vmul.f32 %v2828, %v2835
      %v2862 = vmul.f32 %v2829, %v2835
      %v2863 = vmul.f32 %v2830, %v2835
      %v2864 = vmul.f32 %v2831, %v2835
      %v2865 = vmul.f32 %v2832, %v2835
      %v2866 = vmul.f32 %v2833, %v2835
      %v2867 = vmul.f32 %v2834, %v2835
      %v2868 = vadd.f32 %v2771, %v2836
      %v2869 = vadd.f32 %v2772, %v2837
      %v2870 = vadd.f32 %v2773, %v2838
      %v2871 = vadd.f32 %v2774, %v2839
      %v2872 = vadd.f32 %v2775, %v2840
      %v2873 = vadd.f32 %v2776, %v2841
      %v2874 = vadd.f32 %v2777, %v2842
      %v2875 = vadd.f32 %v2778, %v2843
      %v2876 = vadd.f32 %v2779, %v2844
      %v2877 = vadd.f32 %v2780, %v2845
      %v2878 = vadd.f32 %v2781, %v2846
      %v2879 = vadd.f32 %v2782, %v2847
      %v2880 = vadd.f32 %v2783, %v2848
      %v2881 = vadd.f32 %v2784, %v2849
      %v2882 = vadd.f32 %v2785, %v2850
      %v2883 = vadd.f32 %v2786, %v2851
      %v2884 = vadd.f32 %v2787, %v2852
      %v2885 = vadd.f32 %v2788, %v2853
      %v2886 = vadd.f32 %v2789, %v2854
      %v2887 = vadd.f32 %v2790, %v2855
      %v2888 = vadd.f32 %v2791, %v2856
      %v2889 = vadd.f32 %v2792, %v2857
      %v2890 = vadd.f32 %v2793, %v2858
      %v2891 = vadd.f32 %v2794, %v2859
      %v2892 = vadd.f32 %v2795, %v2860
      %v2893 = vadd.f32 %v2796, %v2861
      %v2894 = vadd.f32 %v2797, %v2862
      %v2895 = vadd.f32 %v2798, %v2863
      %v2896 = vadd.f32 %v2799, %v2864
      %v2897 = vadd.f32 %v2800, %v2865
      %v2898 = vadd.f32 %v2801, %v2866
      %v2899 = vadd.f32 %v2802, %v2867
      %v2900 = vld [vmem:[%s433 + $0x4] sm:$0xff]
      %v2901 = vld [vmem:[%s433 + $0xc] sm:$0xff]
      %v2902 = vld [vmem:[%s433 + $0x1c] sm:$0xff]
      %v2903 = vld [vmem:[%s433 + $0x24] sm:$0xff]
      %v2904 = vld [vmem:[%s433 + $0x34] sm:$0xff]
      %v2905 = vld [vmem:[%s433 + $0x3c] sm:$0xff]
      %v2906 = vld [vmem:[%s433 + $0x4c] sm:$0xff]
      %v2907 = vld [vmem:[%s433 + $0x54] sm:$0xff]
      %v2908 = vld [vmem:[%s433 + $0x64] sm:$0xff]
      %v2909 = vld [vmem:[%s433 + $0x6c] sm:$0xff]
      %v2910 = vld [vmem:[%s433 + $0x7c] sm:$0xff]
      %v2911 = vld [vmem:[%s433 + $0x84] sm:$0xff]
      %v2912 = vld [vmem:[%s433 + $0x94] sm:$0xff]
      %v2913 = vld [vmem:[%s433 + $0x9c] sm:$0xff]
      %v2914 = vld [vmem:[%s433 + $0xac] sm:$0xff]
      %v2915 = vld [vmem:[%s433 + $0xb4] sm:$0xff]
      %v2916 = vld [vmem:[%s433 + $0xc4] sm:$0xff]
      %v2917 = vld [vmem:[%s433 + $0xcc] sm:$0xff]
      %v2918 = vld [vmem:[%s433 + $0xdc] sm:$0xff]
      %v2919 = vld [vmem:[%s433 + $0xe4] sm:$0xff]
      %v2920 = vld [vmem:[%s433 + $0xf4] sm:$0xff]
      %v2921 = vld [vmem:[%s433 + $0xfc] sm:$0xff]
      %v2922 = vld [vmem:[%s433 + $0x10c] sm:$0xff]
      %v2923 = vld [vmem:[%s433 + $0x114] sm:$0xff]
      %v2924 = vld [vmem:[%s433 + $0x124] sm:$0xff]
      %v2925 = vld [vmem:[%s433 + $0x12c] sm:$0xff]
      %v2926 = vld [vmem:[%s433 + $0x13c] sm:$0xff]
      %v2927 = vld [vmem:[%s433 + $0x144] sm:$0xff]
      %v2928 = vld [vmem:[%s433 + $0x154] sm:$0xff]
      %v2929 = vld [vmem:[%s433 + $0x15c] sm:$0xff]
      %v2930 = vld [vmem:[%s433 + $0x16c] sm:$0xff]
      %v2931 = vld [vmem:[%s433 + $0x174] sm:$0xff]
      %v2932 = vperm.slane %v469, 1
      %v2933 = vmul.f32 %v2900, %v2932
      %v2934 = vmul.f32 %v2901, %v2932
      %v2935 = vmul.f32 %v2902, %v2932
      %v2936 = vmul.f32 %v2903, %v2932
      %v2937 = vmul.f32 %v2904, %v2932
      %v2938 = vmul.f32 %v2905, %v2932
      %v2939 = vmul.f32 %v2906, %v2932
      %v2940 = vmul.f32 %v2907, %v2932
      %v2941 = vmul.f32 %v2908, %v2932
      %v2942 = vmul.f32 %v2909, %v2932
      %v2943 = vmul.f32 %v2910, %v2932
      %v2944 = vmul.f32 %v2911, %v2932
      %v2945 = vmul.f32 %v2912, %v2932
      %v2946 = vmul.f32 %v2913, %v2932
      %v2947 = vmul.f32 %v2914, %v2932
      %v2948 = vmul.f32 %v2915, %v2932
      %v2949 = vmul.f32 %v2916, %v2932
      %v2950 = vmul.f32 %v2917, %v2932
      %v2951 = vmul.f32 %v2918, %v2932
      %v2952 = vmul.f32 %v2919, %v2932
      %v2953 = vmul.f32 %v2920, %v2932
      %v2954 = vmul.f32 %v2921, %v2932
      %v2955 = vmul.f32 %v2922, %v2932
      %v2956 = vmul.f32 %v2923, %v2932
      %v2957 = vmul.f32 %v2924, %v2932
      %v2958 = vmul.f32 %v2925, %v2932
      %v2959 = vmul.f32 %v2926, %v2932
      %v2960 = vmul.f32 %v2927, %v2932
      %v2961 = vmul.f32 %v2928, %v2932
      %v2962 = vmul.f32 %v2929, %v2932
      %v2963 = vmul.f32 %v2930, %v2932
      %v2964 = vmul.f32 %v2931, %v2932
      %v2965 = vadd.f32 %v2868, %v2933
      %v2966 = vadd.f32 %v2869, %v2934
      %v2967 = vadd.f32 %v2870, %v2935
      %v2968 = vadd.f32 %v2871, %v2936
      %v2969 = vadd.f32 %v2872, %v2937
      %v2970 = vadd.f32 %v2873, %v2938
      %v2971 = vadd.f32 %v2874, %v2939
      %v2972 = vadd.f32 %v2875, %v2940
      %v2973 = vadd.f32 %v2876, %v2941
      %v2974 = vadd.f32 %v2877, %v2942
      %v2975 = vadd.f32 %v2878, %v2943
      %v2976 = vadd.f32 %v2879, %v2944
      %v2977 = vadd.f32 %v2880, %v2945
      %v2978 = vadd.f32 %v2881, %v2946
      %v2979 = vadd.f32 %v2882, %v2947
      %v2980 = vadd.f32 %v2883, %v2948
      %v2981 = vadd.f32 %v2884, %v2949
      %v2982 = vadd.f32 %v2885, %v2950
      %v2983 = vadd.f32 %v2886, %v2951
      %v2984 = vadd.f32 %v2887, %v2952
      %v2985 = vadd.f32 %v2888, %v2953
      %v2986 = vadd.f32 %v2889, %v2954
      %v2987 = vadd.f32 %v2890, %v2955
      %v2988 = vadd.f32 %v2891, %v2956
      %v2989 = vadd.f32 %v2892, %v2957
      %v2990 = vadd.f32 %v2893, %v2958
      %v2991 = vadd.f32 %v2894, %v2959
      %v2992 = vadd.f32 %v2895, %v2960
      %v2993 = vadd.f32 %v2896, %v2961
      %v2994 = vadd.f32 %v2897, %v2962
      %v2995 = vadd.f32 %v2898, %v2963
      %v2996 = vadd.f32 %v2899, %v2964
      %v2997 = vld [vmem:[%s433 + $0x5] sm:$0xff]
      %v2998 = vld [vmem:[%s433 + $0xd] sm:$0xff]
      %v2999 = vld [vmem:[%s433 + $0x1d] sm:$0xff]
      %v3000 = vld [vmem:[%s433 + $0x25] sm:$0xff]
      %v3001 = vld [vmem:[%s433 + $0x35] sm:$0xff]
      %v3002 = vld [vmem:[%s433 + $0x3d] sm:$0xff]
      %v3003 = vld [vmem:[%s433 + $0x4d] sm:$0xff]
      %v3004 = vld [vmem:[%s433 + $0x55] sm:$0xff]
      %v3005 = vld [vmem:[%s433 + $0x65] sm:$0xff]
      %v3006 = vld [vmem:[%s433 + $0x6d] sm:$0xff]
      %v3007 = vld [vmem:[%s433 + $0x7d] sm:$0xff]
      %v3008 = vld [vmem:[%s433 + $0x85] sm:$0xff]
      %v3009 = vld [vmem:[%s433 + $0x95] sm:$0xff]
      %v3010 = vld [vmem:[%s433 + $0x9d] sm:$0xff]
      %v3011 = vld [vmem:[%s433 + $0xad] sm:$0xff]
      %v3012 = vld [vmem:[%s433 + $0xb5] sm:$0xff]
      %v3013 = vld [vmem:[%s433 + $0xc5] sm:$0xff]
      %v3014 = vld [vmem:[%s433 + $0xcd] sm:$0xff]
      %v3015 = vld [vmem:[%s433 + $0xdd] sm:$0xff]
      %v3016 = vld [vmem:[%s433 + $0xe5] sm:$0xff]
      %v3017 = vld [vmem:[%s433 + $0xf5] sm:$0xff]
      %v3018 = vld [vmem:[%s433 + $0xfd] sm:$0xff]
      %v3019 = vld [vmem:[%s433 + $0x10d] sm:$0xff]
      %v3020 = vld [vmem:[%s433 + $0x115] sm:$0xff]
      %v3021 = vld [vmem:[%s433 + $0x125] sm:$0xff]
      %v3022 = vld [vmem:[%s433 + $0x12d] sm:$0xff]
      %v3023 = vld [vmem:[%s433 + $0x13d] sm:$0xff]
      %v3024 = vld [vmem:[%s433 + $0x145] sm:$0xff]
      %v3025 = vld [vmem:[%s433 + $0x155] sm:$0xff]
      %v3026 = vld [vmem:[%s433 + $0x15d] sm:$0xff]
      %v3027 = vld [vmem:[%s433 + $0x16d] sm:$0xff]
      %v3028 = vld [vmem:[%s433 + $0x175] sm:$0xff]
      %v3029 = vperm.slane %v469, 2
      %v3030 = vmul.f32 %v2997, %v3029
      %v3031 = vmul.f32 %v2998, %v3029
      %v3032 = vmul.f32 %v2999, %v3029
      %v3033 = vmul.f32 %v3000, %v3029
      %v3034 = vmul.f32 %v3001, %v3029
      %v3035 = vmul.f32 %v3002, %v3029
      %v3036 = vmul.f32 %v3003, %v3029
      %v3037 = vmul.f32 %v3004, %v3029
      %v3038 = vmul.f32 %v3005, %v3029
      %v3039 = vmul.f32 %v3006, %v3029
      %v3040 = vmul.f32 %v3007, %v3029
      %v3041 = vmul.f32 %v3008, %v3029
      %v3042 = vmul.f32 %v3009, %v3029
      %v3043 = vmul.f32 %v3010, %v3029
      %v3044 = vmul.f32 %v3011, %v3029
      %v3045 = vmul.f32 %v3012, %v3029
      %v3046 = vmul.f32 %v3013, %v3029
      %v3047 = vmul.f32 %v3014, %v3029
      %v3048 = vmul.f32 %v3015, %v3029
      %v3049 = vmul.f32 %v3016, %v3029
      %v3050 = vmul.f32 %v3017, %v3029
      %v3051 = vmul.f32 %v3018, %v3029
      %v3052 = vmul.f32 %v3019, %v3029
      %v3053 = vmul.f32 %v3020, %v3029
      %v3054 = vmul.f32 %v3021, %v3029
      %v3055 = vmul.f32 %v3022, %v3029
      %v3056 = vmul.f32 %v3023, %v3029
      %v3057 = vmul.f32 %v3024, %v3029
      %v3058 = vmul.f32 %v3025, %v3029
      %v3059 = vmul.f32 %v3026, %v3029
      %v3060 = vmul.f32 %v3027, %v3029
      %v3061 = vmul.f32 %v3028, %v3029
      %v3062 = vadd.f32 %v2965, %v3030
      %v3063 = vadd.f32 %v2966, %v3031
      %v3064 = vadd.f32 %v2967, %v3032
      %v3065 = vadd.f32 %v2968, %v3033
      %v3066 = vadd.f32 %v2969, %v3034
      %v3067 = vadd.f32 %v2970, %v3035
      %v3068 = vadd.f32 %v2971, %v3036
      %v3069 = vadd.f32 %v2972, %v3037
      %v3070 = vadd.f32 %v2973, %v3038
      %v3071 = vadd.f32 %v2974, %v3039
      %v3072 = vadd.f32 %v2975, %v3040
      %v3073 = vadd.f32 %v2976, %v3041
      %v3074 = vadd.f32 %v2977, %v3042
      %v3075 = vadd.f32 %v2978, %v3043
      %v3076 = vadd.f32 %v2979, %v3044
      %v3077 = vadd.f32 %v2980, %v3045
      %v3078 = vadd.f32 %v2981, %v3046
      %v3079 = vadd.f32 %v2982, %v3047
      %v3080 = vadd.f32 %v2983, %v3048
      %v3081 = vadd.f32 %v2984, %v3049
      %v3082 = vadd.f32 %v2985, %v3050
      %v3083 = vadd.f32 %v2986, %v3051
      %v3084 = vadd.f32 %v2987, %v3052
      %v3085 = vadd.f32 %v2988, %v3053
      %v3086 = vadd.f32 %v2989, %v3054
      %v3087 = vadd.f32 %v2990, %v3055
      %v3088 = vadd.f32 %v2991, %v3056
      %v3089 = vadd.f32 %v2992, %v3057
      %v3090 = vadd.f32 %v2993, %v3058
      %v3091 = vadd.f32 %v2994, %v3059
      %v3092 = vadd.f32 %v2995, %v3060
      %v3093 = vadd.f32 %v2996, %v3061
      %v3094 = vld [vmem:[%s433 + $0x6] sm:$0xff]
      %v3095 = vld [vmem:[%s433 + $0xe] sm:$0xff]
      %v3096 = vld [vmem:[%s433 + $0x1e] sm:$0xff]
      %v3097 = vld [vmem:[%s433 + $0x26] sm:$0xff]
      %v3098 = vld [vmem:[%s433 + $0x36] sm:$0xff]
      %v3099 = vld [vmem:[%s433 + $0x3e] sm:$0xff]
      %v3100 = vld [vmem:[%s433 + $0x4e] sm:$0xff]
      %v3101 = vld [vmem:[%s433 + $0x56] sm:$0xff]
      %v3102 = vld [vmem:[%s433 + $0x66] sm:$0xff]
      %v3103 = vld [vmem:[%s433 + $0x6e] sm:$0xff]
      %v3104 = vld [vmem:[%s433 + $0x7e] sm:$0xff]
      %v3105 = vld [vmem:[%s433 + $0x86] sm:$0xff]
      %v3106 = vld [vmem:[%s433 + $0x96] sm:$0xff]
      %v3107 = vld [vmem:[%s433 + $0x9e] sm:$0xff]
      %v3108 = vld [vmem:[%s433 + $0xae] sm:$0xff]
      %v3109 = vld [vmem:[%s433 + $0xb6] sm:$0xff]
      %v3110 = vld [vmem:[%s433 + $0xc6] sm:$0xff]
      %v3111 = vld [vmem:[%s433 + $0xce] sm:$0xff]
      %v3112 = vld [vmem:[%s433 + $0xde] sm:$0xff]
      %v3113 = vld [vmem:[%s433 + $0xe6] sm:$0xff]
      %v3114 = vld [vmem:[%s433 + $0xf6] sm:$0xff]
      %v3115 = vld [vmem:[%s433 + $0xfe] sm:$0xff]
      %v3116 = vld [vmem:[%s433 + $0x10e] sm:$0xff]
      %v3117 = vld [vmem:[%s433 + $0x116] sm:$0xff]
      %v3118 = vld [vmem:[%s433 + $0x126] sm:$0xff]
      %v3119 = vld [vmem:[%s433 + $0x12e] sm:$0xff]
      %v3120 = vld [vmem:[%s433 + $0x13e] sm:$0xff]
      %v3121 = vld [vmem:[%s433 + $0x146] sm:$0xff]
      %v3122 = vld [vmem:[%s433 + $0x156] sm:$0xff]
      %v3123 = vld [vmem:[%s433 + $0x15e] sm:$0xff]
      %v3124 = vld [vmem:[%s433 + $0x16e] sm:$0xff]
      %v3125 = vld [vmem:[%s433 + $0x176] sm:$0xff]
      %v3126 = vperm.slane %v469, 3
      %v3127 = vmul.f32 %v3094, %v3126
      %v3128 = vmul.f32 %v3095, %v3126
      %v3129 = vmul.f32 %v3096, %v3126
      %v3130 = vmul.f32 %v3097, %v3126
      %v3131 = vmul.f32 %v3098, %v3126
      %v3132 = vmul.f32 %v3099, %v3126
      %v3133 = vmul.f32 %v3100, %v3126
      %v3134 = vmul.f32 %v3101, %v3126
      %v3135 = vmul.f32 %v3102, %v3126
      %v3136 = vmul.f32 %v3103, %v3126
      %v3137 = vmul.f32 %v3104, %v3126
      %v3138 = vmul.f32 %v3105, %v3126
      %v3139 = vmul.f32 %v3106, %v3126
      %v3140 = vmul.f32 %v3107, %v3126
      %v3141 = vmul.f32 %v3108, %v3126
      %v3142 = vmul.f32 %v3109, %v3126
      %v3143 = vmul.f32 %v3110, %v3126
      %v3144 = vmul.f32 %v3111, %v3126
      %v3145 = vmul.f32 %v3112, %v3126
      %v3146 = vmul.f32 %v3113, %v3126
      %v3147 = vmul.f32 %v3114, %v3126
      %v3148 = vmul.f32 %v3115, %v3126
      %v3149 = vmul.f32 %v3116, %v3126
      %v3150 = vmul.f32 %v3117, %v3126
      %v3151 = vmul.f32 %v3118, %v3126
      %v3152 = vmul.f32 %v3119, %v3126
      %v3153 = vmul.f32 %v3120, %v3126
      %v3154 = vmul.f32 %v3121, %v3126
      %v3155 = vmul.f32 %v3122, %v3126
      %v3156 = vmul.f32 %v3123, %v3126
      %v3157 = vmul.f32 %v3124, %v3126
      %v3158 = vmul.f32 %v3125, %v3126
      %v3159 = vadd.f32 %v3062, %v3127
      %v3160 = vadd.f32 %v3063, %v3128
      %v3161 = vadd.f32 %v3064, %v3129
      %v3162 = vadd.f32 %v3065, %v3130
      %v3163 = vadd.f32 %v3066, %v3131
      %v3164 = vadd.f32 %v3067, %v3132
      %v3165 = vadd.f32 %v3068, %v3133
      %v3166 = vadd.f32 %v3069, %v3134
      %v3167 = vadd.f32 %v3070, %v3135
      %v3168 = vadd.f32 %v3071, %v3136
      %v3169 = vadd.f32 %v3072, %v3137
      %v3170 = vadd.f32 %v3073, %v3138
      %v3171 = vadd.f32 %v3074, %v3139
      %v3172 = vadd.f32 %v3075, %v3140
      %v3173 = vadd.f32 %v3076, %v3141
      %v3174 = vadd.f32 %v3077, %v3142
      %v3175 = vadd.f32 %v3078, %v3143
      %v3176 = vadd.f32 %v3079, %v3144
      %v3177 = vadd.f32 %v3080, %v3145
      %v3178 = vadd.f32 %v3081, %v3146
      %v3179 = vadd.f32 %v3082, %v3147
      %v3180 = vadd.f32 %v3083, %v3148
      %v3181 = vadd.f32 %v3084, %v3149
      %v3182 = vadd.f32 %v3085, %v3150
      %v3183 = vadd.f32 %v3086, %v3151
      %v3184 = vadd.f32 %v3087, %v3152
      %v3185 = vadd.f32 %v3088, %v3153
      %v3186 = vadd.f32 %v3089, %v3154
      %v3187 = vadd.f32 %v3090, %v3155
      %v3188 = vadd.f32 %v3091, %v3156
      %v3189 = vadd.f32 %v3092, %v3157
      %v3190 = vadd.f32 %v3093, %v3158
      %s3191 = scalar_lea.vmem [#allocation2], 96
      %v3192 = vld [vmem:[%s3191] sm:$0xff]
      %v3193 = vld [vmem:[%s3191 + $0x8] sm:$0xff]
      %v3194 = vld [vmem:[%s3191 + $0x18] sm:$0xff]
      %v3195 = vld [vmem:[%s3191 + $0x20] sm:$0xff]
      %v3196 = vld [vmem:[%s3191 + $0x30] sm:$0xff]
      %v3197 = vld [vmem:[%s3191 + $0x38] sm:$0xff]
      %v3198 = vld [vmem:[%s3191 + $0x48] sm:$0xff]
      %v3199 = vld [vmem:[%s3191 + $0x50] sm:$0xff]
      %v3200 = vld [vmem:[%s3191 + $0x60] sm:$0xff]
      %v3201 = vld [vmem:[%s3191 + $0x68] sm:$0xff]
      %v3202 = vld [vmem:[%s3191 + $0x78] sm:$0xff]
      %v3203 = vld [vmem:[%s3191 + $0x80] sm:$0xff]
      %v3204 = vld [vmem:[%s3191 + $0x90] sm:$0xff]
      %v3205 = vld [vmem:[%s3191 + $0x98] sm:$0xff]
      %v3206 = vld [vmem:[%s3191 + $0xa8] sm:$0xff]
      %v3207 = vld [vmem:[%s3191 + $0xb0] sm:$0xff]
      %v3208 = vld [vmem:[%s3191 + $0xc0] sm:$0xff]
      %v3209 = vld [vmem:[%s3191 + $0xc8] sm:$0xff]
      %v3210 = vld [vmem:[%s3191 + $0xd8] sm:$0xff]
      %v3211 = vld [vmem:[%s3191 + $0xe0] sm:$0xff]
      %v3212 = vld [vmem:[%s3191 + $0xf0] sm:$0xff]
      %v3213 = vld [vmem:[%s3191 + $0xf8] sm:$0xff]
      %v3214 = vld [vmem:[%s3191 + $0x108] sm:$0xff]
      %v3215 = vld [vmem:[%s3191 + $0x110] sm:$0xff]
      %v3216 = vld [vmem:[%s3191 + $0x120] sm:$0xff]
      %v3217 = vld [vmem:[%s3191 + $0x128] sm:$0xff]
      %v3218 = vld [vmem:[%s3191 + $0x138] sm:$0xff]
      %v3219 = vld [vmem:[%s3191 + $0x140] sm:$0xff]
      %v3220 = vld [vmem:[%s3191 + $0x150] sm:$0xff]
      %v3221 = vld [vmem:[%s3191 + $0x158] sm:$0xff]
      %v3222 = vld [vmem:[%s3191 + $0x168] sm:$0xff]
      %v3223 = vld [vmem:[%s3191 + $0x170] sm:$0xff]
      %v3224 = vperm.slane %v469, 4
      %v3225 = vmul.f32 %v3192, %v3224
      %v3226 = vmul.f32 %v3193, %v3224
      %v3227 = vmul.f32 %v3194, %v3224
      %v3228 = vmul.f32 %v3195, %v3224
      %v3229 = vmul.f32 %v3196, %v3224
      %v3230 = vmul.f32 %v3197, %v3224
      %v3231 = vmul.f32 %v3198, %v3224
      %v3232 = vmul.f32 %v3199, %v3224
      %v3233 = vmul.f32 %v3200, %v3224
      %v3234 = vmul.f32 %v3201, %v3224
      %v3235 = vmul.f32 %v3202, %v3224
      %v3236 = vmul.f32 %v3203, %v3224
      %v3237 = vmul.f32 %v3204, %v3224
      %v3238 = vmul.f32 %v3205, %v3224
      %v3239 = vmul.f32 %v3206, %v3224
      %v3240 = vmul.f32 %v3207, %v3224
      %v3241 = vmul.f32 %v3208, %v3224
      %v3242 = vmul.f32 %v3209, %v3224
      %v3243 = vmul.f32 %v3210, %v3224
      %v3244 = vmul.f32 %v3211, %v3224
      %v3245 = vmul.f32 %v3212, %v3224
      %v3246 = vmul.f32 %v3213, %v3224
      %v3247 = vmul.f32 %v3214, %v3224
      %v3248 = vmul.f32 %v3215, %v3224
      %v3249 = vmul.f32 %v3216, %v3224
      %v3250 = vmul.f32 %v3217, %v3224
      %v3251 = vmul.f32 %v3218, %v3224
      %v3252 = vmul.f32 %v3219, %v3224
      %v3253 = vmul.f32 %v3220, %v3224
      %v3254 = vmul.f32 %v3221, %v3224
      %v3255 = vmul.f32 %v3222, %v3224
      %v3256 = vmul.f32 %v3223, %v3224
      %v3257 = vadd.f32 %v3159, %v3225
      %v3258 = vadd.f32 %v3160, %v3226
      %v3259 = vadd.f32 %v3161, %v3227
      %v3260 = vadd.f32 %v3162, %v3228
      %v3261 = vadd.f32 %v3163, %v3229
      %v3262 = vadd.f32 %v3164, %v3230
      %v3263 = vadd.f32 %v3165, %v3231
      %v3264 = vadd.f32 %v3166, %v3232
      %v3265 = vadd.f32 %v3167, %v3233
      %v3266 = vadd.f32 %v3168, %v3234
      %v3267 = vadd.f32 %v3169, %v3235
      %v3268 = vadd.f32 %v3170, %v3236
      %v3269 = vadd.f32 %v3171, %v3237
      %v3270 = vadd.f32 %v3172, %v3238
      %v3271 = vadd.f32 %v3173, %v3239
      %v3272 = vadd.f32 %v3174, %v3240
      %v3273 = vadd.f32 %v3175, %v3241
      %v3274 = vadd.f32 %v3176, %v3242
      %v3275 = vadd.f32 %v3177, %v3243
      %v3276 = vadd.f32 %v3178, %v3244
      %v3277 = vadd.f32 %v3179, %v3245
      %v3278 = vadd.f32 %v3180, %v3246
      %v3279 = vadd.f32 %v3181, %v3247
      %v3280 = vadd.f32 %v3182, %v3248
      %v3281 = vadd.f32 %v3183, %v3249
      %v3282 = vadd.f32 %v3184, %v3250
      %v3283 = vadd.f32 %v3185, %v3251
      %v3284 = vadd.f32 %v3186, %v3252
      %v3285 = vadd.f32 %v3187, %v3253
      %v3286 = vadd.f32 %v3188, %v3254
      %v3287 = vadd.f32 %v3189, %v3255
      %v3288 = vadd.f32 %v3190, %v3256
      %v3289 = vld [vmem:[%s3191 + $0x1] sm:$0xff]
      %v3290 = vld [vmem:[%s3191 + $0x9] sm:$0xff]
      %v3291 = vld [vmem:[%s3191 + $0x19] sm:$0xff]
      %v3292 = vld [vmem:[%s3191 + $0x21] sm:$0xff]
      %v3293 = vld [vmem:[%s3191 + $0x31] sm:$0xff]
      %v3294 = vld [vmem:[%s3191 + $0x39] sm:$0xff]
      %v3295 = vld [vmem:[%s3191 + $0x49] sm:$0xff]
      %v3296 = vld [vmem:[%s3191 + $0x51] sm:$0xff]
      %v3297 = vld [vmem:[%s3191 + $0x61] sm:$0xff]
      %v3298 = vld [vmem:[%s3191 + $0x69] sm:$0xff]
      %v3299 = vld [vmem:[%s3191 + $0x79] sm:$0xff]
      %v3300 = vld [vmem:[%s3191 + $0x81] sm:$0xff]
      %v3301 = vld [vmem:[%s3191 + $0x91] sm:$0xff]
      %v3302 = vld [vmem:[%s3191 + $0x99] sm:$0xff]
      %v3303 = vld [vmem:[%s3191 + $0xa9] sm:$0xff]
      %v3304 = vld [vmem:[%s3191 + $0xb1] sm:$0xff]
      %v3305 = vld [vmem:[%s3191 + $0xc1] sm:$0xff]
      %v3306 = vld [vmem:[%s3191 + $0xc9] sm:$0xff]
      %v3307 = vld [vmem:[%s3191 + $0xd9] sm:$0xff]
      %v3308 = vld [vmem:[%s3191 + $0xe1] sm:$0xff]
      %v3309 = vld [vmem:[%s3191 + $0xf1] sm:$0xff]
      %v3310 = vld [vmem:[%s3191 + $0xf9] sm:$0xff]
      %v3311 = vld [vmem:[%s3191 + $0x109] sm:$0xff]
      %v3312 = vld [vmem:[%s3191 + $0x111] sm:$0xff]
      %v3313 = vld [vmem:[%s3191 + $0x121] sm:$0xff]
      %v3314 = vld [vmem:[%s3191 + $0x129] sm:$0xff]
      %v3315 = vld [vmem:[%s3191 + $0x139] sm:$0xff]
      %v3316 = vld [vmem:[%s3191 + $0x141] sm:$0xff]
      %v3317 = vld [vmem:[%s3191 + $0x151] sm:$0xff]
      %v3318 = vld [vmem:[%s3191 + $0x159] sm:$0xff]
      %v3319 = vld [vmem:[%s3191 + $0x169] sm:$0xff]
      %v3320 = vld [vmem:[%s3191 + $0x171] sm:$0xff]
      %v3321 = vperm.slane %v469, 5
      %v3322 = vmul.f32 %v3289, %v3321
      %v3323 = vmul.f32 %v3290, %v3321
      %v3324 = vmul.f32 %v3291, %v3321
      %v3325 = vmul.f32 %v3292, %v3321
      %v3326 = vmul.f32 %v3293, %v3321
      %v3327 = vmul.f32 %v3294, %v3321
      %v3328 = vmul.f32 %v3295, %v3321
      %v3329 = vmul.f32 %v3296, %v3321
      %v3330 = vmul.f32 %v3297, %v3321
      %v3331 = vmul.f32 %v3298, %v3321
      %v3332 = vmul.f32 %v3299, %v3321
      %v3333 = vmul.f32 %v3300, %v3321
      %v3334 = vmul.f32 %v3301, %v3321
      %v3335 = vmul.f32 %v3302, %v3321
      %v3336 = vmul.f32 %v3303, %v3321
      %v3337 = vmul.f32 %v3304, %v3321
      %v3338 = vmul.f32 %v3305, %v3321
      %v3339 = vmul.f32 %v3306, %v3321
      %v3340 = vmul.f32 %v3307, %v3321
      %v3341 = vmul.f32 %v3308, %v3321
      %v3342 = vmul.f32 %v3309, %v3321
      %v3343 = vmul.f32 %v3310, %v3321
      %v3344 = vmul.f32 %v3311, %v3321
      %v3345 = vmul.f32 %v3312, %v3321
      %v3346 = vmul.f32 %v3313, %v3321
      %v3347 = vmul.f32 %v3314, %v3321
      %v3348 = vmul.f32 %v3315, %v3321
      %v3349 = vmul.f32 %v3316, %v3321
      %v3350 = vmul.f32 %v3317, %v3321
      %v3351 = vmul.f32 %v3318, %v3321
      %v3352 = vmul.f32 %v3319, %v3321
      %v3353 = vmul.f32 %v3320, %v3321
      %v3354 = vadd.f32 %v3257, %v3322
      %v3355 = vadd.f32 %v3258, %v3323
      %v3356 = vadd.f32 %v3259, %v3324
      %v3357 = vadd.f32 %v3260, %v3325
      %v3358 = vadd.f32 %v3261, %v3326
      %v3359 = vadd.f32 %v3262, %v3327
      %v3360 = vadd.f32 %v3263, %v3328
      %v3361 = vadd.f32 %v3264, %v3329
      %v3362 = vadd.f32 %v3265, %v3330
      %v3363 = vadd.f32 %v3266, %v3331
      %v3364 = vadd.f32 %v3267, %v3332
      %v3365 = vadd.f32 %v3268, %v3333
      %v3366 = vadd.f32 %v3269, %v3334
      %v3367 = vadd.f32 %v3270, %v3335
      %v3368 = vadd.f32 %v3271, %v3336
      %v3369 = vadd.f32 %v3272, %v3337
      %v3370 = vadd.f32 %v3273, %v3338
      %v3371 = vadd.f32 %v3274, %v3339
      %v3372 = vadd.f32 %v3275, %v3340
      %v3373 = vadd.f32 %v3276, %v3341
      %v3374 = vadd.f32 %v3277, %v3342
      %v3375 = vadd.f32 %v3278, %v3343
      %v3376 = vadd.f32 %v3279, %v3344
      %v3377 = vadd.f32 %v3280, %v3345
      %v3378 = vadd.f32 %v3281, %v3346
      %v3379 = vadd.f32 %v3282, %v3347
      %v3380 = vadd.f32 %v3283, %v3348
      %v3381 = vadd.f32 %v3284, %v3349
      %v3382 = vadd.f32 %v3285, %v3350
      %v3383 = vadd.f32 %v3286, %v3351
      %v3384 = vadd.f32 %v3287, %v3352
      %v3385 = vadd.f32 %v3288, %v3353
      %v3386 = vld [vmem:[%s3191 + $0x2] sm:$0xff]
      %v3387 = vld [vmem:[%s3191 + $0xa] sm:$0xff]
      %v3388 = vld [vmem:[%s3191 + $0x1a] sm:$0xff]
      %v3389 = vld [vmem:[%s3191 + $0x22] sm:$0xff]
      %v3390 = vld [vmem:[%s3191 + $0x32] sm:$0xff]
      %v3391 = vld [vmem:[%s3191 + $0x3a] sm:$0xff]
      %v3392 = vld [vmem:[%s3191 + $0x4a] sm:$0xff]
      %v3393 = vld [vmem:[%s3191 + $0x52] sm:$0xff]
      %v3394 = vld [vmem:[%s3191 + $0x62] sm:$0xff]
      %v3395 = vld [vmem:[%s3191 + $0x6a] sm:$0xff]
      %v3396 = vld [vmem:[%s3191 + $0x7a] sm:$0xff]
      %v3397 = vld [vmem:[%s3191 + $0x82] sm:$0xff]
      %v3398 = vld [vmem:[%s3191 + $0x92] sm:$0xff]
      %v3399 = vld [vmem:[%s3191 + $0x9a] sm:$0xff]
      %v3400 = vld [vmem:[%s3191 + $0xaa] sm:$0xff]
      %v3401 = vld [vmem:[%s3191 + $0xb2] sm:$0xff]
      %v3402 = vld [vmem:[%s3191 + $0xc2] sm:$0xff]
      %v3403 = vld [vmem:[%s3191 + $0xca] sm:$0xff]
      %v3404 = vld [vmem:[%s3191 + $0xda] sm:$0xff]
      %v3405 = vld [vmem:[%s3191 + $0xe2] sm:$0xff]
      %v3406 = vld [vmem:[%s3191 + $0xf2] sm:$0xff]
      %v3407 = vld [vmem:[%s3191 + $0xfa] sm:$0xff]
      %v3408 = vld [vmem:[%s3191 + $0x10a] sm:$0xff]
      %v3409 = vld [vmem:[%s3191 + $0x112] sm:$0xff]
      %v3410 = vld [vmem:[%s3191 + $0x122] sm:$0xff]
      %v3411 = vld [vmem:[%s3191 + $0x12a] sm:$0xff]
      %v3412 = vld [vmem:[%s3191 + $0x13a] sm:$0xff]
      %v3413 = vld [vmem:[%s3191 + $0x142] sm:$0xff]
      %v3414 = vld [vmem:[%s3191 + $0x152] sm:$0xff]
      %v3415 = vld [vmem:[%s3191 + $0x15a] sm:$0xff]
      %v3416 = vld [vmem:[%s3191 + $0x16a] sm:$0xff]
      %v3417 = vld [vmem:[%s3191 + $0x172] sm:$0xff]
      %v3418 = vperm.slane %v469, 6
      %v3419 = vmul.f32 %v3386, %v3418
      %v3420 = vmul.f32 %v3387, %v3418
      %v3421 = vmul.f32 %v3388, %v3418
      %v3422 = vmul.f32 %v3389, %v3418
      %v3423 = vmul.f32 %v3390, %v3418
      %v3424 = vmul.f32 %v3391, %v3418
      %v3425 = vmul.f32 %v3392, %v3418
      %v3426 = vmul.f32 %v3393, %v3418
      %v3427 = vmul.f32 %v3394, %v3418
      %v3428 = vmul.f32 %v3395, %v3418
      %v3429 = vmul.f32 %v3396, %v3418
      %v3430 = vmul.f32 %v3397, %v3418
      %v3431 = vmul.f32 %v3398, %v3418
      %v3432 = vmul.f32 %v3399, %v3418
      %v3433 = vmul.f32 %v3400, %v3418
      %v3434 = vmul.f32 %v3401, %v3418
      %v3435 = vmul.f32 %v3402, %v3418
      %v3436 = vmul.f32 %v3403, %v3418
      %v3437 = vmul.f32 %v3404, %v3418
      %v3438 = vmul.f32 %v3405, %v3418
      %v3439 = vmul.f32 %v3406, %v3418
      %v3440 = vmul.f32 %v3407, %v3418
      %v3441 = vmul.f32 %v3408, %v3418
      %v3442 = vmul.f32 %v3409, %v3418
      %v3443 = vmul.f32 %v3410, %v3418
      %v3444 = vmul.f32 %v3411, %v3418
      %v3445 = vmul.f32 %v3412, %v3418
      %v3446 = vmul.f32 %v3413, %v3418
      %v3447 = vmul.f32 %v3414, %v3418
      %v3448 = vmul.f32 %v3415, %v3418
      %v3449 = vmul.f32 %v3416, %v3418
      %v3450 = vmul.f32 %v3417, %v3418
      %v3451 = vadd.f32 %v3354, %v3419
      %v3452 = vadd.f32 %v3355, %v3420
      %v3453 = vadd.f32 %v3356, %v3421
      %v3454 = vadd.f32 %v3357, %v3422
      %v3455 = vadd.f32 %v3358, %v3423
      %v3456 = vadd.f32 %v3359, %v3424
      %v3457 = vadd.f32 %v3360, %v3425
      %v3458 = vadd.f32 %v3361, %v3426
      %v3459 = vadd.f32 %v3362, %v3427
      %v3460 = vadd.f32 %v3363, %v3428
      %v3461 = vadd.f32 %v3364, %v3429
      %v3462 = vadd.f32 %v3365, %v3430
      %v3463 = vadd.f32 %v3366, %v3431
      %v3464 = vadd.f32 %v3367, %v3432
      %v3465 = vadd.f32 %v3368, %v3433
      %v3466 = vadd.f32 %v3369, %v3434
      %v3467 = vadd.f32 %v3370, %v3435
      %v3468 = vadd.f32 %v3371, %v3436
      %v3469 = vadd.f32 %v3372, %v3437
      %v3470 = vadd.f32 %v3373, %v3438
      %v3471 = vadd.f32 %v3374, %v3439
      %v3472 = vadd.f32 %v3375, %v3440
      %v3473 = vadd.f32 %v3376, %v3441
      %v3474 = vadd.f32 %v3377, %v3442
      %v3475 = vadd.f32 %v3378, %v3443
      %v3476 = vadd.f32 %v3379, %v3444
      %v3477 = vadd.f32 %v3380, %v3445
      %v3478 = vadd.f32 %v3381, %v3446
      %v3479 = vadd.f32 %v3382, %v3447
      %v3480 = vadd.f32 %v3383, %v3448
      %v3481 = vadd.f32 %v3384, %v3449
      %v3482 = vadd.f32 %v3385, %v3450
      %v3483 = vld [vmem:[%s3191 + $0x3] sm:$0xff]
      %v3484 = vld [vmem:[%s3191 + $0xb] sm:$0xff]
      %v3485 = vld [vmem:[%s3191 + $0x1b] sm:$0xff]
      %v3486 = vld [vmem:[%s3191 + $0x23] sm:$0xff]
      %v3487 = vld [vmem:[%s3191 + $0x33] sm:$0xff]
      %v3488 = vld [vmem:[%s3191 + $0x3b] sm:$0xff]
      %v3489 = vld [vmem:[%s3191 + $0x4b] sm:$0xff]
      %v3490 = vld [vmem:[%s3191 + $0x53] sm:$0xff]
      %v3491 = vld [vmem:[%s3191 + $0x63] sm:$0xff]
      %v3492 = vld [vmem:[%s3191 + $0x6b] sm:$0xff]
      %v3493 = vld [vmem:[%s3191 + $0x7b] sm:$0xff]
      %v3494 = vld [vmem:[%s3191 + $0x83] sm:$0xff]
      %v3495 = vld [vmem:[%s3191 + $0x93] sm:$0xff]
      %v3496 = vld [vmem:[%s3191 + $0x9b] sm:$0xff]
      %v3497 = vld [vmem:[%s3191 + $0xab] sm:$0xff]
      %v3498 = vld [vmem:[%s3191 + $0xb3] sm:$0xff]
      %v3499 = vld [vmem:[%s3191 + $0xc3] sm:$0xff]
      %v3500 = vld [vmem:[%s3191 + $0xcb] sm:$0xff]
      %v3501 = vld [vmem:[%s3191 + $0xdb] sm:$0xff]
      %v3502 = vld [vmem:[%s3191 + $0xe3] sm:$0xff]
      %v3503 = vld [vmem:[%s3191 + $0xf3] sm:$0xff]
      %v3504 = vld [vmem:[%s3191 + $0xfb] sm:$0xff]
      %v3505 = vld [vmem:[%s3191 + $0x10b] sm:$0xff]
      %v3506 = vld [vmem:[%s3191 + $0x113] sm:$0xff]
      %v3507 = vld [vmem:[%s3191 + $0x123] sm:$0xff]
      %v3508 = vld [vmem:[%s3191 + $0x12b] sm:$0xff]
      %v3509 = vld [vmem:[%s3191 + $0x13b] sm:$0xff]
      %v3510 = vld [vmem:[%s3191 + $0x143] sm:$0xff]
      %v3511 = vld [vmem:[%s3191 + $0x153] sm:$0xff]
      %v3512 = vld [vmem:[%s3191 + $0x15b] sm:$0xff]
      %v3513 = vld [vmem:[%s3191 + $0x16b] sm:$0xff]
      %v3514 = vld [vmem:[%s3191 + $0x173] sm:$0xff]
      %v3515 = vperm.slane %v469, 7
      %v3516 = vmul.f32 %v3483, %v3515
      %v3517 = vmul.f32 %v3484, %v3515
      %v3518 = vmul.f32 %v3485, %v3515
      %v3519 = vmul.f32 %v3486, %v3515
      %v3520 = vmul.f32 %v3487, %v3515
      %v3521 = vmul.f32 %v3488, %v3515
      %v3522 = vmul.f32 %v3489, %v3515
      %v3523 = vmul.f32 %v3490, %v3515
      %v3524 = vmul.f32 %v3491, %v3515
      %v3525 = vmul.f32 %v3492, %v3515
      %v3526 = vmul.f32 %v3493, %v3515
      %v3527 = vmul.f32 %v3494, %v3515
      %v3528 = vmul.f32 %v3495, %v3515
      %v3529 = vmul.f32 %v3496, %v3515
      %v3530 = vmul.f32 %v3497, %v3515
      %v3531 = vmul.f32 %v3498, %v3515
      %v3532 = vmul.f32 %v3499, %v3515
      %v3533 = vmul.f32 %v3500, %v3515
      %v3534 = vmul.f32 %v3501, %v3515
      %v3535 = vmul.f32 %v3502, %v3515
      %v3536 = vmul.f32 %v3503, %v3515
      %v3537 = vmul.f32 %v3504, %v3515
      %v3538 = vmul.f32 %v3505, %v3515
      %v3539 = vmul.f32 %v3506, %v3515
      %v3540 = vmul.f32 %v3507, %v3515
      %v3541 = vmul.f32 %v3508, %v3515
      %v3542 = vmul.f32 %v3509, %v3515
      %v3543 = vmul.f32 %v3510, %v3515
      %v3544 = vmul.f32 %v3511, %v3515
      %v3545 = vmul.f32 %v3512, %v3515
      %v3546 = vmul.f32 %v3513, %v3515
      %v3547 = vmul.f32 %v3514, %v3515
      %v3548 = vadd.f32 %v3451, %v3516
      %v3549 = vadd.f32 %v3452, %v3517
      %v3550 = vadd.f32 %v3453, %v3518
      %v3551 = vadd.f32 %v3454, %v3519
      %v3552 = vadd.f32 %v3455, %v3520
      %v3553 = vadd.f32 %v3456, %v3521
      %v3554 = vadd.f32 %v3457, %v3522
      %v3555 = vadd.f32 %v3458, %v3523
      %v3556 = vadd.f32 %v3459, %v3524
      %v3557 = vadd.f32 %v3460, %v3525
      %v3558 = vadd.f32 %v3461, %v3526
      %v3559 = vadd.f32 %v3462, %v3527
      %v3560 = vadd.f32 %v3463, %v3528
      %v3561 = vadd.f32 %v3464, %v3529
      %v3562 = vadd.f32 %v3465, %v3530
      %v3563 = vadd.f32 %v3466, %v3531
      %v3564 = vadd.f32 %v3467, %v3532
      %v3565 = vadd.f32 %v3468, %v3533
      %v3566 = vadd.f32 %v3469, %v3534
      %v3567 = vadd.f32 %v3470, %v3535
      %v3568 = vadd.f32 %v3471, %v3536
      %v3569 = vadd.f32 %v3472, %v3537
      %v3570 = vadd.f32 %v3473, %v3538
      %v3571 = vadd.f32 %v3474, %v3539
      %v3572 = vadd.f32 %v3475, %v3540
      %v3573 = vadd.f32 %v3476, %v3541
      %v3574 = vadd.f32 %v3477, %v3542
      %v3575 = vadd.f32 %v3478, %v3543
      %v3576 = vadd.f32 %v3479, %v3544
      %v3577 = vadd.f32 %v3480, %v3545
      %v3578 = vadd.f32 %v3481, %v3546
      %v3579 = vadd.f32 %v3482, %v3547
      %v3580 = vld [vmem:[%s3191 + $0x4] sm:$0xff]
      %v3581 = vld [vmem:[%s3191 + $0xc] sm:$0xff]
      %v3582 = vld [vmem:[%s3191 + $0x1c] sm:$0xff]
      %v3583 = vld [vmem:[%s3191 + $0x24] sm:$0xff]
      %v3584 = vld [vmem:[%s3191 + $0x34] sm:$0xff]
      %v3585 = vld [vmem:[%s3191 + $0x3c] sm:$0xff]
      %v3586 = vld [vmem:[%s3191 + $0x4c] sm:$0xff]
      %v3587 = vld [vmem:[%s3191 + $0x54] sm:$0xff]
      %v3588 = vld [vmem:[%s3191 + $0x64] sm:$0xff]
      %v3589 = vld [vmem:[%s3191 + $0x6c] sm:$0xff]
      %v3590 = vld [vmem:[%s3191 + $0x7c] sm:$0xff]
      %v3591 = vld [vmem:[%s3191 + $0x84] sm:$0xff]
      %v3592 = vld [vmem:[%s3191 + $0x94] sm:$0xff]
      %v3593 = vld [vmem:[%s3191 + $0x9c] sm:$0xff]
      %v3594 = vld [vmem:[%s3191 + $0xac] sm:$0xff]
      %v3595 = vld [vmem:[%s3191 + $0xb4] sm:$0xff]
      %v3596 = vld [vmem:[%s3191 + $0xc4] sm:$0xff]
      %v3597 = vld [vmem:[%s3191 + $0xcc] sm:$0xff]
      %v3598 = vld [vmem:[%s3191 + $0xdc] sm:$0xff]
      %v3599 = vld [vmem:[%s3191 + $0xe4] sm:$0xff]
      %v3600 = vld [vmem:[%s3191 + $0xf4] sm:$0xff]
      %v3601 = vld [vmem:[%s3191 + $0xfc] sm:$0xff]
      %v3602 = vld [vmem:[%s3191 + $0x10c] sm:$0xff]
      %v3603 = vld [vmem:[%s3191 + $0x114] sm:$0xff]
      %v3604 = vld [vmem:[%s3191 + $0x124] sm:$0xff]
      %v3605 = vld [vmem:[%s3191 + $0x12c] sm:$0xff]
      %v3606 = vld [vmem:[%s3191 + $0x13c] sm:$0xff]
      %v3607 = vld [vmem:[%s3191 + $0x144] sm:$0xff]
      %v3608 = vld [vmem:[%s3191 + $0x154] sm:$0xff]
      %v3609 = vld [vmem:[%s3191 + $0x15c] sm:$0xff]
      %v3610 = vld [vmem:[%s3191 + $0x16c] sm:$0xff]
      %v3611 = vld [vmem:[%s3191 + $0x174] sm:$0xff]
      %v3612 = vperm.slane %v470, 0
      %v3613 = vmul.f32 %v3580, %v3612
      %v3614 = vmul.f32 %v3581, %v3612
      %v3615 = vmul.f32 %v3582, %v3612
      %v3616 = vmul.f32 %v3583, %v3612
      %v3617 = vmul.f32 %v3584, %v3612
      %v3618 = vmul.f32 %v3585, %v3612
      %v3619 = vmul.f32 %v3586, %v3612
      %v3620 = vmul.f32 %v3587, %v3612
      %v3621 = vmul.f32 %v3588, %v3612
      %v3622 = vmul.f32 %v3589, %v3612
      %v3623 = vmul.f32 %v3590, %v3612
      %v3624 = vmul.f32 %v3591, %v3612
      %v3625 = vmul.f32 %v3592, %v3612
      %v3626 = vmul.f32 %v3593, %v3612
      %v3627 = vmul.f32 %v3594, %v3612
      %v3628 = vmul.f32 %v3595, %v3612
      %v3629 = vmul.f32 %v3596, %v3612
      %v3630 = vmul.f32 %v3597, %v3612
      %v3631 = vmul.f32 %v3598, %v3612
      %v3632 = vmul.f32 %v3599, %v3612
      %v3633 = vmul.f32 %v3600, %v3612
      %v3634 = vmul.f32 %v3601, %v3612
      %v3635 = vmul.f32 %v3602, %v3612
      %v3636 = vmul.f32 %v3603, %v3612
      %v3637 = vmul.f32 %v3604, %v3612
      %v3638 = vmul.f32 %v3605, %v3612
      %v3639 = vmul.f32 %v3606, %v3612
      %v3640 = vmul.f32 %v3607, %v3612
      %v3641 = vmul.f32 %v3608, %v3612
      %v3642 = vmul.f32 %v3609, %v3612
      %v3643 = vmul.f32 %v3610, %v3612
      %v3644 = vmul.f32 %v3611, %v3612
      %v3645 = vadd.f32 %v3548, %v3613
      %v3646 = vadd.f32 %v3549, %v3614
      %v3647 = vadd.f32 %v3550, %v3615
      %v3648 = vadd.f32 %v3551, %v3616
      %v3649 = vadd.f32 %v3552, %v3617
      %v3650 = vadd.f32 %v3553, %v3618
      %v3651 = vadd.f32 %v3554, %v3619
      %v3652 = vadd.f32 %v3555, %v3620
      %v3653 = vadd.f32 %v3556, %v3621
      %v3654 = vadd.f32 %v3557, %v3622
      %v3655 = vadd.f32 %v3558, %v3623
      %v3656 = vadd.f32 %v3559, %v3624
      %v3657 = vadd.f32 %v3560, %v3625
      %v3658 = vadd.f32 %v3561, %v3626
      %v3659 = vadd.f32 %v3562, %v3627
      %v3660 = vadd.f32 %v3563, %v3628
      %v3661 = vadd.f32 %v3564, %v3629
      %v3662 = vadd.f32 %v3565, %v3630
      %v3663 = vadd.f32 %v3566, %v3631
      %v3664 = vadd.f32 %v3567, %v3632
      %v3665 = vadd.f32 %v3568, %v3633
      %v3666 = vadd.f32 %v3569, %v3634
      %v3667 = vadd.f32 %v3570, %v3635
      %v3668 = vadd.f32 %v3571, %v3636
      %v3669 = vadd.f32 %v3572, %v3637
      %v3670 = vadd.f32 %v3573, %v3638
      %v3671 = vadd.f32 %v3574, %v3639
      %v3672 = vadd.f32 %v3575, %v3640
      %v3673 = vadd.f32 %v3576, %v3641
      %v3674 = vadd.f32 %v3577, %v3642
      %v3675 = vadd.f32 %v3578, %v3643
      %v3676 = vadd.f32 %v3579, %v3644
      %v3677 = vld [vmem:[%s3191 + $0x5] sm:$0xff]
      %v3678 = vld [vmem:[%s3191 + $0xd] sm:$0xff]
      %v3679 = vld [vmem:[%s3191 + $0x1d] sm:$0xff]
      %v3680 = vld [vmem:[%s3191 + $0x25] sm:$0xff]
      %v3681 = vld [vmem:[%s3191 + $0x35] sm:$0xff]
      %v3682 = vld [vmem:[%s3191 + $0x3d] sm:$0xff]
      %v3683 = vld [vmem:[%s3191 + $0x4d] sm:$0xff]
      %v3684 = vld [vmem:[%s3191 + $0x55] sm:$0xff]
      %v3685 = vld [vmem:[%s3191 + $0x65] sm:$0xff]
      %v3686 = vld [vmem:[%s3191 + $0x6d] sm:$0xff]
      %v3687 = vld [vmem:[%s3191 + $0x7d] sm:$0xff]
      %v3688 = vld [vmem:[%s3191 + $0x85] sm:$0xff]
      %v3689 = vld [vmem:[%s3191 + $0x95] sm:$0xff]
      %v3690 = vld [vmem:[%s3191 + $0x9d] sm:$0xff]
      %v3691 = vld [vmem:[%s3191 + $0xad] sm:$0xff]
      %v3692 = vld [vmem:[%s3191 + $0xb5] sm:$0xff]
      %v3693 = vld [vmem:[%s3191 + $0xc5] sm:$0xff]
      %v3694 = vld [vmem:[%s3191 + $0xcd] sm:$0xff]
      %v3695 = vld [vmem:[%s3191 + $0xdd] sm:$0xff]
      %v3696 = vld [vmem:[%s3191 + $0xe5] sm:$0xff]
      %v3697 = vld [vmem:[%s3191 + $0xf5] sm:$0xff]
      %v3698 = vld [vmem:[%s3191 + $0xfd] sm:$0xff]
      %v3699 = vld [vmem:[%s3191 + $0x10d] sm:$0xff]
      %v3700 = vld [vmem:[%s3191 + $0x115] sm:$0xff]
      %v3701 = vld [vmem:[%s3191 + $0x125] sm:$0xff]
      %v3702 = vld [vmem:[%s3191 + $0x12d] sm:$0xff]
      %v3703 = vld [vmem:[%s3191 + $0x13d] sm:$0xff]
      %v3704 = vld [vmem:[%s3191 + $0x145] sm:$0xff]
      %v3705 = vld [vmem:[%s3191 + $0x155] sm:$0xff]
      %v3706 = vld [vmem:[%s3191 + $0x15d] sm:$0xff]
      %v3707 = vld [vmem:[%s3191 + $0x16d] sm:$0xff]
      %v3708 = vld [vmem:[%s3191 + $0x175] sm:$0xff]
      %v3709 = vperm.slane %v470, 1
      %v3710 = vmul.f32 %v3677, %v3709
      %v3711 = vmul.f32 %v3678, %v3709
      %v3712 = vmul.f32 %v3679, %v3709
      %v3713 = vmul.f32 %v3680, %v3709
      %v3714 = vmul.f32 %v3681, %v3709
      %v3715 = vmul.f32 %v3682, %v3709
      %v3716 = vmul.f32 %v3683, %v3709
      %v3717 = vmul.f32 %v3684, %v3709
      %v3718 = vmul.f32 %v3685, %v3709
      %v3719 = vmul.f32 %v3686, %v3709
      %v3720 = vmul.f32 %v3687, %v3709
      %v3721 = vmul.f32 %v3688, %v3709
      %v3722 = vmul.f32 %v3689, %v3709
      %v3723 = vmul.f32 %v3690, %v3709
      %v3724 = vmul.f32 %v3691, %v3709
      %v3725 = vmul.f32 %v3692, %v3709
      %v3726 = vmul.f32 %v3693, %v3709
      %v3727 = vmul.f32 %v3694, %v3709
      %v3728 = vmul.f32 %v3695, %v3709
      %v3729 = vmul.f32 %v3696, %v3709
      %v3730 = vmul.f32 %v3697, %v3709
      %v3731 = vmul.f32 %v3698, %v3709
      %v3732 = vmul.f32 %v3699, %v3709
      %v3733 = vmul.f32 %v3700, %v3709
      %v3734 = vmul.f32 %v3701, %v3709
      %v3735 = vmul.f32 %v3702, %v3709
      %v3736 = vmul.f32 %v3703, %v3709
      %v3737 = vmul.f32 %v3704, %v3709
      %v3738 = vmul.f32 %v3705, %v3709
      %v3739 = vmul.f32 %v3706, %v3709
      %v3740 = vmul.f32 %v3707, %v3709
      %v3741 = vmul.f32 %v3708, %v3709
      %v3742 = vadd.f32 %v3645, %v3710
      %v3743 = vadd.f32 %v3646, %v3711
      %v3744 = vadd.f32 %v3647, %v3712
      %v3745 = vadd.f32 %v3648, %v3713
      %v3746 = vadd.f32 %v3649, %v3714
      %v3747 = vadd.f32 %v3650, %v3715
      %v3748 = vadd.f32 %v3651, %v3716
      %v3749 = vadd.f32 %v3652, %v3717
      %v3750 = vadd.f32 %v3653, %v3718
      %v3751 = vadd.f32 %v3654, %v3719
      %v3752 = vadd.f32 %v3655, %v3720
      %v3753 = vadd.f32 %v3656, %v3721
      %v3754 = vadd.f32 %v3657, %v3722
      %v3755 = vadd.f32 %v3658, %v3723
      %v3756 = vadd.f32 %v3659, %v3724
      %v3757 = vadd.f32 %v3660, %v3725
      %v3758 = vadd.f32 %v3661, %v3726
      %v3759 = vadd.f32 %v3662, %v3727
      %v3760 = vadd.f32 %v3663, %v3728
      %v3761 = vadd.f32 %v3664, %v3729
      %v3762 = vadd.f32 %v3665, %v3730
      %v3763 = vadd.f32 %v3666, %v3731
      %v3764 = vadd.f32 %v3667, %v3732
      %v3765 = vadd.f32 %v3668, %v3733
      %v3766 = vadd.f32 %v3669, %v3734
      %v3767 = vadd.f32 %v3670, %v3735
      %v3768 = vadd.f32 %v3671, %v3736
      %v3769 = vadd.f32 %v3672, %v3737
      %v3770 = vadd.f32 %v3673, %v3738
      %v3771 = vadd.f32 %v3674, %v3739
      %v3772 = vadd.f32 %v3675, %v3740
      %v3773 = vadd.f32 %v3676, %v3741
      %v3774 = vld [vmem:[%s3191 + $0x6] sm:$0xff]
      %v3775 = vld [vmem:[%s3191 + $0xe] sm:$0xff]
      %v3776 = vld [vmem:[%s3191 + $0x1e] sm:$0xff]
      %v3777 = vld [vmem:[%s3191 + $0x26] sm:$0xff]
      %v3778 = vld [vmem:[%s3191 + $0x36] sm:$0xff]
      %v3779 = vld [vmem:[%s3191 + $0x3e] sm:$0xff]
      %v3780 = vld [vmem:[%s3191 + $0x4e] sm:$0xff]
      %v3781 = vld [vmem:[%s3191 + $0x56] sm:$0xff]
      %v3782 = vld [vmem:[%s3191 + $0x66] sm:$0xff]
      %v3783 = vld [vmem:[%s3191 + $0x6e] sm:$0xff]
      %v3784 = vld [vmem:[%s3191 + $0x7e] sm:$0xff]
      %v3785 = vld [vmem:[%s3191 + $0x86] sm:$0xff]
      %v3786 = vld [vmem:[%s3191 + $0x96] sm:$0xff]
      %v3787 = vld [vmem:[%s3191 + $0x9e] sm:$0xff]
      %v3788 = vld [vmem:[%s3191 + $0xae] sm:$0xff]
      %v3789 = vld [vmem:[%s3191 + $0xb6] sm:$0xff]
      %v3790 = vld [vmem:[%s3191 + $0xc6] sm:$0xff]
      %v3791 = vld [vmem:[%s3191 + $0xce] sm:$0xff]
      %v3792 = vld [vmem:[%s3191 + $0xde] sm:$0xff]
      %v3793 = vld [vmem:[%s3191 + $0xe6] sm:$0xff]
      %v3794 = vld [vmem:[%s3191 + $0xf6] sm:$0xff]
      %v3795 = vld [vmem:[%s3191 + $0xfe] sm:$0xff]
      %v3796 = vld [vmem:[%s3191 + $0x10e] sm:$0xff]
      %v3797 = vld [vmem:[%s3191 + $0x116] sm:$0xff]
      %v3798 = vld [vmem:[%s3191 + $0x126] sm:$0xff]
      %v3799 = vld [vmem:[%s3191 + $0x12e] sm:$0xff]
      %v3800 = vld [vmem:[%s3191 + $0x13e] sm:$0xff]
      %v3801 = vld [vmem:[%s3191 + $0x146] sm:$0xff]
      %v3802 = vld [vmem:[%s3191 + $0x156] sm:$0xff]
      %v3803 = vld [vmem:[%s3191 + $0x15e] sm:$0xff]
      %v3804 = vld [vmem:[%s3191 + $0x16e] sm:$0xff]
      %v3805 = vld [vmem:[%s3191 + $0x176] sm:$0xff]
      %v3806 = vperm.slane %v470, 2
      %v3807 = vmul.f32 %v3774, %v3806
      %v3808 = vmul.f32 %v3775, %v3806
      %v3809 = vmul.f32 %v3776, %v3806
      %v3810 = vmul.f32 %v3777, %v3806
      %v3811 = vmul.f32 %v3778, %v3806
      %v3812 = vmul.f32 %v3779, %v3806
      %v3813 = vmul.f32 %v3780, %v3806
      %v3814 = vmul.f32 %v3781, %v3806
      %v3815 = vmul.f32 %v3782, %v3806
      %v3816 = vmul.f32 %v3783, %v3806
      %v3817 = vmul.f32 %v3784, %v3806
      %v3818 = vmul.f32 %v3785, %v3806
      %v3819 = vmul.f32 %v3786, %v3806
      %v3820 = vmul.f32 %v3787, %v3806
      %v3821 = vmul.f32 %v3788, %v3806
      %v3822 = vmul.f32 %v3789, %v3806
      %v3823 = vmul.f32 %v3790, %v3806
      %v3824 = vmul.f32 %v3791, %v3806
      %v3825 = vmul.f32 %v3792, %v3806
      %v3826 = vmul.f32 %v3793, %v3806
      %v3827 = vmul.f32 %v3794, %v3806
      %v3828 = vmul.f32 %v3795, %v3806
      %v3829 = vmul.f32 %v3796, %v3806
      %v3830 = vmul.f32 %v3797, %v3806
      %v3831 = vmul.f32 %v3798, %v3806
      %v3832 = vmul.f32 %v3799, %v3806
      %v3833 = vmul.f32 %v3800, %v3806
      %v3834 = vmul.f32 %v3801, %v3806
      %v3835 = vmul.f32 %v3802, %v3806
      %v3836 = vmul.f32 %v3803, %v3806
      %v3837 = vmul.f32 %v3804, %v3806
      %v3838 = vmul.f32 %v3805, %v3806
      %v3839 = vadd.f32 %v3742, %v3807
      %v3840 = vadd.f32 %v3743, %v3808
      %v3841 = vadd.f32 %v3744, %v3809
      %v3842 = vadd.f32 %v3745, %v3810
      %v3843 = vadd.f32 %v3746, %v3811
      %v3844 = vadd.f32 %v3747, %v3812
      %v3845 = vadd.f32 %v3748, %v3813
      %v3846 = vadd.f32 %v3749, %v3814
      %v3847 = vadd.f32 %v3750, %v3815
      %v3848 = vadd.f32 %v3751, %v3816
      %v3849 = vadd.f32 %v3752, %v3817
      %v3850 = vadd.f32 %v3753, %v3818
      %v3851 = vadd.f32 %v3754, %v3819
      %v3852 = vadd.f32 %v3755, %v3820
      %v3853 = vadd.f32 %v3756, %v3821
      %v3854 = vadd.f32 %v3757, %v3822
      %v3855 = vadd.f32 %v3758, %v3823
      %v3856 = vadd.f32 %v3759, %v3824
      %v3857 = vadd.f32 %v3760, %v3825
      %v3858 = vadd.f32 %v3761, %v3826
      %v3859 = vadd.f32 %v3762, %v3827
      %v3860 = vadd.f32 %v3763, %v3828
      %v3861 = vadd.f32 %v3764, %v3829
      %v3862 = vadd.f32 %v3765, %v3830
      %v3863 = vadd.f32 %v3766, %v3831
      %v3864 = vadd.f32 %v3767, %v3832
      %v3865 = vadd.f32 %v3768, %v3833
      %v3866 = vadd.f32 %v3769, %v3834
      %v3867 = vadd.f32 %v3770, %v3835
      %v3868 = vadd.f32 %v3771, %v3836
      %v3869 = vadd.f32 %v3772, %v3837
      %v3870 = vadd.f32 %v3773, %v3838
      %s3871 = scalar_lea.vmem [#allocation2], 120
      %v3872 = vld [vmem:[%s3871] sm:$0xff]
      %v3873 = vld [vmem:[%s3871 + $0x8] sm:$0xff]
      %v3874 = vld [vmem:[%s3871 + $0x18] sm:$0xff]
      %v3875 = vld [vmem:[%s3871 + $0x20] sm:$0xff]
      %v3876 = vld [vmem:[%s3871 + $0x30] sm:$0xff]
      %v3877 = vld [vmem:[%s3871 + $0x38] sm:$0xff]
      %v3878 = vld [vmem:[%s3871 + $0x48] sm:$0xff]
      %v3879 = vld [vmem:[%s3871 + $0x50] sm:$0xff]
      %v3880 = vld [vmem:[%s3871 + $0x60] sm:$0xff]
      %v3881 = vld [vmem:[%s3871 + $0x68] sm:$0xff]
      %v3882 = vld [vmem:[%s3871 + $0x78] sm:$0xff]
      %v3883 = vld [vmem:[%s3871 + $0x80] sm:$0xff]
      %v3884 = vld [vmem:[%s3871 + $0x90] sm:$0xff]
      %v3885 = vld [vmem:[%s3871 + $0x98] sm:$0xff]
      %v3886 = vld [vmem:[%s3871 + $0xa8] sm:$0xff]
      %v3887 = vld [vmem:[%s3871 + $0xb0] sm:$0xff]
      %v3888 = vld [vmem:[%s3871 + $0xc0] sm:$0xff]
      %v3889 = vld [vmem:[%s3871 + $0xc8] sm:$0xff]
      %v3890 = vld [vmem:[%s3871 + $0xd8] sm:$0xff]
      %v3891 = vld [vmem:[%s3871 + $0xe0] sm:$0xff]
      %v3892 = vld [vmem:[%s3871 + $0xf0] sm:$0xff]
      %v3893 = vld [vmem:[%s3871 + $0xf8] sm:$0xff]
      %v3894 = vld [vmem:[%s3871 + $0x108] sm:$0xff]
      %v3895 = vld [vmem:[%s3871 + $0x110] sm:$0xff]
      %v3896 = vld [vmem:[%s3871 + $0x120] sm:$0xff]
      %v3897 = vld [vmem:[%s3871 + $0x128] sm:$0xff]
      %v3898 = vld [vmem:[%s3871 + $0x138] sm:$0xff]
      %v3899 = vld [vmem:[%s3871 + $0x140] sm:$0xff]
      %v3900 = vld [vmem:[%s3871 + $0x150] sm:$0xff]
      %v3901 = vld [vmem:[%s3871 + $0x158] sm:$0xff]
      %v3902 = vld [vmem:[%s3871 + $0x168] sm:$0xff]
      %v3903 = vld [vmem:[%s3871 + $0x170] sm:$0xff]
      %v3904 = vperm.slane %v470, 3
      %v3905 = vmul.f32 %v3872, %v3904
      %v3906 = vmul.f32 %v3873, %v3904
      %v3907 = vmul.f32 %v3874, %v3904
      %v3908 = vmul.f32 %v3875, %v3904
      %v3909 = vmul.f32 %v3876, %v3904
      %v3910 = vmul.f32 %v3877, %v3904
      %v3911 = vmul.f32 %v3878, %v3904
      %v3912 = vmul.f32 %v3879, %v3904
      %v3913 = vmul.f32 %v3880, %v3904
      %v3914 = vmul.f32 %v3881, %v3904
      %v3915 = vmul.f32 %v3882, %v3904
      %v3916 = vmul.f32 %v3883, %v3904
      %v3917 = vmul.f32 %v3884, %v3904
      %v3918 = vmul.f32 %v3885, %v3904
      %v3919 = vmul.f32 %v3886, %v3904
      %v3920 = vmul.f32 %v3887, %v3904
      %v3921 = vmul.f32 %v3888, %v3904
      %v3922 = vmul.f32 %v3889, %v3904
      %v3923 = vmul.f32 %v3890, %v3904
      %v3924 = vmul.f32 %v3891, %v3904
      %v3925 = vmul.f32 %v3892, %v3904
      %v3926 = vmul.f32 %v3893, %v3904
      %v3927 = vmul.f32 %v3894, %v3904
      %v3928 = vmul.f32 %v3895, %v3904
      %v3929 = vmul.f32 %v3896, %v3904
      %v3930 = vmul.f32 %v3897, %v3904
      %v3931 = vmul.f32 %v3898, %v3904
      %v3932 = vmul.f32 %v3899, %v3904
      %v3933 = vmul.f32 %v3900, %v3904
      %v3934 = vmul.f32 %v3901, %v3904
      %v3935 = vmul.f32 %v3902, %v3904
      %v3936 = vmul.f32 %v3903, %v3904
      %v3937 = vadd.f32 %v3839, %v3905
      %v3938 = vadd.f32 %v3840, %v3906
      %v3939 = vadd.f32 %v3841, %v3907
      %v3940 = vadd.f32 %v3842, %v3908
      %v3941 = vadd.f32 %v3843, %v3909
      %v3942 = vadd.f32 %v3844, %v3910
      %v3943 = vadd.f32 %v3845, %v3911
      %v3944 = vadd.f32 %v3846, %v3912
      %v3945 = vadd.f32 %v3847, %v3913
      %v3946 = vadd.f32 %v3848, %v3914
      %v3947 = vadd.f32 %v3849, %v3915
      %v3948 = vadd.f32 %v3850, %v3916
      %v3949 = vadd.f32 %v3851, %v3917
      %v3950 = vadd.f32 %v3852, %v3918
      %v3951 = vadd.f32 %v3853, %v3919
      %v3952 = vadd.f32 %v3854, %v3920
      %v3953 = vadd.f32 %v3855, %v3921
      %v3954 = vadd.f32 %v3856, %v3922
      %v3955 = vadd.f32 %v3857, %v3923
      %v3956 = vadd.f32 %v3858, %v3924
      %v3957 = vadd.f32 %v3859, %v3925
      %v3958 = vadd.f32 %v3860, %v3926
      %v3959 = vadd.f32 %v3861, %v3927
      %v3960 = vadd.f32 %v3862, %v3928
      %v3961 = vadd.f32 %v3863, %v3929
      %v3962 = vadd.f32 %v3864, %v3930
      %v3963 = vadd.f32 %v3865, %v3931
      %v3964 = vadd.f32 %v3866, %v3932
      %v3965 = vadd.f32 %v3867, %v3933
      %v3966 = vadd.f32 %v3868, %v3934
      %v3967 = vadd.f32 %v3869, %v3935
      %v3968 = vadd.f32 %v3870, %v3936
      %v3969 = vld [vmem:[%s3871 + $0x1] sm:$0xff]
      %v3970 = vld [vmem:[%s3871 + $0x9] sm:$0xff]
      %v3971 = vld [vmem:[%s3871 + $0x19] sm:$0xff]
      %v3972 = vld [vmem:[%s3871 + $0x21] sm:$0xff]
      %v3973 = vld [vmem:[%s3871 + $0x31] sm:$0xff]
      %v3974 = vld [vmem:[%s3871 + $0x39] sm:$0xff]
      %v3975 = vld [vmem:[%s3871 + $0x49] sm:$0xff]
      %v3976 = vld [vmem:[%s3871 + $0x51] sm:$0xff]
      %v3977 = vld [vmem:[%s3871 + $0x61] sm:$0xff]
      %v3978 = vld [vmem:[%s3871 + $0x69] sm:$0xff]
      %v3979 = vld [vmem:[%s3871 + $0x79] sm:$0xff]
      %v3980 = vld [vmem:[%s3871 + $0x81] sm:$0xff]
      %v3981 = vld [vmem:[%s3871 + $0x91] sm:$0xff]
      %v3982 = vld [vmem:[%s3871 + $0x99] sm:$0xff]
      %v3983 = vld [vmem:[%s3871 + $0xa9] sm:$0xff]
      %v3984 = vld [vmem:[%s3871 + $0xb1] sm:$0xff]
      %v3985 = vld [vmem:[%s3871 + $0xc1] sm:$0xff]
      %v3986 = vld [vmem:[%s3871 + $0xc9] sm:$0xff]
      %v3987 = vld [vmem:[%s3871 + $0xd9] sm:$0xff]
      %v3988 = vld [vmem:[%s3871 + $0xe1] sm:$0xff]
      %v3989 = vld [vmem:[%s3871 + $0xf1] sm:$0xff]
      %v3990 = vld [vmem:[%s3871 + $0xf9] sm:$0xff]
      %v3991 = vld [vmem:[%s3871 + $0x109] sm:$0xff]
      %v3992 = vld [vmem:[%s3871 + $0x111] sm:$0xff]
      %v3993 = vld [vmem:[%s3871 + $0x121] sm:$0xff]
      %v3994 = vld [vmem:[%s3871 + $0x129] sm:$0xff]
      %v3995 = vld [vmem:[%s3871 + $0x139] sm:$0xff]
      %v3996 = vld [vmem:[%s3871 + $0x141] sm:$0xff]
      %v3997 = vld [vmem:[%s3871 + $0x151] sm:$0xff]
      %v3998 = vld [vmem:[%s3871 + $0x159] sm:$0xff]
      %v3999 = vld [vmem:[%s3871 + $0x169] sm:$0xff]
      %v4000 = vld [vmem:[%s3871 + $0x171] sm:$0xff]
      %v4001 = vperm.slane %v470, 4
      %v4002 = vmul.f32 %v3969, %v4001
      %v4003 = vmul.f32 %v3970, %v4001
      %v4004 = vmul.f32 %v3971, %v4001
      %v4005 = vmul.f32 %v3972, %v4001
      %v4006 = vmul.f32 %v3973, %v4001
      %v4007 = vmul.f32 %v3974, %v4001
      %v4008 = vmul.f32 %v3975, %v4001
      %v4009 = vmul.f32 %v3976, %v4001
      %v4010 = vmul.f32 %v3977, %v4001
      %v4011 = vmul.f32 %v3978, %v4001
      %v4012 = vmul.f32 %v3979, %v4001
      %v4013 = vmul.f32 %v3980, %v4001
      %v4014 = vmul.f32 %v3981, %v4001
      %v4015 = vmul.f32 %v3982, %v4001
      %v4016 = vmul.f32 %v3983, %v4001
      %v4017 = vmul.f32 %v3984, %v4001
      %v4018 = vmul.f32 %v3985, %v4001
      %v4019 = vmul.f32 %v3986, %v4001
      %v4020 = vmul.f32 %v3987, %v4001
      %v4021 = vmul.f32 %v3988, %v4001
      %v4022 = vmul.f32 %v3989, %v4001
      %v4023 = vmul.f32 %v3990, %v4001
      %v4024 = vmul.f32 %v3991, %v4001
      %v4025 = vmul.f32 %v3992, %v4001
      %v4026 = vmul.f32 %v3993, %v4001
      %v4027 = vmul.f32 %v3994, %v4001
      %v4028 = vmul.f32 %v3995, %v4001
      %v4029 = vmul.f32 %v3996, %v4001
      %v4030 = vmul.f32 %v3997, %v4001
      %v4031 = vmul.f32 %v3998, %v4001
      %v4032 = vmul.f32 %v3999, %v4001
      %v4033 = vmul.f32 %v4000, %v4001
      %v4034 = vadd.f32 %v3937, %v4002
      %v4035 = vadd.f32 %v3938, %v4003
      %v4036 = vadd.f32 %v3939, %v4004
      %v4037 = vadd.f32 %v3940, %v4005
      %v4038 = vadd.f32 %v3941, %v4006
      %v4039 = vadd.f32 %v3942, %v4007
      %v4040 = vadd.f32 %v3943, %v4008
      %v4041 = vadd.f32 %v3944, %v4009
      %v4042 = vadd.f32 %v3945, %v4010
      %v4043 = vadd.f32 %v3946, %v4011
      %v4044 = vadd.f32 %v3947, %v4012
      %v4045 = vadd.f32 %v3948, %v4013
      %v4046 = vadd.f32 %v3949, %v4014
      %v4047 = vadd.f32 %v3950, %v4015
      %v4048 = vadd.f32 %v3951, %v4016
      %v4049 = vadd.f32 %v3952, %v4017
      %v4050 = vadd.f32 %v3953, %v4018
      %v4051 = vadd.f32 %v3954, %v4019
      %v4052 = vadd.f32 %v3955, %v4020
      %v4053 = vadd.f32 %v3956, %v4021
      %v4054 = vadd.f32 %v3957, %v4022
      %v4055 = vadd.f32 %v3958, %v4023
      %v4056 = vadd.f32 %v3959, %v4024
      %v4057 = vadd.f32 %v3960, %v4025
      %v4058 = vadd.f32 %v3961, %v4026
      %v4059 = vadd.f32 %v3962, %v4027
      %v4060 = vadd.f32 %v3963, %v4028
      %v4061 = vadd.f32 %v3964, %v4029
      %v4062 = vadd.f32 %v3965, %v4030
      %v4063 = vadd.f32 %v3966, %v4031
      %v4064 = vadd.f32 %v3967, %v4032
      %v4065 = vadd.f32 %v3968, %v4033
      %v4066 = vld [vmem:[%s3871 + $0x2] sm:$0xff]
      %v4067 = vld [vmem:[%s3871 + $0xa] sm:$0xff]
      %v4068 = vld [vmem:[%s3871 + $0x1a] sm:$0xff]
      %v4069 = vld [vmem:[%s3871 + $0x22] sm:$0xff]
      %v4070 = vld [vmem:[%s3871 + $0x32] sm:$0xff]
      %v4071 = vld [vmem:[%s3871 + $0x3a] sm:$0xff]
      %v4072 = vld [vmem:[%s3871 + $0x4a] sm:$0xff]
      %v4073 = vld [vmem:[%s3871 + $0x52] sm:$0xff]
      %v4074 = vld [vmem:[%s3871 + $0x62] sm:$0xff]
      %v4075 = vld [vmem:[%s3871 + $0x6a] sm:$0xff]
      %v4076 = vld [vmem:[%s3871 + $0x7a] sm:$0xff]
      %v4077 = vld [vmem:[%s3871 + $0x82] sm:$0xff]
      %v4078 = vld [vmem:[%s3871 + $0x92] sm:$0xff]
      %v4079 = vld [vmem:[%s3871 + $0x9a] sm:$0xff]
      %v4080 = vld [vmem:[%s3871 + $0xaa] sm:$0xff]
      %v4081 = vld [vmem:[%s3871 + $0xb2] sm:$0xff]
      %v4082 = vld [vmem:[%s3871 + $0xc2] sm:$0xff]
      %v4083 = vld [vmem:[%s3871 + $0xca] sm:$0xff]
      %v4084 = vld [vmem:[%s3871 + $0xda] sm:$0xff]
      %v4085 = vld [vmem:[%s3871 + $0xe2] sm:$0xff]
      %v4086 = vld [vmem:[%s3871 + $0xf2] sm:$0xff]
      %v4087 = vld [vmem:[%s3871 + $0xfa] sm:$0xff]
      %v4088 = vld [vmem:[%s3871 + $0x10a] sm:$0xff]
      %v4089 = vld [vmem:[%s3871 + $0x112] sm:$0xff]
      %v4090 = vld [vmem:[%s3871 + $0x122] sm:$0xff]
      %v4091 = vld [vmem:[%s3871 + $0x12a] sm:$0xff]
      %v4092 = vld [vmem:[%s3871 + $0x13a] sm:$0xff]
      %v4093 = vld [vmem:[%s3871 + $0x142] sm:$0xff]
      %v4094 = vld [vmem:[%s3871 + $0x152] sm:$0xff]
      %v4095 = vld [vmem:[%s3871 + $0x15a] sm:$0xff]
      %v4096 = vld [vmem:[%s3871 + $0x16a] sm:$0xff]
      %v4097 = vld [vmem:[%s3871 + $0x172] sm:$0xff]
      %v4098 = vperm.slane %v470, 5
      %v4099 = vmul.f32 %v4066, %v4098
      %v4100 = vmul.f32 %v4067, %v4098
      %v4101 = vmul.f32 %v4068, %v4098
      %v4102 = vmul.f32 %v4069, %v4098
      %v4103 = vmul.f32 %v4070, %v4098
      %v4104 = vmul.f32 %v4071, %v4098
      %v4105 = vmul.f32 %v4072, %v4098
      %v4106 = vmul.f32 %v4073, %v4098
      %v4107 = vmul.f32 %v4074, %v4098
      %v4108 = vmul.f32 %v4075, %v4098
      %v4109 = vmul.f32 %v4076, %v4098
      %v4110 = vmul.f32 %v4077, %v4098
      %v4111 = vmul.f32 %v4078, %v4098
      %v4112 = vmul.f32 %v4079, %v4098
      %v4113 = vmul.f32 %v4080, %v4098
      %v4114 = vmul.f32 %v4081, %v4098
      %v4115 = vmul.f32 %v4082, %v4098
      %v4116 = vmul.f32 %v4083, %v4098
      %v4117 = vmul.f32 %v4084, %v4098
      %v4118 = vmul.f32 %v4085, %v4098
      %v4119 = vmul.f32 %v4086, %v4098
      %v4120 = vmul.f32 %v4087, %v4098
      %v4121 = vmul.f32 %v4088, %v4098
      %v4122 = vmul.f32 %v4089, %v4098
      %v4123 = vmul.f32 %v4090, %v4098
      %v4124 = vmul.f32 %v4091, %v4098
      %v4125 = vmul.f32 %v4092, %v4098
      %v4126 = vmul.f32 %v4093, %v4098
      %v4127 = vmul.f32 %v4094, %v4098
      %v4128 = vmul.f32 %v4095, %v4098
      %v4129 = vmul.f32 %v4096, %v4098
      %v4130 = vmul.f32 %v4097, %v4098
      %v4131 = vadd.f32 %v4034, %v4099
      %v4132 = vadd.f32 %v4035, %v4100
      %v4133 = vadd.f32 %v4036, %v4101
      %v4134 = vadd.f32 %v4037, %v4102
      %v4135 = vadd.f32 %v4038, %v4103
      %v4136 = vadd.f32 %v4039, %v4104
      %v4137 = vadd.f32 %v4040, %v4105
      %v4138 = vadd.f32 %v4041, %v4106
      %v4139 = vadd.f32 %v4042, %v4107
      %v4140 = vadd.f32 %v4043, %v4108
      %v4141 = vadd.f32 %v4044, %v4109
      %v4142 = vadd.f32 %v4045, %v4110
      %v4143 = vadd.f32 %v4046, %v4111
      %v4144 = vadd.f32 %v4047, %v4112
      %v4145 = vadd.f32 %v4048, %v4113
      %v4146 = vadd.f32 %v4049, %v4114
      %v4147 = vadd.f32 %v4050, %v4115
      %v4148 = vadd.f32 %v4051, %v4116
      %v4149 = vadd.f32 %v4052, %v4117
      %v4150 = vadd.f32 %v4053, %v4118
      %v4151 = vadd.f32 %v4054, %v4119
      %v4152 = vadd.f32 %v4055, %v4120
      %v4153 = vadd.f32 %v4056, %v4121
      %v4154 = vadd.f32 %v4057, %v4122
      %v4155 = vadd.f32 %v4058, %v4123
      %v4156 = vadd.f32 %v4059, %v4124
      %v4157 = vadd.f32 %v4060, %v4125
      %v4158 = vadd.f32 %v4061, %v4126
      %v4159 = vadd.f32 %v4062, %v4127
      %v4160 = vadd.f32 %v4063, %v4128
      %v4161 = vadd.f32 %v4064, %v4129
      %v4162 = vadd.f32 %v4065, %v4130
      %v4163 = vld [vmem:[%s3871 + $0x3] sm:$0xff]
      %v4164 = vld [vmem:[%s3871 + $0xb] sm:$0xff]
      %v4165 = vld [vmem:[%s3871 + $0x1b] sm:$0xff]
      %v4166 = vld [vmem:[%s3871 + $0x23] sm:$0xff]
      %v4167 = vld [vmem:[%s3871 + $0x33] sm:$0xff]
      %v4168 = vld [vmem:[%s3871 + $0x3b] sm:$0xff]
      %v4169 = vld [vmem:[%s3871 + $0x4b] sm:$0xff]
      %v4170 = vld [vmem:[%s3871 + $0x53] sm:$0xff]
      %v4171 = vld [vmem:[%s3871 + $0x63] sm:$0xff]
      %v4172 = vld [vmem:[%s3871 + $0x6b] sm:$0xff]
      %v4173 = vld [vmem:[%s3871 + $0x7b] sm:$0xff]
      %v4174 = vld [vmem:[%s3871 + $0x83] sm:$0xff]
      %v4175 = vld [vmem:[%s3871 + $0x93] sm:$0xff]
      %v4176 = vld [vmem:[%s3871 + $0x9b] sm:$0xff]
      %v4177 = vld [vmem:[%s3871 + $0xab] sm:$0xff]
      %v4178 = vld [vmem:[%s3871 + $0xb3] sm:$0xff]
      %v4179 = vld [vmem:[%s3871 + $0xc3] sm:$0xff]
      %v4180 = vld [vmem:[%s3871 + $0xcb] sm:$0xff]
      %v4181 = vld [vmem:[%s3871 + $0xdb] sm:$0xff]
      %v4182 = vld [vmem:[%s3871 + $0xe3] sm:$0xff]
      %v4183 = vld [vmem:[%s3871 + $0xf3] sm:$0xff]
      %v4184 = vld [vmem:[%s3871 + $0xfb] sm:$0xff]
      %v4185 = vld [vmem:[%s3871 + $0x10b] sm:$0xff]
      %v4186 = vld [vmem:[%s3871 + $0x113] sm:$0xff]
      %v4187 = vld [vmem:[%s3871 + $0x123] sm:$0xff]
      %v4188 = vld [vmem:[%s3871 + $0x12b] sm:$0xff]
      %v4189 = vld [vmem:[%s3871 + $0x13b] sm:$0xff]
      %v4190 = vld [vmem:[%s3871 + $0x143] sm:$0xff]
      %v4191 = vld [vmem:[%s3871 + $0x153] sm:$0xff]
      %v4192 = vld [vmem:[%s3871 + $0x15b] sm:$0xff]
      %v4193 = vld [vmem:[%s3871 + $0x16b] sm:$0xff]
      %v4194 = vld [vmem:[%s3871 + $0x173] sm:$0xff]
      %v4195 = vperm.slane %v470, 6
      %v4196 = vmul.f32 %v4163, %v4195
      %v4197 = vmul.f32 %v4164, %v4195
      %v4198 = vmul.f32 %v4165, %v4195
      %v4199 = vmul.f32 %v4166, %v4195
      %v4200 = vmul.f32 %v4167, %v4195
      %v4201 = vmul.f32 %v4168, %v4195
      %v4202 = vmul.f32 %v4169, %v4195
      %v4203 = vmul.f32 %v4170, %v4195
      %v4204 = vmul.f32 %v4171, %v4195
      %v4205 = vmul.f32 %v4172, %v4195
      %v4206 = vmul.f32 %v4173, %v4195
      %v4207 = vmul.f32 %v4174, %v4195
      %v4208 = vmul.f32 %v4175, %v4195
      %v4209 = vmul.f32 %v4176, %v4195
      %v4210 = vmul.f32 %v4177, %v4195
      %v4211 = vmul.f32 %v4178, %v4195
      %v4212 = vmul.f32 %v4179, %v4195
      %v4213 = vmul.f32 %v4180, %v4195
      %v4214 = vmul.f32 %v4181, %v4195
      %v4215 = vmul.f32 %v4182, %v4195
      %v4216 = vmul.f32 %v4183, %v4195
      %v4217 = vmul.f32 %v4184, %v4195
      %v4218 = vmul.f32 %v4185, %v4195
      %v4219 = vmul.f32 %v4186, %v4195
      %v4220 = vmul.f32 %v4187, %v4195
      %v4221 = vmul.f32 %v4188, %v4195
      %v4222 = vmul.f32 %v4189, %v4195
      %v4223 = vmul.f32 %v4190, %v4195
      %v4224 = vmul.f32 %v4191, %v4195
      %v4225 = vmul.f32 %v4192, %v4195
      %v4226 = vmul.f32 %v4193, %v4195
      %v4227 = vmul.f32 %v4194, %v4195
      %v4228 = vadd.f32 %v4131, %v4196
      %v4229 = vadd.f32 %v4132, %v4197
      %v4230 = vadd.f32 %v4133, %v4198
      %v4231 = vadd.f32 %v4134, %v4199
      %v4232 = vadd.f32 %v4135, %v4200
      %v4233 = vadd.f32 %v4136, %v4201
      %v4234 = vadd.f32 %v4137, %v4202
      %v4235 = vadd.f32 %v4138, %v4203
      %v4236 = vadd.f32 %v4139, %v4204
      %v4237 = vadd.f32 %v4140, %v4205
      %v4238 = vadd.f32 %v4141, %v4206
      %v4239 = vadd.f32 %v4142, %v4207
      %v4240 = vadd.f32 %v4143, %v4208
      %v4241 = vadd.f32 %v4144, %v4209
      %v4242 = vadd.f32 %v4145, %v4210
      %v4243 = vadd.f32 %v4146, %v4211
      %v4244 = vadd.f32 %v4147, %v4212
      %v4245 = vadd.f32 %v4148, %v4213
      %v4246 = vadd.f32 %v4149, %v4214
      %v4247 = vadd.f32 %v4150, %v4215
      %v4248 = vadd.f32 %v4151, %v4216
      %v4249 = vadd.f32 %v4152, %v4217
      %v4250 = vadd.f32 %v4153, %v4218
      %v4251 = vadd.f32 %v4154, %v4219
      %v4252 = vadd.f32 %v4155, %v4220
      %v4253 = vadd.f32 %v4156, %v4221
      %v4254 = vadd.f32 %v4157, %v4222
      %v4255 = vadd.f32 %v4158, %v4223
      %v4256 = vadd.f32 %v4159, %v4224
      %v4257 = vadd.f32 %v4160, %v4225
      %v4258 = vadd.f32 %v4161, %v4226
      %v4259 = vadd.f32 %v4162, %v4227
      %v4260 = vld [vmem:[%s3871 + $0x4] sm:$0xff]
      %v4261 = vld [vmem:[%s3871 + $0xc] sm:$0xff]
      %v4262 = vld [vmem:[%s3871 + $0x1c] sm:$0xff]
      %v4263 = vld [vmem:[%s3871 + $0x24] sm:$0xff]
      %v4264 = vld [vmem:[%s3871 + $0x34] sm:$0xff]
      %v4265 = vld [vmem:[%s3871 + $0x3c] sm:$0xff]
      %v4266 = vld [vmem:[%s3871 + $0x4c] sm:$0xff]
      %v4267 = vld [vmem:[%s3871 + $0x54] sm:$0xff]
      %v4268 = vld [vmem:[%s3871 + $0x64] sm:$0xff]
      %v4269 = vld [vmem:[%s3871 + $0x6c] sm:$0xff]
      %v4270 = vld [vmem:[%s3871 + $0x7c] sm:$0xff]
      %v4271 = vld [vmem:[%s3871 + $0x84] sm:$0xff]
      %v4272 = vld [vmem:[%s3871 + $0x94] sm:$0xff]
      %v4273 = vld [vmem:[%s3871 + $0x9c] sm:$0xff]
      %v4274 = vld [vmem:[%s3871 + $0xac] sm:$0xff]
      %v4275 = vld [vmem:[%s3871 + $0xb4] sm:$0xff]
      %v4276 = vld [vmem:[%s3871 + $0xc4] sm:$0xff]
      %v4277 = vld [vmem:[%s3871 + $0xcc] sm:$0xff]
      %v4278 = vld [vmem:[%s3871 + $0xdc] sm:$0xff]
      %v4279 = vld [vmem:[%s3871 + $0xe4] sm:$0xff]
      %v4280 = vld [vmem:[%s3871 + $0xf4] sm:$0xff]
      %v4281 = vld [vmem:[%s3871 + $0xfc] sm:$0xff]
      %v4282 = vld [vmem:[%s3871 + $0x10c] sm:$0xff]
      %v4283 = vld [vmem:[%s3871 + $0x114] sm:$0xff]
      %v4284 = vld [vmem:[%s3871 + $0x124] sm:$0xff]
      %v4285 = vld [vmem:[%s3871 + $0x12c] sm:$0xff]
      %v4286 = vld [vmem:[%s3871 + $0x13c] sm:$0xff]
      %v4287 = vld [vmem:[%s3871 + $0x144] sm:$0xff]
      %v4288 = vld [vmem:[%s3871 + $0x154] sm:$0xff]
      %v4289 = vld [vmem:[%s3871 + $0x15c] sm:$0xff]
      %v4290 = vld [vmem:[%s3871 + $0x16c] sm:$0xff]
      %v4291 = vld [vmem:[%s3871 + $0x174] sm:$0xff]
      %v4292 = vperm.slane %v470, 7
      %v4293 = vmul.f32 %v4260, %v4292
      %v4294 = vmul.f32 %v4261, %v4292
      %v4295 = vmul.f32 %v4262, %v4292
      %v4296 = vmul.f32 %v4263, %v4292
      %v4297 = vmul.f32 %v4264, %v4292
      %v4298 = vmul.f32 %v4265, %v4292
      %v4299 = vmul.f32 %v4266, %v4292
      %v4300 = vmul.f32 %v4267, %v4292
      %v4301 = vmul.f32 %v4268, %v4292
      %v4302 = vmul.f32 %v4269, %v4292
      %v4303 = vmul.f32 %v4270, %v4292
      %v4304 = vmul.f32 %v4271, %v4292
      %v4305 = vmul.f32 %v4272, %v4292
      %v4306 = vmul.f32 %v4273, %v4292
      %v4307 = vmul.f32 %v4274, %v4292
      %v4308 = vmul.f32 %v4275, %v4292
      %v4309 = vmul.f32 %v4276, %v4292
      %v4310 = vmul.f32 %v4277, %v4292
      %v4311 = vmul.f32 %v4278, %v4292
      %v4312 = vmul.f32 %v4279, %v4292
      %v4313 = vmul.f32 %v4280, %v4292
      %v4314 = vmul.f32 %v4281, %v4292
      %v4315 = vmul.f32 %v4282, %v4292
      %v4316 = vmul.f32 %v4283, %v4292
      %v4317 = vmul.f32 %v4284, %v4292
      %v4318 = vmul.f32 %v4285, %v4292
      %v4319 = vmul.f32 %v4286, %v4292
      %v4320 = vmul.f32 %v4287, %v4292
      %v4321 = vmul.f32 %v4288, %v4292
      %v4322 = vmul.f32 %v4289, %v4292
      %v4323 = vmul.f32 %v4290, %v4292
      %v4324 = vmul.f32 %v4291, %v4292
      %v4325 = vadd.f32 %v4228, %v4293
      %v4326 = vadd.f32 %v4229, %v4294
      %v4327 = vadd.f32 %v4230, %v4295
      %v4328 = vadd.f32 %v4231, %v4296
      %v4329 = vadd.f32 %v4232, %v4297
      %v4330 = vadd.f32 %v4233, %v4298
      %v4331 = vadd.f32 %v4234, %v4299
      %v4332 = vadd.f32 %v4235, %v4300
      %v4333 = vadd.f32 %v4236, %v4301
      %v4334 = vadd.f32 %v4237, %v4302
      %v4335 = vadd.f32 %v4238, %v4303
      %v4336 = vadd.f32 %v4239, %v4304
      %v4337 = vadd.f32 %v4240, %v4305
      %v4338 = vadd.f32 %v4241, %v4306
      %v4339 = vadd.f32 %v4242, %v4307
      %v4340 = vadd.f32 %v4243, %v4308
      %v4341 = vadd.f32 %v4244, %v4309
      %v4342 = vadd.f32 %v4245, %v4310
      %v4343 = vadd.f32 %v4246, %v4311
      %v4344 = vadd.f32 %v4247, %v4312
      %v4345 = vadd.f32 %v4248, %v4313
      %v4346 = vadd.f32 %v4249, %v4314
      %v4347 = vadd.f32 %v4250, %v4315
      %v4348 = vadd.f32 %v4251, %v4316
      %v4349 = vadd.f32 %v4252, %v4317
      %v4350 = vadd.f32 %v4253, %v4318
      %v4351 = vadd.f32 %v4254, %v4319
      %v4352 = vadd.f32 %v4255, %v4320
      %v4353 = vadd.f32 %v4256, %v4321
      %v4354 = vadd.f32 %v4257, %v4322
      %v4355 = vadd.f32 %v4258, %v4323
      %v4356 = vadd.f32 %v4259, %v4324
      %v4357 = vld [vmem:[%s3871 + $0x5] sm:$0xff]
      %v4358 = vld [vmem:[%s3871 + $0xd] sm:$0xff]
      %v4359 = vld [vmem:[%s3871 + $0x1d] sm:$0xff]
      %v4360 = vld [vmem:[%s3871 + $0x25] sm:$0xff]
      %v4361 = vld [vmem:[%s3871 + $0x35] sm:$0xff]
      %v4362 = vld [vmem:[%s3871 + $0x3d] sm:$0xff]
      %v4363 = vld [vmem:[%s3871 + $0x4d] sm:$0xff]
      %v4364 = vld [vmem:[%s3871 + $0x55] sm:$0xff]
      %v4365 = vld [vmem:[%s3871 + $0x65] sm:$0xff]
      %v4366 = vld [vmem:[%s3871 + $0x6d] sm:$0xff]
      %v4367 = vld [vmem:[%s3871 + $0x7d] sm:$0xff]
      %v4368 = vld [vmem:[%s3871 + $0x85] sm:$0xff]
      %v4369 = vld [vmem:[%s3871 + $0x95] sm:$0xff]
      %v4370 = vld [vmem:[%s3871 + $0x9d] sm:$0xff]
      %v4371 = vld [vmem:[%s3871 + $0xad] sm:$0xff]
      %v4372 = vld [vmem:[%s3871 + $0xb5] sm:$0xff]
      %v4373 = vld [vmem:[%s3871 + $0xc5] sm:$0xff]
      %v4374 = vld [vmem:[%s3871 + $0xcd] sm:$0xff]
      %v4375 = vld [vmem:[%s3871 + $0xdd] sm:$0xff]
      %v4376 = vld [vmem:[%s3871 + $0xe5] sm:$0xff]
      %v4377 = vld [vmem:[%s3871 + $0xf5] sm:$0xff]
      %v4378 = vld [vmem:[%s3871 + $0xfd] sm:$0xff]
      %v4379 = vld [vmem:[%s3871 + $0x10d] sm:$0xff]
      %v4380 = vld [vmem:[%s3871 + $0x115] sm:$0xff]
      %v4381 = vld [vmem:[%s3871 + $0x125] sm:$0xff]
      %v4382 = vld [vmem:[%s3871 + $0x12d] sm:$0xff]
      %v4383 = vld [vmem:[%s3871 + $0x13d] sm:$0xff]
      %v4384 = vld [vmem:[%s3871 + $0x145] sm:$0xff]
      %v4385 = vld [vmem:[%s3871 + $0x155] sm:$0xff]
      %v4386 = vld [vmem:[%s3871 + $0x15d] sm:$0xff]
      %v4387 = vld [vmem:[%s3871 + $0x16d] sm:$0xff]
      %v4388 = vld [vmem:[%s3871 + $0x175] sm:$0xff]
      %v4389 = vperm.slane %v471, 0
      %v4390 = vmul.f32 %v4357, %v4389
      %v4391 = vmul.f32 %v4358, %v4389
      %v4392 = vmul.f32 %v4359, %v4389
      %v4393 = vmul.f32 %v4360, %v4389
      %v4394 = vmul.f32 %v4361, %v4389
      %v4395 = vmul.f32 %v4362, %v4389
      %v4396 = vmul.f32 %v4363, %v4389
      %v4397 = vmul.f32 %v4364, %v4389
      %v4398 = vmul.f32 %v4365, %v4389
      %v4399 = vmul.f32 %v4366, %v4389
      %v4400 = vmul.f32 %v4367, %v4389
      %v4401 = vmul.f32 %v4368, %v4389
      %v4402 = vmul.f32 %v4369, %v4389
      %v4403 = vmul.f32 %v4370, %v4389
      %v4404 = vmul.f32 %v4371, %v4389
      %v4405 = vmul.f32 %v4372, %v4389
      %v4406 = vmul.f32 %v4373, %v4389
      %v4407 = vmul.f32 %v4374, %v4389
      %v4408 = vmul.f32 %v4375, %v4389
      %v4409 = vmul.f32 %v4376, %v4389
      %v4410 = vmul.f32 %v4377, %v4389
      %v4411 = vmul.f32 %v4378, %v4389
      %v4412 = vmul.f32 %v4379, %v4389
      %v4413 = vmul.f32 %v4380, %v4389
      %v4414 = vmul.f32 %v4381, %v4389
      %v4415 = vmul.f32 %v4382, %v4389
      %v4416 = vmul.f32 %v4383, %v4389
      %v4417 = vmul.f32 %v4384, %v4389
      %v4418 = vmul.f32 %v4385, %v4389
      %v4419 = vmul.f32 %v4386, %v4389
      %v4420 = vmul.f32 %v4387, %v4389
      %v4421 = vmul.f32 %v4388, %v4389
      %v4422 = vadd.f32 %v4325, %v4390
      %v4423 = vadd.f32 %v4326, %v4391
      %v4424 = vadd.f32 %v4327, %v4392
      %v4425 = vadd.f32 %v4328, %v4393
      %v4426 = vadd.f32 %v4329, %v4394
      %v4427 = vadd.f32 %v4330, %v4395
      %v4428 = vadd.f32 %v4331, %v4396
      %v4429 = vadd.f32 %v4332, %v4397
      %v4430 = vadd.f32 %v4333, %v4398
      %v4431 = vadd.f32 %v4334, %v4399
      %v4432 = vadd.f32 %v4335, %v4400
      %v4433 = vadd.f32 %v4336, %v4401
      %v4434 = vadd.f32 %v4337, %v4402
      %v4435 = vadd.f32 %v4338, %v4403
      %v4436 = vadd.f32 %v4339, %v4404
      %v4437 = vadd.f32 %v4340, %v4405
      %v4438 = vadd.f32 %v4341, %v4406
      %v4439 = vadd.f32 %v4342, %v4407
      %v4440 = vadd.f32 %v4343, %v4408
      %v4441 = vadd.f32 %v4344, %v4409
      %v4442 = vadd.f32 %v4345, %v4410
      %v4443 = vadd.f32 %v4346, %v4411
      %v4444 = vadd.f32 %v4347, %v4412
      %v4445 = vadd.f32 %v4348, %v4413
      %v4446 = vadd.f32 %v4349, %v4414
      %v4447 = vadd.f32 %v4350, %v4415
      %v4448 = vadd.f32 %v4351, %v4416
      %v4449 = vadd.f32 %v4352, %v4417
      %v4450 = vadd.f32 %v4353, %v4418
      %v4451 = vadd.f32 %v4354, %v4419
      %v4452 = vadd.f32 %v4355, %v4420
      %v4453 = vadd.f32 %v4356, %v4421
      %v4454 = vld [vmem:[%s3871 + $0x6] sm:$0xff]
      %v4455 = vld [vmem:[%s3871 + $0xe] sm:$0xff]
      %v4456 = vld [vmem:[%s3871 + $0x1e] sm:$0xff]
      %v4457 = vld [vmem:[%s3871 + $0x26] sm:$0xff]
      %v4458 = vld [vmem:[%s3871 + $0x36] sm:$0xff]
      %v4459 = vld [vmem:[%s3871 + $0x3e] sm:$0xff]
      %v4460 = vld [vmem:[%s3871 + $0x4e] sm:$0xff]
      %v4461 = vld [vmem:[%s3871 + $0x56] sm:$0xff]
      %v4462 = vld [vmem:[%s3871 + $0x66] sm:$0xff]
      %v4463 = vld [vmem:[%s3871 + $0x6e] sm:$0xff]
      %v4464 = vld [vmem:[%s3871 + $0x7e] sm:$0xff]
      %v4465 = vld [vmem:[%s3871 + $0x86] sm:$0xff]
      %v4466 = vld [vmem:[%s3871 + $0x96] sm:$0xff]
      %v4467 = vld [vmem:[%s3871 + $0x9e] sm:$0xff]
      %v4468 = vld [vmem:[%s3871 + $0xae] sm:$0xff]
      %v4469 = vld [vmem:[%s3871 + $0xb6] sm:$0xff]
      %v4470 = vld [vmem:[%s3871 + $0xc6] sm:$0xff]
      %v4471 = vld [vmem:[%s3871 + $0xce] sm:$0xff]
      %v4472 = vld [vmem:[%s3871 + $0xde] sm:$0xff]
      %v4473 = vld [vmem:[%s3871 + $0xe6] sm:$0xff]
      %v4474 = vld [vmem:[%s3871 + $0xf6] sm:$0xff]
      %v4475 = vld [vmem:[%s3871 + $0xfe] sm:$0xff]
      %v4476 = vld [vmem:[%s3871 + $0x10e] sm:$0xff]
      %v4477 = vld [vmem:[%s3871 + $0x116] sm:$0xff]
      %v4478 = vld [vmem:[%s3871 + $0x126] sm:$0xff]
      %v4479 = vld [vmem:[%s3871 + $0x12e] sm:$0xff]
      %v4480 = vld [vmem:[%s3871 + $0x13e] sm:$0xff]
      %v4481 = vld [vmem:[%s3871 + $0x146] sm:$0xff]
      %v4482 = vld [vmem:[%s3871 + $0x156] sm:$0xff]
      %v4483 = vld [vmem:[%s3871 + $0x15e] sm:$0xff]
      %v4484 = vld [vmem:[%s3871 + $0x16e] sm:$0xff]
      %v4485 = vld [vmem:[%s3871 + $0x176] sm:$0xff]
      %v4486 = vperm.slane %v471, 1
      %v4487 = vmul.f32 %v4454, %v4486
      %v4488 = vmul.f32 %v4455, %v4486
      %v4489 = vmul.f32 %v4456, %v4486
      %v4490 = vmul.f32 %v4457, %v4486
      %v4491 = vmul.f32 %v4458, %v4486
      %v4492 = vmul.f32 %v4459, %v4486
      %v4493 = vmul.f32 %v4460, %v4486
      %v4494 = vmul.f32 %v4461, %v4486
      %v4495 = vmul.f32 %v4462, %v4486
      %v4496 = vmul.f32 %v4463, %v4486
      %v4497 = vmul.f32 %v4464, %v4486
      %v4498 = vmul.f32 %v4465, %v4486
      %v4499 = vmul.f32 %v4466, %v4486
      %v4500 = vmul.f32 %v4467, %v4486
      %v4501 = vmul.f32 %v4468, %v4486
      %v4502 = vmul.f32 %v4469, %v4486
      %v4503 = vmul.f32 %v4470, %v4486
      %v4504 = vmul.f32 %v4471, %v4486
      %v4505 = vmul.f32 %v4472, %v4486
      %v4506 = vmul.f32 %v4473, %v4486
      %v4507 = vmul.f32 %v4474, %v4486
      %v4508 = vmul.f32 %v4475, %v4486
      %v4509 = vmul.f32 %v4476, %v4486
      %v4510 = vmul.f32 %v4477, %v4486
      %v4511 = vmul.f32 %v4478, %v4486
      %v4512 = vmul.f32 %v4479, %v4486
      %v4513 = vmul.f32 %v4480, %v4486
      %v4514 = vmul.f32 %v4481, %v4486
      %v4515 = vmul.f32 %v4482, %v4486
      %v4516 = vmul.f32 %v4483, %v4486
      %v4517 = vmul.f32 %v4484, %v4486
      %v4518 = vmul.f32 %v4485, %v4486
      %v4519 = vadd.f32 %v4422, %v4487
      %v4520 = vadd.f32 %v4423, %v4488
      %v4521 = vadd.f32 %v4424, %v4489
      %v4522 = vadd.f32 %v4425, %v4490
      %v4523 = vadd.f32 %v4426, %v4491
      %v4524 = vadd.f32 %v4427, %v4492
      %v4525 = vadd.f32 %v4428, %v4493
      %v4526 = vadd.f32 %v4429, %v4494
      %v4527 = vadd.f32 %v4430, %v4495
      %v4528 = vadd.f32 %v4431, %v4496
      %v4529 = vadd.f32 %v4432, %v4497
      %v4530 = vadd.f32 %v4433, %v4498
      %v4531 = vadd.f32 %v4434, %v4499
      %v4532 = vadd.f32 %v4435, %v4500
      %v4533 = vadd.f32 %v4436, %v4501
      %v4534 = vadd.f32 %v4437, %v4502
      %v4535 = vadd.f32 %v4438, %v4503
      %v4536 = vadd.f32 %v4439, %v4504
      %v4537 = vadd.f32 %v4440, %v4505
      %v4538 = vadd.f32 %v4441, %v4506
      %v4539 = vadd.f32 %v4442, %v4507
      %v4540 = vadd.f32 %v4443, %v4508
      %v4541 = vadd.f32 %v4444, %v4509
      %v4542 = vadd.f32 %v4445, %v4510
      %v4543 = vadd.f32 %v4446, %v4511
      %v4544 = vadd.f32 %v4447, %v4512
      %v4545 = vadd.f32 %v4448, %v4513
      %v4546 = vadd.f32 %v4449, %v4514
      %v4547 = vadd.f32 %v4450, %v4515
      %v4548 = vadd.f32 %v4451, %v4516
      %v4549 = vadd.f32 %v4452, %v4517
      %v4550 = vadd.f32 %v4453, %v4518
      %s4551 = scalar_lea.vmem [#allocation2], 144
      %v4552 = vld [vmem:[%s4551] sm:$0xff]
      %v4553 = vld [vmem:[%s4551 + $0x8] sm:$0xff]
      %v4554 = vld [vmem:[%s4551 + $0x18] sm:$0xff]
      %v4555 = vld [vmem:[%s4551 + $0x20] sm:$0xff]
      %v4556 = vld [vmem:[%s4551 + $0x30] sm:$0xff]
      %v4557 = vld [vmem:[%s4551 + $0x38] sm:$0xff]
      %v4558 = vld [vmem:[%s4551 + $0x48] sm:$0xff]
      %v4559 = vld [vmem:[%s4551 + $0x50] sm:$0xff]
      %v4560 = vld [vmem:[%s4551 + $0x60] sm:$0xff]
      %v4561 = vld [vmem:[%s4551 + $0x68] sm:$0xff]
      %v4562 = vld [vmem:[%s4551 + $0x78] sm:$0xff]
      %v4563 = vld [vmem:[%s4551 + $0x80] sm:$0xff]
      %v4564 = vld [vmem:[%s4551 + $0x90] sm:$0xff]
      %v4565 = vld [vmem:[%s4551 + $0x98] sm:$0xff]
      %v4566 = vld [vmem:[%s4551 + $0xa8] sm:$0xff]
      %v4567 = vld [vmem:[%s4551 + $0xb0] sm:$0xff]
      %v4568 = vld [vmem:[%s4551 + $0xc0] sm:$0xff]
      %v4569 = vld [vmem:[%s4551 + $0xc8] sm:$0xff]
      %v4570 = vld [vmem:[%s4551 + $0xd8] sm:$0xff]
      %v4571 = vld [vmem:[%s4551 + $0xe0] sm:$0xff]
      %v4572 = vld [vmem:[%s4551 + $0xf0] sm:$0xff]
      %v4573 = vld [vmem:[%s4551 + $0xf8] sm:$0xff]
      %v4574 = vld [vmem:[%s4551 + $0x108] sm:$0xff]
      %v4575 = vld [vmem:[%s4551 + $0x110] sm:$0xff]
      %v4576 = vld [vmem:[%s4551 + $0x120] sm:$0xff]
      %v4577 = vld [vmem:[%s4551 + $0x128] sm:$0xff]
      %v4578 = vld [vmem:[%s4551 + $0x138] sm:$0xff]
      %v4579 = vld [vmem:[%s4551 + $0x140] sm:$0xff]
      %v4580 = vld [vmem:[%s4551 + $0x150] sm:$0xff]
      %v4581 = vld [vmem:[%s4551 + $0x158] sm:$0xff]
      %v4582 = vld [vmem:[%s4551 + $0x168] sm:$0xff]
      %v4583 = vld [vmem:[%s4551 + $0x170] sm:$0xff]
      %v4584 = vperm.slane %v471, 2
      %v4585 = vmul.f32 %v4552, %v4584
      %v4586 = vmul.f32 %v4553, %v4584
      %v4587 = vmul.f32 %v4554, %v4584
      %v4588 = vmul.f32 %v4555, %v4584
      %v4589 = vmul.f32 %v4556, %v4584
      %v4590 = vmul.f32 %v4557, %v4584
      %v4591 = vmul.f32 %v4558, %v4584
      %v4592 = vmul.f32 %v4559, %v4584
      %v4593 = vmul.f32 %v4560, %v4584
      %v4594 = vmul.f32 %v4561, %v4584
      %v4595 = vmul.f32 %v4562, %v4584
      %v4596 = vmul.f32 %v4563, %v4584
      %v4597 = vmul.f32 %v4564, %v4584
      %v4598 = vmul.f32 %v4565, %v4584
      %v4599 = vmul.f32 %v4566, %v4584
      %v4600 = vmul.f32 %v4567, %v4584
      %v4601 = vmul.f32 %v4568, %v4584
      %v4602 = vmul.f32 %v4569, %v4584
      %v4603 = vmul.f32 %v4570, %v4584
      %v4604 = vmul.f32 %v4571, %v4584
      %v4605 = vmul.f32 %v4572, %v4584
      %v4606 = vmul.f32 %v4573, %v4584
      %v4607 = vmul.f32 %v4574, %v4584
      %v4608 = vmul.f32 %v4575, %v4584
      %v4609 = vmul.f32 %v4576, %v4584
      %v4610 = vmul.f32 %v4577, %v4584
      %v4611 = vmul.f32 %v4578, %v4584
      %v4612 = vmul.f32 %v4579, %v4584
      %v4613 = vmul.f32 %v4580, %v4584
      %v4614 = vmul.f32 %v4581, %v4584
      %v4615 = vmul.f32 %v4582, %v4584
      %v4616 = vmul.f32 %v4583, %v4584
      %v4617 = vadd.f32 %v4519, %v4585
      %v4618 = vadd.f32 %v4520, %v4586
      %v4619 = vadd.f32 %v4521, %v4587
      %v4620 = vadd.f32 %v4522, %v4588
      %v4621 = vadd.f32 %v4523, %v4589
      %v4622 = vadd.f32 %v4524, %v4590
      %v4623 = vadd.f32 %v4525, %v4591
      %v4624 = vadd.f32 %v4526, %v4592
      %v4625 = vadd.f32 %v4527, %v4593
      %v4626 = vadd.f32 %v4528, %v4594
      %v4627 = vadd.f32 %v4529, %v4595
      %v4628 = vadd.f32 %v4530, %v4596
      %v4629 = vadd.f32 %v4531, %v4597
      %v4630 = vadd.f32 %v4532, %v4598
      %v4631 = vadd.f32 %v4533, %v4599
      %v4632 = vadd.f32 %v4534, %v4600
      %v4633 = vadd.f32 %v4535, %v4601
      %v4634 = vadd.f32 %v4536, %v4602
      %v4635 = vadd.f32 %v4537, %v4603
      %v4636 = vadd.f32 %v4538, %v4604
      %v4637 = vadd.f32 %v4539, %v4605
      %v4638 = vadd.f32 %v4540, %v4606
      %v4639 = vadd.f32 %v4541, %v4607
      %v4640 = vadd.f32 %v4542, %v4608
      %v4641 = vadd.f32 %v4543, %v4609
      %v4642 = vadd.f32 %v4544, %v4610
      %v4643 = vadd.f32 %v4545, %v4611
      %v4644 = vadd.f32 %v4546, %v4612
      %v4645 = vadd.f32 %v4547, %v4613
      %v4646 = vadd.f32 %v4548, %v4614
      %v4647 = vadd.f32 %v4549, %v4615
      %v4648 = vadd.f32 %v4550, %v4616
      %v4649 = vld [vmem:[%s4551 + $0x1] sm:$0xff]
      %v4650 = vld [vmem:[%s4551 + $0x9] sm:$0xff]
      %v4651 = vld [vmem:[%s4551 + $0x19] sm:$0xff]
      %v4652 = vld [vmem:[%s4551 + $0x21] sm:$0xff]
      %v4653 = vld [vmem:[%s4551 + $0x31] sm:$0xff]
      %v4654 = vld [vmem:[%s4551 + $0x39] sm:$0xff]
      %v4655 = vld [vmem:[%s4551 + $0x49] sm:$0xff]
      %v4656 = vld [vmem:[%s4551 + $0x51] sm:$0xff]
      %v4657 = vld [vmem:[%s4551 + $0x61] sm:$0xff]
      %v4658 = vld [vmem:[%s4551 + $0x69] sm:$0xff]
      %v4659 = vld [vmem:[%s4551 + $0x79] sm:$0xff]
      %v4660 = vld [vmem:[%s4551 + $0x81] sm:$0xff]
      %v4661 = vld [vmem:[%s4551 + $0x91] sm:$0xff]
      %v4662 = vld [vmem:[%s4551 + $0x99] sm:$0xff]
      %v4663 = vld [vmem:[%s4551 + $0xa9] sm:$0xff]
      %v4664 = vld [vmem:[%s4551 + $0xb1] sm:$0xff]
      %v4665 = vld [vmem:[%s4551 + $0xc1] sm:$0xff]
      %v4666 = vld [vmem:[%s4551 + $0xc9] sm:$0xff]
      %v4667 = vld [vmem:[%s4551 + $0xd9] sm:$0xff]
      %v4668 = vld [vmem:[%s4551 + $0xe1] sm:$0xff]
      %v4669 = vld [vmem:[%s4551 + $0xf1] sm:$0xff]
      %v4670 = vld [vmem:[%s4551 + $0xf9] sm:$0xff]
      %v4671 = vld [vmem:[%s4551 + $0x109] sm:$0xff]
      %v4672 = vld [vmem:[%s4551 + $0x111] sm:$0xff]
      %v4673 = vld [vmem:[%s4551 + $0x121] sm:$0xff]
      %v4674 = vld [vmem:[%s4551 + $0x129] sm:$0xff]
      %v4675 = vld [vmem:[%s4551 + $0x139] sm:$0xff]
      %v4676 = vld [vmem:[%s4551 + $0x141] sm:$0xff]
      %v4677 = vld [vmem:[%s4551 + $0x151] sm:$0xff]
      %v4678 = vld [vmem:[%s4551 + $0x159] sm:$0xff]
      %v4679 = vld [vmem:[%s4551 + $0x169] sm:$0xff]
      %v4680 = vld [vmem:[%s4551 + $0x171] sm:$0xff]
      %v4681 = vperm.slane %v471, 3
      %v4682 = vmul.f32 %v4649, %v4681
      %v4683 = vmul.f32 %v4650, %v4681
      %v4684 = vmul.f32 %v4651, %v4681
      %v4685 = vmul.f32 %v4652, %v4681
      %v4686 = vmul.f32 %v4653, %v4681
      %v4687 = vmul.f32 %v4654, %v4681
      %v4688 = vmul.f32 %v4655, %v4681
      %v4689 = vmul.f32 %v4656, %v4681
      %v4690 = vmul.f32 %v4657, %v4681
      %v4691 = vmul.f32 %v4658, %v4681
      %v4692 = vmul.f32 %v4659, %v4681
      %v4693 = vmul.f32 %v4660, %v4681
      %v4694 = vmul.f32 %v4661, %v4681
      %v4695 = vmul.f32 %v4662, %v4681
      %v4696 = vmul.f32 %v4663, %v4681
      %v4697 = vmul.f32 %v4664, %v4681
      %v4698 = vmul.f32 %v4665, %v4681
      %v4699 = vmul.f32 %v4666, %v4681
      %v4700 = vmul.f32 %v4667, %v4681
      %v4701 = vmul.f32 %v4668, %v4681
      %v4702 = vmul.f32 %v4669, %v4681
      %v4703 = vmul.f32 %v4670, %v4681
      %v4704 = vmul.f32 %v4671, %v4681
      %v4705 = vmul.f32 %v4672, %v4681
      %v4706 = vmul.f32 %v4673, %v4681
      %v4707 = vmul.f32 %v4674, %v4681
      %v4708 = vmul.f32 %v4675, %v4681
      %v4709 = vmul.f32 %v4676, %v4681
      %v4710 = vmul.f32 %v4677, %v4681
      %v4711 = vmul.f32 %v4678, %v4681
      %v4712 = vmul.f32 %v4679, %v4681
      %v4713 = vmul.f32 %v4680, %v4681
      %v4714 = vadd.f32 %v4617, %v4682
      %v4715 = vadd.f32 %v4618, %v4683
      %v4716 = vadd.f32 %v4619, %v4684
      %v4717 = vadd.f32 %v4620, %v4685
      %v4718 = vadd.f32 %v4621, %v4686
      %v4719 = vadd.f32 %v4622, %v4687
      %v4720 = vadd.f32 %v4623, %v4688
      %v4721 = vadd.f32 %v4624, %v4689
      %v4722 = vadd.f32 %v4625, %v4690
      %v4723 = vadd.f32 %v4626, %v4691
      %v4724 = vadd.f32 %v4627, %v4692
      %v4725 = vadd.f32 %v4628, %v4693
      %v4726 = vadd.f32 %v4629, %v4694
      %v4727 = vadd.f32 %v4630, %v4695
      %v4728 = vadd.f32 %v4631, %v4696
      %v4729 = vadd.f32 %v4632, %v4697
      %v4730 = vadd.f32 %v4633, %v4698
      %v4731 = vadd.f32 %v4634, %v4699
      %v4732 = vadd.f32 %v4635, %v4700
      %v4733 = vadd.f32 %v4636, %v4701
      %v4734 = vadd.f32 %v4637, %v4702
      %v4735 = vadd.f32 %v4638, %v4703
      %v4736 = vadd.f32 %v4639, %v4704
      %v4737 = vadd.f32 %v4640, %v4705
      %v4738 = vadd.f32 %v4641, %v4706
      %v4739 = vadd.f32 %v4642, %v4707
      %v4740 = vadd.f32 %v4643, %v4708
      %v4741 = vadd.f32 %v4644, %v4709
      %v4742 = vadd.f32 %v4645, %v4710
      %v4743 = vadd.f32 %v4646, %v4711
      %v4744 = vadd.f32 %v4647, %v4712
      %v4745 = vadd.f32 %v4648, %v4713
      %v4746 = vld [vmem:[%s4551 + $0x2] sm:$0xff]
      %v4747 = vld [vmem:[%s4551 + $0xa] sm:$0xff]
      %v4748 = vld [vmem:[%s4551 + $0x1a] sm:$0xff]
      %v4749 = vld [vmem:[%s4551 + $0x22] sm:$0xff]
      %v4750 = vld [vmem:[%s4551 + $0x32] sm:$0xff]
      %v4751 = vld [vmem:[%s4551 + $0x3a] sm:$0xff]
      %v4752 = vld [vmem:[%s4551 + $0x4a] sm:$0xff]
      %v4753 = vld [vmem:[%s4551 + $0x52] sm:$0xff]
      %v4754 = vld [vmem:[%s4551 + $0x62] sm:$0xff]
      %v4755 = vld [vmem:[%s4551 + $0x6a] sm:$0xff]
      %v4756 = vld [vmem:[%s4551 + $0x7a] sm:$0xff]
      %v4757 = vld [vmem:[%s4551 + $0x82] sm:$0xff]
      %v4758 = vld [vmem:[%s4551 + $0x92] sm:$0xff]
      %v4759 = vld [vmem:[%s4551 + $0x9a] sm:$0xff]
      %v4760 = vld [vmem:[%s4551 + $0xaa] sm:$0xff]
      %v4761 = vld [vmem:[%s4551 + $0xb2] sm:$0xff]
      %v4762 = vld [vmem:[%s4551 + $0xc2] sm:$0xff]
      %v4763 = vld [vmem:[%s4551 + $0xca] sm:$0xff]
      %v4764 = vld [vmem:[%s4551 + $0xda] sm:$0xff]
      %v4765 = vld [vmem:[%s4551 + $0xe2] sm:$0xff]
      %v4766 = vld [vmem:[%s4551 + $0xf2] sm:$0xff]
      %v4767 = vld [vmem:[%s4551 + $0xfa] sm:$0xff]
      %v4768 = vld [vmem:[%s4551 + $0x10a] sm:$0xff]
      %v4769 = vld [vmem:[%s4551 + $0x112] sm:$0xff]
      %v4770 = vld [vmem:[%s4551 + $0x122] sm:$0xff]
      %v4771 = vld [vmem:[%s4551 + $0x12a] sm:$0xff]
      %v4772 = vld [vmem:[%s4551 + $0x13a] sm:$0xff]
      %v4773 = vld [vmem:[%s4551 + $0x142] sm:$0xff]
      %v4774 = vld [vmem:[%s4551 + $0x152] sm:$0xff]
      %v4775 = vld [vmem:[%s4551 + $0x15a] sm:$0xff]
      %v4776 = vld [vmem:[%s4551 + $0x16a] sm:$0xff]
      %v4777 = vld [vmem:[%s4551 + $0x172] sm:$0xff]
      %v4778 = vperm.slane %v471, 4
      %v4779 = vmul.f32 %v4746, %v4778
      %v4780 = vmul.f32 %v4747, %v4778
      %v4781 = vmul.f32 %v4748, %v4778
      %v4782 = vmul.f32 %v4749, %v4778
      %v4783 = vmul.f32 %v4750, %v4778
      %v4784 = vmul.f32 %v4751, %v4778
      %v4785 = vmul.f32 %v4752, %v4778
      %v4786 = vmul.f32 %v4753, %v4778
      %v4787 = vmul.f32 %v4754, %v4778
      %v4788 = vmul.f32 %v4755, %v4778
      %v4789 = vmul.f32 %v4756, %v4778
      %v4790 = vmul.f32 %v4757, %v4778
      %v4791 = vmul.f32 %v4758, %v4778
      %v4792 = vmul.f32 %v4759, %v4778
      %v4793 = vmul.f32 %v4760, %v4778
      %v4794 = vmul.f32 %v4761, %v4778
      %v4795 = vmul.f32 %v4762, %v4778
      %v4796 = vmul.f32 %v4763, %v4778
      %v4797 = vmul.f32 %v4764, %v4778
      %v4798 = vmul.f32 %v4765, %v4778
      %v4799 = vmul.f32 %v4766, %v4778
      %v4800 = vmul.f32 %v4767, %v4778
      %v4801 = vmul.f32 %v4768, %v4778
      %v4802 = vmul.f32 %v4769, %v4778
      %v4803 = vmul.f32 %v4770, %v4778
      %v4804 = vmul.f32 %v4771, %v4778
      %v4805 = vmul.f32 %v4772, %v4778
      %v4806 = vmul.f32 %v4773, %v4778
      %v4807 = vmul.f32 %v4774, %v4778
      %v4808 = vmul.f32 %v4775, %v4778
      %v4809 = vmul.f32 %v4776, %v4778
      %v4810 = vmul.f32 %v4777, %v4778
      %v4811 = vadd.f32 %v4714, %v4779
      %v4812 = vadd.f32 %v4715, %v4780
      %v4813 = vadd.f32 %v4716, %v4781
      %v4814 = vadd.f32 %v4717, %v4782
      %v4815 = vadd.f32 %v4718, %v4783
      %v4816 = vadd.f32 %v4719, %v4784
      %v4817 = vadd.f32 %v4720, %v4785
      %v4818 = vadd.f32 %v4721, %v4786
      %v4819 = vadd.f32 %v4722, %v4787
      %v4820 = vadd.f32 %v4723, %v4788
      %v4821 = vadd.f32 %v4724, %v4789
      %v4822 = vadd.f32 %v4725, %v4790
      %v4823 = vadd.f32 %v4726, %v4791
      %v4824 = vadd.f32 %v4727, %v4792
      %v4825 = vadd.f32 %v4728, %v4793
      %v4826 = vadd.f32 %v4729, %v4794
      %v4827 = vadd.f32 %v4730, %v4795
      %v4828 = vadd.f32 %v4731, %v4796
      %v4829 = vadd.f32 %v4732, %v4797
      %v4830 = vadd.f32 %v4733, %v4798
      %v4831 = vadd.f32 %v4734, %v4799
      %v4832 = vadd.f32 %v4735, %v4800
      %v4833 = vadd.f32 %v4736, %v4801
      %v4834 = vadd.f32 %v4737, %v4802
      %v4835 = vadd.f32 %v4738, %v4803
      %v4836 = vadd.f32 %v4739, %v4804
      %v4837 = vadd.f32 %v4740, %v4805
      %v4838 = vadd.f32 %v4741, %v4806
      %v4839 = vadd.f32 %v4742, %v4807
      %v4840 = vadd.f32 %v4743, %v4808
      %v4841 = vadd.f32 %v4744, %v4809
      %v4842 = vadd.f32 %v4745, %v4810
      %v4843 = vld [vmem:[%s4551 + $0x3] sm:$0xff]
      %v4844 = vld [vmem:[%s4551 + $0xb] sm:$0xff]
      %v4845 = vld [vmem:[%s4551 + $0x1b] sm:$0xff]
      %v4846 = vld [vmem:[%s4551 + $0x23] sm:$0xff]
      %v4847 = vld [vmem:[%s4551 + $0x33] sm:$0xff]
      %v4848 = vld [vmem:[%s4551 + $0x3b] sm:$0xff]
      %v4849 = vld [vmem:[%s4551 + $0x4b] sm:$0xff]
      %v4850 = vld [vmem:[%s4551 + $0x53] sm:$0xff]
      %v4851 = vld [vmem:[%s4551 + $0x63] sm:$0xff]
      %v4852 = vld [vmem:[%s4551 + $0x6b] sm:$0xff]
      %v4853 = vld [vmem:[%s4551 + $0x7b] sm:$0xff]
      %v4854 = vld [vmem:[%s4551 + $0x83] sm:$0xff]
      %v4855 = vld [vmem:[%s4551 + $0x93] sm:$0xff]
      %v4856 = vld [vmem:[%s4551 + $0x9b] sm:$0xff]
      %v4857 = vld [vmem:[%s4551 + $0xab] sm:$0xff]
      %v4858 = vld [vmem:[%s4551 + $0xb3] sm:$0xff]
      %v4859 = vld [vmem:[%s4551 + $0xc3] sm:$0xff]
      %v4860 = vld [vmem:[%s4551 + $0xcb] sm:$0xff]
      %v4861 = vld [vmem:[%s4551 + $0xdb] sm:$0xff]
      %v4862 = vld [vmem:[%s4551 + $0xe3] sm:$0xff]
      %v4863 = vld [vmem:[%s4551 + $0xf3] sm:$0xff]
      %v4864 = vld [vmem:[%s4551 + $0xfb] sm:$0xff]
      %v4865 = vld [vmem:[%s4551 + $0x10b] sm:$0xff]
      %v4866 = vld [vmem:[%s4551 + $0x113] sm:$0xff]
      %v4867 = vld [vmem:[%s4551 + $0x123] sm:$0xff]
      %v4868 = vld [vmem:[%s4551 + $0x12b] sm:$0xff]
      %v4869 = vld [vmem:[%s4551 + $0x13b] sm:$0xff]
      %v4870 = vld [vmem:[%s4551 + $0x143] sm:$0xff]
      %v4871 = vld [vmem:[%s4551 + $0x153] sm:$0xff]
      %v4872 = vld [vmem:[%s4551 + $0x15b] sm:$0xff]
      %v4873 = vld [vmem:[%s4551 + $0x16b] sm:$0xff]
      %v4874 = vld [vmem:[%s4551 + $0x173] sm:$0xff]
      %v4875 = vperm.slane %v471, 5
      %v4876 = vmul.f32 %v4843, %v4875
      %v4877 = vmul.f32 %v4844, %v4875
      %v4878 = vmul.f32 %v4845, %v4875
      %v4879 = vmul.f32 %v4846, %v4875
      %v4880 = vmul.f32 %v4847, %v4875
      %v4881 = vmul.f32 %v4848, %v4875
      %v4882 = vmul.f32 %v4849, %v4875
      %v4883 = vmul.f32 %v4850, %v4875
      %v4884 = vmul.f32 %v4851, %v4875
      %v4885 = vmul.f32 %v4852, %v4875
      %v4886 = vmul.f32 %v4853, %v4875
      %v4887 = vmul.f32 %v4854, %v4875
      %v4888 = vmul.f32 %v4855, %v4875
      %v4889 = vmul.f32 %v4856, %v4875
      %v4890 = vmul.f32 %v4857, %v4875
      %v4891 = vmul.f32 %v4858, %v4875
      %v4892 = vmul.f32 %v4859, %v4875
      %v4893 = vmul.f32 %v4860, %v4875
      %v4894 = vmul.f32 %v4861, %v4875
      %v4895 = vmul.f32 %v4862, %v4875
      %v4896 = vmul.f32 %v4863, %v4875
      %v4897 = vmul.f32 %v4864, %v4875
      %v4898 = vmul.f32 %v4865, %v4875
      %v4899 = vmul.f32 %v4866, %v4875
      %v4900 = vmul.f32 %v4867, %v4875
      %v4901 = vmul.f32 %v4868, %v4875
      %v4902 = vmul.f32 %v4869, %v4875
      %v4903 = vmul.f32 %v4870, %v4875
      %v4904 = vmul.f32 %v4871, %v4875
      %v4905 = vmul.f32 %v4872, %v4875
      %v4906 = vmul.f32 %v4873, %v4875
      %v4907 = vmul.f32 %v4874, %v4875
      %v4908 = vadd.f32 %v4811, %v4876
      %v4909 = vadd.f32 %v4812, %v4877
      %v4910 = vadd.f32 %v4813, %v4878
      %v4911 = vadd.f32 %v4814, %v4879
      %v4912 = vadd.f32 %v4815, %v4880
      %v4913 = vadd.f32 %v4816, %v4881
      %v4914 = vadd.f32 %v4817, %v4882
      %v4915 = vadd.f32 %v4818, %v4883
      %v4916 = vadd.f32 %v4819, %v4884
      %v4917 = vadd.f32 %v4820, %v4885
      %v4918 = vadd.f32 %v4821, %v4886
      %v4919 = vadd.f32 %v4822, %v4887
      %v4920 = vadd.f32 %v4823, %v4888
      %v4921 = vadd.f32 %v4824, %v4889
      %v4922 = vadd.f32 %v4825, %v4890
      %v4923 = vadd.f32 %v4826, %v4891
      %v4924 = vadd.f32 %v4827, %v4892
      %v4925 = vadd.f32 %v4828, %v4893
      %v4926 = vadd.f32 %v4829, %v4894
      %v4927 = vadd.f32 %v4830, %v4895
      %v4928 = vadd.f32 %v4831, %v4896
      %v4929 = vadd.f32 %v4832, %v4897
      %v4930 = vadd.f32 %v4833, %v4898
      %v4931 = vadd.f32 %v4834, %v4899
      %v4932 = vadd.f32 %v4835, %v4900
      %v4933 = vadd.f32 %v4836, %v4901
      %v4934 = vadd.f32 %v4837, %v4902
      %v4935 = vadd.f32 %v4838, %v4903
      %v4936 = vadd.f32 %v4839, %v4904
      %v4937 = vadd.f32 %v4840, %v4905
      %v4938 = vadd.f32 %v4841, %v4906
      %v4939 = vadd.f32 %v4842, %v4907
      %v4940 = vld [vmem:[%s4551 + $0x4] sm:$0xff]
      %v4941 = vld [vmem:[%s4551 + $0xc] sm:$0xff]
      %v4942 = vld [vmem:[%s4551 + $0x1c] sm:$0xff]
      %v4943 = vld [vmem:[%s4551 + $0x24] sm:$0xff]
      %v4944 = vld [vmem:[%s4551 + $0x34] sm:$0xff]
      %v4945 = vld [vmem:[%s4551 + $0x3c] sm:$0xff]
      %v4946 = vld [vmem:[%s4551 + $0x4c] sm:$0xff]
      %v4947 = vld [vmem:[%s4551 + $0x54] sm:$0xff]
      %v4948 = vld [vmem:[%s4551 + $0x64] sm:$0xff]
      %v4949 = vld [vmem:[%s4551 + $0x6c] sm:$0xff]
      %v4950 = vld [vmem:[%s4551 + $0x7c] sm:$0xff]
      %v4951 = vld [vmem:[%s4551 + $0x84] sm:$0xff]
      %v4952 = vld [vmem:[%s4551 + $0x94] sm:$0xff]
      %v4953 = vld [vmem:[%s4551 + $0x9c] sm:$0xff]
      %v4954 = vld [vmem:[%s4551 + $0xac] sm:$0xff]
      %v4955 = vld [vmem:[%s4551 + $0xb4] sm:$0xff]
      %v4956 = vld [vmem:[%s4551 + $0xc4] sm:$0xff]
      %v4957 = vld [vmem:[%s4551 + $0xcc] sm:$0xff]
      %v4958 = vld [vmem:[%s4551 + $0xdc] sm:$0xff]
      %v4959 = vld [vmem:[%s4551 + $0xe4] sm:$0xff]
      %v4960 = vld [vmem:[%s4551 + $0xf4] sm:$0xff]
      %v4961 = vld [vmem:[%s4551 + $0xfc] sm:$0xff]
      %v4962 = vld [vmem:[%s4551 + $0x10c] sm:$0xff]
      %v4963 = vld [vmem:[%s4551 + $0x114] sm:$0xff]
      %v4964 = vld [vmem:[%s4551 + $0x124] sm:$0xff]
      %v4965 = vld [vmem:[%s4551 + $0x12c] sm:$0xff]
      %v4966 = vld [vmem:[%s4551 + $0x13c] sm:$0xff]
      %v4967 = vld [vmem:[%s4551 + $0x144] sm:$0xff]
      %v4968 = vld [vmem:[%s4551 + $0x154] sm:$0xff]
      %v4969 = vld [vmem:[%s4551 + $0x15c] sm:$0xff]
      %v4970 = vld [vmem:[%s4551 + $0x16c] sm:$0xff]
      %v4971 = vld [vmem:[%s4551 + $0x174] sm:$0xff]
      %v4972 = vperm.slane %v471, 6
      %v4973 = vmul.f32 %v4940, %v4972
      %v4974 = vmul.f32 %v4941, %v4972
      %v4975 = vmul.f32 %v4942, %v4972
      %v4976 = vmul.f32 %v4943, %v4972
      %v4977 = vmul.f32 %v4944, %v4972
      %v4978 = vmul.f32 %v4945, %v4972
      %v4979 = vmul.f32 %v4946, %v4972
      %v4980 = vmul.f32 %v4947, %v4972
      %v4981 = vmul.f32 %v4948, %v4972
      %v4982 = vmul.f32 %v4949, %v4972
      %v4983 = vmul.f32 %v4950, %v4972
      %v4984 = vmul.f32 %v4951, %v4972
      %v4985 = vmul.f32 %v4952, %v4972
      %v4986 = vmul.f32 %v4953, %v4972
      %v4987 = vmul.f32 %v4954, %v4972
      %v4988 = vmul.f32 %v4955, %v4972
      %v4989 = vmul.f32 %v4956, %v4972
      %v4990 = vmul.f32 %v4957, %v4972
      %v4991 = vmul.f32 %v4958, %v4972
      %v4992 = vmul.f32 %v4959, %v4972
      %v4993 = vmul.f32 %v4960, %v4972
      %v4994 = vmul.f32 %v4961, %v4972
      %v4995 = vmul.f32 %v4962, %v4972
      %v4996 = vmul.f32 %v4963, %v4972
      %v4997 = vmul.f32 %v4964, %v4972
      %v4998 = vmul.f32 %v4965, %v4972
      %v4999 = vmul.f32 %v4966, %v4972
      %v5000 = vmul.f32 %v4967, %v4972
      %v5001 = vmul.f32 %v4968, %v4972
      %v5002 = vmul.f32 %v4969, %v4972
      %v5003 = vmul.f32 %v4970, %v4972
      %v5004 = vmul.f32 %v4971, %v4972
      %v5005 = vadd.f32 %v4908, %v4973
      %v5006 = vadd.f32 %v4909, %v4974
      %v5007 = vadd.f32 %v4910, %v4975
      %v5008 = vadd.f32 %v4911, %v4976
      %v5009 = vadd.f32 %v4912, %v4977
      %v5010 = vadd.f32 %v4913, %v4978
      %v5011 = vadd.f32 %v4914, %v4979
      %v5012 = vadd.f32 %v4915, %v4980
      %v5013 = vadd.f32 %v4916, %v4981
      %v5014 = vadd.f32 %v4917, %v4982
      %v5015 = vadd.f32 %v4918, %v4983
      %v5016 = vadd.f32 %v4919, %v4984
      %v5017 = vadd.f32 %v4920, %v4985
      %v5018 = vadd.f32 %v4921, %v4986
      %v5019 = vadd.f32 %v4922, %v4987
      %v5020 = vadd.f32 %v4923, %v4988
      %v5021 = vadd.f32 %v4924, %v4989
      %v5022 = vadd.f32 %v4925, %v4990
      %v5023 = vadd.f32 %v4926, %v4991
      %v5024 = vadd.f32 %v4927, %v4992
      %v5025 = vadd.f32 %v4928, %v4993
      %v5026 = vadd.f32 %v4929, %v4994
      %v5027 = vadd.f32 %v4930, %v4995
      %v5028 = vadd.f32 %v4931, %v4996
      %v5029 = vadd.f32 %v4932, %v4997
      %v5030 = vadd.f32 %v4933, %v4998
      %v5031 = vadd.f32 %v4934, %v4999
      %v5032 = vadd.f32 %v4935, %v5000
      %v5033 = vadd.f32 %v4936, %v5001
      %v5034 = vadd.f32 %v4937, %v5002
      %v5035 = vadd.f32 %v4938, %v5003
      %v5036 = vadd.f32 %v4939, %v5004
      %v5037 = vld [vmem:[%s4551 + $0x5] sm:$0xff]
      %v5038 = vld [vmem:[%s4551 + $0xd] sm:$0xff]
      %v5039 = vld [vmem:[%s4551 + $0x1d] sm:$0xff]
      %v5040 = vld [vmem:[%s4551 + $0x25] sm:$0xff]
      %v5041 = vld [vmem:[%s4551 + $0x35] sm:$0xff]
      %v5042 = vld [vmem:[%s4551 + $0x3d] sm:$0xff]
      %v5043 = vld [vmem:[%s4551 + $0x4d] sm:$0xff]
      %v5044 = vld [vmem:[%s4551 + $0x55] sm:$0xff]
      %v5045 = vld [vmem:[%s4551 + $0x65] sm:$0xff]
      %v5046 = vld [vmem:[%s4551 + $0x6d] sm:$0xff]
      %v5047 = vld [vmem:[%s4551 + $0x7d] sm:$0xff]
      %v5048 = vld [vmem:[%s4551 + $0x85] sm:$0xff]
      %v5049 = vld [vmem:[%s4551 + $0x95] sm:$0xff]
      %v5050 = vld [vmem:[%s4551 + $0x9d] sm:$0xff]
      %v5051 = vld [vmem:[%s4551 + $0xad] sm:$0xff]
      %v5052 = vld [vmem:[%s4551 + $0xb5] sm:$0xff]
      %v5053 = vld [vmem:[%s4551 + $0xc5] sm:$0xff]
      %v5054 = vld [vmem:[%s4551 + $0xcd] sm:$0xff]
      %v5055 = vld [vmem:[%s4551 + $0xdd] sm:$0xff]
      %v5056 = vld [vmem:[%s4551 + $0xe5] sm:$0xff]
      %v5057 = vld [vmem:[%s4551 + $0xf5] sm:$0xff]
      %v5058 = vld [vmem:[%s4551 + $0xfd] sm:$0xff]
      %v5059 = vld [vmem:[%s4551 + $0x10d] sm:$0xff]
      %v5060 = vld [vmem:[%s4551 + $0x115] sm:$0xff]
      %v5061 = vld [vmem:[%s4551 + $0x125] sm:$0xff]
      %v5062 = vld [vmem:[%s4551 + $0x12d] sm:$0xff]
      %v5063 = vld [vmem:[%s4551 + $0x13d] sm:$0xff]
      %v5064 = vld [vmem:[%s4551 + $0x145] sm:$0xff]
      %v5065 = vld [vmem:[%s4551 + $0x155] sm:$0xff]
      %v5066 = vld [vmem:[%s4551 + $0x15d] sm:$0xff]
      %v5067 = vld [vmem:[%s4551 + $0x16d] sm:$0xff]
      %v5068 = vld [vmem:[%s4551 + $0x175] sm:$0xff]
      %v5069 = vperm.slane %v471, 7
      %v5070 = vmul.f32 %v5037, %v5069
      %v5071 = vmul.f32 %v5038, %v5069
      %v5072 = vmul.f32 %v5039, %v5069
      %v5073 = vmul.f32 %v5040, %v5069
      %v5074 = vmul.f32 %v5041, %v5069
      %v5075 = vmul.f32 %v5042, %v5069
      %v5076 = vmul.f32 %v5043, %v5069
      %v5077 = vmul.f32 %v5044, %v5069
      %v5078 = vmul.f32 %v5045, %v5069
      %v5079 = vmul.f32 %v5046, %v5069
      %v5080 = vmul.f32 %v5047, %v5069
      %v5081 = vmul.f32 %v5048, %v5069
      %v5082 = vmul.f32 %v5049, %v5069
      %v5083 = vmul.f32 %v5050, %v5069
      %v5084 = vmul.f32 %v5051, %v5069
      %v5085 = vmul.f32 %v5052, %v5069
      %v5086 = vmul.f32 %v5053, %v5069
      %v5087 = vmul.f32 %v5054, %v5069
      %v5088 = vmul.f32 %v5055, %v5069
      %v5089 = vmul.f32 %v5056, %v5069
      %v5090 = vmul.f32 %v5057, %v5069
      %v5091 = vmul.f32 %v5058, %v5069
      %v5092 = vmul.f32 %v5059, %v5069
      %v5093 = vmul.f32 %v5060, %v5069
      %v5094 = vmul.f32 %v5061, %v5069
      %v5095 = vmul.f32 %v5062, %v5069
      %v5096 = vmul.f32 %v5063, %v5069
      %v5097 = vmul.f32 %v5064, %v5069
      %v5098 = vmul.f32 %v5065, %v5069
      %v5099 = vmul.f32 %v5066, %v5069
      %v5100 = vmul.f32 %v5067, %v5069
      %v5101 = vmul.f32 %v5068, %v5069
      %v5102 = vadd.f32 %v5005, %v5070
      %v5103 = vadd.f32 %v5006, %v5071
      %v5104 = vadd.f32 %v5007, %v5072
      %v5105 = vadd.f32 %v5008, %v5073
      %v5106 = vadd.f32 %v5009, %v5074
      %v5107 = vadd.f32 %v5010, %v5075
      %v5108 = vadd.f32 %v5011, %v5076
      %v5109 = vadd.f32 %v5012, %v5077
      %v5110 = vadd.f32 %v5013, %v5078
      %v5111 = vadd.f32 %v5014, %v5079
      %v5112 = vadd.f32 %v5015, %v5080
      %v5113 = vadd.f32 %v5016, %v5081
      %v5114 = vadd.f32 %v5017, %v5082
      %v5115 = vadd.f32 %v5018, %v5083
      %v5116 = vadd.f32 %v5019, %v5084
      %v5117 = vadd.f32 %v5020, %v5085
      %v5118 = vadd.f32 %v5021, %v5086
      %v5119 = vadd.f32 %v5022, %v5087
      %v5120 = vadd.f32 %v5023, %v5088
      %v5121 = vadd.f32 %v5024, %v5089
      %v5122 = vadd.f32 %v5025, %v5090
      %v5123 = vadd.f32 %v5026, %v5091
      %v5124 = vadd.f32 %v5027, %v5092
      %v5125 = vadd.f32 %v5028, %v5093
      %v5126 = vadd.f32 %v5029, %v5094
      %v5127 = vadd.f32 %v5030, %v5095
      %v5128 = vadd.f32 %v5031, %v5096
      %v5129 = vadd.f32 %v5032, %v5097
      %v5130 = vadd.f32 %v5033, %v5098
      %v5131 = vadd.f32 %v5034, %v5099
      %v5132 = vadd.f32 %v5035, %v5100
      %v5133 = vadd.f32 %v5036, %v5101
      %v5134 = vld [vmem:[%s4551 + $0x6] sm:$0xff]
      %v5135 = vld [vmem:[%s4551 + $0xe] sm:$0xff]
      %v5136 = vld [vmem:[%s4551 + $0x1e] sm:$0xff]
      %v5137 = vld [vmem:[%s4551 + $0x26] sm:$0xff]
      %v5138 = vld [vmem:[%s4551 + $0x36] sm:$0xff]
      %v5139 = vld [vmem:[%s4551 + $0x3e] sm:$0xff]
      %v5140 = vld [vmem:[%s4551 + $0x4e] sm:$0xff]
      %v5141 = vld [vmem:[%s4551 + $0x56] sm:$0xff]
      %v5142 = vld [vmem:[%s4551 + $0x66] sm:$0xff]
      %v5143 = vld [vmem:[%s4551 + $0x6e] sm:$0xff]
      %v5144 = vld [vmem:[%s4551 + $0x7e] sm:$0xff]
      %v5145 = vld [vmem:[%s4551 + $0x86] sm:$0xff]
      %v5146 = vld [vmem:[%s4551 + $0x96] sm:$0xff]
      %v5147 = vld [vmem:[%s4551 + $0x9e] sm:$0xff]
      %v5148 = vld [vmem:[%s4551 + $0xae] sm:$0xff]
      %v5149 = vld [vmem:[%s4551 + $0xb6] sm:$0xff]
      %v5150 = vld [vmem:[%s4551 + $0xc6] sm:$0xff]
      %v5151 = vld [vmem:[%s4551 + $0xce] sm:$0xff]
      %v5152 = vld [vmem:[%s4551 + $0xde] sm:$0xff]
      %v5153 = vld [vmem:[%s4551 + $0xe6] sm:$0xff]
      %v5154 = vld [vmem:[%s4551 + $0xf6] sm:$0xff]
      %v5155 = vld [vmem:[%s4551 + $0xfe] sm:$0xff]
      %v5156 = vld [vmem:[%s4551 + $0x10e] sm:$0xff]
      %v5157 = vld [vmem:[%s4551 + $0x116] sm:$0xff]
      %v5158 = vld [vmem:[%s4551 + $0x126] sm:$0xff]
      %v5159 = vld [vmem:[%s4551 + $0x12e] sm:$0xff]
      %v5160 = vld [vmem:[%s4551 + $0x13e] sm:$0xff]
      %v5161 = vld [vmem:[%s4551 + $0x146] sm:$0xff]
      %v5162 = vld [vmem:[%s4551 + $0x156] sm:$0xff]
      %v5163 = vld [vmem:[%s4551 + $0x15e] sm:$0xff]
      %v5164 = vld [vmem:[%s4551 + $0x16e] sm:$0xff]
      %v5165 = vld [vmem:[%s4551 + $0x176] sm:$0xff]
      %v5166 = vperm.slane %v472, 0
      %v5167 = vmul.f32 %v5134, %v5166
      %v5168 = vmul.f32 %v5135, %v5166
      %v5169 = vmul.f32 %v5136, %v5166
      %v5170 = vmul.f32 %v5137, %v5166
      %v5171 = vmul.f32 %v5138, %v5166
      %v5172 = vmul.f32 %v5139, %v5166
      %v5173 = vmul.f32 %v5140, %v5166
      %v5174 = vmul.f32 %v5141, %v5166
      %v5175 = vmul.f32 %v5142, %v5166
      %v5176 = vmul.f32 %v5143, %v5166
      %v5177 = vmul.f32 %v5144, %v5166
      %v5178 = vmul.f32 %v5145, %v5166
      %v5179 = vmul.f32 %v5146, %v5166
      %v5180 = vmul.f32 %v5147, %v5166
      %v5181 = vmul.f32 %v5148, %v5166
      %v5182 = vmul.f32 %v5149, %v5166
      %v5183 = vmul.f32 %v5150, %v5166
      %v5184 = vmul.f32 %v5151, %v5166
      %v5185 = vmul.f32 %v5152, %v5166
      %v5186 = vmul.f32 %v5153, %v5166
      %v5187 = vmul.f32 %v5154, %v5166
      %v5188 = vmul.f32 %v5155, %v5166
      %v5189 = vmul.f32 %v5156, %v5166
      %v5190 = vmul.f32 %v5157, %v5166
      %v5191 = vmul.f32 %v5158, %v5166
      %v5192 = vmul.f32 %v5159, %v5166
      %v5193 = vmul.f32 %v5160, %v5166
      %v5194 = vmul.f32 %v5161, %v5166
      %v5195 = vmul.f32 %v5162, %v5166
      %v5196 = vmul.f32 %v5163, %v5166
      %v5197 = vmul.f32 %v5164, %v5166
      %v5198 = vmul.f32 %v5165, %v5166
      %v5199 = vadd.f32 %v5102, %v5167
      %v5200 = vadd.f32 %v5103, %v5168
      %v5201 = vadd.f32 %v5104, %v5169
      %v5202 = vadd.f32 %v5105, %v5170
      %v5203 = vadd.f32 %v5106, %v5171
      %v5204 = vadd.f32 %v5107, %v5172
      %v5205 = vadd.f32 %v5108, %v5173
      %v5206 = vadd.f32 %v5109, %v5174
      %v5207 = vadd.f32 %v5110, %v5175
      %v5208 = vadd.f32 %v5111, %v5176
      %v5209 = vadd.f32 %v5112, %v5177
      %v5210 = vadd.f32 %v5113, %v5178
      %v5211 = vadd.f32 %v5114, %v5179
      %v5212 = vadd.f32 %v5115, %v5180
      %v5213 = vadd.f32 %v5116, %v5181
      %v5214 = vadd.f32 %v5117, %v5182
      %v5215 = vadd.f32 %v5118, %v5183
      %v5216 = vadd.f32 %v5119, %v5184
      %v5217 = vadd.f32 %v5120, %v5185
      %v5218 = vadd.f32 %v5121, %v5186
      %v5219 = vadd.f32 %v5122, %v5187
      %v5220 = vadd.f32 %v5123, %v5188
      %v5221 = vadd.f32 %v5124, %v5189
      %v5222 = vadd.f32 %v5125, %v5190
      %v5223 = vadd.f32 %v5126, %v5191
      %v5224 = vadd.f32 %v5127, %v5192
      %v5225 = vadd.f32 %v5128, %v5193
      %v5226 = vadd.f32 %v5129, %v5194
      %v5227 = vadd.f32 %v5130, %v5195
      %v5228 = vadd.f32 %v5131, %v5196
      %v5229 = vadd.f32 %v5132, %v5197
      %v5230 = vadd.f32 %v5133, %v5198
      %v5231 = vld [vmem:[%s2] sm:$0x1]
      %v5233 = vperm.slane %v5231, 0
      %v5235 = vadd.f32 %v5199, %v5233
      %v5236 = vadd.f32 %v5200, %v5233
      %v5237 = vadd.f32 %v5201, %v5233
      %v5238 = vadd.f32 %v5202, %v5233
      %v5239 = vadd.f32 %v5203, %v5233
      %v5240 = vadd.f32 %v5204, %v5233
      %v5241 = vadd.f32 %v5205, %v5233
      %v5242 = vadd.f32 %v5206, %v5233
      %v5243 = vadd.f32 %v5207, %v5233
      %v5244 = vadd.f32 %v5208, %v5233
      %v5245 = vadd.f32 %v5209, %v5233
      %v5246 = vadd.f32 %v5210, %v5233
      %v5247 = vadd.f32 %v5211, %v5233
      %v5248 = vadd.f32 %v5212, %v5233
      %v5249 = vadd.f32 %v5213, %v5233
      %v5250 = vadd.f32 %v5214, %v5233
      %v5251 = vadd.f32 %v5215, %v5233
      %v5252 = vadd.f32 %v5216, %v5233
      %v5253 = vadd.f32 %v5217, %v5233
      %v5254 = vadd.f32 %v5218, %v5233
      %v5255 = vadd.f32 %v5219, %v5233
      %v5256 = vadd.f32 %v5220, %v5233
      %v5257 = vadd.f32 %v5221, %v5233
      %v5258 = vadd.f32 %v5222, %v5233
      %v5259 = vadd.f32 %v5223, %v5233
      %v5260 = vadd.f32 %v5224, %v5233
      %v5261 = vadd.f32 %v5225, %v5233
      %v5262 = vadd.f32 %v5226, %v5233
      %v5263 = vadd.f32 %v5227, %v5233
      %v5264 = vadd.f32 %v5228, %v5233
      %v5265 = vadd.f32 %v5229, %v5233
      %v5266 = vadd.f32 %v5230, %v5233
      %v5267 = vsel %vm365, %v5235, 0.0
      %5268 = vadd.xlane.f32.xlu0 %v5267
      %v5269 = vpop.xlane.xlu0 %5268
      %v5270 = vsel %vm365, %v5236, 0.0
      %5271 = vadd.xlane.f32.xlu0 %v5270
      %v5272 = vpop.xlane.xlu0 %5271
      %v5273 = vsel %vm365, %v5237, 0.0
      %5274 = vadd.xlane.f32.xlu0 %v5273
      %v5275 = vpop.xlane.xlu0 %5274
      %v5276 = vsel %vm365, %v5238, 0.0
      %5277 = vadd.xlane.f32.xlu0 %v5276
      %v5278 = vpop.xlane.xlu0 %5277
      %v5279 = vsel %vm365, %v5239, 0.0
      %5280 = vadd.xlane.f32.xlu0 %v5279
      %v5281 = vpop.xlane.xlu0 %5280
      %v5282 = vsel %vm365, %v5240, 0.0
      %5283 = vadd.xlane.f32.xlu0 %v5282
      %v5284 = vpop.xlane.xlu0 %5283
      %v5285 = vsel %vm365, %v5241, 0.0
      %5286 = vadd.xlane.f32.xlu0 %v5285
      %v5287 = vpop.xlane.xlu0 %5286
      %v5288 = vsel %vm365, %v5242, 0.0
      %5289 = vadd.xlane.f32.xlu0 %v5288
      %v5290 = vpop.xlane.xlu0 %5289
      %v5291 = vsel %vm365, %v5243, 0.0
      %5292 = vadd.xlane.f32.xlu0 %v5291
      %v5293 = vpop.xlane.xlu0 %5292
      %v5294 = vsel %vm365, %v5244, 0.0
      %5295 = vadd.xlane.f32.xlu0 %v5294
      %v5296 = vpop.xlane.xlu0 %5295
      %v5297 = vsel %vm365, %v5245, 0.0
      %5298 = vadd.xlane.f32.xlu0 %v5297
      %v5299 = vpop.xlane.xlu0 %5298
      %v5300 = vsel %vm365, %v5246, 0.0
      %5301 = vadd.xlane.f32.xlu0 %v5300
      %v5302 = vpop.xlane.xlu0 %5301
      %v5303 = vsel %vm365, %v5247, 0.0
      %5304 = vadd.xlane.f32.xlu0 %v5303
      %v5305 = vpop.xlane.xlu0 %5304
      %v5306 = vsel %vm365, %v5248, 0.0
      %5307 = vadd.xlane.f32.xlu0 %v5306
      %v5308 = vpop.xlane.xlu0 %5307
      %v5309 = vsel %vm365, %v5249, 0.0
      %5310 = vadd.xlane.f32.xlu0 %v5309
      %v5311 = vpop.xlane.xlu0 %5310
      %v5312 = vsel %vm365, %v5250, 0.0
      %5313 = vadd.xlane.f32.xlu0 %v5312
      %v5314 = vpop.xlane.xlu0 %5313
      %v5315 = vsel %vm365, %v5251, 0.0
      %5316 = vadd.xlane.f32.xlu0 %v5315
      %v5317 = vpop.xlane.xlu0 %5316
      %v5318 = vsel %vm365, %v5252, 0.0
      %5319 = vadd.xlane.f32.xlu0 %v5318
      %v5320 = vpop.xlane.xlu0 %5319
      %v5321 = vsel %vm365, %v5253, 0.0
      %5322 = vadd.xlane.f32.xlu0 %v5321
      %v5323 = vpop.xlane.xlu0 %5322
      %v5324 = vsel %vm365, %v5254, 0.0
      %5325 = vadd.xlane.f32.xlu0 %v5324
      %v5326 = vpop.xlane.xlu0 %5325
      %v5327 = vsel %vm365, %v5255, 0.0
      %5328 = vadd.xlane.f32.xlu0 %v5327
      %v5329 = vpop.xlane.xlu0 %5328
      %v5330 = vsel %vm365, %v5256, 0.0
      %5331 = vadd.xlane.f32.xlu0 %v5330
      %v5332 = vpop.xlane.xlu0 %5331
      %v5333 = vsel %vm365, %v5257, 0.0
      %5334 = vadd.xlane.f32.xlu0 %v5333
      %v5335 = vpop.xlane.xlu0 %5334
      %v5336 = vsel %vm365, %v5258, 0.0
      %5337 = vadd.xlane.f32.xlu0 %v5336
      %v5338 = vpop.xlane.xlu0 %5337
      %v5339 = vsel %vm365, %v5259, 0.0
      %5340 = vadd.xlane.f32.xlu0 %v5339
      %v5341 = vpop.xlane.xlu0 %5340
      %v5342 = vsel %vm365, %v5260, 0.0
      %5343 = vadd.xlane.f32.xlu0 %v5342
      %v5344 = vpop.xlane.xlu0 %5343
      %v5345 = vsel %vm365, %v5261, 0.0
      %5346 = vadd.xlane.f32.xlu0 %v5345
      %v5347 = vpop.xlane.xlu0 %5346
      %v5348 = vsel %vm365, %v5262, 0.0
      %5349 = vadd.xlane.f32.xlu0 %v5348
      %v5350 = vpop.xlane.xlu0 %5349
      %v5351 = vsel %vm365, %v5263, 0.0
      %5352 = vadd.xlane.f32.xlu0 %v5351
      %v5353 = vpop.xlane.xlu0 %5352
      %v5354 = vsel %vm365, %v5264, 0.0
      %5355 = vadd.xlane.f32.xlu0 %v5354
      %v5356 = vpop.xlane.xlu0 %5355
      %v5357 = vsel %vm365, %v5265, 0.0
      %5358 = vadd.xlane.f32.xlu0 %v5357
      %v5359 = vpop.xlane.xlu0 %5358
      %v5360 = vsel %vm365, %v5266, 0.0
      %5361 = vadd.xlane.f32.xlu0 %v5360
      %v5362 = vpop.xlane.xlu0 %5361
      %v5363 = vrcp.pop 4.0
      %v5364 = vmul.f32 4.0, %v5363
      %v5365 = vsub.f32 1.0, %v5364
      %v5366 = vmul.f32 %v5363, %v5365
      %v5367 = vadd.f32 %v5363, %v5366
      %vm5368 = vweird.f32 %v5363
      %v5369 = vsel %vm5368, %v5363, %v5367
      %v5370 = vmul.f32 %v5269, %v5369
      %v5371 = vmul.f32 %v5272, %v5369
      %v5372 = vmul.f32 %v5275, %v5369
      %v5373 = vmul.f32 %v5278, %v5369
      %v5374 = vmul.f32 %v5281, %v5369
      %v5375 = vmul.f32 %v5284, %v5369
      %v5376 = vmul.f32 %v5287, %v5369
      %v5377 = vmul.f32 %v5290, %v5369
      %v5378 = vmul.f32 %v5293, %v5369
      %v5379 = vmul.f32 %v5296, %v5369
      %v5380 = vmul.f32 %v5299, %v5369
      %v5381 = vmul.f32 %v5302, %v5369
      %v5382 = vmul.f32 %v5305, %v5369
      %v5383 = vmul.f32 %v5308, %v5369
      %v5384 = vmul.f32 %v5311, %v5369
      %v5385 = vmul.f32 %v5314, %v5369
      %v5386 = vmul.f32 %v5317, %v5369
      %v5387 = vmul.f32 %v5320, %v5369
      %v5388 = vmul.f32 %v5323, %v5369
      %v5389 = vmul.f32 %v5326, %v5369
      %v5390 = vmul.f32 %v5329, %v5369
      %v5391 = vmul.f32 %v5332, %v5369
      %v5392 = vmul.f32 %v5335, %v5369
      %v5393 = vmul.f32 %v5338, %v5369
      %v5394 = vmul.f32 %v5341, %v5369
      %v5395 = vmul.f32 %v5344, %v5369
      %v5396 = vmul.f32 %v5347, %v5369
      %v5397 = vmul.f32 %v5350, %v5369
      %v5398 = vmul.f32 %v5353, %v5369
      %v5399 = vmul.f32 %v5356, %v5369
      %v5400 = vmul.f32 %v5359, %v5369
      %v5401 = vmul.f32 %v5362, %v5369
      %v5402 = vsub.f32 %v5235, %v5370
      %v5403 = vsub.f32 %v5236, %v5371
      %v5404 = vsub.f32 %v5237, %v5372
      %v5405 = vsub.f32 %v5238, %v5373
      %v5406 = vsub.f32 %v5239, %v5374
      %v5407 = vsub.f32 %v5240, %v5375
      %v5408 = vsub.f32 %v5241, %v5376
      %v5409 = vsub.f32 %v5242, %v5377
      %v5410 = vsub.f32 %v5243, %v5378
      %v5411 = vsub.f32 %v5244, %v5379
      %v5412 = vsub.f32 %v5245, %v5380
      %v5413 = vsub.f32 %v5246, %v5381
      %v5414 = vsub.f32 %v5247, %v5382
      %v5415 = vsub.f32 %v5248, %v5383
      %v5416 = vsub.f32 %v5249, %v5384
      %v5417 = vsub.f32 %v5250, %v5385
      %v5418 = vsub.f32 %v5251, %v5386
      %v5419 = vsub.f32 %v5252, %v5387
      %v5420 = vsub.f32 %v5253, %v5388
      %v5421 = vsub.f32 %v5254, %v5389
      %v5422 = vsub.f32 %v5255, %v5390
      %v5423 = vsub.f32 %v5256, %v5391
      %v5424 = vsub.f32 %v5257, %v5392
      %v5425 = vsub.f32 %v5258, %v5393
      %v5426 = vsub.f32 %v5259, %v5394
      %v5427 = vsub.f32 %v5260, %v5395
      %v5428 = vsub.f32 %v5261, %v5396
      %v5429 = vsub.f32 %v5262, %v5397
      %v5430 = vsub.f32 %v5263, %v5398
      %v5431 = vsub.f32 %v5264, %v5399
      %v5432 = vsub.f32 %v5265, %v5400
      %v5433 = vsub.f32 %v5266, %v5401
      %v5434 = vmul.f32 %v5402, %v5402
      %v5435 = vmul.f32 %v5403, %v5403
      %v5436 = vmul.f32 %v5404, %v5404
      %v5437 = vmul.f32 %v5405, %v5405
      %v5438 = vmul.f32 %v5406, %v5406
      %v5439 = vmul.f32 %v5407, %v5407
      %v5440 = vmul.f32 %v5408, %v5408
      %v5441 = vmul.f32 %v5409, %v5409
      %v5442 = vmul.f32 %v5410, %v5410
      %v5443 = vmul.f32 %v5411, %v5411
      %v5444 = vmul.f32 %v5412, %v5412
      %v5445 = vmul.f32 %v5413, %v5413
      %v5446 = vmul.f32 %v5414, %v5414
      %v5447 = vmul.f32 %v5415, %v5415
      %v5448 = vmul.f32 %v5416, %v5416
      %v5449 = vmul.f32 %v5417, %v5417
      %v5450 = vmul.f32 %v5418, %v5418
      %v5451 = vmul.f32 %v5419, %v5419
      %v5452 = vmul.f32 %v5420, %v5420
      %v5453 = vmul.f32 %v5421, %v5421
      %v5454 = vmul.f32 %v5422, %v5422
      %v5455 = vmul.f32 %v5423, %v5423
      %v5456 = vmul.f32 %v5424, %v5424
      %v5457 = vmul.f32 %v5425, %v5425
      %v5458 = vmul.f32 %v5426, %v5426
      %v5459 = vmul.f32 %v5427, %v5427
      %v5460 = vmul.f32 %v5428, %v5428
      %v5461 = vmul.f32 %v5429, %v5429
      %v5462 = vmul.f32 %v5430, %v5430
      %v5463 = vmul.f32 %v5431, %v5431
      %v5464 = vmul.f32 %v5432, %v5432
      %v5465 = vmul.f32 %v5433, %v5433
      %v5466 = vsel %vm365, %v5434, 0.0
      %5467 = vadd.xlane.f32.xlu0 %v5466
      %v5468 = vpop.xlane.xlu0 %5467
      %v5469 = vsel %vm365, %v5435, 0.0
      %5470 = vadd.xlane.f32.xlu0 %v5469
      %v5471 = vpop.xlane.xlu0 %5470
      %v5472 = vsel %vm365, %v5436, 0.0
      %5473 = vadd.xlane.f32.xlu0 %v5472
      %v5474 = vpop.xlane.xlu0 %5473
      %v5475 = vsel %vm365, %v5437, 0.0
      %5476 = vadd.xlane.f32.xlu0 %v5475
      %v5477 = vpop.xlane.xlu0 %5476
      %v5478 = vsel %vm365, %v5438, 0.0
      %5479 = vadd.xlane.f32.xlu0 %v5478
      %v5480 = vpop.xlane.xlu0 %5479
      %v5481 = vsel %vm365, %v5439, 0.0
      %5482 = vadd.xlane.f32.xlu0 %v5481
      %v5483 = vpop.xlane.xlu0 %5482
      %v5484 = vsel %vm365, %v5440, 0.0
      %5485 = vadd.xlane.f32.xlu0 %v5484
      %v5486 = vpop.xlane.xlu0 %5485
      %v5487 = vsel %vm365, %v5441, 0.0
      %5488 = vadd.xlane.f32.xlu0 %v5487
      %v5489 = vpop.xlane.xlu0 %5488
      %v5490 = vsel %vm365, %v5442, 0.0
      %5491 = vadd.xlane.f32.xlu0 %v5490
      %v5492 = vpop.xlane.xlu0 %5491
      %v5493 = vsel %vm365, %v5443, 0.0
      %5494 = vadd.xlane.f32.xlu0 %v5493
      %v5495 = vpop.xlane.xlu0 %5494
      %v5496 = vsel %vm365, %v5444, 0.0
      %5497 = vadd.xlane.f32.xlu0 %v5496
      %v5498 = vpop.xlane.xlu0 %5497
      %v5499 = vsel %vm365, %v5445, 0.0
      %5500 = vadd.xlane.f32.xlu0 %v5499
      %v5501 = vpop.xlane.xlu0 %5500
      %v5502 = vsel %vm365, %v5446, 0.0
      %5503 = vadd.xlane.f32.xlu0 %v5502
      %v5504 = vpop.xlane.xlu0 %5503
      %v5505 = vsel %vm365, %v5447, 0.0
      %5506 = vadd.xlane.f32.xlu0 %v5505
      %v5507 = vpop.xlane.xlu0 %5506
      %v5508 = vsel %vm365, %v5448, 0.0
      %5509 = vadd.xlane.f32.xlu0 %v5508
      %v5510 = vpop.xlane.xlu0 %5509
      %v5511 = vsel %vm365, %v5449, 0.0
      %5512 = vadd.xlane.f32.xlu0 %v5511
      %v5513 = vpop.xlane.xlu0 %5512
      %v5514 = vsel %vm365, %v5450, 0.0
      %5515 = vadd.xlane.f32.xlu0 %v5514
      %v5516 = vpop.xlane.xlu0 %5515
      %v5517 = vsel %vm365, %v5451, 0.0
      %5518 = vadd.xlane.f32.xlu0 %v5517
      %v5519 = vpop.xlane.xlu0 %5518
      %v5520 = vsel %vm365, %v5452, 0.0
      %5521 = vadd.xlane.f32.xlu0 %v5520
      %v5522 = vpop.xlane.xlu0 %5521
      %v5523 = vsel %vm365, %v5453, 0.0
      %5524 = vadd.xlane.f32.xlu0 %v5523
      %v5525 = vpop.xlane.xlu0 %5524
      %v5526 = vsel %vm365, %v5454, 0.0
      %5527 = vadd.xlane.f32.xlu0 %v5526
      %v5528 = vpop.xlane.xlu0 %5527
      %v5529 = vsel %vm365, %v5455, 0.0
      %5530 = vadd.xlane.f32.xlu0 %v5529
      %v5531 = vpop.xlane.xlu0 %5530
      %v5532 = vsel %vm365, %v5456, 0.0
      %5533 = vadd.xlane.f32.xlu0 %v5532
      %v5534 = vpop.xlane.xlu0 %5533
      %v5535 = vsel %vm365, %v5457, 0.0
      %5536 = vadd.xlane.f32.xlu0 %v5535
      %v5537 = vpop.xlane.xlu0 %5536
      %v5538 = vsel %vm365, %v5458, 0.0
      %5539 = vadd.xlane.f32.xlu0 %v5538
      %v5540 = vpop.xlane.xlu0 %5539
      %v5541 = vsel %vm365, %v5459, 0.0
      %5542 = vadd.xlane.f32.xlu0 %v5541
      %v5543 = vpop.xlane.xlu0 %5542
      %v5544 = vsel %vm365, %v5460, 0.0
      %5545 = vadd.xlane.f32.xlu0 %v5544
      %v5546 = vpop.xlane.xlu0 %5545
      %v5547 = vsel %vm365, %v5461, 0.0
      %5548 = vadd.xlane.f32.xlu0 %v5547
      %v5549 = vpop.xlane.xlu0 %5548
      %v5550 = vsel %vm365, %v5462, 0.0
      %5551 = vadd.xlane.f32.xlu0 %v5550
      %v5552 = vpop.xlane.xlu0 %5551
      %v5553 = vsel %vm365, %v5463, 0.0
      %5554 = vadd.xlane.f32.xlu0 %v5553
      %v5555 = vpop.xlane.xlu0 %5554
      %v5556 = vsel %vm365, %v5464, 0.0
      %5557 = vadd.xlane.f32.xlu0 %v5556
      %v5558 = vpop.xlane.xlu0 %5557
      %v5559 = vsel %vm365, %v5465, 0.0
      %5560 = vadd.xlane.f32.xlu0 %v5559
      %v5561 = vpop.xlane.xlu0 %5560
      %v5562 = vmul.f32 %v5468, %v5369
      %v5563 = vmul.f32 %v5471, %v5369
      %v5564 = vmul.f32 %v5474, %v5369
      %v5565 = vmul.f32 %v5477, %v5369
      %v5566 = vmul.f32 %v5480, %v5369
      %v5567 = vmul.f32 %v5483, %v5369
      %v5568 = vmul.f32 %v5486, %v5369
      %v5569 = vmul.f32 %v5489, %v5369
      %v5570 = vmul.f32 %v5492, %v5369
      %v5571 = vmul.f32 %v5495, %v5369
      %v5572 = vmul.f32 %v5498, %v5369
      %v5573 = vmul.f32 %v5501, %v5369
      %v5574 = vmul.f32 %v5504, %v5369
      %v5575 = vmul.f32 %v5507, %v5369
      %v5576 = vmul.f32 %v5510, %v5369
      %v5577 = vmul.f32 %v5513, %v5369
      %v5578 = vmul.f32 %v5516, %v5369
      %v5579 = vmul.f32 %v5519, %v5369
      %v5580 = vmul.f32 %v5522, %v5369
      %v5581 = vmul.f32 %v5525, %v5369
      %v5582 = vmul.f32 %v5528, %v5369
      %v5583 = vmul.f32 %v5531, %v5369
      %v5584 = vmul.f32 %v5534, %v5369
      %v5585 = vmul.f32 %v5537, %v5369
      %v5586 = vmul.f32 %v5540, %v5369
      %v5587 = vmul.f32 %v5543, %v5369
      %v5588 = vmul.f32 %v5546, %v5369
      %v5589 = vmul.f32 %v5549, %v5369
      %v5590 = vmul.f32 %v5552, %v5369
      %v5591 = vmul.f32 %v5555, %v5369
      %v5592 = vmul.f32 %v5558, %v5369
      %v5593 = vmul.f32 %v5561, %v5369
      %v5594 = vadd.f32 %v5562, 1e-06
      %v5595 = vadd.f32 %v5563, 1e-06
      %v5596 = vadd.f32 %v5564, 1e-06
      %v5597 = vadd.f32 %v5565, 1e-06
      %v5598 = vadd.f32 %v5566, 1e-06
      %v5599 = vadd.f32 %v5567, 1e-06
      %v5600 = vadd.f32 %v5568, 1e-06
      %v5601 = vadd.f32 %v5569, 1e-06
      %v5602 = vadd.f32 %v5570, 1e-06
      %v5603 = vadd.f32 %v5571, 1e-06
      %v5604 = vadd.f32 %v5572, 1e-06
      %v5605 = vadd.f32 %v5573, 1e-06
      %v5606 = vadd.f32 %v5574, 1e-06
      %v5607 = vadd.f32 %v5575, 1e-06
      %v5608 = vadd.f32 %v5576, 1e-06
      %v5609 = vadd.f32 %v5577, 1e-06
      %v5610 = vadd.f32 %v5578, 1e-06
      %v5611 = vadd.f32 %v5579, 1e-06
      %v5612 = vadd.f32 %v5580, 1e-06
      %v5613 = vadd.f32 %v5581, 1e-06
      %v5614 = vadd.f32 %v5582, 1e-06
      %v5615 = vadd.f32 %v5583, 1e-06
      %v5616 = vadd.f32 %v5584, 1e-06
      %v5617 = vadd.f32 %v5585, 1e-06
      %v5618 = vadd.f32 %v5586, 1e-06
      %v5619 = vadd.f32 %v5587, 1e-06
      %v5620 = vadd.f32 %v5588, 1e-06
      %v5621 = vadd.f32 %v5589, 1e-06
      %v5622 = vadd.f32 %v5590, 1e-06
      %v5623 = vadd.f32 %v5591, 1e-06
      %v5624 = vadd.f32 %v5592, 1e-06
      %v5625 = vadd.f32 %v5593, 1e-06
      %v5626 = vrsqrt.pop %v5594
      %v5627 = vmul.f32 %v5626, %v5594
      %v5628 = vmul.f32 %v5627, %v5626
      %v5629 = vmul.f32 0.5, %v5628
      %v5630 = vsub.f32 1.5, %v5629
      %v5631 = vmul.f32 %v5626, %v5630
      %vm5632 = vweird.f32 %v5594
      %vm5633 = vweird.f32 %v5626
      %vm5634 = vmor %vm5632, %vm5633
      %v5635 = vsel %vm5634, %v5626, %v5631
      %v5636 = vrsqrt.pop %v5595
      %v5637 = vmul.f32 %v5636, %v5595
      %v5638 = vmul.f32 %v5637, %v5636
      %v5639 = vmul.f32 0.5, %v5638
      %v5640 = vsub.f32 1.5, %v5639
      %v5641 = vmul.f32 %v5636, %v5640
      %vm5642 = vweird.f32 %v5595
      %vm5643 = vweird.f32 %v5636
      %vm5644 = vmor %vm5642, %vm5643
      %v5645 = vsel %vm5644, %v5636, %v5641
      %v5646 = vrsqrt.pop %v5596
      %v5647 = vmul.f32 %v5646, %v5596
      %v5648 = vmul.f32 %v5647, %v5646
      %v5649 = vmul.f32 0.5, %v5648
      %v5650 = vsub.f32 1.5, %v5649
      %v5651 = vmul.f32 %v5646, %v5650
      %vm5652 = vweird.f32 %v5596
      %vm5653 = vweird.f32 %v5646
      %vm5654 = vmor %vm5652, %vm5653
      %v5655 = vsel %vm5654, %v5646, %v5651
      %v5656 = vrsqrt.pop %v5597
      %v5657 = vmul.f32 %v5656, %v5597
      %v5658 = vmul.f32 %v5657, %v5656
      %v5659 = vmul.f32 0.5, %v5658
      %v5660 = vsub.f32 1.5, %v5659
      %v5661 = vmul.f32 %v5656, %v5660
      %vm5662 = vweird.f32 %v5597
      %vm5663 = vweird.f32 %v5656
      %vm5664 = vmor %vm5662, %vm5663
      %v5665 = vsel %vm5664, %v5656, %v5661
      %v5666 = vrsqrt.pop %v5598
      %v5667 = vmul.f32 %v5666, %v5598
      %v5668 = vmul.f32 %v5667, %v5666
      %v5669 = vmul.f32 0.5, %v5668
      %v5670 = vsub.f32 1.5, %v5669
      %v5671 = vmul.f32 %v5666, %v5670
      %vm5672 = vweird.f32 %v5598
      %vm5673 = vweird.f32 %v5666
      %vm5674 = vmor %vm5672, %vm5673
      %v5675 = vsel %vm5674, %v5666, %v5671
      %v5676 = vrsqrt.pop %v5599
      %v5677 = vmul.f32 %v5676, %v5599
      %v5678 = vmul.f32 %v5677, %v5676
      %v5679 = vmul.f32 0.5, %v5678
      %v5680 = vsub.f32 1.5, %v5679
      %v5681 = vmul.f32 %v5676, %v5680
      %vm5682 = vweird.f32 %v5599
      %vm5683 = vweird.f32 %v5676
      %vm5684 = vmor %vm5682, %vm5683
      %v5685 = vsel %vm5684, %v5676, %v5681
      %v5686 = vrsqrt.pop %v5600
      %v5687 = vmul.f32 %v5686, %v5600
      %v5688 = vmul.f32 %v5687, %v5686
      %v5689 = vmul.f32 0.5, %v5688
      %v5690 = vsub.f32 1.5, %v5689
      %v5691 = vmul.f32 %v5686, %v5690
      %vm5692 = vweird.f32 %v5600
      %vm5693 = vweird.f32 %v5686
      %vm5694 = vmor %vm5692, %vm5693
      %v5695 = vsel %vm5694, %v5686, %v5691
      %v5696 = vrsqrt.pop %v5601
      %v5697 = vmul.f32 %v5696, %v5601
      %v5698 = vmul.f32 %v5697, %v5696
      %v5699 = vmul.f32 0.5, %v5698
      %v5700 = vsub.f32 1.5, %v5699
      %v5701 = vmul.f32 %v5696, %v5700
      %vm5702 = vweird.f32 %v5601
      %vm5703 = vweird.f32 %v5696
      %vm5704 = vmor %vm5702, %vm5703
      %v5705 = vsel %vm5704, %v5696, %v5701
      %v5706 = vrsqrt.pop %v5602
      %v5707 = vmul.f32 %v5706, %v5602
      %v5708 = vmul.f32 %v5707, %v5706
      %v5709 = vmul.f32 0.5, %v5708
      %v5710 = vsub.f32 1.5, %v5709
      %v5711 = vmul.f32 %v5706, %v5710
      %vm5712 = vweird.f32 %v5602
      %vm5713 = vweird.f32 %v5706
      %vm5714 = vmor %vm5712, %vm5713
      %v5715 = vsel %vm5714, %v5706, %v5711
      %v5716 = vrsqrt.pop %v5603
      %v5717 = vmul.f32 %v5716, %v5603
      %v5718 = vmul.f32 %v5717, %v5716
      %v5719 = vmul.f32 0.5, %v5718
      %v5720 = vsub.f32 1.5, %v5719
      %v5721 = vmul.f32 %v5716, %v5720
      %vm5722 = vweird.f32 %v5603
      %vm5723 = vweird.f32 %v5716
      %vm5724 = vmor %vm5722, %vm5723
      %v5725 = vsel %vm5724, %v5716, %v5721
      %v5726 = vrsqrt.pop %v5604
      %v5727 = vmul.f32 %v5726, %v5604
      %v5728 = vmul.f32 %v5727, %v5726
      %v5729 = vmul.f32 0.5, %v5728
      %v5730 = vsub.f32 1.5, %v5729
      %v5731 = vmul.f32 %v5726, %v5730
      %vm5732 = vweird.f32 %v5604
      %vm5733 = vweird.f32 %v5726
      %vm5734 = vmor %vm5732, %vm5733
      %v5735 = vsel %vm5734, %v5726, %v5731
      %v5736 = vrsqrt.pop %v5605
      %v5737 = vmul.f32 %v5736, %v5605
      %v5738 = vmul.f32 %v5737, %v5736
      %v5739 = vmul.f32 0.5, %v5738
      %v5740 = vsub.f32 1.5, %v5739
      %v5741 = vmul.f32 %v5736, %v5740
      %vm5742 = vweird.f32 %v5605
      %vm5743 = vweird.f32 %v5736
      %vm5744 = vmor %vm5742, %vm5743
      %v5745 = vsel %vm5744, %v5736, %v5741
      %v5746 = vrsqrt.pop %v5606
      %v5747 = vmul.f32 %v5746, %v5606
      %v5748 = vmul.f32 %v5747, %v5746
      %v5749 = vmul.f32 0.5, %v5748
      %v5750 = vsub.f32 1.5, %v5749
      %v5751 = vmul.f32 %v5746, %v5750
      %vm5752 = vweird.f32 %v5606
      %vm5753 = vweird.f32 %v5746
      %vm5754 = vmor %vm5752, %vm5753
      %v5755 = vsel %vm5754, %v5746, %v5751
      %v5756 = vrsqrt.pop %v5607
      %v5757 = vmul.f32 %v5756, %v5607
      %v5758 = vmul.f32 %v5757, %v5756
      %v5759 = vmul.f32 0.5, %v5758
      %v5760 = vsub.f32 1.5, %v5759
      %v5761 = vmul.f32 %v5756, %v5760
      %vm5762 = vweird.f32 %v5607
      %vm5763 = vweird.f32 %v5756
      %vm5764 = vmor %vm5762, %vm5763
      %v5765 = vsel %vm5764, %v5756, %v5761
      %v5766 = vrsqrt.pop %v5608
      %v5767 = vmul.f32 %v5766, %v5608
      %v5768 = vmul.f32 %v5767, %v5766
      %v5769 = vmul.f32 0.5, %v5768
      %v5770 = vsub.f32 1.5, %v5769
      %v5771 = vmul.f32 %v5766, %v5770
      %vm5772 = vweird.f32 %v5608
      %vm5773 = vweird.f32 %v5766
      %vm5774 = vmor %vm5772, %vm5773
      %v5775 = vsel %vm5774, %v5766, %v5771
      %v5776 = vrsqrt.pop %v5609
      %v5777 = vmul.f32 %v5776, %v5609
      %v5778 = vmul.f32 %v5777, %v5776
      %v5779 = vmul.f32 0.5, %v5778
      %v5780 = vsub.f32 1.5, %v5779
      %v5781 = vmul.f32 %v5776, %v5780
      %vm5782 = vweird.f32 %v5609
      %vm5783 = vweird.f32 %v5776
      %vm5784 = vmor %vm5782, %vm5783
      %v5785 = vsel %vm5784, %v5776, %v5781
      %v5786 = vrsqrt.pop %v5610
      %v5787 = vmul.f32 %v5786, %v5610
      %v5788 = vmul.f32 %v5787, %v5786
      %v5789 = vmul.f32 0.5, %v5788
      %v5790 = vsub.f32 1.5, %v5789
      %v5791 = vmul.f32 %v5786, %v5790
      %vm5792 = vweird.f32 %v5610
      %vm5793 = vweird.f32 %v5786
      %vm5794 = vmor %vm5792, %vm5793
      %v5795 = vsel %vm5794, %v5786, %v5791
      %v5796 = vrsqrt.pop %v5611
      %v5797 = vmul.f32 %v5796, %v5611
      %v5798 = vmul.f32 %v5797, %v5796
      %v5799 = vmul.f32 0.5, %v5798
      %v5800 = vsub.f32 1.5, %v5799
      %v5801 = vmul.f32 %v5796, %v5800
      %vm5802 = vweird.f32 %v5611
      %vm5803 = vweird.f32 %v5796
      %vm5804 = vmor %vm5802, %vm5803
      %v5805 = vsel %vm5804, %v5796, %v5801
      %v5806 = vrsqrt.pop %v5612
      %v5807 = vmul.f32 %v5806, %v5612
      %v5808 = vmul.f32 %v5807, %v5806
      %v5809 = vmul.f32 0.5, %v5808
      %v5810 = vsub.f32 1.5, %v5809
      %v5811 = vmul.f32 %v5806, %v5810
      %vm5812 = vweird.f32 %v5612
      %vm5813 = vweird.f32 %v5806
      %vm5814 = vmor %vm5812, %vm5813
      %v5815 = vsel %vm5814, %v5806, %v5811
      %v5816 = vrsqrt.pop %v5613
      %v5817 = vmul.f32 %v5816, %v5613
      %v5818 = vmul.f32 %v5817, %v5816
      %v5819 = vmul.f32 0.5, %v5818
      %v5820 = vsub.f32 1.5, %v5819
      %v5821 = vmul.f32 %v5816, %v5820
      %vm5822 = vweird.f32 %v5613
      %vm5823 = vweird.f32 %v5816
      %vm5824 = vmor %vm5822, %vm5823
      %v5825 = vsel %vm5824, %v5816, %v5821
      %v5826 = vrsqrt.pop %v5614
      %v5827 = vmul.f32 %v5826, %v5614
      %v5828 = vmul.f32 %v5827, %v5826
      %v5829 = vmul.f32 0.5, %v5828
      %v5830 = vsub.f32 1.5, %v5829
      %v5831 = vmul.f32 %v5826, %v5830
      %vm5832 = vweird.f32 %v5614
      %vm5833 = vweird.f32 %v5826
      %vm5834 = vmor %vm5832, %vm5833
      %v5835 = vsel %vm5834, %v5826, %v5831
      %v5836 = vrsqrt.pop %v5615
      %v5837 = vmul.f32 %v5836, %v5615
      %v5838 = vmul.f32 %v5837, %v5836
      %v5839 = vmul.f32 0.5, %v5838
      %v5840 = vsub.f32 1.5, %v5839
      %v5841 = vmul.f32 %v5836, %v5840
      %vm5842 = vweird.f32 %v5615
      %vm5843 = vweird.f32 %v5836
      %vm5844 = vmor %vm5842, %vm5843
      %v5845 = vsel %vm5844, %v5836, %v5841
      %v5846 = vrsqrt.pop %v5616
      %v5847 = vmul.f32 %v5846, %v5616
      %v5848 = vmul.f32 %v5847, %v5846
      %v5849 = vmul.f32 0.5, %v5848
      %v5850 = vsub.f32 1.5, %v5849
      %v5851 = vmul.f32 %v5846, %v5850
      %vm5852 = vweird.f32 %v5616
      %vm5853 = vweird.f32 %v5846
      %vm5854 = vmor %vm5852, %vm5853
      %v5855 = vsel %vm5854, %v5846, %v5851
      %v5856 = vrsqrt.pop %v5617
      %v5857 = vmul.f32 %v5856, %v5617
      %v5858 = vmul.f32 %v5857, %v5856
      %v5859 = vmul.f32 0.5, %v5858
      %v5860 = vsub.f32 1.5, %v5859
      %v5861 = vmul.f32 %v5856, %v5860
      %vm5862 = vweird.f32 %v5617
      %vm5863 = vweird.f32 %v5856
      %vm5864 = vmor %vm5862, %vm5863
      %v5865 = vsel %vm5864, %v5856, %v5861
      %v5866 = vrsqrt.pop %v5618
      %v5867 = vmul.f32 %v5866, %v5618
      %v5868 = vmul.f32 %v5867, %v5866
      %v5869 = vmul.f32 0.5, %v5868
      %v5870 = vsub.f32 1.5, %v5869
      %v5871 = vmul.f32 %v5866, %v5870
      %vm5872 = vweird.f32 %v5618
      %vm5873 = vweird.f32 %v5866
      %vm5874 = vmor %vm5872, %vm5873
      %v5875 = vsel %vm5874, %v5866, %v5871
      %v5876 = vrsqrt.pop %v5619
      %v5877 = vmul.f32 %v5876, %v5619
      %v5878 = vmul.f32 %v5877, %v5876
      %v5879 = vmul.f32 0.5, %v5878
      %v5880 = vsub.f32 1.5, %v5879
      %v5881 = vmul.f32 %v5876, %v5880
      %vm5882 = vweird.f32 %v5619
      %vm5883 = vweird.f32 %v5876
      %vm5884 = vmor %vm5882, %vm5883
      %v5885 = vsel %vm5884, %v5876, %v5881
      %v5886 = vrsqrt.pop %v5620
      %v5887 = vmul.f32 %v5886, %v5620
      %v5888 = vmul.f32 %v5887, %v5886
      %v5889 = vmul.f32 0.5, %v5888
      %v5890 = vsub.f32 1.5, %v5889
      %v5891 = vmul.f32 %v5886, %v5890
      %vm5892 = vweird.f32 %v5620
      %vm5893 = vweird.f32 %v5886
      %vm5894 = vmor %vm5892, %vm5893
      %v5895 = vsel %vm5894, %v5886, %v5891
      %v5896 = vrsqrt.pop %v5621
      %v5897 = vmul.f32 %v5896, %v5621
      %v5898 = vmul.f32 %v5897, %v5896
      %v5899 = vmul.f32 0.5, %v5898
      %v5900 = vsub.f32 1.5, %v5899
      %v5901 = vmul.f32 %v5896, %v5900
      %vm5902 = vweird.f32 %v5621
      %vm5903 = vweird.f32 %v5896
      %vm5904 = vmor %vm5902, %vm5903
      %v5905 = vsel %vm5904, %v5896, %v5901
      %v5906 = vrsqrt.pop %v5622
      %v5907 = vmul.f32 %v5906, %v5622
      %v5908 = vmul.f32 %v5907, %v5906
      %v5909 = vmul.f32 0.5, %v5908
      %v5910 = vsub.f32 1.5, %v5909
      %v5911 = vmul.f32 %v5906, %v5910
      %vm5912 = vweird.f32 %v5622
      %vm5913 = vweird.f32 %v5906
      %vm5914 = vmor %vm5912, %vm5913
      %v5915 = vsel %vm5914, %v5906, %v5911
      %v5916 = vrsqrt.pop %v5623
      %v5917 = vmul.f32 %v5916, %v5623
      %v5918 = vmul.f32 %v5917, %v5916
      %v5919 = vmul.f32 0.5, %v5918
      %v5920 = vsub.f32 1.5, %v5919
      %v5921 = vmul.f32 %v5916, %v5920
      %vm5922 = vweird.f32 %v5623
      %vm5923 = vweird.f32 %v5916
      %vm5924 = vmor %vm5922, %vm5923
      %v5925 = vsel %vm5924, %v5916, %v5921
      %v5926 = vrsqrt.pop %v5624
      %v5927 = vmul.f32 %v5926, %v5624
      %v5928 = vmul.f32 %v5927, %v5926
      %v5929 = vmul.f32 0.5, %v5928
      %v5930 = vsub.f32 1.5, %v5929
      %v5931 = vmul.f32 %v5926, %v5930
      %vm5932 = vweird.f32 %v5624
      %vm5933 = vweird.f32 %v5926
      %vm5934 = vmor %vm5932, %vm5933
      %v5935 = vsel %vm5934, %v5926, %v5931
      %v5936 = vrsqrt.pop %v5625
      %v5937 = vmul.f32 %v5936, %v5625
      %v5938 = vmul.f32 %v5937, %v5936
      %v5939 = vmul.f32 0.5, %v5938
      %v5940 = vsub.f32 1.5, %v5939
      %v5941 = vmul.f32 %v5936, %v5940
      %vm5942 = vweird.f32 %v5625
      %vm5943 = vweird.f32 %v5936
      %vm5944 = vmor %vm5942, %vm5943
      %v5945 = vsel %vm5944, %v5936, %v5941
      %v5946 = vmul.f32 %v5402, %v5635
      %v5947 = vmul.f32 %v5403, %v5645
      %v5948 = vmul.f32 %v5404, %v5655
      %v5949 = vmul.f32 %v5405, %v5665
      %v5950 = vmul.f32 %v5406, %v5675
      %v5951 = vmul.f32 %v5407, %v5685
      %v5952 = vmul.f32 %v5408, %v5695
      %v5953 = vmul.f32 %v5409, %v5705
      %v5954 = vmul.f32 %v5410, %v5715
      %v5955 = vmul.f32 %v5411, %v5725
      %v5956 = vmul.f32 %v5412, %v5735
      %v5957 = vmul.f32 %v5413, %v5745
      %v5958 = vmul.f32 %v5414, %v5755
      %v5959 = vmul.f32 %v5415, %v5765
      %v5960 = vmul.f32 %v5416, %v5775
      %v5961 = vmul.f32 %v5417, %v5785
      %v5962 = vmul.f32 %v5418, %v5795
      %v5963 = vmul.f32 %v5419, %v5805
      %v5964 = vmul.f32 %v5420, %v5815
      %v5965 = vmul.f32 %v5421, %v5825
      %v5966 = vmul.f32 %v5422, %v5835
      %v5967 = vmul.f32 %v5423, %v5845
      %v5968 = vmul.f32 %v5424, %v5855
      %v5969 = vmul.f32 %v5425, %v5865
      %v5970 = vmul.f32 %v5426, %v5875
      %v5971 = vmul.f32 %v5427, %v5885
      %v5972 = vmul.f32 %v5428, %v5895
      %v5973 = vmul.f32 %v5429, %v5905
      %v5974 = vmul.f32 %v5430, %v5915
      %v5975 = vmul.f32 %v5431, %v5925
      %v5976 = vmul.f32 %v5432, %v5935
      %v5977 = vmul.f32 %v5433, %v5945
      %v5978 = vld [vmem:[%s3] sm:$0x1]
      %v5980 = vperm.slane %v5978, 0
      %v5982 = vmul.f32 %v5946, %v5980
      %v5983 = vmul.f32 %v5947, %v5980
      %v5984 = vmul.f32 %v5948, %v5980
      %v5985 = vmul.f32 %v5949, %v5980
      %v5986 = vmul.f32 %v5950, %v5980
      %v5987 = vmul.f32 %v5951, %v5980
      %v5988 = vmul.f32 %v5952, %v5980
      %v5989 = vmul.f32 %v5953, %v5980
      %v5990 = vmul.f32 %v5954, %v5980
      %v5991 = vmul.f32 %v5955, %v5980
      %v5992 = vmul.f32 %v5956, %v5980
      %v5993 = vmul.f32 %v5957, %v5980
      %v5994 = vmul.f32 %v5958, %v5980
      %v5995 = vmul.f32 %v5959, %v5980
      %v5996 = vmul.f32 %v5960, %v5980
      %v5997 = vmul.f32 %v5961, %v5980
      %v5998 = vmul.f32 %v5962, %v5980
      %v5999 = vmul.f32 %v5963, %v5980
      %v6000 = vmul.f32 %v5964, %v5980
      %v6001 = vmul.f32 %v5965, %v5980
      %v6002 = vmul.f32 %v5966, %v5980
      %v6003 = vmul.f32 %v5967, %v5980
      %v6004 = vmul.f32 %v5968, %v5980
      %v6005 = vmul.f32 %v5969, %v5980
      %v6006 = vmul.f32 %v5970, %v5980
      %v6007 = vmul.f32 %v5971, %v5980
      %v6008 = vmul.f32 %v5972, %v5980
      %v6009 = vmul.f32 %v5973, %v5980
      %v6010 = vmul.f32 %v5974, %v5980
      %v6011 = vmul.f32 %v5975, %v5980
      %v6012 = vmul.f32 %v5976, %v5980
      %v6013 = vmul.f32 %v5977, %v5980
      %v6014 = vld [vmem:[%s4] sm:$0x1]
      %v6016 = vperm.slane %v6014, 0
      %v6018 = vadd.f32 %v5982, %v6016
      %v6019 = vadd.f32 %v5983, %v6016
      %v6020 = vadd.f32 %v5984, %v6016
      %v6021 = vadd.f32 %v5985, %v6016
      %v6022 = vadd.f32 %v5986, %v6016
      %v6023 = vadd.f32 %v5987, %v6016
      %v6024 = vadd.f32 %v5988, %v6016
      %v6025 = vadd.f32 %v5989, %v6016
      %v6026 = vadd.f32 %v5990, %v6016
      %v6027 = vadd.f32 %v5991, %v6016
      %v6028 = vadd.f32 %v5992, %v6016
      %v6029 = vadd.f32 %v5993, %v6016
      %v6030 = vadd.f32 %v5994, %v6016
      %v6031 = vadd.f32 %v5995, %v6016
      %v6032 = vadd.f32 %v5996, %v6016
      %v6033 = vadd.f32 %v5997, %v6016
      %v6034 = vadd.f32 %v5998, %v6016
      %v6035 = vadd.f32 %v5999, %v6016
      %v6036 = vadd.f32 %v6000, %v6016
      %v6037 = vadd.f32 %v6001, %v6016
      %v6038 = vadd.f32 %v6002, %v6016
      %v6039 = vadd.f32 %v6003, %v6016
      %v6040 = vadd.f32 %v6004, %v6016
      %v6041 = vadd.f32 %v6005, %v6016
      %v6042 = vadd.f32 %v6006, %v6016
      %v6043 = vadd.f32 %v6007, %v6016
      %v6044 = vadd.f32 %v6008, %v6016
      %v6045 = vadd.f32 %v6009, %v6016
      %v6046 = vadd.f32 %v6010, %v6016
      %v6047 = vadd.f32 %v6011, %v6016
      %v6048 = vadd.f32 %v6012, %v6016
      %v6049 = vadd.f32 %v6013, %v6016
      %v6050 = vld [vmem:[%s5] sm:$0xf]
      %v6051 = vld [vmem:[%s6] sm:$0x1]
      %v6053 = vperm.slane %v6051, 0
      %v6056 = vsel %vm365, %v6018, 0
      %v6059 = vsel %vm365, %v6019, 0
      %v6062 = vsel %vm365, %v6020, 0
      %v6065 = vsel %vm365, %v6021, 0
      %v6068 = vsel %vm365, %v6022, 0
      %v6071 = vsel %vm365, %v6023, 0
      %v6074 = vsel %vm365, %v6024, 0
      %v6077 = vsel %vm365, %v6025, 0
      %v6080 = vsel %vm365, %v6026, 0
      %v6083 = vsel %vm365, %v6027, 0
      %v6086 = vsel %vm365, %v6028, 0
      %v6089 = vsel %vm365, %v6029, 0
      %v6092 = vsel %vm365, %v6030, 0
      %v6095 = vsel %vm365, %v6031, 0
      %v6098 = vsel %vm365, %v6032, 0
      %v6101 = vsel %vm365, %v6033, 0
      %v6104 = vsel %vm365, %v6034, 0
      %v6107 = vsel %vm365, %v6035, 0
      %v6110 = vsel %vm365, %v6036, 0
      %v6113 = vsel %vm365, %v6037, 0
      %v6116 = vsel %vm365, %v6038, 0
      %v6119 = vsel %vm365, %v6039, 0
      %v6122 = vsel %vm365, %v6040, 0
      %v6125 = vsel %vm365, %v6041, 0
      %v6128 = vsel %vm365, %v6042, 0
      %v6131 = vsel %vm365, %v6043, 0
      %v6134 = vsel %vm365, %v6044, 0
      %v6137 = vsel %vm365, %v6045, 0
      %v6140 = vsel %vm365, %v6046, 0
      %v6143 = vsel %vm365, %v6047, 0
      %v6146 = vsel %vm365, %v6048, 0
      %v6149 = vsel %vm365, %v6049, 0
      %vm6151 = vcmask 1043456
      %v6153 = vsel %vm6151, %v6050, 0
      %6155 = vmatpush.msra.mxu0 0.0
      %6156 = vmatpush.msra.mxu0 0.0
      %6157 = vmatpush.msra.mxu0 0.0
      %6158 = vmatpush.msra.mxu0 0.0
      %6159 = vmatpush.msra.mxu0 0.0
      %6160 = vmatpush.msra.mxu0 0.0
      %6161 = vmatpush.msra.mxu0 0.0
      %6162 = vmatpush.msra.mxu0 0.0
      %6163 = vmatpush.msra.mxu0 0.0
      %6164 = vmatpush.msra.mxu0 0.0
      %6165 = vmatpush.msra.mxu0 0.0
      %6166 = vmatpush.msra.mxu0 0.0
      %6167 = vmatpush.msra.mxu0 0.0
      %6168 = vmatpush.msra.mxu0 0.0
      %6169 = vmatpush.msra.mxu0 0.0
      %6170 = vmatpush.msra.mxu0 %v6153
      %6171 = vmatmul.f32.gmra.mxu0 %v6056
      %v6172 = vpop.f32.mrf.mxu0
      %v6173 = vadd.f32 %v6053, %v6172
      %6174 = vmatmul.f32.gmra.mxu0 %v6059
      %v6175 = vpop.f32.mrf.mxu0
      %v6176 = vadd.f32 %v6053, %v6175
      %6177 = vmatmul.f32.gmra.mxu0 %v6062
      %v6178 = vpop.f32.mrf.mxu0
      %v6179 = vadd.f32 %v6053, %v6178
      %6180 = vmatmul.f32.gmra.mxu0 %v6065
      %v6181 = vpop.f32.mrf.mxu0
      %v6182 = vadd.f32 %v6053, %v6181
      %6183 = vmatmul.f32.gmra.mxu0 %v6068
      %v6184 = vpop.f32.mrf.mxu0
      %v6185 = vadd.f32 %v6053, %v6184
      %6186 = vmatmul.f32.gmra.mxu0 %v6071
      %v6187 = vpop.f32.mrf.mxu0
      %v6188 = vadd.f32 %v6053, %v6187
      %6189 = vmatmul.f32.gmra.mxu0 %v6074
      %v6190 = vpop.f32.mrf.mxu0
      %v6191 = vadd.f32 %v6053, %v6190
      %6192 = vmatmul.f32.gmra.mxu0 %v6077
      %v6193 = vpop.f32.mrf.mxu0
      %v6194 = vadd.f32 %v6053, %v6193
      %6195 = vmatmul.f32.gmra.mxu0 %v6080
      %v6196 = vpop.f32.mrf.mxu0
      %v6197 = vadd.f32 %v6053, %v6196
      %6198 = vmatmul.f32.gmra.mxu0 %v6083
      %v6199 = vpop.f32.mrf.mxu0
      %v6200 = vadd.f32 %v6053, %v6199
      %6201 = vmatmul.f32.gmra.mxu0 %v6086
      %v6202 = vpop.f32.mrf.mxu0
      %v6203 = vadd.f32 %v6053, %v6202
      %6204 = vmatmul.f32.gmra.mxu0 %v6089
      %v6205 = vpop.f32.mrf.mxu0
      %v6206 = vadd.f32 %v6053, %v6205
      %6207 = vmatmul.f32.gmra.mxu0 %v6092
      %v6208 = vpop.f32.mrf.mxu0
      %v6209 = vadd.f32 %v6053, %v6208
      %6210 = vmatmul.f32.gmra.mxu0 %v6095
      %v6211 = vpop.f32.mrf.mxu0
      %v6212 = vadd.f32 %v6053, %v6211
      %6213 = vmatmul.f32.gmra.mxu0 %v6098
      %v6214 = vpop.f32.mrf.mxu0
      %v6215 = vadd.f32 %v6053, %v6214
      %6216 = vmatmul.f32.gmra.mxu0 %v6101
      %v6217 = vpop.f32.mrf.mxu0
      %v6218 = vadd.f32 %v6053, %v6217
      %6219 = vmatmul.f32.gmra.mxu0 %v6104
      %v6220 = vpop.f32.mrf.mxu0
      %v6221 = vadd.f32 %v6053, %v6220
      %6222 = vmatmul.f32.gmra.mxu0 %v6107
      %v6223 = vpop.f32.mrf.mxu0
      %v6224 = vadd.f32 %v6053, %v6223
      %6225 = vmatmul.f32.gmra.mxu0 %v6110
      %v6226 = vpop.f32.mrf.mxu0
      %v6227 = vadd.f32 %v6053, %v6226
      %6228 = vmatmul.f32.gmra.mxu0 %v6113
      %v6229 = vpop.f32.mrf.mxu0
      %v6230 = vadd.f32 %v6053, %v6229
      %6231 = vmatmul.f32.gmra.mxu0 %v6116
      %v6232 = vpop.f32.mrf.mxu0
      %v6233 = vadd.f32 %v6053, %v6232
      %6234 = vmatmul.f32.gmra.mxu0 %v6119
      %v6235 = vpop.f32.mrf.mxu0
      %v6236 = vadd.f32 %v6053, %v6235
      %6237 = vmatmul.f32.gmra.mxu0 %v6122
      %v6238 = vpop.f32.mrf.mxu0
      %v6239 = vadd.f32 %v6053, %v6238
      %6240 = vmatmul.f32.gmra.mxu0 %v6125
      %v6241 = vpop.f32.mrf.mxu0
      %v6242 = vadd.f32 %v6053, %v6241
      %6243 = vmatmul.f32.gmra.mxu0 %v6128
      %v6244 = vpop.f32.mrf.mxu0
      %v6245 = vadd.f32 %v6053, %v6244
      %6246 = vmatmul.f32.gmra.mxu0 %v6131
      %v6247 = vpop.f32.mrf.mxu0
      %v6248 = vadd.f32 %v6053, %v6247
      %6249 = vmatmul.f32.gmra.mxu0 %v6134
      %v6250 = vpop.f32.mrf.mxu0
      %v6251 = vadd.f32 %v6053, %v6250
      %6252 = vmatmul.f32.gmra.mxu0 %v6137
      %v6253 = vpop.f32.mrf.mxu0
      %v6254 = vadd.f32 %v6053, %v6253
      %6255 = vmatmul.f32.gmra.mxu0 %v6140
      %v6256 = vpop.f32.mrf.mxu0
      %v6257 = vadd.f32 %v6053, %v6256
      %6258 = vmatmul.f32.gmra.mxu0 %v6143
      %v6259 = vpop.f32.mrf.mxu0
      %v6260 = vadd.f32 %v6053, %v6259
      %6261 = vmatmul.f32.gmra.mxu0 %v6146
      %v6262 = vpop.f32.mrf.mxu0
      %v6263 = vadd.f32 %v6053, %v6262
      %6264 = vmatmul.f32.gmra.mxu0 %v6149
      %v6265 = vpop.f32.mrf.mxu0
      %v6266 = vadd.f32 %v6053, %v6265
      %6267 = vdwg.mxu0
      %v6268 = vmax.f32 %v6173, 0.0
      %v6269 = vmax.f32 %v6176, 0.0
      %v6270 = vmax.f32 %v6179, 0.0
      %v6271 = vmax.f32 %v6182, 0.0
      %v6272 = vmax.f32 %v6185, 0.0
      %v6273 = vmax.f32 %v6188, 0.0
      %v6274 = vmax.f32 %v6191, 0.0
      %v6275 = vmax.f32 %v6194, 0.0
      %v6276 = vmax.f32 %v6197, 0.0
      %v6277 = vmax.f32 %v6200, 0.0
      %v6278 = vmax.f32 %v6203, 0.0
      %v6279 = vmax.f32 %v6206, 0.0
      %v6280 = vmax.f32 %v6209, 0.0
      %v6281 = vmax.f32 %v6212, 0.0
      %v6282 = vmax.f32 %v6215, 0.0
      %v6283 = vmax.f32 %v6218, 0.0
      %v6284 = vmax.f32 %v6221, 0.0
      %v6285 = vmax.f32 %v6224, 0.0
      %v6286 = vmax.f32 %v6227, 0.0
      %v6287 = vmax.f32 %v6230, 0.0
      %v6288 = vmax.f32 %v6233, 0.0
      %v6289 = vmax.f32 %v6236, 0.0
      %v6290 = vmax.f32 %v6239, 0.0
      %v6291 = vmax.f32 %v6242, 0.0
      %v6292 = vmax.f32 %v6245, 0.0
      %v6293 = vmax.f32 %v6248, 0.0
      %v6294 = vmax.f32 %v6251, 0.0
      %v6295 = vmax.f32 %v6254, 0.0
      %v6296 = vmax.f32 %v6257, 0.0
      %v6297 = vmax.f32 %v6260, 0.0
      %v6298 = vmax.f32 %v6263, 0.0
      %v6299 = vmax.f32 %v6266, 0.0
      %v6300 = vld [vmem:[%s7] sm:$0xff]
      %v6301 = vld [vmem:[%s7 + $0x8] sm:$0xff]
      %v6302 = vld [vmem:[%s8] sm:$0x1]
      %v6304 = vperm.slane %v6302, 0
      %vm6306 = vcmask 130048
      %v6308 = vsel %vm6306, %v6268, 0
      %v6311 = vsel %vm6306, %v6269, 0
      %v6314 = vsel %vm6306, %v6270, 0
      %v6317 = vsel %vm6306, %v6271, 0
      %v6320 = vsel %vm6306, %v6272, 0
      %v6323 = vsel %vm6306, %v6273, 0
      %v6326 = vsel %vm6306, %v6274, 0
      %v6329 = vsel %vm6306, %v6275, 0
      %v6332 = vsel %vm6306, %v6276, 0
      %v6335 = vsel %vm6306, %v6277, 0
      %v6338 = vsel %vm6306, %v6278, 0
      %v6341 = vsel %vm6306, %v6279, 0
      %v6344 = vsel %vm6306, %v6280, 0
      %v6347 = vsel %vm6306, %v6281, 0
      %v6350 = vsel %vm6306, %v6282, 0
      %v6353 = vsel %vm6306, %v6283, 0
      %v6356 = vsel %vm6306, %v6284, 0
      %v6359 = vsel %vm6306, %v6285, 0
      %v6362 = vsel %vm6306, %v6286, 0
      %v6365 = vsel %vm6306, %v6287, 0
      %v6368 = vsel %vm6306, %v6288, 0
      %v6371 = vsel %vm6306, %v6289, 0
      %v6374 = vsel %vm6306, %v6290, 0
      %v6377 = vsel %vm6306, %v6291, 0
      %v6380 = vsel %vm6306, %v6292, 0
      %v6383 = vsel %vm6306, %v6293, 0
      %v6386 = vsel %vm6306, %v6294, 0
      %v6389 = vsel %vm6306, %v6295, 0
      %v6392 = vsel %vm6306, %v6296, 0
      %v6395 = vsel %vm6306, %v6297, 0
      %v6398 = vsel %vm6306, %v6298, 0
      %v6401 = vsel %vm6306, %v6299, 0
      %6403 = vmatpush.msra.mxu0 0.0
      %6404 = vmatpush.msra.mxu0 0.0
      %6405 = vmatpush.msra.mxu0 0.0
      %6406 = vmatpush.msra.mxu0 0.0
      %6407 = vmatpush.msra.mxu0 0.0
      %6408 = vmatpush.msra.mxu0 0.0
      %6409 = vmatpush.msra.mxu0 0.0
      %6410 = vmatpush.msra.mxu0 0.0
      %6411 = vmatpush.msra.mxu0 0.0
      %6412 = vmatpush.msra.mxu0 0.0
      %6413 = vmatpush.msra.mxu0 0.0
      %6414 = vmatpush.msra.mxu0 0.0
      %6415 = vmatpush.msra.mxu0 0.0
      %6416 = vmatpush.msra.mxu0 0.0
      %6417 = vmatpush.msra.mxu0 %v6301
      %6418 = vmatpush.msra.mxu0 %v6300
      %6419 = vmatmul.f32.gmra.mxu0 %v6308
      %v6420 = vpop.f32.mrf.mxu0
      %v6421 = vadd.f32 %v6304, %v6420
      %6422 = vmatmul.f32.gmra.mxu0 %v6311
      %v6423 = vpop.f32.mrf.mxu0
      %v6424 = vadd.f32 %v6304, %v6423
      %6425 = vmatmul.f32.gmra.mxu0 %v6314
      %v6426 = vpop.f32.mrf.mxu0
      %v6427 = vadd.f32 %v6304, %v6426
      %6428 = vmatmul.f32.gmra.mxu0 %v6317
      %v6429 = vpop.f32.mrf.mxu0
      %v6430 = vadd.f32 %v6304, %v6429
      %6431 = vmatmul.f32.gmra.mxu0 %v6320
      %v6432 = vpop.f32.mrf.mxu0
      %v6433 = vadd.f32 %v6304, %v6432
      %6434 = vmatmul.f32.gmra.mxu0 %v6323
      %v6435 = vpop.f32.mrf.mxu0
      %v6436 = vadd.f32 %v6304, %v6435
      %6437 = vmatmul.f32.gmra.mxu0 %v6326
      %v6438 = vpop.f32.mrf.mxu0
      %v6439 = vadd.f32 %v6304, %v6438
      %6440 = vmatmul.f32.gmra.mxu0 %v6329
      %v6441 = vpop.f32.mrf.mxu0
      %v6442 = vadd.f32 %v6304, %v6441
      %6443 = vmatmul.f32.gmra.mxu0 %v6332
      %v6444 = vpop.f32.mrf.mxu0
      %v6445 = vadd.f32 %v6304, %v6444
      %6446 = vmatmul.f32.gmra.mxu0 %v6335
      %v6447 = vpop.f32.mrf.mxu0
      %v6448 = vadd.f32 %v6304, %v6447
      %6449 = vmatmul.f32.gmra.mxu0 %v6338
      %v6450 = vpop.f32.mrf.mxu0
      %v6451 = vadd.f32 %v6304, %v6450
      %6452 = vmatmul.f32.gmra.mxu0 %v6341
      %v6453 = vpop.f32.mrf.mxu0
      %v6454 = vadd.f32 %v6304, %v6453
      %6455 = vmatmul.f32.gmra.mxu0 %v6344
      %v6456 = vpop.f32.mrf.mxu0
      %v6457 = vadd.f32 %v6304, %v6456
      %6458 = vmatmul.f32.gmra.mxu0 %v6347
      %v6459 = vpop.f32.mrf.mxu0
      %v6460 = vadd.f32 %v6304, %v6459
      %6461 = vmatmul.f32.gmra.mxu0 %v6350
      %v6462 = vpop.f32.mrf.mxu0
      %v6463 = vadd.f32 %v6304, %v6462
      %6464 = vmatmul.f32.gmra.mxu0 %v6353
      %v6465 = vpop.f32.mrf.mxu0
      %v6466 = vadd.f32 %v6304, %v6465
      %6467 = vmatmul.f32.gmra.mxu0 %v6356
      %v6468 = vpop.f32.mrf.mxu0
      %v6469 = vadd.f32 %v6304, %v6468
      %6470 = vmatmul.f32.gmra.mxu0 %v6359
      %v6471 = vpop.f32.mrf.mxu0
      %v6472 = vadd.f32 %v6304, %v6471
      %6473 = vmatmul.f32.gmra.mxu0 %v6362
      %v6474 = vpop.f32.mrf.mxu0
      %v6475 = vadd.f32 %v6304, %v6474
      %6476 = vmatmul.f32.gmra.mxu0 %v6365
      %v6477 = vpop.f32.mrf.mxu0
      %v6478 = vadd.f32 %v6304, %v6477
      %6479 = vmatmul.f32.gmra.mxu0 %v6368
      %v6480 = vpop.f32.mrf.mxu0
      %v6481 = vadd.f32 %v6304, %v6480
      %6482 = vmatmul.f32.gmra.mxu0 %v6371
      %v6483 = vpop.f32.mrf.mxu0
      %v6484 = vadd.f32 %v6304, %v6483
      %6485 = vmatmul.f32.gmra.mxu0 %v6374
      %v6486 = vpop.f32.mrf.mxu0
      %v6487 = vadd.f32 %v6304, %v6486
      %6488 = vmatmul.f32.gmra.mxu0 %v6377
      %v6489 = vpop.f32.mrf.mxu0
      %v6490 = vadd.f32 %v6304, %v6489
      %6491 = vmatmul.f32.gmra.mxu0 %v6380
      %v6492 = vpop.f32.mrf.mxu0
      %v6493 = vadd.f32 %v6304, %v6492
      %6494 = vmatmul.f32.gmra.mxu0 %v6383
      %v6495 = vpop.f32.mrf.mxu0
      %v6496 = vadd.f32 %v6304, %v6495
      %6497 = vmatmul.f32.gmra.mxu0 %v6386
      %v6498 = vpop.f32.mrf.mxu0
      %v6499 = vadd.f32 %v6304, %v6498
      %6500 = vmatmul.f32.gmra.mxu0 %v6389
      %v6501 = vpop.f32.mrf.mxu0
      %v6502 = vadd.f32 %v6304, %v6501
      %6503 = vmatmul.f32.gmra.mxu0 %v6392
      %v6504 = vpop.f32.mrf.mxu0
      %v6505 = vadd.f32 %v6304, %v6504
      %6506 = vmatmul.f32.gmra.mxu0 %v6395
      %v6507 = vpop.f32.mrf.mxu0
      %v6508 = vadd.f32 %v6304, %v6507
      %6509 = vmatmul.f32.gmra.mxu0 %v6398
      %v6510 = vpop.f32.mrf.mxu0
      %v6511 = vadd.f32 %v6304, %v6510
      %6512 = vmatmul.f32.gmra.mxu0 %v6401
      %v6513 = vpop.f32.mrf.mxu0
      %v6514 = vadd.f32 %v6304, %v6513
      %6515 = vdwg.mxu0
      %v6516 = vadd.f32 %v333, %v6421
      %v6517 = vadd.f32 %v334, %v6424
      %v6518 = vadd.f32 %v335, %v6427
      %v6519 = vadd.f32 %v336, %v6430
      %v6520 = vadd.f32 %v337, %v6433
      %v6521 = vadd.f32 %v338, %v6436
      %v6522 = vadd.f32 %v339, %v6439
      %v6523 = vadd.f32 %v340, %v6442
      %v6524 = vadd.f32 %v341, %v6445
      %v6525 = vadd.f32 %v342, %v6448
      %v6526 = vadd.f32 %v343, %v6451
      %v6527 = vadd.f32 %v344, %v6454
      %v6528 = vadd.f32 %v345, %v6457
      %v6529 = vadd.f32 %v346, %v6460
      %v6530 = vadd.f32 %v347, %v6463
      %v6531 = vadd.f32 %v348, %v6466
      %v6532 = vadd.f32 %v349, %v6469
      %v6533 = vadd.f32 %v350, %v6472
      %v6534 = vadd.f32 %v351, %v6475
      %v6535 = vadd.f32 %v352, %v6478
      %v6536 = vadd.f32 %v353, %v6481
      %v6537 = vadd.f32 %v354, %v6484
      %v6538 = vadd.f32 %v355, %v6487
      %v6539 = vadd.f32 %v356, %v6490
      %v6540 = vadd.f32 %v357, %v6493
      %v6541 = vadd.f32 %v358, %v6496
      %v6542 = vadd.f32 %v359, %v6499
      %v6543 = vadd.f32 %v360, %v6502
      %v6544 = vadd.f32 %v361, %v6505
      %v6545 = vadd.f32 %v362, %v6508
      %v6546 = vadd.f32 %v363, %v6511
      %v6547 = vadd.f32 %v364, %v6514
      %6548 = vst.msk [vmem:[%s332] sm:$0xff] %vm365, %v6516
      %6549 = vst.msk [vmem:[%s332 + $0x8] sm:$0xff] %vm365, %v6517
      %6550 = vst.msk [vmem:[%s332 + $0x10] sm:$0xff] %vm365, %v6518
      %6551 = vst.msk [vmem:[%s332 + $0x18] sm:$0xff] %vm365, %v6519
      %6552 = vst.msk [vmem:[%s332 + $0x20] sm:$0xff] %vm365, %v6520
      %6553 = vst.msk [vmem:[%s332 + $0x28] sm:$0xff] %vm365, %v6521
      %6554 = vst.msk [vmem:[%s332 + $0x30] sm:$0xff] %vm365, %v6522
      %6555 = vst.msk [vmem:[%s332 + $0x38] sm:$0xff] %vm365, %v6523
      %6556 = vst.msk [vmem:[%s332 + $0x40] sm:$0xff] %vm365, %v6524
      %6557 = vst.msk [vmem:[%s332 + $0x48] sm:$0xff] %vm365, %v6525
      %6558 = vst.msk [vmem:[%s332 + $0x50] sm:$0xff] %vm365, %v6526
      %6559 = vst.msk [vmem:[%s332 + $0x58] sm:$0xff] %vm365, %v6527
      %6560 = vst.msk [vmem:[%s332 + $0x60] sm:$0xff] %vm365, %v6528
      %6561 = vst.msk [vmem:[%s332 + $0x68] sm:$0xff] %vm365, %v6529
      %6562 = vst.msk [vmem:[%s332 + $0x70] sm:$0xff] %vm365, %v6530
      %6563 = vst.msk [vmem:[%s332 + $0x78] sm:$0xff] %vm365, %v6531
      %6564 = vst.msk [vmem:[%s332 + $0x80] sm:$0xff] %vm365, %v6532
      %6565 = vst.msk [vmem:[%s332 + $0x88] sm:$0xff] %vm365, %v6533
      %6566 = vst.msk [vmem:[%s332 + $0x90] sm:$0xff] %vm365, %v6534
      %6567 = vst.msk [vmem:[%s332 + $0x98] sm:$0xff] %vm365, %v6535
      %6568 = vst.msk [vmem:[%s332 + $0xa0] sm:$0xff] %vm365, %v6536
      %6569 = vst.msk [vmem:[%s332 + $0xa8] sm:$0xff] %vm365, %v6537
      %6570 = vst.msk [vmem:[%s332 + $0xb0] sm:$0xff] %vm365, %v6538
      %6571 = vst.msk [vmem:[%s332 + $0xb8] sm:$0xff] %vm365, %v6539
      %6572 = vst.msk [vmem:[%s332 + $0xc0] sm:$0xff] %vm365, %v6540
      %6573 = vst.msk [vmem:[%s332 + $0xc8] sm:$0xff] %vm365, %v6541
      %6574 = vst.msk [vmem:[%s332 + $0xd0] sm:$0xff] %vm365, %v6542
      %6575 = vst.msk [vmem:[%s332 + $0xd8] sm:$0xff] %vm365, %v6543
      %6576 = vst.msk [vmem:[%s332 + $0xe0] sm:$0xff] %vm365, %v6544
      %6577 = vst.msk [vmem:[%s332 + $0xe8] sm:$0xff] %vm365, %v6545
      %6578 = vst.msk [vmem:[%s332 + $0xf0] sm:$0xff] %vm365, %v6546
      %6579 = vst.msk [vmem:[%s332 + $0xf8] sm:$0xff] %vm365, %v6547
      %p6580 = scmp.lt.s32.totalorder %s20, 1
      %s6581 = scalar_select %p6580, %s20, 1
      %s6582 = smul.addr %s6581, 32
      %s6583 = smul.addr %s6582, 8
      %s6584 = scalar_lea.vmem %s9, %s6583
      // Predicated region
      $region57: #{tpu_custom_call.1} parent=55 // pred_check
        %p6585 = pneg %p232
      $region58: #{tpu_custom_call.1} parent=55 // pred_check_branch
        %6587 = sbr.rel (%p6585) target = $region60
      $region59: #{tpu_custom_call.1} parent=55 // pred_region
        _
      $region60: #{tpu_custom_call.1} parent=55 // pred_fallthru
        _
    $region56: #{tpu_custom_call.1} parent=5 // pred_fallthru
      _
    %p6588 = scmp.le.s32.totalorder 2, %s15
    // Predicated region
    $region61: #{tpu_custom_call.1} parent=5 // pred_check
      %p6589 = pneg %p6588
    $region62: #{tpu_custom_call.1} parent=5 // pred_check_branch
      %6591 = sbr.rel (%p6589) target = $region64
    $region63: #{tpu_custom_call.1} parent=5 // pred_region
      %s6592 = ssub.s32 %s15, 2
      // Predicated region
      $region65: #{tpu_custom_call.1} parent=63 // pred_check
        %p6593 = pneg %p238
      $region66: #{tpu_custom_call.1} parent=63 // pred_check_branch
        %6595 = sbr.rel (%p6593) target = $region68
      $region67: #{tpu_custom_call.1} parent=63 // pred_region
        %p6596 = scmp.lt.s32.totalorder %s21, 1
        %s6597 = scalar_select %p6596, %s21, 1
        %s6598 = smul.addr %s6597, 32
        %s6599 = smul.addr %s6598, 8
        %s6600 = scalar_lea.vmem %s9, %s6599
      $region68: #{tpu_custom_call.1} parent=63 // pred_fallthru
        _
    $region64: #{tpu_custom_call.1} parent=5 // pred_fallthru
      _
  $region6: #{tpu_custom_call.1} parent=0 // loop_footer
    %s19 = sadd.s32 1, %s15
  $region7: #{tpu_custom_call.1} parent=0 // loop_footer_branch
    %14 = sbr.rel target = $region3
  $region8: #{tpu_custom_call.1} parent=0 // loop_exit
    _

</llo_original>
